<compile_context>
chip_gen: v7x
topology: tpu7x:2x2x1
jax: 0.10.0
libtpu: 0.0.40
codegen_flags: <defaults>
</compile_context>

<pallas_src>
import functools

import jax
import jax.numpy as jnp
from jax.experimental import pallas as pl
from jax.experimental.pallas import tpu as pltpu


# ----------------------------------------------------------------------------
# Small helpers
# ----------------------------------------------------------------------------
def _pick_tm(m):
    for cand in (1024, 512, 256, 128, 64, 32, 16, 8):
        if m >= cand and m % cand == 0:
            return cand
    return m


def smooth_l1(x):
    ax = jnp.abs(x)
    return jnp.where(ax < 1.0, 0.5 * x * x, ax - 0.5)


# ----------------------------------------------------------------------------
# Kernel 1: generic tiled matmul + bias (+ReLU) — used for the fused backbone
# ----------------------------------------------------------------------------
def _matmul_bias_kernel(x_ref, w_ref, b_ref, o_ref, *, relu):
    acc = jnp.dot(x_ref[...], w_ref[...], preferred_element_type=jnp.float32)
    acc = acc + b_ref[...]
    if relu:
        acc = jnp.maximum(acc, 0.0)
    o_ref[...] = acc.astype(o_ref.dtype)


def pallas_matmul_bias(x, w, b, *, relu=False, out_dtype=jnp.float32):
    """y = x @ w + b (optional ReLU). x:(M,K) bf16, w:(K,N) bf16, b:(N,) f32."""
    M, K = x.shape
    K2, N = w.shape
    assert K == K2
    tm = _pick_tm(M)
    b2 = b.reshape(1, N).astype(jnp.float32)
    kern = functools.partial(_matmul_bias_kernel, relu=relu)
    return pl.pallas_call(
        kern,
        out_shape=jax.ShapeDtypeStruct((M, N), out_dtype),
        grid_spec=pltpu.PrefetchScalarGridSpec(
            num_scalar_prefetch=0,
            grid=(M // tm,),
            in_specs=[
                pl.BlockSpec((tm, K), lambda i: (i, 0)),
                pl.BlockSpec((K, N), lambda i: (0, 0)),
                pl.BlockSpec((1, N), lambda i: (0, 0)),
            ],
            out_specs=pl.BlockSpec((tm, N), lambda i: (i, 0)),
        ),
        compiler_params=pltpu.CompilerParams(
            dimension_semantics=("parallel",),
            vmem_limit_bytes=32 * 1024 * 1024,
        ),
    )(x, w, b2)


# ----------------------------------------------------------------------------
# Kernel 2: fused student RPN (conv3x3 -> ReLU -> cls/bbox heads -> loss sums)
# ----------------------------------------------------------------------------
def _rpn_fused_kernel(cols_ref, wc_ref, bc_ref, wcls_ref, bcls_ref,
                      wbox_ref, bboxb_ref, obj_ref, reg_ref):
    @pl.when(pl.program_id(0) == 0)
    def _():
        obj_ref[...] = jnp.zeros_like(obj_ref)
        reg_ref[...] = jnp.zeros_like(reg_ref)

    h = jnp.dot(cols_ref[...], wc_ref[...], preferred_element_type=jnp.float32)
    h = jnp.maximum(h + bc_ref[...], 0.0)
    hb = h.astype(wcls_ref.dtype)

    obj = jnp.dot(hb, wcls_ref[...], preferred_element_type=jnp.float32) + bcls_ref[...]
    reg = jnp.dot(hb, wbox_ref[...], preferred_element_type=jnp.float32) + bboxb_ref[...]

    # BCE-with-logits vs all-zero targets == softplus(logits) (stable form).
    sp = jnp.maximum(obj, 0.0) + jnp.log(1.0 + jnp.exp(-jnp.abs(obj)))
    aa = jnp.abs(reg)
    sl1 = jnp.where(aa < 1.0, 0.5 * reg * reg, aa - 0.5)

    obj_ref[...] += jnp.sum(sp).reshape(1, 1)
    reg_ref[...] += jnp.sum(sl1).reshape(1, 1)


# ----------------------------------------------------------------------------
# Kernel 3: fused box tower (student fc6->fc7->predictor, teacher fc6->fc7, KD)
# ----------------------------------------------------------------------------
def _box_tower_kernel(sp_ref, tp_ref,
                      sf6w_ref, sf6b_ref, sf7w_ref, sf7b_ref,
                      spw_ref, spb_ref,
                      tf6w_ref, tf6b_ref, tf7w_ref, tf7b_ref,
                      scale_ref,
                      pred_ref, kd_ref):
    # student tower
    sh6 = jnp.dot(sp_ref[...], sf6w_ref[...], preferred_element_type=jnp.float32)
    sh6 = jnp.maximum(sh6 + sf6b_ref[...], 0.0)
    sfeat = jnp.dot(sh6.astype(sf7w_ref.dtype), sf7w_ref[...],
                    preferred_element_type=jnp.float32)
    sfeat = jnp.maximum(sfeat + sf7b_ref[...], 0.0)
    pred = jnp.dot(sfeat.astype(spw_ref.dtype), spw_ref[...],
                   preferred_element_type=jnp.float32) + spb_ref[...]
    pred_ref[...] = pred.astype(pred_ref.dtype)

    # teacher tower (frozen)
    th6 = jnp.dot(tp_ref[...], tf6w_ref[...], preferred_element_type=jnp.float32)
    th6 = jnp.maximum(th6 + tf6b_ref[...], 0.0)
    tfeat = jnp.dot(th6.astype(tf7w_ref.dtype), tf7w_ref[...],
                    preferred_element_type=jnp.float32)
    tfeat = jnp.maximum(tfeat + tf7b_ref[...], 0.0)

    # KD loss = MSE(s_box_features, t_box_features) / std^2
    d = sfeat - tfeat
    kd_ref[...] = jnp.sum(d * d).reshape(1, 1) * scale_ref[...] * (1.0 / d.size)


# ----------------------------------------------------------------------------
# XLA-side layout glue (im2col in bf16, K padded; weight reshaping; pooling)
# ----------------------------------------------------------------------------
IMG_MEAN = jnp.array([0.485, 0.456, 0.406], jnp.float32)
IMG_STD = jnp.array([0.229, 0.224, 0.225], jnp.float32)
PRED_PAD = 128  # lane-dense padded width of the fused cls|bbox predictor output


def transform_normalize(images_nchw):
    # TODO(synk): variable-size resize / image batching of GeneralizedRCNNTransform not modeled.
    x = jnp.transpose(images_nchw, (0, 2, 3, 1)).astype(jnp.float32)  # -> NHWC
    return (x - IMG_MEAN) / IMG_STD


def _im2col_3x3(x_nhwc, k_pad):
    """SAME-padded 3x3 im2col, emitted in bf16 with K zero-padded to k_pad."""
    B, H, W, C = x_nhwc.shape
    xp = jnp.pad(x_nhwc, ((0, 0), (1, 1), (1, 1), (0, 0)))
    patches = [xp[:, dy:dy + H, dx:dx + W, :] for dy in range(3) for dx in range(3)]
    cols = jnp.concatenate(patches, axis=-1).reshape(B * H * W, 9 * C)
    cols = cols.astype(jnp.bfloat16)
    if k_pad > 9 * C:
        cols = jnp.pad(cols, ((0, 0), (0, k_pad - 9 * C)))
    return cols


def _conv3x3_weight_matrix(w_oihw, k_pad):
    cout, cin = w_oihw.shape[0], w_oihw.shape[1]
    wm = jnp.transpose(w_oihw, (2, 3, 1, 0)).reshape(9 * cin, cout)
    if k_pad > 9 * cin:
        wm = jnp.pad(wm, ((0, k_pad - 9 * cin), (0, 0)))
    return wm.astype(jnp.bfloat16)


def roi_pool_fixed_grid(feat):
    """Pool 2x2 quadrants of the feature map into 4x4 bins (avg pooling).

    TODO(synk): true RoIAlign (bilinear sampling at arbitrary proposal boxes)
    has no clean Pallas equivalent; proposals are a fixed 2x2 grid here.
    """
    B, H, W, C = feat.shape
    ph, pw = H // 8, W // 8
    x = feat.astype(jnp.float32).reshape(B, 2, 4, ph, 2, 4, pw, C)
    x = x.mean(axis=(3, 6))                       # (B, 2, 4, 2, 4, C)
    x = jnp.transpose(x, (0, 1, 3, 2, 4, 5))      # (B, rH, rW, binH, binW, C)
    return x.reshape(B * 4, 4 * 4 * C)            # (num_rois, 16*C)


# ----------------------------------------------------------------------------
# Fused sub-modules
# ----------------------------------------------------------------------------
def fused_backbone(x, p):
    """Student + teacher 3x3 backbone conv as one Pallas matmul (Cout stacked)."""
    cols = _im2col_3x3(x, k_pad=128)
    ws = _conv3x3_weight_matrix(p["s_backbone_w"], 128)
    wt = _conv3x3_weight_matrix(jax.lax.stop_gradient(p["t_backbone_w"]), 128)
    w = jnp.concatenate([ws, wt], axis=1)                       # (128, 2*feat) bf16
    b = jnp.concatenate([p["s_backbone_b"],
                         jax.lax.stop_gradient(p["t_backbone_b"])], axis=0)
    feat = pallas_matmul_bias(cols, w, b, relu=True, out_dtype=jnp.bfloat16)
    B, H, W, _ = x.shape
    cout = ws.shape[1]
    s_feature = feat[:, :cout].reshape(B, H, W, cout)
    t_feature = jax.lax.stop_gradient(feat[:, cout:]).reshape(B, H, W, cout)
    return s_feature, t_feature


def fused_rpn_losses(s_feature, p):
    """Student RPN conv + cls/bbox heads + simplified loss reductions, one kernel."""
    cols = _im2col_3x3(s_feature, k_pad=256)
    wc = _conv3x3_weight_matrix(p["s_rpn_conv_w"], 256)                     # (256, feat)
    bc = p["s_rpn_conv_b"].reshape(1, -1).astype(jnp.float32)
    wcls = p["s_rpn_cls_w"].reshape(p["s_rpn_cls_w"].shape[0], -1).T.astype(jnp.bfloat16)
    bcls = p["s_rpn_cls_b"].reshape(1, -1).astype(jnp.float32)
    wbox = p["s_rpn_bbox_w"].reshape(p["s_rpn_bbox_w"].shape[0], -1).T.astype(jnp.bfloat16)
    bbox = p["s_rpn_bbox_b"].reshape(1, -1).astype(jnp.float32)

    M, K = cols.shape
    tm = _pick_tm(M)
    obj_sum, reg_sum = pl.pallas_call(
        _rpn_fused_kernel,
        out_shape=(jax.ShapeDtypeStruct((1, 1), jnp.float32),
                   jax.ShapeDtypeStruct((1, 1), jnp.float32)),
        grid_spec=pltpu.PrefetchScalarGridSpec(
            num_scalar_prefetch=0,
            grid=(M // tm,),
            in_specs=[
                pl.BlockSpec((tm, K), lambda i: (i, 0)),
                pl.BlockSpec(wc.shape, lambda i: (0, 0)),
                pl.BlockSpec(bc.shape, lambda i: (0, 0)),
                pl.BlockSpec(wcls.shape, lambda i: (0, 0)),
                pl.BlockSpec(bcls.shape, lambda i: (0, 0)),
                pl.BlockSpec(wbox.shape, lambda i: (0, 0)),
                pl.BlockSpec(bbox.shape, lambda i: (0, 0)),
            ],
            out_specs=(pl.BlockSpec((1, 1), lambda i: (0, 0)),
                       pl.BlockSpec((1, 1), lambda i: (0, 0))),
        ),
        compiler_params=pltpu.CompilerParams(
            dimension_semantics=("arbitrary",),          # scalar accumulators
            vmem_limit_bytes=32 * 1024 * 1024,
        ),
    )(cols, wc, bc, wcls, bcls, wbox, bbox)

    # TODO(synk): anchor/proposal matching and fg/bg sampling not modeled; use
    #             all-background objectness targets (BCE == softplus).
    loss_objectness = obj_sum[0, 0] / (M * wcls.shape[1])
    loss_rpn_box_reg = reg_sum[0, 0] / (M * wbox.shape[1])
    return loss_objectness, loss_rpn_box_reg


def fused_box_tower(s_pooled, t_pooled, p, kd_scale):
    """Student fc6/fc7/predictor + teacher fc6/fc7 + KD-MSE in one pallas_call."""
    bf = jnp.bfloat16
    sp = s_pooled.astype(bf)
    tp = jax.lax.stop_gradient(t_pooled).astype(bf)

    s_f6w = p["s_fc6_w"].astype(bf)
    s_f6b = p["s_fc6_b"].reshape(1, -1).astype(jnp.float32)
    s_f7w = p["s_fc7_w"].astype(bf)
    s_f7b = p["s_fc7_b"].reshape(1, -1).astype(jnp.float32)

    pred_full_w = jnp.concatenate([p["s_cls_w"], p["s_bbox_w"]], axis=1)     # (h, 5nc)
    pred_full_b = jnp.concatenate([p["s_cls_b"], p["s_bbox_b"]], axis=0)
    pad_n = PRED_PAD - pred_full_w.shape[1]
    s_pw = jnp.pad(pred_full_w, ((0, 0), (0, pad_n))).astype(bf)             # (h, 128)
    s_pb = jnp.pad(pred_full_b, (0, pad_n)).reshape(1, -1).astype(jnp.float32)

    sg = jax.lax.stop_gradient
    t_f6w = sg(p["t_fc6_w"]).astype(bf)
    t_f6b = sg(p["t_fc6_b"]).reshape(1, -1).astype(jnp.float32)
    t_f7w = sg(p["t_fc7_w"]).astype(bf)
    t_f7b = sg(p["t_fc7_b"]).reshape(1, -1).astype(jnp.float32)

    args = (sp, tp, s_f6w, s_f6b, s_f7w, s_f7b, s_pw, s_pb,
            t_f6w, t_f6b, t_f7w, t_f7b, kd_scale)

    n_rois = s_pooled.shape[0]
    pred, kd = pl.pallas_call(
        _box_tower_kernel,
        out_shape=(jax.ShapeDtypeStruct((n_rois, PRED_PAD), jnp.float32),
                   jax.ShapeDtypeStruct((1, 1), jnp.float32)),
        in_specs=[pl.BlockSpec(a.shape, lambda: (0, 0)) for a in args],
        out_specs=(pl.BlockSpec((n_rois, PRED_PAD), lambda: (0, 0)),
                   pl.BlockSpec((1, 1), lambda: (0, 0))),
        compiler_params=pltpu.CompilerParams(vmem_limit_bytes=32 * 1024 * 1024),
    )(*args)
    return pred, kd


# ----------------------------------------------------------------------------
# FasterRCNNKD forward (training path -> dict of losses)
# ----------------------------------------------------------------------------
def faster_rcnn_kd_forward(params, images, targets):
    # --- input validation mirroring the PyTorch forward ---
    for t in targets:
        boxes = t["boxes"]
        if boxes.ndim != 2 or boxes.shape[-1] != 4:
            raise ValueError("Expected target boxes of shape [N, 4]")

    x = transform_normalize(images)

    # Fused student+teacher backbone (one Pallas matmul, Cout-stacked weights).
    s_feature, t_feature = fused_backbone(x, params)

    # Student RPN conv + heads + loss reductions, fully in-kernel.
    # Note: the teacher RPN of the original module never contributes to any
    # returned loss (its proposals are overwritten by s_proposals) -> omitted.
    # TODO(synk): anchor decoding + NMS proposal filtering is data-dependent
    #             control flow; proposals are a fixed 2x2 grid of boxes here.
    loss_objectness, loss_rpn_box_reg = fused_rpn_losses(s_feature, params)

    # RoI pooling on the fixed proposal grid (s_box_raw_features equivalent).
    s_pooled = roi_pool_fixed_grid(s_feature)
    t_pooled = jax.lax.stop_gradient(roi_pool_fixed_grid(t_feature))

    # TODO(synk): create_KD_loss implementation is external; modeled as MSE on
    #             box features scaled by 1/opt['std']^2 (teacher cls weight std).
    std = params["kd_std"]
    kd_scale = (1.0 / (std * std)).reshape(1, 1).astype(jnp.float32)

    pred, kd = fused_box_tower(s_pooled, t_pooled, params, kd_scale)
    kd_loss = kd[0, 0]

    nc = params["s_cls_w"].shape[1]
    s_cls = pred[:, :nc]
    s_reg = pred[:, nc:nc + 4 * nc]

    # ---------------- simplified detector losses (tiny, XLA glue) ----------------
    # TODO(synk): proposal-target matching and fg/bg sampling not modeled; use
    #             label[0] per image for every RoI of that image.
    B = images.shape[0]
    labels = jnp.stack([t["labels"][0] for t in targets])            # (B,)
    roi_labels = jnp.repeat(labels, s_pooled.shape[0] // B)          # 4 rois / image
    logp = jax.nn.log_softmax(s_cls, axis=-1)
    loss_classifier = -jnp.mean(jnp.take_along_axis(logp, roi_labels[:, None], axis=-1))
    loss_box_reg = jnp.mean(smooth_l1(s_reg))

    return {
        "loss_classifier": loss_classifier,
        "loss_box_reg": loss_box_reg,
        "loss_objectness": loss_objectness,
        "loss_rpn_box_reg": loss_rpn_box_reg,
        "kd_loss": kd_loss,
    }


# ----------------------------------------------------------------------------
# Deterministic parameter construction
# ----------------------------------------------------------------------------
def make_params(key, cin=3, feat=16, anchors=3, hidden=32, num_classes=5):
    keys = iter(jax.random.split(key, 64))
    p = {}

    def w(shape, scale=0.05):
        return scale * jax.random.normal(next(keys), shape, jnp.float32)

    for prefix in ("s_", "t_"):
        p[prefix + "backbone_w"] = w((feat, cin, 3, 3))
        p[prefix + "backbone_b"] = jnp.zeros((feat,), jnp.float32)
        p[prefix + "rpn_conv_w"] = w((feat, feat, 3, 3))
        p[prefix + "rpn_conv_b"] = jnp.zeros((feat,), jnp.float32)
        p[prefix + "rpn_cls_w"] = w((anchors, feat, 1, 1))
        p[prefix + "rpn_cls_b"] = jnp.zeros((anchors,), jnp.float32)
        p[prefix + "rpn_bbox_w"] = w((4 * anchors, feat, 1, 1))
        p[prefix + "rpn_bbox_b"] = jnp.zeros((4 * anchors,), jnp.float32)
        p[prefix + "fc6_w"] = w((feat * 4 * 4, hidden))
        p[prefix + "fc6_b"] = jnp.zeros((hidden,), jnp.float32)
        p[prefix + "fc7_w"] = w((hidden, hidden))
        p[prefix + "fc7_b"] = jnp.zeros((hidden,), jnp.float32)
        p[prefix + "cls_w"] = w((hidden, num_classes))
        p[prefix + "cls_b"] = jnp.zeros((num_classes,), jnp.float32)
        p[prefix + "bbox_w"] = w((hidden, num_classes * 4))
        p[prefix + "bbox_b"] = jnp.zeros((num_classes * 4,), jnp.float32)

    # opt['std'] default: std of teacher cls_score weight
    p["kd_std"] = jnp.std(p["t_cls_w"])
    return p


# ----------------------------------------------------------------------------
if __name__ == "__main__":
    key = jax.random.PRNGKey(0)
    pkey, ikey, bkey, lkey = jax.random.split(key, 4)

    params = make_params(pkey)

    B, C, H, W = 2, 3, 32, 32
    images = jax.random.uniform(ikey, (B, C, H, W), jnp.float32)  # NCHW like PyTorch
    targets = [
        {
            "boxes": jnp.abs(jax.random.normal(bkey, (2, 4), jnp.float32)) * 10.0,
            "labels": jax.random.randint(lkey, (2,), 1, 5),
        }
        for _ in range(B)
    ]

    losses = jax.jit(faster_rcnn_kd_forward)(params, images, targets)
    jax.block_until_ready(losses)

    for v in losses.values():
        assert jnp.isfinite(v), "non-finite loss"
    print("KERNEL_OK")
</pallas_src>

<mosaic_0001>
module attributes {stable_mosaic.version = 11 : i64} {
  func.func @_matmul_bias_kernel(%arg0: i32, %arg1: memref<1024x128xbf16, #tpu.memory_space<vmem>>, %arg2: memref<128x32xbf16, #tpu.memory_space<vmem>>, %arg3: memref<1x32xf32, #tpu.memory_space<vmem>>, %arg4: memref<1024x32xbf16, #tpu.memory_space<vmem>>) attributes {dimension_semantics = [#tpu.dimension_semantics<parallel>], iteration_bounds = array<i64: 2>, scalar_prefetch = 0 : i64, scratch_operands = 0 : i64, tpu.core_type = #tpu.core_type<tc>, window_params = [{transform_indices = @transform_0, window_bounds = array<i64: 1024, 128>}, {pipeline_mode = #tpu.pipeline_mode<synchronous>, transform_indices = @transform_1, window_bounds = array<i64: 128, 32>}, {pipeline_mode = #tpu.pipeline_mode<synchronous>, transform_indices = @transform_2, window_bounds = array<i64: 1, 32>}, {transform_indices = @transform_3, window_bounds = array<i64: 1024, 32>}]} {
    %c0 = arith.constant 0 : index
    %c0_0 = arith.constant 0 : index
    %0 = vector.load %arg1[%c0, %c0_0] : memref<1024x128xbf16, #tpu.memory_space<vmem>>, vector<1024x128xbf16>
    %c0_1 = arith.constant 0 : index
    %c0_2 = arith.constant 0 : index
    %1 = vector.load %arg2[%c0_1, %c0_2] : memref<128x32xbf16, #tpu.memory_space<vmem>>, vector<128x32xbf16>
    %cst = arith.constant dense<0.000000e+00> : vector<1024x32xf32>
    %2 = tpu.matmul %0, %1, %cst {dimension_numbers = #tpu.dot_dimension_numbers<[1], [0], [0], [1], [0, 0, 1, 1], [], []>} : vector<1024x128xbf16>, vector<128x32xbf16>, vector<1024x32xf32> -> vector<1024x32xf32>
    %c0_3 = arith.constant 0 : index
    %c0_4 = arith.constant 0 : index
    %3 = vector.load %arg3[%c0_3, %c0_4] : memref<1x32xf32, #tpu.memory_space<vmem>>, vector<1x32xf32>
    %4 = vector.broadcast %3 : vector<1x32xf32> to vector<1024x32xf32>
    %5 = arith.addf %2, %4 : vector<1024x32xf32>
    %cst_5 = arith.constant 0.000000e+00 : f32
    %6 = vector.broadcast %cst_5 : f32 to vector<1024x32xf32>
    %7 = arith.maximumf %5, %6 : vector<1024x32xf32>
    %8 = arith.truncf %7 : vector<1024x32xf32> to vector<1024x32xbf16>
    %c0_6 = arith.constant 0 : index
    %c0_7 = arith.constant 0 : index
    %9 = vector.load %arg4[%c0_6, %c0_7] : memref<1024x32xbf16, #tpu.memory_space<vmem>>, vector<1024x32xbf16>
    tpu.vector_store %arg4[%c0_6, %c0_7], %8 {strides = array<i32>} : memref<1024x32xbf16, #tpu.memory_space<vmem>>, vector<1024x32xbf16>,
    return
  }
  func.func @transform_0(%arg0: i32) -> (i32, i32) {
    %c0_i32 = arith.constant 0 : i32
    %c0_i32_0 = arith.constant 0 : i32
    return %arg0, %c0_i32 : i32, i32
  }
  func.func @transform_1(%arg0: i32) -> (i32, i32) {
    %c0_i32 = arith.constant 0 : i32
    %c0_i32_0 = arith.constant 0 : i32
    %c0_i32_1 = arith.constant 0 : i32
    return %c0_i32, %c0_i32_0 : i32, i32
  }
  func.func @transform_2(%arg0: i32) -> (i32, i32) {
    %c0_i32 = arith.constant 0 : i32
    %c0_i32_0 = arith.constant 0 : i32
    %c0_i32_1 = arith.constant 0 : i32
    return %c0_i32, %c0_i32_0 : i32, i32
  }
  func.func @transform_3(%arg0: i32) -> (i32, i32) {
    %c0_i32 = arith.constant 0 : i32
    %c0_i32_0 = arith.constant 0 : i32
    return %arg0, %c0_i32 : i32, i32
  }
}

module attributes {stable_mosaic.version = 11 : i64} {
  func.func @_box_tower_kernel(%arg0: memref<8x256xbf16, #tpu.memory_space<vmem>>, %arg1: memref<8x256xbf16, #tpu.memory_space<vmem>>, %arg2: memref<256x32xbf16, #tpu.memory_space<vmem>>, %arg3: memref<1x32xf32, #tpu.memory_space<vmem>>, %arg4: memref<32x32xbf16, #tpu.memory_space<vmem>>, %arg5: memref<1x32xf32, #tpu.memory_space<vmem>>, %arg6: memref<32x128xbf16, #tpu.memory_space<vmem>>, %arg7: memref<1x128xf32, #tpu.memory_space<vmem>>, %arg8: memref<256x32xbf16, #tpu.memory_space<vmem>>, %arg9: memref<1x32xf32, #tpu.memory_space<vmem>>, %arg10: memref<32x32xbf16, #tpu.memory_space<vmem>>, %arg11: memref<1x32xf32, #tpu.memory_space<vmem>>, %arg12: memref<1x1xf32, #tpu.memory_space<vmem>>, %arg13: memref<8x128xf32, #tpu.memory_space<vmem>>, %arg14: memref<1x1xf32, #tpu.memory_space<vmem>>) attributes {dimension_semantics = [], scalar_prefetch = 0 : i64, scratch_operands = 0 : i64, tpu.core_type = #tpu.core_type<tc>} {
    %c0 = arith.constant 0 : index
    %c0_0 = arith.constant 0 : index
    %0 = vector.load %arg0[%c0, %c0_0] : memref<8x256xbf16, #tpu.memory_space<vmem>>, vector<8x256xbf16>
    %c0_1 = arith.constant 0 : index
    %c0_2 = arith.constant 0 : index
    %1 = vector.load %arg2[%c0_1, %c0_2] : memref<256x32xbf16, #tpu.memory_space<vmem>>, vector<256x32xbf16>
    %cst = arith.constant dense<0.000000e+00> : vector<8x32xf32>
    %2 = tpu.matmul %0, %1, %cst {dimension_numbers = #tpu.dot_dimension_numbers<[1], [0], [0], [1], [0, 0, 1, 1], [], []>} : vector<8x256xbf16>, vector<256x32xbf16>, vector<8x32xf32> -> vector<8x32xf32>
    %c0_3 = arith.constant 0 : index
    %c0_4 = arith.constant 0 : index
    %3 = vector.load %arg3[%c0_3, %c0_4] : memref<1x32xf32, #tpu.memory_space<vmem>>, vector<1x32xf32>
    %4 = vector.broadcast %3 : vector<1x32xf32> to vector<8x32xf32>
    %5 = arith.addf %2, %4 : vector<8x32xf32>
    %cst_5 = arith.constant 0.000000e+00 : f32
    %6 = vector.broadcast %cst_5 : f32 to vector<8x32xf32>
    %7 = arith.maximumf %5, %6 : vector<8x32xf32>
    %8 = arith.truncf %7 : vector<8x32xf32> to vector<8x32xbf16>
    %c0_6 = arith.constant 0 : index
    %c0_7 = arith.constant 0 : index
    %9 = vector.load %arg4[%c0_6, %c0_7] : memref<32x32xbf16, #tpu.memory_space<vmem>>, vector<32x32xbf16>
    %cst_8 = arith.constant dense<0.000000e+00> : vector<8x32xf32>
    %10 = tpu.matmul %8, %9, %cst_8 {dimension_numbers = #tpu.dot_dimension_numbers<[1], [0], [0], [1], [0, 0, 1, 1], [], []>} : vector<8x32xbf16>, vector<32x32xbf16>, vector<8x32xf32> -> vector<8x32xf32>
    %c0_9 = arith.constant 0 : index
    %c0_10 = arith.constant 0 : index
    %11 = vector.load %arg5[%c0_9, %c0_10] : memref<1x32xf32, #tpu.memory_space<vmem>>, vector<1x32xf32>
    %12 = vector.broadcast %11 : vector<1x32xf32> to vector<8x32xf32>
    %13 = arith.addf %10, %12 : vector<8x32xf32>
    %cst_11 = arith.constant 0.000000e+00 : f32
    %14 = vector.broadcast %cst_11 : f32 to vector<8x32xf32>
    %15 = arith.maximumf %13, %14 : vector<8x32xf32>
    %16 = arith.truncf %15 : vector<8x32xf32> to vector<8x32xbf16>
    %c0_12 = arith.constant 0 : index
    %c0_13 = arith.constant 0 : index
    %17 = vector.load %arg6[%c0_12, %c0_13] : memref<32x128xbf16, #tpu.memory_space<vmem>>, vector<32x128xbf16>
    %cst_14 = arith.constant dense<0.000000e+00> : vector<8x128xf32>
    %18 = tpu.matmul %16, %17, %cst_14 {dimension_numbers = #tpu.dot_dimension_numbers<[1], [0], [0], [1], [0, 0, 1, 1], [], []>} : vector<8x32xbf16>, vector<32x128xbf16>, vector<8x128xf32> -> vector<8x128xf32>
    %c0_15 = arith.constant 0 : index
    %c0_16 = arith.constant 0 : index
    %19 = vector.load %arg7[%c0_15, %c0_16] : memref<1x128xf32, #tpu.memory_space<vmem>>, vector<1x128xf32>
    %20 = vector.broadcast %19 : vector<1x128xf32> to vector<8x128xf32>
    %21 = arith.addf %18, %20 : vector<8x128xf32>
    %c0_17 = arith.constant 0 : index
    %c0_18 = arith.constant 0 : index
    %22 = vector.load %arg13[%c0_17, %c0_18] : memref<8x128xf32, #tpu.memory_space<vmem>>, vector<8x128xf32>
    tpu.vector_store %arg13[%c0_17, %c0_18], %21 {strides = array<i32>} : memref<8x128xf32, #tpu.memory_space<vmem>>, vector<8x128xf32>,
    %c0_19 = arith.constant 0 : index
    %c0_20 = arith.constant 0 : index
    %23 = vector.load %arg1[%c0_19, %c0_20] : memref<8x256xbf16, #tpu.memory_space<vmem>>, vector<8x256xbf16>
    %c0_21 = arith.constant 0 : index
    %c0_22 = arith.constant 0 : index
    %24 = vector.load %arg8[%c0_21, %c0_22] : memref<256x32xbf16, #tpu.memory_space<vmem>>, vector<256x32xbf16>
    %cst_23 = arith.constant dense<0.000000e+00> : vector<8x32xf32>
    %25 = tpu.matmul %23, %24, %cst_23 {dimension_numbers = #tpu.dot_dimension_numbers<[1], [0], [0], [1], [0, 0, 1, 1], [], []>} : vector<8x256xbf16>, vector<256x32xbf16>, vector<8x32xf32> -> vector<8x32xf32>
    %c0_24 = arith.constant 0 : index
    %c0_25 = arith.constant 0 : index
    %26 = vector.load %arg9[%c0_24, %c0_25] : memref<1x32xf32, #tpu.memory_space<vmem>>, vector<1x32xf32>
    %27 = vector.broadcast %26 : vector<1x32xf32> to vector<8x32xf32>
    %28 = arith.addf %25, %27 : vector<8x32xf32>
    %cst_26 = arith.constant 0.000000e+00 : f32
    %29 = vector.broadcast %cst_26 : f32 to vector<8x32xf32>
    %30 = arith.maximumf %28, %29 : vector<8x32xf32>
    %31 = arith.truncf %30 : vector<8x32xf32> to vector<8x32xbf16>
    %c0_27 = arith.constant 0 : index
    %c0_28 = arith.constant 0 : index
    %32 = vector.load %arg10[%c0_27, %c0_28] : memref<32x32xbf16, #tpu.memory_space<vmem>>, vector<32x32xbf16>
    %cst_29 = arith.constant dense<0.000000e+00> : vector<8x32xf32>
    %33 = tpu.matmul %31, %32, %cst_29 {dimension_numbers = #tpu.dot_dimension_numbers<[1], [0], [0], [1], [0, 0, 1, 1], [], []>} : vector<8x32xbf16>, vector<32x32xbf16>, vector<8x32xf32> -> vector<8x32xf32>
    %c0_30 = arith.constant 0 : index
    %c0_31 = arith.constant 0 : index
    %34 = vector.load %arg11[%c0_30, %c0_31] : memref<1x32xf32, #tpu.memory_space<vmem>>, vector<1x32xf32>
    %35 = vector.broadcast %34 : vector<1x32xf32> to vector<8x32xf32>
    %36 = arith.addf %33, %35 : vector<8x32xf32>
    %cst_32 = arith.constant 0.000000e+00 : f32
    %37 = vector.broadcast %cst_32 : f32 to vector<8x32xf32>
    %38 = arith.maximumf %36, %37 : vector<8x32xf32>
    %39 = arith.subf %15, %38 : vector<8x32xf32>
    %40 = arith.mulf %39, %39 : vector<8x32xf32>
    %41 = vector.shape_cast %40 : vector<8x32xf32> to vector<1x8x32xf32>
    %cst_33 = arith.constant dense<0.000000e+00> : vector<1xf32>
    %42 = vector.multi_reduction <add>, %41, %cst_33 [1, 2] : vector<1x8x32xf32> to vector<1xf32>
    %43 = vector.shape_cast %42 : vector<1xf32> to vector<1x1x1xf32>
    %44 = vector.extract %43[0, 0, 0] : f32 from vector<1x1x1xf32>
    %45 = vector.broadcast %44 : f32 to vector<1x1xf32>
    %c0_34 = arith.constant 0 : index
    %c0_35 = arith.constant 0 : index
    %46 = vector.load %arg12[%c0_34, %c0_35] : memref<1x1xf32, #tpu.memory_space<vmem>>, vector<1x1xf32>
    %47 = arith.mulf %45, %46 : vector<1x1xf32>
    %cst_36 = arith.constant 3.906250e-03 : f32
    %48 = vector.broadcast %cst_36 : f32 to vector<1x1xf32>
    %49 = arith.mulf %47, %48 : vector<1x1xf32>
    %c0_37 = arith.constant 0 : index
    %c0_38 = arith.constant 0 : index
    %50 = vector.load %arg14[%c0_37, %c0_38] : memref<1x1xf32, #tpu.memory_space<vmem>>, vector<1x1xf32>
    tpu.vector_store %arg14[%c0_37, %c0_38], %49 {strides = array<i32>} : memref<1x1xf32, #tpu.memory_space<vmem>>, vector<1x1xf32>,
    return
  }
}

module attributes {stable_mosaic.version = 11 : i64} {
  func.func @_rpn_fused_kernel(%arg0: i32, %arg1: memref<1024x256xbf16, #tpu.memory_space<vmem>>, %arg2: memref<256x16xbf16, #tpu.memory_space<vmem>>, %arg3: memref<1x16xf32, #tpu.memory_space<vmem>>, %arg4: memref<16x3xbf16, #tpu.memory_space<vmem>>, %arg5: memref<1x3xf32, #tpu.memory_space<vmem>>, %arg6: memref<16x12xbf16, #tpu.memory_space<vmem>>, %arg7: memref<1x12xf32, #tpu.memory_space<vmem>>, %arg8: memref<1x1xf32, #tpu.memory_space<vmem>>, %arg9: memref<1x1xf32, #tpu.memory_space<vmem>>) attributes {dimension_semantics = [#tpu.dimension_semantics<arbitrary>], iteration_bounds = array<i64: 2>, scalar_prefetch = 0 : i64, scratch_operands = 0 : i64, tpu.core_type = #tpu.core_type<tc>, window_params = [{transform_indices = @transform_0, window_bounds = array<i64: 1024, 256>}, {pipeline_mode = #tpu.pipeline_mode<synchronous>, transform_indices = @transform_1, window_bounds = array<i64: 256, 16>}, {pipeline_mode = #tpu.pipeline_mode<synchronous>, transform_indices = @transform_2, window_bounds = array<i64: 1, 16>}, {pipeline_mode = #tpu.pipeline_mode<synchronous>, transform_indices = @transform_3, window_bounds = array<i64: 16, 3>}, {pipeline_mode = #tpu.pipeline_mode<synchronous>, transform_indices = @transform_4, window_bounds = array<i64: 1, 3>}, {pipeline_mode = #tpu.pipeline_mode<synchronous>, transform_indices = @transform_5, window_bounds = array<i64: 16, 12>}, {pipeline_mode = #tpu.pipeline_mode<synchronous>, transform_indices = @transform_6, window_bounds = array<i64: 1, 12>}, {pipeline_mode = #tpu.pipeline_mode<synchronous>, transform_indices = @transform_7, window_bounds = array<i64: 1, 1>}, {pipeline_mode = #tpu.pipeline_mode<synchronous>, transform_indices = @transform_8, window_bounds = array<i64: 1, 1>}]} {
    %c0_i32 = arith.constant 0 : i32
    %0 = arith.cmpi eq, %arg0, %c0_i32 : i32
    %1 = arith.extui %0 : i1 to i32
    %c0_i32_0 = arith.constant 0 : i32
    %2 = arith.cmpi ne, %1, %c0_i32_0 : i32
    scf.if %2 {
      %cst_33 = arith.constant 0.000000e+00 : f32
      %57 = vector.broadcast %cst_33 : f32 to vector<1x1xf32>
      %c0_34 = arith.constant 0 : index
      %c0_35 = arith.constant 0 : index
      %58 = vector.load %arg8[%c0_34, %c0_35] : memref<1x1xf32, #tpu.memory_space<vmem>>, vector<1x1xf32>
      tpu.vector_store %arg8[%c0_34, %c0_35], %57 {strides = array<i32>} : memref<1x1xf32, #tpu.memory_space<vmem>>, vector<1x1xf32>,
      %cst_36 = arith.constant 0.000000e+00 : f32
      %59 = vector.broadcast %cst_36 : f32 to vector<1x1xf32>
      %c0_37 = arith.constant 0 : index
      %c0_38 = arith.constant 0 : index
      %60 = vector.load %arg9[%c0_37, %c0_38] : memref<1x1xf32, #tpu.memory_space<vmem>>, vector<1x1xf32>
      tpu.vector_store %arg9[%c0_37, %c0_38], %59 {strides = array<i32>} : memref<1x1xf32, #tpu.memory_space<vmem>>, vector<1x1xf32>,
    } else {
    }
    %c0 = arith.constant 0 : index
    %c0_1 = arith.constant 0 : index
    %3 = vector.load %arg1[%c0, %c0_1] : memref<1024x256xbf16, #tpu.memory_space<vmem>>, vector<1024x256xbf16>
    %c0_2 = arith.constant 0 : index
    %c0_3 = arith.constant 0 : index
    %4 = vector.load %arg2[%c0_2, %c0_3] : memref<256x16xbf16, #tpu.memory_space<vmem>>, vector<256x16xbf16>
    %cst = arith.constant dense<0.000000e+00> : vector<1024x16xf32>
    %5 = tpu.matmul %3, %4, %cst {dimension_numbers = #tpu.dot_dimension_numbers<[1], [0], [0], [1], [0, 0, 1, 1], [], []>} : vector<1024x256xbf16>, vector<256x16xbf16>, vector<1024x16xf32> -> vector<1024x16xf32>
    %c0_4 = arith.constant 0 : index
    %c0_5 = arith.constant 0 : index
    %6 = vector.load %arg3[%c0_4, %c0_5] : memref<1x16xf32, #tpu.memory_space<vmem>>, vector<1x16xf32>
    %7 = vector.broadcast %6 : vector<1x16xf32> to vector<1024x16xf32>
    %8 = arith.addf %5, %7 : vector<1024x16xf32>
    %cst_6 = arith.constant 0.000000e+00 : f32
    %9 = vector.broadcast %cst_6 : f32 to vector<1024x16xf32>
    %10 = arith.maximumf %8, %9 : vector<1024x16xf32>
    %11 = arith.truncf %10 : vector<1024x16xf32> to vector<1024x16xbf16>
    %c0_7 = arith.constant 0 : index
    %c0_8 = arith.constant 0 : index
    %12 = vector.load %arg4[%c0_7, %c0_8] : memref<16x3xbf16, #tpu.memory_space<vmem>>, vector<16x3xbf16>
    %cst_9 = arith.constant dense<0.000000e+00> : vector<1024x3xf32>
    %13 = tpu.matmul %11, %12, %cst_9 {dimension_numbers = #tpu.dot_dimension_numbers<[1], [0], [0], [1], [0, 0, 1, 1], [], []>} : vector<1024x16xbf16>, vector<16x3xbf16>, vector<1024x3xf32> -> vector<1024x3xf32>
    %c0_10 = arith.constant 0 : index
    %c0_11 = arith.constant 0 : index
    %14 = vector.load %arg5[%c0_10, %c0_11] : memref<1x3xf32, #tpu.memory_space<vmem>>, vector<1x3xf32>
    %15 = vector.broadcast %14 : vector<1x3xf32> to vector<1024x3xf32>
    %16 = arith.addf %13, %15 : vector<1024x3xf32>
    %c0_12 = arith.constant 0 : index
    %c0_13 = arith.constant 0 : index
    %17 = vector.load %arg6[%c0_12, %c0_13] : memref<16x12xbf16, #tpu.memory_space<vmem>>, vector<16x12xbf16>
    %cst_14 = arith.constant dense<0.000000e+00> : vector<1024x12xf32>
    %18 = tpu.matmul %11, %17, %cst_14 {dimension_numbers = #tpu.dot_dimension_numbers<[1], [0], [0], [1], [0, 0, 1, 1], [], []>} : vector<1024x16xbf16>, vector<16x12xbf16>, vector<1024x12xf32> -> vector<1024x12xf32>
    %c0_15 = arith.constant 0 : index
    %c0_16 = arith.constant 0 : index
    %19 = vector.load %arg7[%c0_15, %c0_16] : memref<1x12xf32, #tpu.memory_space<vmem>>, vector<1x12xf32>
    %20 = vector.broadcast %19 : vector<1x12xf32> to vector<1024x12xf32>
    %21 = arith.addf %18, %20 : vector<1024x12xf32>
    %cst_17 = arith.constant 0.000000e+00 : f32
    %22 = vector.broadcast %cst_17 : f32 to vector<1024x3xf32>
    %23 = arith.maximumf %16, %22 : vector<1024x3xf32>
    %24 = math.absf %16 : vector<1024x3xf32>
    %cst_18 = arith.constant 0.000000e+00 : f32
    %25 = vector.broadcast %cst_18 : f32 to vector<1024x3xf32>
    %26 = arith.subf %25, %24 : vector<1024x3xf32>
    %27 = math.exp %26 : vector<1024x3xf32>
    %cst_19 = arith.constant 1.000000e+00 : f32
    %28 = vector.broadcast %cst_19 : f32 to vector<1024x3xf32>
    %29 = arith.addf %28, %27 : vector<1024x3xf32>
    %30 = math.log %29 : vector<1024x3xf32>
    %31 = arith.addf %23, %30 : vector<1024x3xf32>
    %32 = math.absf %21 : vector<1024x12xf32>
    %cst_20 = arith.constant 1.000000e+00 : f32
    %33 = vector.broadcast %cst_20 : f32 to vector<1024x12xf32>
    %34 = arith.cmpf olt, %32, %33 : vector<1024x12xf32>
    %cst_21 = arith.constant 5.000000e-01 : f32
    %35 = vector.broadcast %cst_21 : f32 to vector<1024x12xf32>
    %36 = arith.mulf %35, %21 : vector<1024x12xf32>
    %37 = arith.mulf %36, %21 : vector<1024x12xf32>
    %cst_22 = arith.constant 5.000000e-01 : f32
    %38 = vector.broadcast %cst_22 : f32 to vector<1024x12xf32>
    %39 = arith.subf %32, %38 : vector<1024x12xf32>
    %40 = arith.select %34, %37, %39 : vector<1024x12xi1>, vector<1024x12xf32>
    %c0_23 = arith.constant 0 : index
    %c0_24 = arith.constant 0 : index
    %41 = vector.load %arg8[%c0_23, %c0_24] : memref<1x1xf32, #tpu.memory_space<vmem>>, vector<1x1xf32>
    %42 = vector.shape_cast %31 : vector<1024x3xf32> to vector<1x1024x3xf32>
    %cst_25 = arith.constant dense<0.000000e+00> : vector<1xf32>
    %43 = vector.multi_reduction <add>, %42, %cst_25 [1, 2] : vector<1x1024x3xf32> to vector<1xf32>
    %44 = vector.shape_cast %43 : vector<1xf32> to vector<1x1x1xf32>
    %45 = vector.extract %44[0, 0, 0] : f32 from vector<1x1x1xf32>
    %46 = vector.broadcast %45 : f32 to vector<1x1xf32>
    %47 = arith.addf %41, %46 : vector<1x1xf32>
    %c0_26 = arith.constant 0 : index
    %c0_27 = arith.constant 0 : index
    %48 = vector.load %arg8[%c0_26, %c0_27] : memref<1x1xf32, #tpu.memory_space<vmem>>, vector<1x1xf32>
    tpu.vector_store %arg8[%c0_26, %c0_27], %47 {strides = array<i32>} : memref<1x1xf32, #tpu.memory_space<vmem>>, vector<1x1xf32>,
    %c0_28 = arith.constant 0 : index
    %c0_29 = arith.constant 0 : index
    %49 = vector.load %arg9[%c0_28, %c0_29] : memref<1x1xf32, #tpu.memory_space<vmem>>, vector<1x1xf32>
    %50 = vector.shape_cast %40 : vector<1024x12xf32> to vector<1x1024x12xf32>
    %cst_30 = arith.constant dense<0.000000e+00> : vector<1xf32>
    %51 = vector.multi_reduction <add>, %50, %cst_30 [1, 2] : vector<1x1024x12xf32> to vector<1xf32>
    %52 = vector.shape_cast %51 : vector<1xf32> to vector<1x1x1xf32>
    %53 = vector.extract %52[0, 0, 0] : f32 from vector<1x1x1xf32>
    %54 = vector.broadcast %53 : f32 to vector<1x1xf32>
    %55 = arith.addf %49, %54 : vector<1x1xf32>
    %c0_31 = arith.constant 0 : index
    %c0_32 = arith.constant 0 : index
    %56 = vector.load %arg9[%c0_31, %c0_32] : memref<1x1xf32, #tpu.memory_space<vmem>>, vector<1x1xf32>
    tpu.vector_store %arg9[%c0_31, %c0_32], %55 {strides = array<i32>} : memref<1x1xf32, #tpu.memory_space<vmem>>, vector<1x1xf32>,
    return
  }
  func.func @transform_0(%arg0: i32) -> (i32, i32) {
    %c0_i32 = arith.constant 0 : i32
    %c0_i32_0 = arith.constant 0 : i32
    return %arg0, %c0_i32 : i32, i32
  }
  func.func @transform_1(%arg0: i32) -> (i32, i32) {
    %c0_i32 = arith.constant 0 : i32
    %c0_i32_0 = arith.constant 0 : i32
    %c0_i32_1 = arith.constant 0 : i32
    return %c0_i32, %c0_i32_0 : i32, i32
  }
  func.func @transform_2(%arg0: i32) -> (i32, i32) {
    %c0_i32 = arith.constant 0 : i32
    %c0_i32_0 = arith.constant 0 : i32
    %c0_i32_1 = arith.constant 0 : i32
    return %c0_i32, %c0_i32_0 : i32, i32
  }
  func.func @transform_3(%arg0: i32) -> (i32, i32) {
    %c0_i32 = arith.constant 0 : i32
    %c0_i32_0 = arith.constant 0 : i32
    %c0_i32_1 = arith.constant 0 : i32
    return %c0_i32, %c0_i32_0 : i32, i32
  }
  func.func @transform_4(%arg0: i32) -> (i32, i32) {
    %c0_i32 = arith.constant 0 : i32
    %c0_i32_0 = arith.constant 0 : i32
    %c0_i32_1 = arith.constant 0 : i32
    return %c0_i32, %c0_i32_0 : i32, i32
  }
  func.func @transform_5(%arg0: i32) -> (i32, i32) {
    %c0_i32 = arith.constant 0 : i32
    %c0_i32_0 = arith.constant 0 : i32
    %c0_i32_1 = arith.constant 0 : i32
    return %c0_i32, %c0_i32_0 : i32, i32
  }
  func.func @transform_6(%arg0: i32) -> (i32, i32) {
    %c0_i32 = arith.constant 0 : i32
    %c0_i32_0 = arith.constant 0 : i32
    %c0_i32_1 = arith.constant 0 : i32
    return %c0_i32, %c0_i32_0 : i32, i32
  }
  func.func @transform_7(%arg0: i32) -> (i32, i32) {
    %c0_i32 = arith.constant 0 : i32
    %c0_i32_0 = arith.constant 0 : i32
    %c0_i32_1 = arith.constant 0 : i32
    return %c0_i32, %c0_i32_0 : i32, i32
  }
  func.func @transform_8(%arg0: i32) -> (i32, i32) {
    %c0_i32 = arith.constant 0 : i32
    %c0_i32_0 = arith.constant 0 : i32
    %c0_i32_1 = arith.constant 0 : i32
    return %c0_i32, %c0_i32_0 : i32, i32
  }
}

</mosaic_0001>

<llo_original>
// kernel: faster_rcnn_kd_forward.3
$region0: #{faster_rcnn_kd_forward.3}
  #allocation0 [shape = 'u32[]', space=smem, size = 0x4, offset = 0x4, fixed_abs, tag = 'smem constant byte address 0x4 - core index']
  #allocation1 [shape = 'u32[144,128]{1,0:T(1,128)}', space=vmem, size = 0x12000, scoped, tag = 'internal scratch']
  %s0 = inlined_call_operand.vmem [shape: bf16[2048,128], index: 0, kind: input, shape index: {}]
  %s1 = inlined_call_operand.vmem [shape: bf16[128,32], index: 1, kind: input, shape index: {}]
  %s2 = inlined_call_operand.vmem [shape: f32[1,32], index: 2, kind: input, shape index: {}]
  %s3 = inlined_call_operand.vmem [shape: bf16[2048,32], index: 3, kind: output, shape index: {}]
  %s4 = sld [smem:[#allocation0]]
  $region45: #{faster_rcnn_kd_forward.3} parent=0
    _
  %s6 = ssub.s32 1, %s4
  %s7 = scalar_select 0, %s6, %s4
  loop: start=0, step=1, limit=4
  $region2: #{faster_rcnn_kd_forward.3} parent=0 // loop_pre_header
    _
  $region3: #{faster_rcnn_kd_forward.3} parent=0 // loop_header
    %s9 = sphi 0, %s13
    %p10 = scmp.ge.s32.totalorder %s9, 4
    %s19 = sphi 0, %s21
    %s22 = sphi 0, %s19
    %s23 = sphi 0, %s22
    %s39 = sphi 0, %s23
    %s43 = sphi 0, %s43
    %s45 = sphi 0, %s43
    %s46 = sphi 0, %s45
    %s60 = sphi 0, %s46
    %s64 = sphi 0, %s64
    %s66 = sphi 0, %s64
    %s67 = sphi 0, %s66
    %s81 = sphi 0, %s67
    %s87 = sphi 0, %s89
    %s90 = sphi 0, %s87
    %s91 = sphi 0, %s90
    %s107 = sphi 0, %s91
  $region4: #{faster_rcnn_kd_forward.3} parent=0 // loop_header_branch
    %12 = sbr.rel (%p10) target = $region8
  $region5: #{faster_rcnn_kd_forward.3} parent=0 // loop_body
    %s14 = ssub.s32 %s9, 1
    %s15 = ssub.s32 %s9, 2
    %s16 = sadd.s32 %s9, 1
    %s17 = ssub.s32 %s9, %s16
    %p18 = scmp.eq.s32.totalorder %s17, 0
    %s20 = sadd.s32 %s19, 1
    %s21 = scalar_select %p18, %s19, %s20
    %p24 = pneg %p18
    %p25 = scmp.eq.s32.totalorder %s9, 1
    %p26 = por %p24, %p25
    %p27 = scmp.ne.s32.totalorder %s19, %s22
    %p28 = scmp.eq.s32.totalorder %s9, 0
    %p29 = por %p27, %p28
    %p30 = scmp.ne.s32.totalorder %s19, %s22
    %p31 = scmp.eq.s32.totalorder %s14, 1
    %p32 = por %p30, %p31
    %p33 = scmp.ne.s32.totalorder %s22, %s23
    %p34 = scmp.eq.s32.totalorder %s14, 0
    %p35 = por %p33, %p34
    %p36 = scmp.ne.s32.totalorder %s22, %s23
    %p37 = scmp.eq.s32.totalorder %s15, 1
    %p38 = por %p36, %p37
    %p40 = scmp.ne.s32.totalorder %s23, %s39
    %p41 = scmp.eq.s32.totalorder %s15, 0
    %p42 = por %p40, %p41
    %s44 = sadd.s32 %s43, 1
    %p47 = scmp.eq.s32.totalorder %s9, 1
    %p48 = scmp.ne.s32.totalorder %s43, %s45
    %p49 = scmp.eq.s32.totalorder %s9, 0
    %p50 = por %p48, %p49
    %p51 = scmp.ne.s32.totalorder %s43, %s45
    %p52 = scmp.eq.s32.totalorder %s14, 1
    %p53 = por %p51, %p52
    %p54 = scmp.ne.s32.totalorder %s45, %s46
    %p55 = scmp.eq.s32.totalorder %s14, 0
    %p56 = por %p54, %p55
    %p57 = scmp.ne.s32.totalorder %s45, %s46
    %p58 = scmp.eq.s32.totalorder %s15, 1
    %p59 = por %p57, %p58
    %p61 = scmp.ne.s32.totalorder %s46, %s60
    %p62 = scmp.eq.s32.totalorder %s15, 0
    %p63 = por %p61, %p62
    %s65 = sadd.s32 %s64, 1
    %p68 = scmp.eq.s32.totalorder %s9, 1
    %p69 = scmp.ne.s32.totalorder %s64, %s66
    %p70 = scmp.eq.s32.totalorder %s9, 0
    %p71 = por %p69, %p70
    %p72 = scmp.ne.s32.totalorder %s64, %s66
    %p73 = scmp.eq.s32.totalorder %s14, 1
    %p74 = por %p72, %p73
    %p75 = scmp.ne.s32.totalorder %s66, %s67
    %p76 = scmp.eq.s32.totalorder %s14, 0
    %p77 = por %p75, %p76
    %p78 = scmp.ne.s32.totalorder %s66, %s67
    %p79 = scmp.eq.s32.totalorder %s15, 1
    %p80 = por %p78, %p79
    %p82 = scmp.ne.s32.totalorder %s67, %s81
    %p83 = scmp.eq.s32.totalorder %s15, 0
    %p84 = por %p82, %p83
    %s85 = ssub.s32 %s9, %s16
    %p86 = scmp.eq.s32.totalorder %s85, 0
    %s88 = sadd.s32 %s87, 1
    %s89 = scalar_select %p86, %s87, %s88
    %p92 = pneg %p86
    %p93 = scmp.eq.s32.totalorder %s9, 1
    %p94 = por %p92, %p93
    %p95 = scmp.ne.s32.totalorder %s87, %s90
    %p96 = scmp.eq.s32.totalorder %s9, 0
    %p97 = por %p95, %p96
    %p98 = scmp.ne.s32.totalorder %s87, %s90
    %p99 = scmp.eq.s32.totalorder %s14, 1
    %p100 = por %p98, %p99
    %p101 = scmp.ne.s32.totalorder %s90, %s91
    %p102 = scmp.eq.s32.totalorder %s14, 0
    %p103 = por %p101, %p102
    %p104 = scmp.ne.s32.totalorder %s90, %s91
    %p105 = scmp.eq.s32.totalorder %s15, 1
    %p106 = por %p104, %p105
    %p108 = scmp.ne.s32.totalorder %s91, %s107
    %p109 = scmp.eq.s32.totalorder %s15, 0
    %p110 = por %p108, %p109
    %p111 = scmp.le.s32.totalorder 1, %s9
    %p112 = scmp.lt.s32.totalorder %s9, 3
    %p113 = pnand %p111, %p112
    %p114 = pneg %p113
    // Predicated region
    $region9: #{faster_rcnn_kd_forward.3} parent=5 // pred_check
      _
    $region10: #{faster_rcnn_kd_forward.3} parent=5 // pred_check_branch
      %116 = sbr.rel (%p113) target = $region12
    $region11: #{faster_rcnn_kd_forward.3} parent=5 // pred_region
      %s117 = ssub.s32 %s9, 1
      // Predicated region
      $region13: #{faster_rcnn_kd_forward.3} parent=11 // pred_check
        %p118 = pneg %p56
      $region14: #{faster_rcnn_kd_forward.3} parent=11 // pred_check_branch
        %120 = sbr.rel (%p118) target = $region16
      $region15: #{faster_rcnn_kd_forward.3} parent=11 // pred_region
        _
      $region16: #{faster_rcnn_kd_forward.3} parent=11 // pred_fallthru
        _
      // Predicated region
      $region17: #{faster_rcnn_kd_forward.3} parent=11 // pred_check
        %p121 = pneg %p77
      $region18: #{faster_rcnn_kd_forward.3} parent=11 // pred_check_branch
        %123 = sbr.rel (%p121) target = $region20
      $region19: #{faster_rcnn_kd_forward.3} parent=11 // pred_region
        _
      $region20: #{faster_rcnn_kd_forward.3} parent=11 // pred_fallthru
        _
    $region12: #{faster_rcnn_kd_forward.3} parent=5 // pred_fallthru
      _
    %p124 = scmp.lt.s32.totalorder %s9, 2
    // Predicated region
    $region21: #{faster_rcnn_kd_forward.3} parent=5 // pred_check
      %p125 = pneg %p124
    $region22: #{faster_rcnn_kd_forward.3} parent=5 // pred_check_branch
      %127 = sbr.rel (%p125) target = $region24
    $region23: #{faster_rcnn_kd_forward.3} parent=5 // pred_region
      // Predicated region
      $region25: #{faster_rcnn_kd_forward.3} parent=23 // pred_check
        %p128 = pneg %p29
      $region26: #{faster_rcnn_kd_forward.3} parent=23 // pred_check_branch
        %130 = sbr.rel (%p128) target = $region28
      $region27: #{faster_rcnn_kd_forward.3} parent=23 // pred_region
        %s131 = smul.u32 128, %s9
        %p132 = scmp.lt.s32.totalorder %s131, 255
        %s133 = scalar_select %p132, %s131, 255
        %s134 = smul.addr %s133, 4
        %s135 = scalar_lea.vmem %s0, %s134
        %s136 = smul.u32 128, %s9
      $region28: #{faster_rcnn_kd_forward.3} parent=23 // pred_fallthru
        _
    $region24: #{faster_rcnn_kd_forward.3} parent=5 // pred_fallthru
      _
    %p137 = scmp.le.s32.totalorder 1, %s9
    %p138 = scmp.lt.s32.totalorder %s9, 3
    %p139 = pnand %p137, %p138
    %p140 = pneg %p139
    // Predicated region
    $region29: #{faster_rcnn_kd_forward.3} parent=5 // pred_check
      _
    $region30: #{faster_rcnn_kd_forward.3} parent=5 // pred_check_branch
      %142 = sbr.rel (%p139) target = $region32
    $region31: #{faster_rcnn_kd_forward.3} parent=5 // pred_region
      %s143 = ssub.s32 %s9, 1
      %s144 = smul.u32 128, %s14
      %p145 = scmp.lt.s32.totalorder %s144, 255
      %s146 = scalar_select %p145, %s144, 255
      %s147 = smul.addr %s146, 4
      %s148 = scalar_lea.vmem %s0, %s147
      %p149 = pneg %p35
      %p150 = pneg %p32
      %p151 = pneg %p56
      %p152 = pneg %p53
      %p153 = pneg %p77
      %p154 = pneg %p74
      %p155 = pneg %p103
      %p156 = pneg %p100
      %s157 = smul.u32 128, %s14
      %p158 = scmp.lt.s32.totalorder %s157, 255
      %s159 = scalar_select %p158, %s157, 255
      %s160 = smul.addr %s159, 4
      %s161 = scalar_lea.vmem %s3, %s160
      %s162 = smul.u32 128, %s14
      %p163 = scmp.lt.s32.totalorder %s162, 255
      %s164 = scalar_select %p163, %s162, 255
      %s165 = smul.addr %s164, 4
      %s166 = scalar_lea.vmem %s0, %s165
      %s167 = smul.u32 128, %s14
      %s168 = smul.u32 128, %s14
      %p169 = scmp.lt.s32.totalorder %s168, 255
      %s170 = scalar_select %p169, %s168, 255
      %s171 = smul.addr %s170, 4
      %s172 = scalar_lea.vmem %s3, %s171
      %s173 = smul.u32 128, %s14
      %v175 = vld [vmem:[%s166] sm:$0xf]
      %v176 = vld [vmem:[%s166 + $0x4] sm:$0xf]
      %v177 = vld [vmem:[%s166 + $0x8] sm:$0xf]
      %v178 = vld [vmem:[%s166 + $0xc] sm:$0xf]
      %v179 = vld [vmem:[%s166 + $0x10] sm:$0xf]
      %v180 = vld [vmem:[%s166 + $0x14] sm:$0xf]
      %v181 = vld [vmem:[%s166 + $0x18] sm:$0xf]
      %v182 = vld [vmem:[%s166 + $0x1c] sm:$0xf]
      %v183 = vld [vmem:[%s166 + $0x20] sm:$0xf]
      %v184 = vld [vmem:[%s166 + $0x24] sm:$0xf]
      %v185 = vld [vmem:[%s166 + $0x28] sm:$0xf]
      %v186 = vld [vmem:[%s166 + $0x2c] sm:$0xf]
      %v187 = vld [vmem:[%s166 + $0x30] sm:$0xf]
      %v188 = vld [vmem:[%s166 + $0x34] sm:$0xf]
      %v189 = vld [vmem:[%s166 + $0x38] sm:$0xf]
      %v190 = vld [vmem:[%s166 + $0x3c] sm:$0xf]
      %v191 = vld [vmem:[%s166 + $0x40] sm:$0xf]
      %v192 = vld [vmem:[%s166 + $0x44] sm:$0xf]
      %v193 = vld [vmem:[%s166 + $0x48] sm:$0xf]
      %v194 = vld [vmem:[%s166 + $0x4c] sm:$0xf]
      %v195 = vld [vmem:[%s166 + $0x50] sm:$0xf]
      %v196 = vld [vmem:[%s166 + $0x54] sm:$0xf]
      %v197 = vld [vmem:[%s166 + $0x58] sm:$0xf]
      %v198 = vld [vmem:[%s166 + $0x5c] sm:$0xf]
      %v199 = vld [vmem:[%s166 + $0x60] sm:$0xf]
      %v200 = vld [vmem:[%s166 + $0x64] sm:$0xf]
      %v201 = vld [vmem:[%s166 + $0x68] sm:$0xf]
      %v202 = vld [vmem:[%s166 + $0x6c] sm:$0xf]
      %v203 = vld [vmem:[%s166 + $0x70] sm:$0xf]
      %v204 = vld [vmem:[%s166 + $0x74] sm:$0xf]
      %v205 = vld [vmem:[%s166 + $0x78] sm:$0xf]
      %v206 = vld [vmem:[%s166 + $0x7c] sm:$0xf]
      %v207 = vld [vmem:[%s166 + $0x80] sm:$0xf]
      %v208 = vld [vmem:[%s166 + $0x84] sm:$0xf]
      %v209 = vld [vmem:[%s166 + $0x88] sm:$0xf]
      %v210 = vld [vmem:[%s166 + $0x8c] sm:$0xf]
      %v211 = vld [vmem:[%s166 + $0x90] sm:$0xf]
      %v212 = vld [vmem:[%s166 + $0x94] sm:$0xf]
      %v213 = vld [vmem:[%s166 + $0x98] sm:$0xf]
      %v214 = vld [vmem:[%s166 + $0x9c] sm:$0xf]
      %v215 = vld [vmem:[%s166 + $0xa0] sm:$0xf]
      %v216 = vld [vmem:[%s166 + $0xa4] sm:$0xf]
      %v217 = vld [vmem:[%s166 + $0xa8] sm:$0xf]
      %v218 = vld [vmem:[%s166 + $0xac] sm:$0xf]
      %v219 = vld [vmem:[%s166 + $0xb0] sm:$0xf]
      %v220 = vld [vmem:[%s166 + $0xb4] sm:$0xf]
      %v221 = vld [vmem:[%s166 + $0xb8] sm:$0xf]
      %v222 = vld [vmem:[%s166 + $0xbc] sm:$0xf]
      %v223 = vld [vmem:[%s166 + $0xc0] sm:$0xf]
      %v224 = vld [vmem:[%s166 + $0xc4] sm:$0xf]
      %v225 = vld [vmem:[%s166 + $0xc8] sm:$0xf]
      %v226 = vld [vmem:[%s166 + $0xcc] sm:$0xf]
      %v227 = vld [vmem:[%s166 + $0xd0] sm:$0xf]
      %v228 = vld [vmem:[%s166 + $0xd4] sm:$0xf]
      %v229 = vld [vmem:[%s166 + $0xd8] sm:$0xf]
      %v230 = vld [vmem:[%s166 + $0xdc] sm:$0xf]
      %v231 = vld [vmem:[%s166 + $0xe0] sm:$0xf]
      %v232 = vld [vmem:[%s166 + $0xe4] sm:$0xf]
      %v233 = vld [vmem:[%s166 + $0xe8] sm:$0xf]
      %v234 = vld [vmem:[%s166 + $0xec] sm:$0xf]
      %v235 = vld [vmem:[%s166 + $0xf0] sm:$0xf]
      %v236 = vld [vmem:[%s166 + $0xf4] sm:$0xf]
      %v237 = vld [vmem:[%s166 + $0xf8] sm:$0xf]
      %v238 = vld [vmem:[%s166 + $0xfc] sm:$0xf]
      %v239 = vld [vmem:[%s166 + $0x100] sm:$0xf]
      %v240 = vld [vmem:[%s166 + $0x104] sm:$0xf]
      %v241 = vld [vmem:[%s166 + $0x108] sm:$0xf]
      %v242 = vld [vmem:[%s166 + $0x10c] sm:$0xf]
      %v243 = vld [vmem:[%s166 + $0x110] sm:$0xf]
      %v244 = vld [vmem:[%s166 + $0x114] sm:$0xf]
      %v245 = vld [vmem:[%s166 + $0x118] sm:$0xf]
      %v246 = vld [vmem:[%s166 + $0x11c] sm:$0xf]
      %v247 = vld [vmem:[%s166 + $0x120] sm:$0xf]
      %v248 = vld [vmem:[%s166 + $0x124] sm:$0xf]
      %v249 = vld [vmem:[%s166 + $0x128] sm:$0xf]
      %v250 = vld [vmem:[%s166 + $0x12c] sm:$0xf]
      %v251 = vld [vmem:[%s166 + $0x130] sm:$0xf]
      %v252 = vld [vmem:[%s166 + $0x134] sm:$0xf]
      %v253 = vld [vmem:[%s166 + $0x138] sm:$0xf]
      %v254 = vld [vmem:[%s166 + $0x13c] sm:$0xf]
      %v255 = vld [vmem:[%s166 + $0x140] sm:$0xf]
      %v256 = vld [vmem:[%s166 + $0x144] sm:$0xf]
      %v257 = vld [vmem:[%s166 + $0x148] sm:$0xf]
      %v258 = vld [vmem:[%s166 + $0x14c] sm:$0xf]
      %v259 = vld [vmem:[%s166 + $0x150] sm:$0xf]
      %v260 = vld [vmem:[%s166 + $0x154] sm:$0xf]
      %v261 = vld [vmem:[%s166 + $0x158] sm:$0xf]
      %v262 = vld [vmem:[%s166 + $0x15c] sm:$0xf]
      %v263 = vld [vmem:[%s166 + $0x160] sm:$0xf]
      %v264 = vld [vmem:[%s166 + $0x164] sm:$0xf]
      %v265 = vld [vmem:[%s166 + $0x168] sm:$0xf]
      %v266 = vld [vmem:[%s166 + $0x16c] sm:$0xf]
      %v267 = vld [vmem:[%s166 + $0x170] sm:$0xf]
      %v268 = vld [vmem:[%s166 + $0x174] sm:$0xf]
      %v269 = vld [vmem:[%s166 + $0x178] sm:$0xf]
      %v270 = vld [vmem:[%s166 + $0x17c] sm:$0xf]
      %v271 = vld [vmem:[%s166 + $0x180] sm:$0xf]
      %v272 = vld [vmem:[%s166 + $0x184] sm:$0xf]
      %v273 = vld [vmem:[%s166 + $0x188] sm:$0xf]
      %v274 = vld [vmem:[%s166 + $0x18c] sm:$0xf]
      %v275 = vld [vmem:[%s166 + $0x190] sm:$0xf]
      %v276 = vld [vmem:[%s166 + $0x194] sm:$0xf]
      %v277 = vld [vmem:[%s166 + $0x198] sm:$0xf]
      %v278 = vld [vmem:[%s166 + $0x19c] sm:$0xf]
      %v279 = vld [vmem:[%s166 + $0x1a0] sm:$0xf]
      %v280 = vld [vmem:[%s166 + $0x1a4] sm:$0xf]
      %v281 = vld [vmem:[%s166 + $0x1a8] sm:$0xf]
      %v282 = vld [vmem:[%s166 + $0x1ac] sm:$0xf]
      %v283 = vld [vmem:[%s166 + $0x1b0] sm:$0xf]
      %v284 = vld [vmem:[%s166 + $0x1b4] sm:$0xf]
      %v285 = vld [vmem:[%s166 + $0x1b8] sm:$0xf]
      %v286 = vld [vmem:[%s166 + $0x1bc] sm:$0xf]
      %v287 = vld [vmem:[%s166 + $0x1c0] sm:$0xf]
      %v288 = vld [vmem:[%s166 + $0x1c4] sm:$0xf]
      %v289 = vld [vmem:[%s166 + $0x1c8] sm:$0xf]
      %v290 = vld [vmem:[%s166 + $0x1cc] sm:$0xf]
      %v291 = vld [vmem:[%s166 + $0x1d0] sm:$0xf]
      %v292 = vld [vmem:[%s166 + $0x1d4] sm:$0xf]
      %v293 = vld [vmem:[%s166 + $0x1d8] sm:$0xf]
      %v294 = vld [vmem:[%s166 + $0x1dc] sm:$0xf]
      %v295 = vld [vmem:[%s166 + $0x1e0] sm:$0xf]
      %v296 = vld [vmem:[%s166 + $0x1e4] sm:$0xf]
      %v297 = vld [vmem:[%s166 + $0x1e8] sm:$0xf]
      %v298 = vld [vmem:[%s166 + $0x1ec] sm:$0xf]
      %v299 = vld [vmem:[%s166 + $0x1f0] sm:$0xf]
      %v300 = vld [vmem:[%s166 + $0x1f4] sm:$0xf]
      %v301 = vld [vmem:[%s166 + $0x1f8] sm:$0xf]
      %v302 = vld [vmem:[%s166 + $0x1fc] sm:$0xf]
      %v303 = vld [vmem:[%s1] sm:$0xf]
      %v304 = vld [vmem:[%s1 + $0x4] sm:$0xf]
      %v305 = vld [vmem:[%s1 + $0x8] sm:$0xf]
      %v306 = vld [vmem:[%s1 + $0xc] sm:$0xf]
      %v307 = vld [vmem:[%s1 + $0x10] sm:$0xf]
      %v308 = vld [vmem:[%s1 + $0x14] sm:$0xf]
      %v309 = vld [vmem:[%s1 + $0x18] sm:$0xf]
      %v310 = vld [vmem:[%s1 + $0x1c] sm:$0xf]
      %v311 = vld [vmem:[%s1 + $0x20] sm:$0xf]
      %v312 = vld [vmem:[%s1 + $0x24] sm:$0xf]
      %v313 = vld [vmem:[%s1 + $0x28] sm:$0xf]
      %v314 = vld [vmem:[%s1 + $0x2c] sm:$0xf]
      %v315 = vld [vmem:[%s1 + $0x30] sm:$0xf]
      %v316 = vld [vmem:[%s1 + $0x34] sm:$0xf]
      %v317 = vld [vmem:[%s1 + $0x38] sm:$0xf]
      %v318 = vld [vmem:[%s1 + $0x3c] sm:$0xf]
      %v319 = vld [vmem:[%s2] sm:$0x1]
      %v321 = vlaneseq
      %v322 = vshrl.u32 %v321, 7
      %v323 = vsub.s32 0, %v322
      %v324 = vrot.slane %v319, %v323
      %v454 = vunpack.c.l.b16 %v175
      %v455 = vunpack.c.l.b16 %v176
      %v456 = vunpack.c.l.b16 %v177
      %v457 = vunpack.c.l.b16 %v178
      %v458 = vunpack.c.l.b16 %v179
      %v459 = vunpack.c.l.b16 %v180
      %v460 = vunpack.c.l.b16 %v181
      %v461 = vunpack.c.l.b16 %v182
      %v462 = vunpack.c.l.b16 %v183
      %v463 = vunpack.c.l.b16 %v184
      %v464 = vunpack.c.l.b16 %v185
      %v465 = vunpack.c.l.b16 %v186
      %v466 = vunpack.c.l.b16 %v187
      %v467 = vunpack.c.l.b16 %v188
      %v468 = vunpack.c.l.b16 %v189
      %v469 = vunpack.c.l.b16 %v190
      %v470 = vunpack.c.l.b16 %v191
      %v471 = vunpack.c.l.b16 %v192
      %v472 = vunpack.c.l.b16 %v193
      %v473 = vunpack.c.l.b16 %v194
      %v474 = vunpack.c.l.b16 %v195
      %v475 = vunpack.c.l.b16 %v196
      %v476 = vunpack.c.l.b16 %v197
      %v477 = vunpack.c.l.b16 %v198
      %v478 = vunpack.c.l.b16 %v199
      %v479 = vunpack.c.l.b16 %v200
      %v480 = vunpack.c.l.b16 %v201
      %v481 = vunpack.c.l.b16 %v202
      %v482 = vunpack.c.l.b16 %v203
      %v483 = vunpack.c.l.b16 %v204
      %v484 = vunpack.c.l.b16 %v205
      %v485 = vunpack.c.l.b16 %v206
      %v486 = vunpack.c.l.b16 %v207
      %v487 = vunpack.c.l.b16 %v208
      %v488 = vunpack.c.l.b16 %v209
      %v489 = vunpack.c.l.b16 %v210
      %v490 = vunpack.c.l.b16 %v211
      %v491 = vunpack.c.l.b16 %v212
      %v492 = vunpack.c.l.b16 %v213
      %v493 = vunpack.c.l.b16 %v214
      %v494 = vunpack.c.l.b16 %v215
      %v495 = vunpack.c.l.b16 %v216
      %v496 = vunpack.c.l.b16 %v217
      %v497 = vunpack.c.l.b16 %v218
      %v498 = vunpack.c.l.b16 %v219
      %v499 = vunpack.c.l.b16 %v220
      %v500 = vunpack.c.l.b16 %v221
      %v501 = vunpack.c.l.b16 %v222
      %v502 = vunpack.c.l.b16 %v223
      %v503 = vunpack.c.l.b16 %v224
      %v504 = vunpack.c.l.b16 %v225
      %v505 = vunpack.c.l.b16 %v226
      %v506 = vunpack.c.l.b16 %v227
      %v507 = vunpack.c.l.b16 %v228
      %v508 = vunpack.c.l.b16 %v229
      %v509 = vunpack.c.l.b16 %v230
      %v510 = vunpack.c.l.b16 %v231
      %v511 = vunpack.c.l.b16 %v232
      %v512 = vunpack.c.l.b16 %v233
      %v513 = vunpack.c.l.b16 %v234
      %v514 = vunpack.c.l.b16 %v235
      %v515 = vunpack.c.l.b16 %v236
      %v516 = vunpack.c.l.b16 %v237
      %v517 = vunpack.c.l.b16 %v238
      %v518 = vunpack.c.l.b16 %v239
      %v519 = vunpack.c.l.b16 %v240
      %v520 = vunpack.c.l.b16 %v241
      %v521 = vunpack.c.l.b16 %v242
      %v522 = vunpack.c.l.b16 %v243
      %v523 = vunpack.c.l.b16 %v244
      %v524 = vunpack.c.l.b16 %v245
      %v525 = vunpack.c.l.b16 %v246
      %v526 = vunpack.c.l.b16 %v247
      %v527 = vunpack.c.l.b16 %v248
      %v528 = vunpack.c.l.b16 %v249
      %v529 = vunpack.c.l.b16 %v250
      %v530 = vunpack.c.l.b16 %v251
      %v531 = vunpack.c.l.b16 %v252
      %v532 = vunpack.c.l.b16 %v253
      %v533 = vunpack.c.l.b16 %v254
      %v534 = vunpack.c.l.b16 %v255
      %v535 = vunpack.c.l.b16 %v256
      %v536 = vunpack.c.l.b16 %v257
      %v537 = vunpack.c.l.b16 %v258
      %v538 = vunpack.c.l.b16 %v259
      %v539 = vunpack.c.l.b16 %v260
      %v540 = vunpack.c.l.b16 %v261
      %v541 = vunpack.c.l.b16 %v262
      %v542 = vunpack.c.l.b16 %v263
      %v543 = vunpack.c.l.b16 %v264
      %v544 = vunpack.c.l.b16 %v265
      %v545 = vunpack.c.l.b16 %v266
      %v546 = vunpack.c.l.b16 %v267
      %v547 = vunpack.c.l.b16 %v268
      %v548 = vunpack.c.l.b16 %v269
      %v549 = vunpack.c.l.b16 %v270
      %v550 = vunpack.c.l.b16 %v271
      %v551 = vunpack.c.l.b16 %v272
      %v552 = vunpack.c.l.b16 %v273
      %v553 = vunpack.c.l.b16 %v274
      %v554 = vunpack.c.l.b16 %v275
      %v555 = vunpack.c.l.b16 %v276
      %v556 = vunpack.c.l.b16 %v277
      %v557 = vunpack.c.l.b16 %v278
      %v558 = vunpack.c.l.b16 %v279
      %v559 = vunpack.c.l.b16 %v280
      %v560 = vunpack.c.l.b16 %v281
      %v561 = vunpack.c.l.b16 %v282
      %v562 = vunpack.c.l.b16 %v283
      %v563 = vunpack.c.l.b16 %v284
      %v564 = vunpack.c.l.b16 %v285
      %v565 = vunpack.c.l.b16 %v286
      %v566 = vunpack.c.l.b16 %v287
      %v567 = vunpack.c.l.b16 %v288
      %v568 = vunpack.c.l.b16 %v289
      %v569 = vunpack.c.l.b16 %v290
      %v570 = vunpack.c.l.b16 %v291
      %v571 = vunpack.c.l.b16 %v292
      %v572 = vunpack.c.l.b16 %v293
      %v573 = vunpack.c.l.b16 %v294
      %v574 = vunpack.c.l.b16 %v295
      %v575 = vunpack.c.l.b16 %v296
      %v576 = vunpack.c.l.b16 %v297
      %v577 = vunpack.c.l.b16 %v298
      %v578 = vunpack.c.l.b16 %v299
      %v579 = vunpack.c.l.b16 %v300
      %v580 = vunpack.c.l.b16 %v301
      %v581 = vunpack.c.l.b16 %v302
      %v582 = vpack.c.b16 %v455, %v454
      %v583 = vpack.c.b16 %v457, %v456
      %v584 = vpack.c.b16 %v459, %v458
      %v585 = vpack.c.b16 %v461, %v460
      %v586 = vpack.c.b16 %v463, %v462
      %v587 = vpack.c.b16 %v465, %v464
      %v588 = vpack.c.b16 %v467, %v466
      %v589 = vpack.c.b16 %v469, %v468
      %v590 = vpack.c.b16 %v471, %v470
      %v591 = vpack.c.b16 %v473, %v472
      %v592 = vpack.c.b16 %v475, %v474
      %v593 = vpack.c.b16 %v477, %v476
      %v594 = vpack.c.b16 %v479, %v478
      %v595 = vpack.c.b16 %v481, %v480
      %v596 = vpack.c.b16 %v483, %v482
      %v597 = vpack.c.b16 %v485, %v484
      %v598 = vpack.c.b16 %v487, %v486
      %v599 = vpack.c.b16 %v489, %v488
      %v600 = vpack.c.b16 %v491, %v490
      %v601 = vpack.c.b16 %v493, %v492
      %v602 = vpack.c.b16 %v495, %v494
      %v603 = vpack.c.b16 %v497, %v496
      %v604 = vpack.c.b16 %v499, %v498
      %v605 = vpack.c.b16 %v501, %v500
      %v606 = vpack.c.b16 %v503, %v502
      %v607 = vpack.c.b16 %v505, %v504
      %v608 = vpack.c.b16 %v507, %v506
      %v609 = vpack.c.b16 %v509, %v508
      %v610 = vpack.c.b16 %v511, %v510
      %v611 = vpack.c.b16 %v513, %v512
      %v612 = vpack.c.b16 %v515, %v514
      %v613 = vpack.c.b16 %v517, %v516
      %v614 = vpack.c.b16 %v519, %v518
      %v615 = vpack.c.b16 %v521, %v520
      %v616 = vpack.c.b16 %v523, %v522
      %v617 = vpack.c.b16 %v525, %v524
      %v618 = vpack.c.b16 %v527, %v526
      %v619 = vpack.c.b16 %v529, %v528
      %v620 = vpack.c.b16 %v531, %v530
      %v621 = vpack.c.b16 %v533, %v532
      %v622 = vpack.c.b16 %v535, %v534
      %v623 = vpack.c.b16 %v537, %v536
      %v624 = vpack.c.b16 %v539, %v538
      %v625 = vpack.c.b16 %v541, %v540
      %v626 = vpack.c.b16 %v543, %v542
      %v627 = vpack.c.b16 %v545, %v544
      %v628 = vpack.c.b16 %v547, %v546
      %v629 = vpack.c.b16 %v549, %v548
      %v630 = vpack.c.b16 %v551, %v550
      %v631 = vpack.c.b16 %v553, %v552
      %v632 = vpack.c.b16 %v555, %v554
      %v633 = vpack.c.b16 %v557, %v556
      %v634 = vpack.c.b16 %v559, %v558
      %v635 = vpack.c.b16 %v561, %v560
      %v636 = vpack.c.b16 %v563, %v562
      %v637 = vpack.c.b16 %v565, %v564
      %v638 = vpack.c.b16 %v567, %v566
      %v639 = vpack.c.b16 %v569, %v568
      %v640 = vpack.c.b16 %v571, %v570
      %v641 = vpack.c.b16 %v573, %v572
      %v642 = vpack.c.b16 %v575, %v574
      %v643 = vpack.c.b16 %v577, %v576
      %v644 = vpack.c.b16 %v579, %v578
      %v645 = vpack.c.b16 %v581, %v580
      %v726 = vunpack.c.l.b16 %v303
      %v727 = vunpack.c.l.b16 %v304
      %v728 = vunpack.c.l.b16 %v305
      %v729 = vunpack.c.l.b16 %v306
      %v730 = vunpack.c.l.b16 %v307
      %v731 = vunpack.c.l.b16 %v308
      %v732 = vunpack.c.l.b16 %v309
      %v733 = vunpack.c.l.b16 %v310
      %v734 = vunpack.c.l.b16 %v311
      %v735 = vunpack.c.l.b16 %v312
      %v736 = vunpack.c.l.b16 %v313
      %v737 = vunpack.c.l.b16 %v314
      %v738 = vunpack.c.l.b16 %v315
      %v739 = vunpack.c.l.b16 %v316
      %v740 = vunpack.c.l.b16 %v317
      %v741 = vunpack.c.l.b16 %v318
      %v742 = vpack.c.b16 %v727, %v726
      %v743 = vpack.c.b16 %v729, %v728
      %v744 = vpack.c.b16 %v731, %v730
      %v745 = vpack.c.b16 %v733, %v732
      %v746 = vpack.c.b16 %v735, %v734
      %v747 = vpack.c.b16 %v737, %v736
      %v748 = vpack.c.b16 %v739, %v738
      %v749 = vpack.c.b16 %v741, %v740
      %758 = vmatprep.subr.bf16.mxu0 0
      %759 = vmatpush1.bf16.msra.mxu0 %v742
      %760 = vmatprep.subr.bf16.mxu0 0
      %761 = vmatpush1.bf16.msra.mxu0 %v743
      %762 = vmatprep.subr.bf16.mxu0 0
      %763 = vmatpush1.bf16.msra.mxu0 %v744
      %764 = vmatprep.subr.bf16.mxu0 0
      %765 = vmatpush1.bf16.msra.mxu0 %v745
      %766 = vmatprep.subr.bf16.mxu0 0
      %767 = vmatpush1.bf16.msra.mxu0 %v746
      %768 = vmatprep.subr.bf16.mxu0 0
      %769 = vmatpush1.bf16.msra.mxu0 %v747
      %770 = vmatprep.subr.bf16.mxu0 0
      %771 = vmatpush1.bf16.msra.mxu0 %v748
      %772 = vmatprep.subr.bf16.mxu0 0
      %773 = vmatpush1.bf16.msra.mxu0 %v749
      %774 = vmatprep.subr.bf16.mxu0 0
      %775 = vmatpush1.bf16.msra.mxu0 0
      %776 = vmatprep.subr.bf16.mxu0 0
      %777 = vmatpush1.bf16.msra.mxu0 0
      %778 = vmatprep.subr.bf16.mxu0 0
      %779 = vmatpush1.bf16.msra.mxu0 0
      %780 = vmatprep.subr.bf16.mxu0 0
      %781 = vmatpush1.bf16.msra.mxu0 0
      %782 = vmatprep.subr.bf16.mxu0 0
      %783 = vmatpush1.bf16.msra.mxu0 0
      %784 = vmatprep.subr.bf16.mxu0 0
      %785 = vmatpush1.bf16.msra.mxu0 0
      %786 = vmatprep.subr.bf16.mxu0 0
      %787 = vmatpush1.bf16.msra.mxu0 0
      %788 = vmatprep.subr.bf16.mxu0 0
      %789 = vmatpush1.bf16.msra.mxu0 0
      %790 = vmatprep.mubr.bf16.mxu0 0
      %791 = vmatmul.mubr.bf16.gmra.mrb[0].mxu0 %v582
      %v792 = vpop.f32.mrb[0].mxu0
      %v793 = vadd.f32 %v324, %v792
      %v794 = vpop.f32.mrb[0].mxu0
      %v795 = vpop.f32.mrb[0].mxu0
      %v796 = vadd.f32 %v324, %v795
      %v797 = vpop.f32.mrb[0].mxu0
      %798 = vmatprep.mubr.bf16.mxu0 0
      %799 = vmatmul.mubr.bf16.gmra.mrb[0].mxu0 %v583
      %v800 = vpop.f32.mrb[0].mxu0
      %v801 = vadd.f32 %v324, %v800
      %v802 = vpop.f32.mrb[0].mxu0
      %v803 = vpop.f32.mrb[0].mxu0
      %v804 = vadd.f32 %v324, %v803
      %v805 = vpop.f32.mrb[0].mxu0
      %806 = vmatprep.mubr.bf16.mxu0 0
      %807 = vmatmul.mubr.bf16.gmra.mrb[0].mxu0 %v584
      %v808 = vpop.f32.mrb[0].mxu0
      %v809 = vadd.f32 %v324, %v808
      %v810 = vpop.f32.mrb[0].mxu0
      %v811 = vpop.f32.mrb[0].mxu0
      %v812 = vadd.f32 %v324, %v811
      %v813 = vpop.f32.mrb[0].mxu0
      %814 = vmatprep.mubr.bf16.mxu0 0
      %815 = vmatmul.mubr.bf16.gmra.mrb[0].mxu0 %v585
      %v816 = vpop.f32.mrb[0].mxu0
      %v817 = vadd.f32 %v324, %v816
      %v818 = vpop.f32.mrb[0].mxu0
      %v819 = vpop.f32.mrb[0].mxu0
      %v820 = vadd.f32 %v324, %v819
      %v821 = vpop.f32.mrb[0].mxu0
      %822 = vmatprep.mubr.bf16.mxu0 0
      %823 = vmatmul.mubr.bf16.gmra.mrb[0].mxu0 %v586
      %v824 = vpop.f32.mrb[0].mxu0
      %v825 = vadd.f32 %v324, %v824
      %v826 = vpop.f32.mrb[0].mxu0
      %v827 = vpop.f32.mrb[0].mxu0
      %v828 = vadd.f32 %v324, %v827
      %v829 = vpop.f32.mrb[0].mxu0
      %830 = vmatprep.mubr.bf16.mxu0 0
      %831 = vmatmul.mubr.bf16.gmra.mrb[0].mxu0 %v587
      %v832 = vpop.f32.mrb[0].mxu0
      %v833 = vadd.f32 %v324, %v832
      %v834 = vpop.f32.mrb[0].mxu0
      %v835 = vpop.f32.mrb[0].mxu0
      %v836 = vadd.f32 %v324, %v835
      %v837 = vpop.f32.mrb[0].mxu0
      %838 = vmatprep.mubr.bf16.mxu0 0
      %839 = vmatmul.mubr.bf16.gmra.mrb[0].mxu0 %v588
      %v840 = vpop.f32.mrb[0].mxu0
      %v841 = vadd.f32 %v324, %v840
      %v842 = vpop.f32.mrb[0].mxu0
      %v843 = vpop.f32.mrb[0].mxu0
      %v844 = vadd.f32 %v324, %v843
      %v845 = vpop.f32.mrb[0].mxu0
      %846 = vmatprep.mubr.bf16.mxu0 0
      %847 = vmatmul.mubr.bf16.gmra.mrb[0].mxu0 %v589
      %v848 = vpop.f32.mrb[0].mxu0
      %v849 = vadd.f32 %v324, %v848
      %v850 = vpop.f32.mrb[0].mxu0
      %v851 = vpop.f32.mrb[0].mxu0
      %v852 = vadd.f32 %v324, %v851
      %v853 = vpop.f32.mrb[0].mxu0
      %854 = vmatprep.mubr.bf16.mxu0 0
      %855 = vmatmul.mubr.bf16.gmra.mrb[0].mxu0 %v590
      %v856 = vpop.f32.mrb[0].mxu0
      %v857 = vadd.f32 %v324, %v856
      %v858 = vpop.f32.mrb[0].mxu0
      %v859 = vpop.f32.mrb[0].mxu0
      %v860 = vadd.f32 %v324, %v859
      %v861 = vpop.f32.mrb[0].mxu0
      %862 = vmatprep.mubr.bf16.mxu0 0
      %863 = vmatmul.mubr.bf16.gmra.mrb[0].mxu0 %v591
      %v864 = vpop.f32.mrb[0].mxu0
      %v865 = vadd.f32 %v324, %v864
      %v866 = vpop.f32.mrb[0].mxu0
      %v867 = vpop.f32.mrb[0].mxu0
      %v868 = vadd.f32 %v324, %v867
      %v869 = vpop.f32.mrb[0].mxu0
      %870 = vmatprep.mubr.bf16.mxu0 0
      %871 = vmatmul.mubr.bf16.gmra.mrb[0].mxu0 %v592
      %v872 = vpop.f32.mrb[0].mxu0
      %v873 = vadd.f32 %v324, %v872
      %v874 = vpop.f32.mrb[0].mxu0
      %v875 = vpop.f32.mrb[0].mxu0
      %v876 = vadd.f32 %v324, %v875
      %v877 = vpop.f32.mrb[0].mxu0
      %878 = vmatprep.mubr.bf16.mxu0 0
      %879 = vmatmul.mubr.bf16.gmra.mrb[0].mxu0 %v593
      %v880 = vpop.f32.mrb[0].mxu0
      %v881 = vadd.f32 %v324, %v880
      %v882 = vpop.f32.mrb[0].mxu0
      %v883 = vpop.f32.mrb[0].mxu0
      %v884 = vadd.f32 %v324, %v883
      %v885 = vpop.f32.mrb[0].mxu0
      %886 = vmatprep.mubr.bf16.mxu0 0
      %887 = vmatmul.mubr.bf16.gmra.mrb[0].mxu0 %v594
      %v888 = vpop.f32.mrb[0].mxu0
      %v889 = vadd.f32 %v324, %v888
      %v890 = vpop.f32.mrb[0].mxu0
      %v891 = vpop.f32.mrb[0].mxu0
      %v892 = vadd.f32 %v324, %v891
      %v893 = vpop.f32.mrb[0].mxu0
      %894 = vmatprep.mubr.bf16.mxu0 0
      %895 = vmatmul.mubr.bf16.gmra.mrb[0].mxu0 %v595
      %v896 = vpop.f32.mrb[0].mxu0
      %v897 = vadd.f32 %v324, %v896
      %v898 = vpop.f32.mrb[0].mxu0
      %v899 = vpop.f32.mrb[0].mxu0
      %v900 = vadd.f32 %v324, %v899
      %v901 = vpop.f32.mrb[0].mxu0
      %902 = vmatprep.mubr.bf16.mxu0 0
      %903 = vmatmul.mubr.bf16.gmra.mrb[0].mxu0 %v596
      %v904 = vpop.f32.mrb[0].mxu0
      %v905 = vadd.f32 %v324, %v904
      %v906 = vpop.f32.mrb[0].mxu0
      %v907 = vpop.f32.mrb[0].mxu0
      %v908 = vadd.f32 %v324, %v907
      %v909 = vpop.f32.mrb[0].mxu0
      %910 = vmatprep.mubr.bf16.mxu0 0
      %911 = vmatmul.mubr.bf16.gmra.mrb[0].mxu0 %v597
      %v912 = vpop.f32.mrb[0].mxu0
      %v913 = vadd.f32 %v324, %v912
      %v914 = vpop.f32.mrb[0].mxu0
      %v915 = vpop.f32.mrb[0].mxu0
      %v916 = vadd.f32 %v324, %v915
      %v917 = vpop.f32.mrb[0].mxu0
      %918 = vmatprep.mubr.bf16.mxu0 0
      %919 = vmatmul.mubr.bf16.gmra.mrb[0].mxu0 %v598
      %v920 = vpop.f32.mrb[0].mxu0
      %v921 = vadd.f32 %v324, %v920
      %v922 = vpop.f32.mrb[0].mxu0
      %v923 = vpop.f32.mrb[0].mxu0
      %v924 = vadd.f32 %v324, %v923
      %v925 = vpop.f32.mrb[0].mxu0
      %926 = vmatprep.mubr.bf16.mxu0 0
      %927 = vmatmul.mubr.bf16.gmra.mrb[0].mxu0 %v599
      %v928 = vpop.f32.mrb[0].mxu0
      %v929 = vadd.f32 %v324, %v928
      %v930 = vpop.f32.mrb[0].mxu0
      %v931 = vpop.f32.mrb[0].mxu0
      %v932 = vadd.f32 %v324, %v931
      %v933 = vpop.f32.mrb[0].mxu0
      %934 = vmatprep.mubr.bf16.mxu0 0
      %935 = vmatmul.mubr.bf16.gmra.mrb[0].mxu0 %v600
      %v936 = vpop.f32.mrb[0].mxu0
      %v937 = vadd.f32 %v324, %v936
      %v938 = vpop.f32.mrb[0].mxu0
      %v939 = vpop.f32.mrb[0].mxu0
      %v940 = vadd.f32 %v324, %v939
      %v941 = vpop.f32.mrb[0].mxu0
      %942 = vmatprep.mubr.bf16.mxu0 0
      %943 = vmatmul.mubr.bf16.gmra.mrb[0].mxu0 %v601
      %v944 = vpop.f32.mrb[0].mxu0
      %v945 = vadd.f32 %v324, %v944
      %v946 = vpop.f32.mrb[0].mxu0
      %v947 = vpop.f32.mrb[0].mxu0
      %v948 = vadd.f32 %v324, %v947
      %v949 = vpop.f32.mrb[0].mxu0
      %950 = vmatprep.mubr.bf16.mxu0 0
      %951 = vmatmul.mubr.bf16.gmra.mrb[0].mxu0 %v602
      %v952 = vpop.f32.mrb[0].mxu0
      %v953 = vadd.f32 %v324, %v952
      %v954 = vpop.f32.mrb[0].mxu0
      %v955 = vpop.f32.mrb[0].mxu0
      %v956 = vadd.f32 %v324, %v955
      %v957 = vpop.f32.mrb[0].mxu0
      %958 = vmatprep.mubr.bf16.mxu0 0
      %959 = vmatmul.mubr.bf16.gmra.mrb[0].mxu0 %v603
      %v960 = vpop.f32.mrb[0].mxu0
      %v961 = vadd.f32 %v324, %v960
      %v962 = vpop.f32.mrb[0].mxu0
      %v963 = vpop.f32.mrb[0].mxu0
      %v964 = vadd.f32 %v324, %v963
      %v965 = vpop.f32.mrb[0].mxu0
      %966 = vmatprep.mubr.bf16.mxu0 0
      %967 = vmatmul.mubr.bf16.gmra.mrb[0].mxu0 %v604
      %v968 = vpop.f32.mrb[0].mxu0
      %v969 = vadd.f32 %v324, %v968
      %v970 = vpop.f32.mrb[0].mxu0
      %v971 = vpop.f32.mrb[0].mxu0
      %v972 = vadd.f32 %v324, %v971
      %v973 = vpop.f32.mrb[0].mxu0
      %974 = vmatprep.mubr.bf16.mxu0 0
      %975 = vmatmul.mubr.bf16.gmra.mrb[0].mxu0 %v605
      %v976 = vpop.f32.mrb[0].mxu0
      %v977 = vadd.f32 %v324, %v976
      %v978 = vpop.f32.mrb[0].mxu0
      %v979 = vpop.f32.mrb[0].mxu0
      %v980 = vadd.f32 %v324, %v979
      %v981 = vpop.f32.mrb[0].mxu0
      %982 = vmatprep.mubr.bf16.mxu0 0
      %983 = vmatmul.mubr.bf16.gmra.mrb[0].mxu0 %v606
      %v984 = vpop.f32.mrb[0].mxu0
      %v985 = vadd.f32 %v324, %v984
      %v986 = vpop.f32.mrb[0].mxu0
      %v987 = vpop.f32.mrb[0].mxu0
      %v988 = vadd.f32 %v324, %v987
      %v989 = vpop.f32.mrb[0].mxu0
      %990 = vmatprep.mubr.bf16.mxu0 0
      %991 = vmatmul.mubr.bf16.gmra.mrb[0].mxu0 %v607
      %v992 = vpop.f32.mrb[0].mxu0
      %v993 = vadd.f32 %v324, %v992
      %v994 = vpop.f32.mrb[0].mxu0
      %v995 = vpop.f32.mrb[0].mxu0
      %v996 = vadd.f32 %v324, %v995
      %v997 = vpop.f32.mrb[0].mxu0
      %998 = vmatprep.mubr.bf16.mxu0 0
      %999 = vmatmul.mubr.bf16.gmra.mrb[0].mxu0 %v608
      %v1000 = vpop.f32.mrb[0].mxu0
      %v1001 = vadd.f32 %v324, %v1000
      %v1002 = vpop.f32.mrb[0].mxu0
      %v1003 = vpop.f32.mrb[0].mxu0
      %v1004 = vadd.f32 %v324, %v1003
      %v1005 = vpop.f32.mrb[0].mxu0
      %1006 = vmatprep.mubr.bf16.mxu0 0
      %1007 = vmatmul.mubr.bf16.gmra.mrb[0].mxu0 %v609
      %v1008 = vpop.f32.mrb[0].mxu0
      %v1009 = vadd.f32 %v324, %v1008
      %v1010 = vpop.f32.mrb[0].mxu0
      %v1011 = vpop.f32.mrb[0].mxu0
      %v1012 = vadd.f32 %v324, %v1011
      %v1013 = vpop.f32.mrb[0].mxu0
      %1014 = vmatprep.mubr.bf16.mxu0 0
      %1015 = vmatmul.mubr.bf16.gmra.mrb[0].mxu0 %v610
      %v1016 = vpop.f32.mrb[0].mxu0
      %v1017 = vadd.f32 %v324, %v1016
      %v1018 = vpop.f32.mrb[0].mxu0
      %v1019 = vpop.f32.mrb[0].mxu0
      %v1020 = vadd.f32 %v324, %v1019
      %v1021 = vpop.f32.mrb[0].mxu0
      %1022 = vmatprep.mubr.bf16.mxu0 0
      %1023 = vmatmul.mubr.bf16.gmra.mrb[0].mxu0 %v611
      %v1024 = vpop.f32.mrb[0].mxu0
      %v1025 = vadd.f32 %v324, %v1024
      %v1026 = vpop.f32.mrb[0].mxu0
      %v1027 = vpop.f32.mrb[0].mxu0
      %v1028 = vadd.f32 %v324, %v1027
      %v1029 = vpop.f32.mrb[0].mxu0
      %1030 = vmatprep.mubr.bf16.mxu0 0
      %1031 = vmatmul.mubr.bf16.gmra.mrb[0].mxu0 %v612
      %v1032 = vpop.f32.mrb[0].mxu0
      %v1033 = vadd.f32 %v324, %v1032
      %v1034 = vpop.f32.mrb[0].mxu0
      %v1035 = vpop.f32.mrb[0].mxu0
      %v1036 = vadd.f32 %v324, %v1035
      %v1037 = vpop.f32.mrb[0].mxu0
      %1038 = vmatprep.mubr.bf16.mxu0 0
      %1039 = vmatmul.mubr.bf16.gmra.mrb[0].mxu0 %v613
      %v1040 = vpop.f32.mrb[0].mxu0
      %v1041 = vadd.f32 %v324, %v1040
      %v1042 = vpop.f32.mrb[0].mxu0
      %v1043 = vpop.f32.mrb[0].mxu0
      %v1044 = vadd.f32 %v324, %v1043
      %v1045 = vpop.f32.mrb[0].mxu0
      %1046 = vmatprep.mubr.bf16.mxu0 0
      %1047 = vmatmul.mubr.bf16.gmra.mrb[0].mxu0 %v614
      %v1048 = vpop.f32.mrb[0].mxu0
      %v1049 = vadd.f32 %v324, %v1048
      %v1050 = vpop.f32.mrb[0].mxu0
      %v1051 = vpop.f32.mrb[0].mxu0
      %v1052 = vadd.f32 %v324, %v1051
      %v1053 = vpop.f32.mrb[0].mxu0
      %1054 = vmatprep.mubr.bf16.mxu0 0
      %1055 = vmatmul.mubr.bf16.gmra.mrb[0].mxu0 %v615
      %v1056 = vpop.f32.mrb[0].mxu0
      %v1057 = vadd.f32 %v324, %v1056
      %v1058 = vpop.f32.mrb[0].mxu0
      %v1059 = vpop.f32.mrb[0].mxu0
      %v1060 = vadd.f32 %v324, %v1059
      %v1061 = vpop.f32.mrb[0].mxu0
      %1062 = vmatprep.mubr.bf16.mxu0 0
      %1063 = vmatmul.mubr.bf16.gmra.mrb[0].mxu0 %v616
      %v1064 = vpop.f32.mrb[0].mxu0
      %v1065 = vadd.f32 %v324, %v1064
      %v1066 = vpop.f32.mrb[0].mxu0
      %v1067 = vpop.f32.mrb[0].mxu0
      %v1068 = vadd.f32 %v324, %v1067
      %v1069 = vpop.f32.mrb[0].mxu0
      %1070 = vmatprep.mubr.bf16.mxu0 0
      %1071 = vmatmul.mubr.bf16.gmra.mrb[0].mxu0 %v617
      %v1072 = vpop.f32.mrb[0].mxu0
      %v1073 = vadd.f32 %v324, %v1072
      %v1074 = vpop.f32.mrb[0].mxu0
      %v1075 = vpop.f32.mrb[0].mxu0
      %v1076 = vadd.f32 %v324, %v1075
      %v1077 = vpop.f32.mrb[0].mxu0
      %1078 = vmatprep.mubr.bf16.mxu0 0
      %1079 = vmatmul.mubr.bf16.gmra.mrb[0].mxu0 %v618
      %v1080 = vpop.f32.mrb[0].mxu0
      %v1081 = vadd.f32 %v324, %v1080
      %v1082 = vpop.f32.mrb[0].mxu0
      %v1083 = vpop.f32.mrb[0].mxu0
      %v1084 = vadd.f32 %v324, %v1083
      %v1085 = vpop.f32.mrb[0].mxu0
      %1086 = vmatprep.mubr.bf16.mxu0 0
      %1087 = vmatmul.mubr.bf16.gmra.mrb[0].mxu0 %v619
      %v1088 = vpop.f32.mrb[0].mxu0
      %v1089 = vadd.f32 %v324, %v1088
      %v1090 = vpop.f32.mrb[0].mxu0
      %v1091 = vpop.f32.mrb[0].mxu0
      %v1092 = vadd.f32 %v324, %v1091
      %v1093 = vpop.f32.mrb[0].mxu0
      %1094 = vmatprep.mubr.bf16.mxu0 0
      %1095 = vmatmul.mubr.bf16.gmra.mrb[0].mxu0 %v620
      %v1096 = vpop.f32.mrb[0].mxu0
      %v1097 = vadd.f32 %v324, %v1096
      %v1098 = vpop.f32.mrb[0].mxu0
      %v1099 = vpop.f32.mrb[0].mxu0
      %v1100 = vadd.f32 %v324, %v1099
      %v1101 = vpop.f32.mrb[0].mxu0
      %1102 = vmatprep.mubr.bf16.mxu0 0
      %1103 = vmatmul.mubr.bf16.gmra.mrb[0].mxu0 %v621
      %v1104 = vpop.f32.mrb[0].mxu0
      %v1105 = vadd.f32 %v324, %v1104
      %v1106 = vpop.f32.mrb[0].mxu0
      %v1107 = vpop.f32.mrb[0].mxu0
      %v1108 = vadd.f32 %v324, %v1107
      %v1109 = vpop.f32.mrb[0].mxu0
      %1110 = vmatprep.mubr.bf16.mxu0 0
      %1111 = vmatmul.mubr.bf16.gmra.mrb[0].mxu0 %v622
      %v1112 = vpop.f32.mrb[0].mxu0
      %v1113 = vadd.f32 %v324, %v1112
      %v1114 = vpop.f32.mrb[0].mxu0
      %v1115 = vpop.f32.mrb[0].mxu0
      %v1116 = vadd.f32 %v324, %v1115
      %v1117 = vpop.f32.mrb[0].mxu0
      %1118 = vmatprep.mubr.bf16.mxu0 0
      %1119 = vmatmul.mubr.bf16.gmra.mrb[0].mxu0 %v623
      %v1120 = vpop.f32.mrb[0].mxu0
      %v1121 = vadd.f32 %v324, %v1120
      %v1122 = vpop.f32.mrb[0].mxu0
      %v1123 = vpop.f32.mrb[0].mxu0
      %v1124 = vadd.f32 %v324, %v1123
      %v1125 = vpop.f32.mrb[0].mxu0
      %1126 = vmatprep.mubr.bf16.mxu0 0
      %1127 = vmatmul.mubr.bf16.gmra.mrb[0].mxu0 %v624
      %v1128 = vpop.f32.mrb[0].mxu0
      %v1129 = vadd.f32 %v324, %v1128
      %v1130 = vpop.f32.mrb[0].mxu0
      %v1131 = vpop.f32.mrb[0].mxu0
      %v1132 = vadd.f32 %v324, %v1131
      %v1133 = vpop.f32.mrb[0].mxu0
      %1134 = vmatprep.mubr.bf16.mxu0 0
      %1135 = vmatmul.mubr.bf16.gmra.mrb[0].mxu0 %v625
      %v1136 = vpop.f32.mrb[0].mxu0
      %v1137 = vadd.f32 %v324, %v1136
      %v1138 = vpop.f32.mrb[0].mxu0
      %v1139 = vpop.f32.mrb[0].mxu0
      %v1140 = vadd.f32 %v324, %v1139
      %v1141 = vpop.f32.mrb[0].mxu0
      %1142 = vmatprep.mubr.bf16.mxu0 0
      %1143 = vmatmul.mubr.bf16.gmra.mrb[0].mxu0 %v626
      %v1144 = vpop.f32.mrb[0].mxu0
      %v1145 = vadd.f32 %v324, %v1144
      %v1146 = vpop.f32.mrb[0].mxu0
      %v1147 = vpop.f32.mrb[0].mxu0
      %v1148 = vadd.f32 %v324, %v1147
      %v1149 = vpop.f32.mrb[0].mxu0
      %1150 = vmatprep.mubr.bf16.mxu0 0
      %1151 = vmatmul.mubr.bf16.gmra.mrb[0].mxu0 %v627
      %v1152 = vpop.f32.mrb[0].mxu0
      %v1153 = vadd.f32 %v324, %v1152
      %v1154 = vpop.f32.mrb[0].mxu0
      %v1155 = vpop.f32.mrb[0].mxu0
      %v1156 = vadd.f32 %v324, %v1155
      %v1157 = vpop.f32.mrb[0].mxu0
      %1158 = vmatprep.mubr.bf16.mxu0 0
      %1159 = vmatmul.mubr.bf16.gmra.mrb[0].mxu0 %v628
      %v1160 = vpop.f32.mrb[0].mxu0
      %v1161 = vadd.f32 %v324, %v1160
      %v1162 = vpop.f32.mrb[0].mxu0
      %v1163 = vpop.f32.mrb[0].mxu0
      %v1164 = vadd.f32 %v324, %v1163
      %v1165 = vpop.f32.mrb[0].mxu0
      %1166 = vmatprep.mubr.bf16.mxu0 0
      %1167 = vmatmul.mubr.bf16.gmra.mrb[0].mxu0 %v629
      %v1168 = vpop.f32.mrb[0].mxu0
      %v1169 = vadd.f32 %v324, %v1168
      %v1170 = vpop.f32.mrb[0].mxu0
      %v1171 = vpop.f32.mrb[0].mxu0
      %v1172 = vadd.f32 %v324, %v1171
      %v1173 = vpop.f32.mrb[0].mxu0
      %1174 = vmatprep.mubr.bf16.mxu0 0
      %1175 = vmatmul.mubr.bf16.gmra.mrb[0].mxu0 %v630
      %v1176 = vpop.f32.mrb[0].mxu0
      %v1177 = vadd.f32 %v324, %v1176
      %v1178 = vpop.f32.mrb[0].mxu0
      %v1179 = vpop.f32.mrb[0].mxu0
      %v1180 = vadd.f32 %v324, %v1179
      %v1181 = vpop.f32.mrb[0].mxu0
      %1182 = vmatprep.mubr.bf16.mxu0 0
      %1183 = vmatmul.mubr.bf16.gmra.mrb[0].mxu0 %v631
      %v1184 = vpop.f32.mrb[0].mxu0
      %v1185 = vadd.f32 %v324, %v1184
      %v1186 = vpop.f32.mrb[0].mxu0
      %v1187 = vpop.f32.mrb[0].mxu0
      %v1188 = vadd.f32 %v324, %v1187
      %v1189 = vpop.f32.mrb[0].mxu0
      %1190 = vmatprep.mubr.bf16.mxu0 0
      %1191 = vmatmul.mubr.bf16.gmra.mrb[0].mxu0 %v632
      %v1192 = vpop.f32.mrb[0].mxu0
      %v1193 = vadd.f32 %v324, %v1192
      %v1194 = vpop.f32.mrb[0].mxu0
      %v1195 = vpop.f32.mrb[0].mxu0
      %v1196 = vadd.f32 %v324, %v1195
      %v1197 = vpop.f32.mrb[0].mxu0
      %1198 = vmatprep.mubr.bf16.mxu0 0
      %1199 = vmatmul.mubr.bf16.gmra.mrb[0].mxu0 %v633
      %v1200 = vpop.f32.mrb[0].mxu0
      %v1201 = vadd.f32 %v324, %v1200
      %v1202 = vpop.f32.mrb[0].mxu0
      %v1203 = vpop.f32.mrb[0].mxu0
      %v1204 = vadd.f32 %v324, %v1203
      %v1205 = vpop.f32.mrb[0].mxu0
      %1206 = vmatprep.mubr.bf16.mxu0 0
      %1207 = vmatmul.mubr.bf16.gmra.mrb[0].mxu0 %v634
      %v1208 = vpop.f32.mrb[0].mxu0
      %v1209 = vadd.f32 %v324, %v1208
      %v1210 = vpop.f32.mrb[0].mxu0
      %v1211 = vpop.f32.mrb[0].mxu0
      %v1212 = vadd.f32 %v324, %v1211
      %v1213 = vpop.f32.mrb[0].mxu0
      %1214 = vmatprep.mubr.bf16.mxu0 0
      %1215 = vmatmul.mubr.bf16.gmra.mrb[0].mxu0 %v635
      %v1216 = vpop.f32.mrb[0].mxu0
      %v1217 = vadd.f32 %v324, %v1216
      %v1218 = vpop.f32.mrb[0].mxu0
      %v1219 = vpop.f32.mrb[0].mxu0
      %v1220 = vadd.f32 %v324, %v1219
      %v1221 = vpop.f32.mrb[0].mxu0
      %1222 = vmatprep.mubr.bf16.mxu0 0
      %1223 = vmatmul.mubr.bf16.gmra.mrb[0].mxu0 %v636
      %v1224 = vpop.f32.mrb[0].mxu0
      %v1225 = vadd.f32 %v324, %v1224
      %v1226 = vpop.f32.mrb[0].mxu0
      %v1227 = vpop.f32.mrb[0].mxu0
      %v1228 = vadd.f32 %v324, %v1227
      %v1229 = vpop.f32.mrb[0].mxu0
      %1230 = vmatprep.mubr.bf16.mxu0 0
      %1231 = vmatmul.mubr.bf16.gmra.mrb[0].mxu0 %v637
      %v1232 = vpop.f32.mrb[0].mxu0
      %v1233 = vadd.f32 %v324, %v1232
      %v1234 = vpop.f32.mrb[0].mxu0
      %v1235 = vpop.f32.mrb[0].mxu0
      %v1236 = vadd.f32 %v324, %v1235
      %v1237 = vpop.f32.mrb[0].mxu0
      %1238 = vmatprep.mubr.bf16.mxu0 0
      %1239 = vmatmul.mubr.bf16.gmra.mrb[0].mxu0 %v638
      %v1240 = vpop.f32.mrb[0].mxu0
      %v1241 = vadd.f32 %v324, %v1240
      %v1242 = vpop.f32.mrb[0].mxu0
      %v1243 = vpop.f32.mrb[0].mxu0
      %v1244 = vadd.f32 %v324, %v1243
      %v1245 = vpop.f32.mrb[0].mxu0
      %1246 = vmatprep.mubr.bf16.mxu0 0
      %1247 = vmatmul.mubr.bf16.gmra.mrb[0].mxu0 %v639
      %v1248 = vpop.f32.mrb[0].mxu0
      %v1249 = vadd.f32 %v324, %v1248
      %v1250 = vpop.f32.mrb[0].mxu0
      %v1251 = vpop.f32.mrb[0].mxu0
      %v1252 = vadd.f32 %v324, %v1251
      %v1253 = vpop.f32.mrb[0].mxu0
      %1254 = vmatprep.mubr.bf16.mxu0 0
      %1255 = vmatmul.mubr.bf16.gmra.mrb[0].mxu0 %v640
      %v1256 = vpop.f32.mrb[0].mxu0
      %v1257 = vadd.f32 %v324, %v1256
      %v1258 = vpop.f32.mrb[0].mxu0
      %v1259 = vpop.f32.mrb[0].mxu0
      %v1260 = vadd.f32 %v324, %v1259
      %v1261 = vpop.f32.mrb[0].mxu0
      %1262 = vmatprep.mubr.bf16.mxu0 0
      %1263 = vmatmul.mubr.bf16.gmra.mrb[0].mxu0 %v641
      %v1264 = vpop.f32.mrb[0].mxu0
      %v1265 = vadd.f32 %v324, %v1264
      %v1266 = vpop.f32.mrb[0].mxu0
      %v1267 = vpop.f32.mrb[0].mxu0
      %v1268 = vadd.f32 %v324, %v1267
      %v1269 = vpop.f32.mrb[0].mxu0
      %1270 = vmatprep.mubr.bf16.mxu0 0
      %1271 = vmatmul.mubr.bf16.gmra.mrb[0].mxu0 %v642
      %v1272 = vpop.f32.mrb[0].mxu0
      %v1273 = vadd.f32 %v324, %v1272
      %v1274 = vpop.f32.mrb[0].mxu0
      %v1275 = vpop.f32.mrb[0].mxu0
      %v1276 = vadd.f32 %v324, %v1275
      %v1277 = vpop.f32.mrb[0].mxu0
      %1278 = vmatprep.mubr.bf16.mxu0 0
      %1279 = vmatmul.mubr.bf16.gmra.mrb[0].mxu0 %v643
      %v1280 = vpop.f32.mrb[0].mxu0
      %v1281 = vadd.f32 %v324, %v1280
      %v1282 = vpop.f32.mrb[0].mxu0
      %v1283 = vpop.f32.mrb[0].mxu0
      %v1284 = vadd.f32 %v324, %v1283
      %v1285 = vpop.f32.mrb[0].mxu0
      %1286 = vmatprep.mubr.bf16.mxu0 0
      %1287 = vmatmul.mubr.bf16.gmra.mrb[0].mxu0 %v644
      %v1288 = vpop.f32.mrb[0].mxu0
      %v1289 = vadd.f32 %v324, %v1288
      %v1290 = vpop.f32.mrb[0].mxu0
      %v1291 = vpop.f32.mrb[0].mxu0
      %v1292 = vadd.f32 %v324, %v1291
      %v1293 = vpop.f32.mrb[0].mxu0
      %1294 = vmatprep.mubr.bf16.mxu0 0
      %1295 = vmatmul.mubr.bf16.gmra.mrb[0].mxu0 %v645
      %v1296 = vpop.f32.mrb[0].mxu0
      %v1297 = vadd.f32 %v324, %v1296
      %v1298 = vpop.f32.mrb[0].mxu0
      %v1299 = vpop.f32.mrb[0].mxu0
      %v1300 = vadd.f32 %v324, %v1299
      %v1301 = vpop.f32.mrb[0].mxu0
      %1302 = vdwg.mxu0
      %v1303 = vmax.f32 %v793, 0.0
      %v1304 = vmax.f32 %v796, 0.0
      %v1305 = vmax.f32 %v801, 0.0
      %v1306 = vmax.f32 %v804, 0.0
      %v1307 = vmax.f32 %v809, 0.0
      %v1308 = vmax.f32 %v812, 0.0
      %v1309 = vmax.f32 %v817, 0.0
      %v1310 = vmax.f32 %v820, 0.0
      %v1311 = vmax.f32 %v825, 0.0
      %v1312 = vmax.f32 %v828, 0.0
      %v1313 = vmax.f32 %v833, 0.0
      %v1314 = vmax.f32 %v836, 0.0
      %v1315 = vmax.f32 %v841, 0.0
      %v1316 = vmax.f32 %v844, 0.0
      %v1317 = vmax.f32 %v849, 0.0
      %v1318 = vmax.f32 %v852, 0.0
      %v1319 = vmax.f32 %v857, 0.0
      %v1320 = vmax.f32 %v860, 0.0
      %v1321 = vmax.f32 %v865, 0.0
      %v1322 = vmax.f32 %v868, 0.0
      %v1323 = vmax.f32 %v873, 0.0
      %v1324 = vmax.f32 %v876, 0.0
      %v1325 = vmax.f32 %v881, 0.0
      %v1326 = vmax.f32 %v884, 0.0
      %v1327 = vmax.f32 %v889, 0.0
      %v1328 = vmax.f32 %v892, 0.0
      %v1329 = vmax.f32 %v897, 0.0
      %v1330 = vmax.f32 %v900, 0.0
      %v1331 = vmax.f32 %v905, 0.0
      %v1332 = vmax.f32 %v908, 0.0
      %v1333 = vmax.f32 %v913, 0.0
      %v1334 = vmax.f32 %v916, 0.0
      %v1335 = vmax.f32 %v921, 0.0
      %v1336 = vmax.f32 %v924, 0.0
      %v1337 = vmax.f32 %v929, 0.0
      %v1338 = vmax.f32 %v932, 0.0
      %v1339 = vmax.f32 %v937, 0.0
      %v1340 = vmax.f32 %v940, 0.0
      %v1341 = vmax.f32 %v945, 0.0
      %v1342 = vmax.f32 %v948, 0.0
      %v1343 = vmax.f32 %v953, 0.0
      %v1344 = vmax.f32 %v956, 0.0
      %v1345 = vmax.f32 %v961, 0.0
      %v1346 = vmax.f32 %v964, 0.0
      %v1347 = vmax.f32 %v969, 0.0
      %v1348 = vmax.f32 %v972, 0.0
      %v1349 = vmax.f32 %v977, 0.0
      %v1350 = vmax.f32 %v980, 0.0
      %v1351 = vmax.f32 %v985, 0.0
      %v1352 = vmax.f32 %v988, 0.0
      %v1353 = vmax.f32 %v993, 0.0
      %v1354 = vmax.f32 %v996, 0.0
      %v1355 = vmax.f32 %v1001, 0.0
      %v1356 = vmax.f32 %v1004, 0.0
      %v1357 = vmax.f32 %v1009, 0.0
      %v1358 = vmax.f32 %v1012, 0.0
      %v1359 = vmax.f32 %v1017, 0.0
      %v1360 = vmax.f32 %v1020, 0.0
      %v1361 = vmax.f32 %v1025, 0.0
      %v1362 = vmax.f32 %v1028, 0.0
      %v1363 = vmax.f32 %v1033, 0.0
      %v1364 = vmax.f32 %v1036, 0.0
      %v1365 = vmax.f32 %v1041, 0.0
      %v1366 = vmax.f32 %v1044, 0.0
      %v1367 = vmax.f32 %v1049, 0.0
      %v1368 = vmax.f32 %v1052, 0.0
      %v1369 = vmax.f32 %v1057, 0.0
      %v1370 = vmax.f32 %v1060, 0.0
      %v1371 = vmax.f32 %v1065, 0.0
      %v1372 = vmax.f32 %v1068, 0.0
      %v1373 = vmax.f32 %v1073, 0.0
      %v1374 = vmax.f32 %v1076, 0.0
      %v1375 = vmax.f32 %v1081, 0.0
      %v1376 = vmax.f32 %v1084, 0.0
      %v1377 = vmax.f32 %v1089, 0.0
      %v1378 = vmax.f32 %v1092, 0.0
      %v1379 = vmax.f32 %v1097, 0.0
      %v1380 = vmax.f32 %v1100, 0.0
      %v1381 = vmax.f32 %v1105, 0.0
      %v1382 = vmax.f32 %v1108, 0.0
      %v1383 = vmax.f32 %v1113, 0.0
      %v1384 = vmax.f32 %v1116, 0.0
      %v1385 = vmax.f32 %v1121, 0.0
      %v1386 = vmax.f32 %v1124, 0.0
      %v1387 = vmax.f32 %v1129, 0.0
      %v1388 = vmax.f32 %v1132, 0.0
      %v1389 = vmax.f32 %v1137, 0.0
      %v1390 = vmax.f32 %v1140, 0.0
      %v1391 = vmax.f32 %v1145, 0.0
      %v1392 = vmax.f32 %v1148, 0.0
      %v1393 = vmax.f32 %v1153, 0.0
      %v1394 = vmax.f32 %v1156, 0.0
      %v1395 = vmax.f32 %v1161, 0.0
      %v1396 = vmax.f32 %v1164, 0.0
      %v1397 = vmax.f32 %v1169, 0.0
      %v1398 = vmax.f32 %v1172, 0.0
      %v1399 = vmax.f32 %v1177, 0.0
      %v1400 = vmax.f32 %v1180, 0.0
      %v1401 = vmax.f32 %v1185, 0.0
      %v1402 = vmax.f32 %v1188, 0.0
      %v1403 = vmax.f32 %v1193, 0.0
      %v1404 = vmax.f32 %v1196, 0.0
      %v1405 = vmax.f32 %v1201, 0.0
      %v1406 = vmax.f32 %v1204, 0.0
      %v1407 = vmax.f32 %v1209, 0.0
      %v1408 = vmax.f32 %v1212, 0.0
      %v1409 = vmax.f32 %v1217, 0.0
      %v1410 = vmax.f32 %v1220, 0.0
      %v1411 = vmax.f32 %v1225, 0.0
      %v1412 = vmax.f32 %v1228, 0.0
      %v1413 = vmax.f32 %v1233, 0.0
      %v1414 = vmax.f32 %v1236, 0.0
      %v1415 = vmax.f32 %v1241, 0.0
      %v1416 = vmax.f32 %v1244, 0.0
      %v1417 = vmax.f32 %v1249, 0.0
      %v1418 = vmax.f32 %v1252, 0.0
      %v1419 = vmax.f32 %v1257, 0.0
      %v1420 = vmax.f32 %v1260, 0.0
      %v1421 = vmax.f32 %v1265, 0.0
      %v1422 = vmax.f32 %v1268, 0.0
      %v1423 = vmax.f32 %v1273, 0.0
      %v1424 = vmax.f32 %v1276, 0.0
      %v1425 = vmax.f32 %v1281, 0.0
      %v1426 = vmax.f32 %v1284, 0.0
      %v1427 = vmax.f32 %v1289, 0.0
      %v1428 = vmax.f32 %v1292, 0.0
      %v1429 = vmax.f32 %v1297, 0.0
      %v1430 = vmax.f32 %v1300, 0.0
      %v1431 = vpack.c.bf16 %v1304, %v1303
      %v1432 = vpack.c.bf16 %v1306, %v1305
      %v1433 = vpack.c.bf16 %v1308, %v1307
      %v1434 = vpack.c.bf16 %v1310, %v1309
      %v1435 = vpack.c.bf16 %v1312, %v1311
      %v1436 = vpack.c.bf16 %v1314, %v1313
      %v1437 = vpack.c.bf16 %v1316, %v1315
      %v1438 = vpack.c.bf16 %v1318, %v1317
      %v1439 = vpack.c.bf16 %v1320, %v1319
      %v1440 = vpack.c.bf16 %v1322, %v1321
      %v1441 = vpack.c.bf16 %v1324, %v1323
      %v1442 = vpack.c.bf16 %v1326, %v1325
      %v1443 = vpack.c.bf16 %v1328, %v1327
      %v1444 = vpack.c.bf16 %v1330, %v1329
      %v1445 = vpack.c.bf16 %v1332, %v1331
      %v1446 = vpack.c.bf16 %v1334, %v1333
      %v1447 = vpack.c.bf16 %v1336, %v1335
      %v1448 = vpack.c.bf16 %v1338, %v1337
      %v1449 = vpack.c.bf16 %v1340, %v1339
      %v1450 = vpack.c.bf16 %v1342, %v1341
      %v1451 = vpack.c.bf16 %v1344, %v1343
      %v1452 = vpack.c.bf16 %v1346, %v1345
      %v1453 = vpack.c.bf16 %v1348, %v1347
      %v1454 = vpack.c.bf16 %v1350, %v1349
      %v1455 = vpack.c.bf16 %v1352, %v1351
      %v1456 = vpack.c.bf16 %v1354, %v1353
      %v1457 = vpack.c.bf16 %v1356, %v1355
      %v1458 = vpack.c.bf16 %v1358, %v1357
      %v1459 = vpack.c.bf16 %v1360, %v1359
      %v1460 = vpack.c.bf16 %v1362, %v1361
      %v1461 = vpack.c.bf16 %v1364, %v1363
      %v1462 = vpack.c.bf16 %v1366, %v1365
      %v1463 = vpack.c.bf16 %v1368, %v1367
      %v1464 = vpack.c.bf16 %v1370, %v1369
      %v1465 = vpack.c.bf16 %v1372, %v1371
      %v1466 = vpack.c.bf16 %v1374, %v1373
      %v1467 = vpack.c.bf16 %v1376, %v1375
      %v1468 = vpack.c.bf16 %v1378, %v1377
      %v1469 = vpack.c.bf16 %v1380, %v1379
      %v1470 = vpack.c.bf16 %v1382, %v1381
      %v1471 = vpack.c.bf16 %v1384, %v1383
      %v1472 = vpack.c.bf16 %v1386, %v1385
      %v1473 = vpack.c.bf16 %v1388, %v1387
      %v1474 = vpack.c.bf16 %v1390, %v1389
      %v1475 = vpack.c.bf16 %v1392, %v1391
      %v1476 = vpack.c.bf16 %v1394, %v1393
      %v1477 = vpack.c.bf16 %v1396, %v1395
      %v1478 = vpack.c.bf16 %v1398, %v1397
      %v1479 = vpack.c.bf16 %v1400, %v1399
      %v1480 = vpack.c.bf16 %v1402, %v1401
      %v1481 = vpack.c.bf16 %v1404, %v1403
      %v1482 = vpack.c.bf16 %v1406, %v1405
      %v1483 = vpack.c.bf16 %v1408, %v1407
      %v1484 = vpack.c.bf16 %v1410, %v1409
      %v1485 = vpack.c.bf16 %v1412, %v1411
      %v1486 = vpack.c.bf16 %v1414, %v1413
      %v1487 = vpack.c.bf16 %v1416, %v1415
      %v1488 = vpack.c.bf16 %v1418, %v1417
      %v1489 = vpack.c.bf16 %v1420, %v1419
      %v1490 = vpack.c.bf16 %v1422, %v1421
      %v1491 = vpack.c.bf16 %v1424, %v1423
      %v1492 = vpack.c.bf16 %v1426, %v1425
      %v1493 = vpack.c.bf16 %v1428, %v1427
      %v1494 = vpack.c.bf16 %v1430, %v1429
      %v1559 = vunpack.c.l.b16 %v1431
      %v1560 = vunpack.c.h.b16 %v1431
      %v1561 = vunpack.c.l.b16 %v1432
      %v1562 = vunpack.c.h.b16 %v1432
      %v1563 = vunpack.c.l.b16 %v1433
      %v1564 = vunpack.c.h.b16 %v1433
      %v1565 = vunpack.c.l.b16 %v1434
      %v1566 = vunpack.c.h.b16 %v1434
      %v1567 = vunpack.c.l.b16 %v1435
      %v1568 = vunpack.c.h.b16 %v1435
      %v1569 = vunpack.c.l.b16 %v1436
      %v1570 = vunpack.c.h.b16 %v1436
      %v1571 = vunpack.c.l.b16 %v1437
      %v1572 = vunpack.c.h.b16 %v1437
      %v1573 = vunpack.c.l.b16 %v1438
      %v1574 = vunpack.c.h.b16 %v1438
      %v1575 = vunpack.c.l.b16 %v1439
      %v1576 = vunpack.c.h.b16 %v1439
      %v1577 = vunpack.c.l.b16 %v1440
      %v1578 = vunpack.c.h.b16 %v1440
      %v1579 = vunpack.c.l.b16 %v1441
      %v1580 = vunpack.c.h.b16 %v1441
      %v1581 = vunpack.c.l.b16 %v1442
      %v1582 = vunpack.c.h.b16 %v1442
      %v1583 = vunpack.c.l.b16 %v1443
      %v1584 = vunpack.c.h.b16 %v1443
      %v1585 = vunpack.c.l.b16 %v1444
      %v1586 = vunpack.c.h.b16 %v1444
      %v1587 = vunpack.c.l.b16 %v1445
      %v1588 = vunpack.c.h.b16 %v1445
      %v1589 = vunpack.c.l.b16 %v1446
      %v1590 = vunpack.c.h.b16 %v1446
      %v1591 = vunpack.c.l.b16 %v1447
      %v1592 = vunpack.c.h.b16 %v1447
      %v1593 = vunpack.c.l.b16 %v1448
      %v1594 = vunpack.c.h.b16 %v1448
      %v1595 = vunpack.c.l.b16 %v1449
      %v1596 = vunpack.c.h.b16 %v1449
      %v1597 = vunpack.c.l.b16 %v1450
      %v1598 = vunpack.c.h.b16 %v1450
      %v1599 = vunpack.c.l.b16 %v1451
      %v1600 = vunpack.c.h.b16 %v1451
      %v1601 = vunpack.c.l.b16 %v1452
      %v1602 = vunpack.c.h.b16 %v1452
      %v1603 = vunpack.c.l.b16 %v1453
      %v1604 = vunpack.c.h.b16 %v1453
      %v1605 = vunpack.c.l.b16 %v1454
      %v1606 = vunpack.c.h.b16 %v1454
      %v1607 = vunpack.c.l.b16 %v1455
      %v1608 = vunpack.c.h.b16 %v1455
      %v1609 = vunpack.c.l.b16 %v1456
      %v1610 = vunpack.c.h.b16 %v1456
      %v1611 = vunpack.c.l.b16 %v1457
      %v1612 = vunpack.c.h.b16 %v1457
      %v1613 = vunpack.c.l.b16 %v1458
      %v1614 = vunpack.c.h.b16 %v1458
      %v1615 = vunpack.c.l.b16 %v1459
      %v1616 = vunpack.c.h.b16 %v1459
      %v1617 = vunpack.c.l.b16 %v1460
      %v1618 = vunpack.c.h.b16 %v1460
      %v1619 = vunpack.c.l.b16 %v1461
      %v1620 = vunpack.c.h.b16 %v1461
      %v1621 = vunpack.c.l.b16 %v1462
      %v1622 = vunpack.c.h.b16 %v1462
      %v1623 = vunpack.c.l.b16 %v1463
      %v1624 = vunpack.c.h.b16 %v1463
      %v1625 = vunpack.c.l.b16 %v1464
      %v1626 = vunpack.c.h.b16 %v1464
      %v1627 = vunpack.c.l.b16 %v1465
      %v1628 = vunpack.c.h.b16 %v1465
      %v1629 = vunpack.c.l.b16 %v1466
      %v1630 = vunpack.c.h.b16 %v1466
      %v1631 = vunpack.c.l.b16 %v1467
      %v1632 = vunpack.c.h.b16 %v1467
      %v1633 = vunpack.c.l.b16 %v1468
      %v1634 = vunpack.c.h.b16 %v1468
      %v1635 = vunpack.c.l.b16 %v1469
      %v1636 = vunpack.c.h.b16 %v1469
      %v1637 = vunpack.c.l.b16 %v1470
      %v1638 = vunpack.c.h.b16 %v1470
      %v1639 = vunpack.c.l.b16 %v1471
      %v1640 = vunpack.c.h.b16 %v1471
      %v1641 = vunpack.c.l.b16 %v1472
      %v1642 = vunpack.c.h.b16 %v1472
      %v1643 = vunpack.c.l.b16 %v1473
      %v1644 = vunpack.c.h.b16 %v1473
      %v1645 = vunpack.c.l.b16 %v1474
      %v1646 = vunpack.c.h.b16 %v1474
      %v1647 = vunpack.c.l.b16 %v1475
      %v1648 = vunpack.c.h.b16 %v1475
      %v1649 = vunpack.c.l.b16 %v1476
      %v1650 = vunpack.c.h.b16 %v1476
      %v1651 = vunpack.c.l.b16 %v1477
      %v1652 = vunpack.c.h.b16 %v1477
      %v1653 = vunpack.c.l.b16 %v1478
      %v1654 = vunpack.c.h.b16 %v1478
      %v1655 = vunpack.c.l.b16 %v1479
      %v1656 = vunpack.c.h.b16 %v1479
      %v1657 = vunpack.c.l.b16 %v1480
      %v1658 = vunpack.c.h.b16 %v1480
      %v1659 = vunpack.c.l.b16 %v1481
      %v1660 = vunpack.c.h.b16 %v1481
      %v1661 = vunpack.c.l.b16 %v1482
      %v1662 = vunpack.c.h.b16 %v1482
      %v1663 = vunpack.c.l.b16 %v1483
      %v1664 = vunpack.c.h.b16 %v1483
      %v1665 = vunpack.c.l.b16 %v1484
      %v1666 = vunpack.c.h.b16 %v1484
      %v1667 = vunpack.c.l.b16 %v1485
      %v1668 = vunpack.c.h.b16 %v1485
      %v1669 = vunpack.c.l.b16 %v1486
      %v1670 = vunpack.c.h.b16 %v1486
      %v1671 = vunpack.c.l.b16 %v1487
      %v1672 = vunpack.c.h.b16 %v1487
      %v1673 = vunpack.c.l.b16 %v1488
      %v1674 = vunpack.c.h.b16 %v1488
      %v1675 = vunpack.c.l.b16 %v1489
      %v1676 = vunpack.c.h.b16 %v1489
      %v1677 = vunpack.c.l.b16 %v1490
      %v1678 = vunpack.c.h.b16 %v1490
      %v1679 = vunpack.c.l.b16 %v1491
      %v1680 = vunpack.c.h.b16 %v1491
      %v1681 = vunpack.c.l.b16 %v1492
      %v1682 = vunpack.c.h.b16 %v1492
      %v1683 = vunpack.c.l.b16 %v1493
      %v1684 = vunpack.c.h.b16 %v1493
      %v1685 = vunpack.c.l.b16 %v1494
      %v1686 = vunpack.c.h.b16 %v1494
      %v1687 = vpack.c.b16 %v1559, %v1559
      %v1688 = vpack.c.b16 %v1560, %v1560
      %v1689 = vpack.c.b16 %v1561, %v1561
      %v1690 = vpack.c.b16 %v1562, %v1562
      %v1691 = vpack.c.b16 %v1563, %v1563
      %v1692 = vpack.c.b16 %v1564, %v1564
      %v1693 = vpack.c.b16 %v1565, %v1565
      %v1694 = vpack.c.b16 %v1566, %v1566
      %v1695 = vpack.c.b16 %v1567, %v1567
      %v1696 = vpack.c.b16 %v1568, %v1568
      %v1697 = vpack.c.b16 %v1569, %v1569
      %v1698 = vpack.c.b16 %v1570, %v1570
      %v1699 = vpack.c.b16 %v1571, %v1571
      %v1700 = vpack.c.b16 %v1572, %v1572
      %v1701 = vpack.c.b16 %v1573, %v1573
      %v1702 = vpack.c.b16 %v1574, %v1574
      %v1703 = vpack.c.b16 %v1575, %v1575
      %v1704 = vpack.c.b16 %v1576, %v1576
      %v1705 = vpack.c.b16 %v1577, %v1577
      %v1706 = vpack.c.b16 %v1578, %v1578
      %v1707 = vpack.c.b16 %v1579, %v1579
      %v1708 = vpack.c.b16 %v1580, %v1580
      %v1709 = vpack.c.b16 %v1581, %v1581
      %v1710 = vpack.c.b16 %v1582, %v1582
      %v1711 = vpack.c.b16 %v1583, %v1583
      %v1712 = vpack.c.b16 %v1584, %v1584
      %v1713 = vpack.c.b16 %v1585, %v1585
      %v1714 = vpack.c.b16 %v1586, %v1586
      %v1715 = vpack.c.b16 %v1587, %v1587
      %v1716 = vpack.c.b16 %v1588, %v1588
      %v1717 = vpack.c.b16 %v1589, %v1589
      %v1718 = vpack.c.b16 %v1590, %v1590
      %v1719 = vpack.c.b16 %v1591, %v1591
      %v1720 = vpack.c.b16 %v1592, %v1592
      %v1721 = vpack.c.b16 %v1593, %v1593
      %v1722 = vpack.c.b16 %v1594, %v1594
      %v1723 = vpack.c.b16 %v1595, %v1595
      %v1724 = vpack.c.b16 %v1596, %v1596
      %v1725 = vpack.c.b16 %v1597, %v1597
      %v1726 = vpack.c.b16 %v1598, %v1598
      %v1727 = vpack.c.b16 %v1599, %v1599
      %v1728 = vpack.c.b16 %v1600, %v1600
      %v1729 = vpack.c.b16 %v1601, %v1601
      %v1730 = vpack.c.b16 %v1602, %v1602
      %v1731 = vpack.c.b16 %v1603, %v1603
      %v1732 = vpack.c.b16 %v1604, %v1604
      %v1733 = vpack.c.b16 %v1605, %v1605
      %v1734 = vpack.c.b16 %v1606, %v1606
      %v1735 = vpack.c.b16 %v1607, %v1607
      %v1736 = vpack.c.b16 %v1608, %v1608
      %v1737 = vpack.c.b16 %v1609, %v1609
      %v1738 = vpack.c.b16 %v1610, %v1610
      %v1739 = vpack.c.b16 %v1611, %v1611
      %v1740 = vpack.c.b16 %v1612, %v1612
      %v1741 = vpack.c.b16 %v1613, %v1613
      %v1742 = vpack.c.b16 %v1614, %v1614
      %v1743 = vpack.c.b16 %v1615, %v1615
      %v1744 = vpack.c.b16 %v1616, %v1616
      %v1745 = vpack.c.b16 %v1617, %v1617
      %v1746 = vpack.c.b16 %v1618, %v1618
      %v1747 = vpack.c.b16 %v1619, %v1619
      %v1748 = vpack.c.b16 %v1620, %v1620
      %v1749 = vpack.c.b16 %v1621, %v1621
      %v1750 = vpack.c.b16 %v1622, %v1622
      %v1751 = vpack.c.b16 %v1623, %v1623
      %v1752 = vpack.c.b16 %v1624, %v1624
      %v1753 = vpack.c.b16 %v1625, %v1625
      %v1754 = vpack.c.b16 %v1626, %v1626
      %v1755 = vpack.c.b16 %v1627, %v1627
      %v1756 = vpack.c.b16 %v1628, %v1628
      %v1757 = vpack.c.b16 %v1629, %v1629
      %v1758 = vpack.c.b16 %v1630, %v1630
      %v1759 = vpack.c.b16 %v1631, %v1631
      %v1760 = vpack.c.b16 %v1632, %v1632
      %v1761 = vpack.c.b16 %v1633, %v1633
      %v1762 = vpack.c.b16 %v1634, %v1634
      %v1763 = vpack.c.b16 %v1635, %v1635
      %v1764 = vpack.c.b16 %v1636, %v1636
      %v1765 = vpack.c.b16 %v1637, %v1637
      %v1766 = vpack.c.b16 %v1638, %v1638
      %v1767 = vpack.c.b16 %v1639, %v1639
      %v1768 = vpack.c.b16 %v1640, %v1640
      %v1769 = vpack.c.b16 %v1641, %v1641
      %v1770 = vpack.c.b16 %v1642, %v1642
      %v1771 = vpack.c.b16 %v1643, %v1643
      %v1772 = vpack.c.b16 %v1644, %v1644
      %v1773 = vpack.c.b16 %v1645, %v1645
      %v1774 = vpack.c.b16 %v1646, %v1646
      %v1775 = vpack.c.b16 %v1647, %v1647
      %v1776 = vpack.c.b16 %v1648, %v1648
      %v1777 = vpack.c.b16 %v1649, %v1649
      %v1778 = vpack.c.b16 %v1650, %v1650
      %v1779 = vpack.c.b16 %v1651, %v1651
      %v1780 = vpack.c.b16 %v1652, %v1652
      %v1781 = vpack.c.b16 %v1653, %v1653
      %v1782 = vpack.c.b16 %v1654, %v1654
      %v1783 = vpack.c.b16 %v1655, %v1655
      %v1784 = vpack.c.b16 %v1656, %v1656
      %v1785 = vpack.c.b16 %v1657, %v1657
      %v1786 = vpack.c.b16 %v1658, %v1658
      %v1787 = vpack.c.b16 %v1659, %v1659
      %v1788 = vpack.c.b16 %v1660, %v1660
      %v1789 = vpack.c.b16 %v1661, %v1661
      %v1790 = vpack.c.b16 %v1662, %v1662
      %v1791 = vpack.c.b16 %v1663, %v1663
      %v1792 = vpack.c.b16 %v1664, %v1664
      %v1793 = vpack.c.b16 %v1665, %v1665
      %v1794 = vpack.c.b16 %v1666, %v1666
      %v1795 = vpack.c.b16 %v1667, %v1667
      %v1796 = vpack.c.b16 %v1668, %v1668
      %v1797 = vpack.c.b16 %v1669, %v1669
      %v1798 = vpack.c.b16 %v1670, %v1670
      %v1799 = vpack.c.b16 %v1671, %v1671
      %v1800 = vpack.c.b16 %v1672, %v1672
      %v1801 = vpack.c.b16 %v1673, %v1673
      %v1802 = vpack.c.b16 %v1674, %v1674
      %v1803 = vpack.c.b16 %v1675, %v1675
      %v1804 = vpack.c.b16 %v1676, %v1676
      %v1805 = vpack.c.b16 %v1677, %v1677
      %v1806 = vpack.c.b16 %v1678, %v1678
      %v1807 = vpack.c.b16 %v1679, %v1679
      %v1808 = vpack.c.b16 %v1680, %v1680
      %v1809 = vpack.c.b16 %v1681, %v1681
      %v1810 = vpack.c.b16 %v1682, %v1682
      %v1811 = vpack.c.b16 %v1683, %v1683
      %v1812 = vpack.c.b16 %v1684, %v1684
      %v1813 = vpack.c.b16 %v1685, %v1685
      %v1814 = vpack.c.b16 %v1686, %v1686
      %vm1943 = vcmask 257024
      %1944 = vst.msk [vmem:[%s172] sm:$0xf] %vm1943, %v1687
      %1945 = vst.msk [vmem:[%s172 + $0x4] sm:$0xf] %vm1943, %v1688
      %1946 = vst.msk [vmem:[%s172 + $0x8] sm:$0xf] %vm1943, %v1689
      %1947 = vst.msk [vmem:[%s172 + $0xc] sm:$0xf] %vm1943, %v1690
      %1948 = vst.msk [vmem:[%s172 + $0x10] sm:$0xf] %vm1943, %v1691
      %1949 = vst.msk [vmem:[%s172 + $0x14] sm:$0xf] %vm1943, %v1692
      %1950 = vst.msk [vmem:[%s172 + $0x18] sm:$0xf] %vm1943, %v1693
      %1951 = vst.msk [vmem:[%s172 + $0x1c] sm:$0xf] %vm1943, %v1694
      %1952 = vst.msk [vmem:[%s172 + $0x20] sm:$0xf] %vm1943, %v1695
      %1953 = vst.msk [vmem:[%s172 + $0x24] sm:$0xf] %vm1943, %v1696
      %1954 = vst.msk [vmem:[%s172 + $0x28] sm:$0xf] %vm1943, %v1697
      %1955 = vst.msk [vmem:[%s172 + $0x2c] sm:$0xf] %vm1943, %v1698
      %1956 = vst.msk [vmem:[%s172 + $0x30] sm:$0xf] %vm1943, %v1699
      %1957 = vst.msk [vmem:[%s172 + $0x34] sm:$0xf] %vm1943, %v1700
      %1958 = vst.msk [vmem:[%s172 + $0x38] sm:$0xf] %vm1943, %v1701
      %1959 = vst.msk [vmem:[%s172 + $0x3c] sm:$0xf] %vm1943, %v1702
      %1960 = vst.msk [vmem:[%s172 + $0x40] sm:$0xf] %vm1943, %v1703
      %1961 = vst.msk [vmem:[%s172 + $0x44] sm:$0xf] %vm1943, %v1704
      %1962 = vst.msk [vmem:[%s172 + $0x48] sm:$0xf] %vm1943, %v1705
      %1963 = vst.msk [vmem:[%s172 + $0x4c] sm:$0xf] %vm1943, %v1706
      %1964 = vst.msk [vmem:[%s172 + $0x50] sm:$0xf] %vm1943, %v1707
      %1965 = vst.msk [vmem:[%s172 + $0x54] sm:$0xf] %vm1943, %v1708
      %1966 = vst.msk [vmem:[%s172 + $0x58] sm:$0xf] %vm1943, %v1709
      %1967 = vst.msk [vmem:[%s172 + $0x5c] sm:$0xf] %vm1943, %v1710
      %1968 = vst.msk [vmem:[%s172 + $0x60] sm:$0xf] %vm1943, %v1711
      %1969 = vst.msk [vmem:[%s172 + $0x64] sm:$0xf] %vm1943, %v1712
      %1970 = vst.msk [vmem:[%s172 + $0x68] sm:$0xf] %vm1943, %v1713
      %1971 = vst.msk [vmem:[%s172 + $0x6c] sm:$0xf] %vm1943, %v1714
      %1972 = vst.msk [vmem:[%s172 + $0x70] sm:$0xf] %vm1943, %v1715
      %1973 = vst.msk [vmem:[%s172 + $0x74] sm:$0xf] %vm1943, %v1716
      %1974 = vst.msk [vmem:[%s172 + $0x78] sm:$0xf] %vm1943, %v1717
      %1975 = vst.msk [vmem:[%s172 + $0x7c] sm:$0xf] %vm1943, %v1718
      %1976 = vst.msk [vmem:[%s172 + $0x80] sm:$0xf] %vm1943, %v1719
      %1977 = vst.msk [vmem:[%s172 + $0x84] sm:$0xf] %vm1943, %v1720
      %1978 = vst.msk [vmem:[%s172 + $0x88] sm:$0xf] %vm1943, %v1721
      %1979 = vst.msk [vmem:[%s172 + $0x8c] sm:$0xf] %vm1943, %v1722
      %1980 = vst.msk [vmem:[%s172 + $0x90] sm:$0xf] %vm1943, %v1723
      %1981 = vst.msk [vmem:[%s172 + $0x94] sm:$0xf] %vm1943, %v1724
      %1982 = vst.msk [vmem:[%s172 + $0x98] sm:$0xf] %vm1943, %v1725
      %1983 = vst.msk [vmem:[%s172 + $0x9c] sm:$0xf] %vm1943, %v1726
      %1984 = vst.msk [vmem:[%s172 + $0xa0] sm:$0xf] %vm1943, %v1727
      %1985 = vst.msk [vmem:[%s172 + $0xa4] sm:$0xf] %vm1943, %v1728
      %1986 = vst.msk [vmem:[%s172 + $0xa8] sm:$0xf] %vm1943, %v1729
      %1987 = vst.msk [vmem:[%s172 + $0xac] sm:$0xf] %vm1943, %v1730
      %1988 = vst.msk [vmem:[%s172 + $0xb0] sm:$0xf] %vm1943, %v1731
      %1989 = vst.msk [vmem:[%s172 + $0xb4] sm:$0xf] %vm1943, %v1732
      %1990 = vst.msk [vmem:[%s172 + $0xb8] sm:$0xf] %vm1943, %v1733
      %1991 = vst.msk [vmem:[%s172 + $0xbc] sm:$0xf] %vm1943, %v1734
      %1992 = vst.msk [vmem:[%s172 + $0xc0] sm:$0xf] %vm1943, %v1735
      %1993 = vst.msk [vmem:[%s172 + $0xc4] sm:$0xf] %vm1943, %v1736
      %1994 = vst.msk [vmem:[%s172 + $0xc8] sm:$0xf] %vm1943, %v1737
      %1995 = vst.msk [vmem:[%s172 + $0xcc] sm:$0xf] %vm1943, %v1738
      %1996 = vst.msk [vmem:[%s172 + $0xd0] sm:$0xf] %vm1943, %v1739
      %1997 = vst.msk [vmem:[%s172 + $0xd4] sm:$0xf] %vm1943, %v1740
      %1998 = vst.msk [vmem:[%s172 + $0xd8] sm:$0xf] %vm1943, %v1741
      %1999 = vst.msk [vmem:[%s172 + $0xdc] sm:$0xf] %vm1943, %v1742
      %2000 = vst.msk [vmem:[%s172 + $0xe0] sm:$0xf] %vm1943, %v1743
      %2001 = vst.msk [vmem:[%s172 + $0xe4] sm:$0xf] %vm1943, %v1744
      %2002 = vst.msk [vmem:[%s172 + $0xe8] sm:$0xf] %vm1943, %v1745
      %2003 = vst.msk [vmem:[%s172 + $0xec] sm:$0xf] %vm1943, %v1746
      %2004 = vst.msk [vmem:[%s172 + $0xf0] sm:$0xf] %vm1943, %v1747
      %2005 = vst.msk [vmem:[%s172 + $0xf4] sm:$0xf] %vm1943, %v1748
      %2006 = vst.msk [vmem:[%s172 + $0xf8] sm:$0xf] %vm1943, %v1749
      %2007 = vst.msk [vmem:[%s172 + $0xfc] sm:$0xf] %vm1943, %v1750
      %2008 = vst.msk [vmem:[%s172 + $0x100] sm:$0xf] %vm1943, %v1751
      %2009 = vst.msk [vmem:[%s172 + $0x104] sm:$0xf] %vm1943, %v1752
      %2010 = vst.msk [vmem:[%s172 + $0x108] sm:$0xf] %vm1943, %v1753
      %2011 = vst.msk [vmem:[%s172 + $0x10c] sm:$0xf] %vm1943, %v1754
      %2012 = vst.msk [vmem:[%s172 + $0x110] sm:$0xf] %vm1943, %v1755
      %2013 = vst.msk [vmem:[%s172 + $0x114] sm:$0xf] %vm1943, %v1756
      %2014 = vst.msk [vmem:[%s172 + $0x118] sm:$0xf] %vm1943, %v1757
      %2015 = vst.msk [vmem:[%s172 + $0x11c] sm:$0xf] %vm1943, %v1758
      %2016 = vst.msk [vmem:[%s172 + $0x120] sm:$0xf] %vm1943, %v1759
      %2017 = vst.msk [vmem:[%s172 + $0x124] sm:$0xf] %vm1943, %v1760
      %2018 = vst.msk [vmem:[%s172 + $0x128] sm:$0xf] %vm1943, %v1761
      %2019 = vst.msk [vmem:[%s172 + $0x12c] sm:$0xf] %vm1943, %v1762
      %2020 = vst.msk [vmem:[%s172 + $0x130] sm:$0xf] %vm1943, %v1763
      %2021 = vst.msk [vmem:[%s172 + $0x134] sm:$0xf] %vm1943, %v1764
      %2022 = vst.msk [vmem:[%s172 + $0x138] sm:$0xf] %vm1943, %v1765
      %2023 = vst.msk [vmem:[%s172 + $0x13c] sm:$0xf] %vm1943, %v1766
      %2024 = vst.msk [vmem:[%s172 + $0x140] sm:$0xf] %vm1943, %v1767
      %2025 = vst.msk [vmem:[%s172 + $0x144] sm:$0xf] %vm1943, %v1768
      %2026 = vst.msk [vmem:[%s172 + $0x148] sm:$0xf] %vm1943, %v1769
      %2027 = vst.msk [vmem:[%s172 + $0x14c] sm:$0xf] %vm1943, %v1770
      %2028 = vst.msk [vmem:[%s172 + $0x150] sm:$0xf] %vm1943, %v1771
      %2029 = vst.msk [vmem:[%s172 + $0x154] sm:$0xf] %vm1943, %v1772
      %2030 = vst.msk [vmem:[%s172 + $0x158] sm:$0xf] %vm1943, %v1773
      %2031 = vst.msk [vmem:[%s172 + $0x15c] sm:$0xf] %vm1943, %v1774
      %2032 = vst.msk [vmem:[%s172 + $0x160] sm:$0xf] %vm1943, %v1775
      %2033 = vst.msk [vmem:[%s172 + $0x164] sm:$0xf] %vm1943, %v1776
      %2034 = vst.msk [vmem:[%s172 + $0x168] sm:$0xf] %vm1943, %v1777
      %2035 = vst.msk [vmem:[%s172 + $0x16c] sm:$0xf] %vm1943, %v1778
      %2036 = vst.msk [vmem:[%s172 + $0x170] sm:$0xf] %vm1943, %v1779
      %2037 = vst.msk [vmem:[%s172 + $0x174] sm:$0xf] %vm1943, %v1780
      %2038 = vst.msk [vmem:[%s172 + $0x178] sm:$0xf] %vm1943, %v1781
      %2039 = vst.msk [vmem:[%s172 + $0x17c] sm:$0xf] %vm1943, %v1782
      %2040 = vst.msk [vmem:[%s172 + $0x180] sm:$0xf] %vm1943, %v1783
      %2041 = vst.msk [vmem:[%s172 + $0x184] sm:$0xf] %vm1943, %v1784
      %2042 = vst.msk [vmem:[%s172 + $0x188] sm:$0xf] %vm1943, %v1785
      %2043 = vst.msk [vmem:[%s172 + $0x18c] sm:$0xf] %vm1943, %v1786
      %2044 = vst.msk [vmem:[%s172 + $0x190] sm:$0xf] %vm1943, %v1787
      %2045 = vst.msk [vmem:[%s172 + $0x194] sm:$0xf] %vm1943, %v1788
      %2046 = vst.msk [vmem:[%s172 + $0x198] sm:$0xf] %vm1943, %v1789
      %2047 = vst.msk [vmem:[%s172 + $0x19c] sm:$0xf] %vm1943, %v1790
      %2048 = vst.msk [vmem:[%s172 + $0x1a0] sm:$0xf] %vm1943, %v1791
      %2049 = vst.msk [vmem:[%s172 + $0x1a4] sm:$0xf] %vm1943, %v1792
      %2050 = vst.msk [vmem:[%s172 + $0x1a8] sm:$0xf] %vm1943, %v1793
      %2051 = vst.msk [vmem:[%s172 + $0x1ac] sm:$0xf] %vm1943, %v1794
      %2052 = vst.msk [vmem:[%s172 + $0x1b0] sm:$0xf] %vm1943, %v1795
      %2053 = vst.msk [vmem:[%s172 + $0x1b4] sm:$0xf] %vm1943, %v1796
      %2054 = vst.msk [vmem:[%s172 + $0x1b8] sm:$0xf] %vm1943, %v1797
      %2055 = vst.msk [vmem:[%s172 + $0x1bc] sm:$0xf] %vm1943, %v1798
      %2056 = vst.msk [vmem:[%s172 + $0x1c0] sm:$0xf] %vm1943, %v1799
      %2057 = vst.msk [vmem:[%s172 + $0x1c4] sm:$0xf] %vm1943, %v1800
      %2058 = vst.msk [vmem:[%s172 + $0x1c8] sm:$0xf] %vm1943, %v1801
      %2059 = vst.msk [vmem:[%s172 + $0x1cc] sm:$0xf] %vm1943, %v1802
      %2060 = vst.msk [vmem:[%s172 + $0x1d0] sm:$0xf] %vm1943, %v1803
      %2061 = vst.msk [vmem:[%s172 + $0x1d4] sm:$0xf] %vm1943, %v1804
      %2062 = vst.msk [vmem:[%s172 + $0x1d8] sm:$0xf] %vm1943, %v1805
      %2063 = vst.msk [vmem:[%s172 + $0x1dc] sm:$0xf] %vm1943, %v1806
      %2064 = vst.msk [vmem:[%s172 + $0x1e0] sm:$0xf] %vm1943, %v1807
      %2065 = vst.msk [vmem:[%s172 + $0x1e4] sm:$0xf] %vm1943, %v1808
      %2066 = vst.msk [vmem:[%s172 + $0x1e8] sm:$0xf] %vm1943, %v1809
      %2067 = vst.msk [vmem:[%s172 + $0x1ec] sm:$0xf] %vm1943, %v1810
      %2068 = vst.msk [vmem:[%s172 + $0x1f0] sm:$0xf] %vm1943, %v1811
      %2069 = vst.msk [vmem:[%s172 + $0x1f4] sm:$0xf] %vm1943, %v1812
      %2070 = vst.msk [vmem:[%s172 + $0x1f8] sm:$0xf] %vm1943, %v1813
      %2071 = vst.msk [vmem:[%s172 + $0x1fc] sm:$0xf] %vm1943, %v1814
      %s2072 = smul.u32 128, %s14
      %p2073 = scmp.lt.s32.totalorder %s2072, 255
      %s2074 = scalar_select %p2073, %s2072, 255
      %s2075 = smul.addr %s2074, 4
      %s2076 = scalar_lea.vmem %s3, %s2075
      // Predicated region
      $region33: #{faster_rcnn_kd_forward.3} parent=31 // pred_check
        %p2077 = pneg %p100
      $region34: #{faster_rcnn_kd_forward.3} parent=31 // pred_check_branch
        %2079 = sbr.rel (%p2077) target = $region36
      $region35: #{faster_rcnn_kd_forward.3} parent=31 // pred_region
        %s2080 = smul.u32 128, %s14
      $region36: #{faster_rcnn_kd_forward.3} parent=31 // pred_fallthru
        _
    $region32: #{faster_rcnn_kd_forward.3} parent=5 // pred_fallthru
      _
    %p2081 = scmp.le.s32.totalorder 2, %s9
    // Predicated region
    $region37: #{faster_rcnn_kd_forward.3} parent=5 // pred_check
      %p2082 = pneg %p2081
    $region38: #{faster_rcnn_kd_forward.3} parent=5 // pred_check_branch
      %2084 = sbr.rel (%p2082) target = $region40
    $region39: #{faster_rcnn_kd_forward.3} parent=5 // pred_region
      %s2085 = ssub.s32 %s9, 2
      // Predicated region
      $region41: #{faster_rcnn_kd_forward.3} parent=39 // pred_check
        %p2086 = pneg %p106
      $region42: #{faster_rcnn_kd_forward.3} parent=39 // pred_check_branch
        %2088 = sbr.rel (%p2086) target = $region44
      $region43: #{faster_rcnn_kd_forward.3} parent=39 // pred_region
        %s2089 = smul.u32 128, %s15
        %p2090 = scmp.lt.s32.totalorder %s2089, 255
        %s2091 = scalar_select %p2090, %s2089, 255
        %s2092 = smul.addr %s2091, 4
        %s2093 = scalar_lea.vmem %s3, %s2092
      $region44: #{faster_rcnn_kd_forward.3} parent=39 // pred_fallthru
        _
    $region40: #{faster_rcnn_kd_forward.3} parent=5 // pred_fallthru
      _
  $region6: #{faster_rcnn_kd_forward.3} parent=0 // loop_footer
    %s13 = sadd.s32 1, %s9
  $region7: #{faster_rcnn_kd_forward.3} parent=0 // loop_footer_branch
    %8 = sbr.rel target = $region3
  $region8: #{faster_rcnn_kd_forward.3} parent=0 // loop_exit
    _

// kernel: faster_rcnn_kd_forward.5
$region0: #{faster_rcnn_kd_forward.5}
  #allocation0 [shape = 'u32[]', space=smem, size = 0x4, offset = 0x4, fixed_abs, tag = 'smem constant byte address 0x4 - core index']
  #allocation1 [shape = 'u32[144,128]{1,0:T(1,128)}', space=vmem, size = 0x12000, scoped, tag = 'internal scratch']
  #allocation2 [shape = 'f32[1,1]{1,0:T(1,128)S(1)}', space=vmem, size = 0x200, scoped, tag = 'scoped memory for faster_rcnn_kd_forward.5']
  %s0 = inlined_call_operand.vmem [shape: bf16[8,256], index: 0, kind: input, shape index: {}]
  %s1 = inlined_call_operand.vmem [shape: bf16[8,256], index: 1, kind: input, shape index: {}]
  %s2 = inlined_call_operand.vmem [shape: bf16[256,32], index: 2, kind: input, shape index: {}]
  %s3 = inlined_call_operand.vmem [shape: f32[1,32], index: 3, kind: input, shape index: {}]
  %s4 = inlined_call_operand.vmem [shape: bf16[32,32], index: 4, kind: input, shape index: {}]
  %s5 = inlined_call_operand.vmem [shape: f32[1,32], index: 5, kind: input, shape index: {}]
  %s6 = inlined_call_operand.vmem [shape: bf16[32,128], index: 6, kind: input, shape index: {}]
  %s7 = inlined_call_operand.vmem [shape: f32[1,128], index: 7, kind: input, shape index: {}]
  %s8 = inlined_call_operand.vmem [shape: bf16[256,32], index: 8, kind: input, shape index: {}]
  %s9 = inlined_call_operand.vmem [shape: f32[1,32], index: 9, kind: input, shape index: {}]
  %s10 = inlined_call_operand.vmem [shape: bf16[32,32], index: 10, kind: input, shape index: {}]
  %s11 = inlined_call_operand.vmem [shape: f32[1,32], index: 11, kind: input, shape index: {}]
  %s12 = inlined_call_operand.<no memory space> [shape: f32[1,1], index: 12, kind: input, shape index: {}]
  %s13 = inlined_call_operand.vmem [shape: f32[8,128], index: 13, kind: output, shape index: {0}]
  %s14 = inlined_call_operand.hbm [shape: f32[1,1], index: 14, kind: output, shape index: {1}]
  %15 = xla_tuple %s13, %s14
  %s16 = sld [smem:[#allocation0]]
  $region70: #{faster_rcnn_kd_forward.5} parent=0
    _
  %s18 = ssub.s32 1, %s16
  %s19 = scalar_select 0, %s18, %s16
  %v20 = vstv %s12
  %21 = vst [vmem:[#allocation2] sm:$0x1] %v20
  $region1: #{faster_rcnn_kd_forward.5} parent=0
    #allocation3 [shape = 'u8[512]{0}', space=vmem, size = 0x400, scoped, tag = 'output window, operand 1, single buffered']
    #allocation4 [shape = 's32[1]{0}', space=sflag, size = 0x4, scoped, tag = 'scoped memory for faster_rcnn_kd_forward.5']
    %22 = vsyncpa [#allocation4], 0
    // Predicated region
    $region2: #{faster_rcnn_kd_forward.5} parent=1 // pred_check
      _
    $region3: #{faster_rcnn_kd_forward.5} parent=1 // pred_check_branch
      %24 = sbr.rel (0) target = $region5
    $region4: #{faster_rcnn_kd_forward.5} parent=1 // pred_region
      _
    $region5: #{faster_rcnn_kd_forward.5} parent=1 // pred_fallthru
      _
    // Predicated region
    $region6: #{faster_rcnn_kd_forward.5} parent=1 // pred_check
      _
    $region7: #{faster_rcnn_kd_forward.5} parent=1 // pred_check_branch
      %26 = sbr.rel (0) target = $region9
    $region8: #{faster_rcnn_kd_forward.5} parent=1 // pred_region
      _
    $region9: #{faster_rcnn_kd_forward.5} parent=1 // pred_fallthru
      _
    // Predicated region
    $region10: #{faster_rcnn_kd_forward.5} parent=1 // pred_check
      _
    $region11: #{faster_rcnn_kd_forward.5} parent=1 // pred_check_branch
      %28 = sbr.rel (0) target = $region13
    $region12: #{faster_rcnn_kd_forward.5} parent=1 // pred_region
      _
    $region13: #{faster_rcnn_kd_forward.5} parent=1 // pred_fallthru
      _
    // Predicated region
    $region14: #{faster_rcnn_kd_forward.5} parent=1 // pred_check
      _
    $region15: #{faster_rcnn_kd_forward.5} parent=1 // pred_check_branch
      %30 = sbr.rel (0) target = $region17
    $region16: #{faster_rcnn_kd_forward.5} parent=1 // pred_region
      _
    $region17: #{faster_rcnn_kd_forward.5} parent=1 // pred_fallthru
      _
    // Predicated region
    $region18: #{faster_rcnn_kd_forward.5} parent=1 // pred_check
      _
    $region19: #{faster_rcnn_kd_forward.5} parent=1 // pred_check_branch
      %32 = sbr.rel (0) target = $region21
    $region20: #{faster_rcnn_kd_forward.5} parent=1 // pred_region
      _
    $region21: #{faster_rcnn_kd_forward.5} parent=1 // pred_fallthru
      _
    // Predicated region
    $region22: #{faster_rcnn_kd_forward.5} parent=1 // pred_check
      _
    $region23: #{faster_rcnn_kd_forward.5} parent=1 // pred_check_branch
      %34 = sbr.rel (0) target = $region25
    $region24: #{faster_rcnn_kd_forward.5} parent=1 // pred_region
      _
    $region25: #{faster_rcnn_kd_forward.5} parent=1 // pred_fallthru
      _
    // Predicated region
    $region26: #{faster_rcnn_kd_forward.5} parent=1 // pred_check
      _
    $region27: #{faster_rcnn_kd_forward.5} parent=1 // pred_check_branch
      %36 = sbr.rel (0) target = $region29
    $region28: #{faster_rcnn_kd_forward.5} parent=1 // pred_region
      _
    $region29: #{faster_rcnn_kd_forward.5} parent=1 // pred_fallthru
      _
    // Predicated region
    $region30: #{faster_rcnn_kd_forward.5} parent=1 // pred_check
      _
    $region31: #{faster_rcnn_kd_forward.5} parent=1 // pred_check_branch
      %38 = sbr.rel (0) target = $region33
    $region32: #{faster_rcnn_kd_forward.5} parent=1 // pred_region
      _
    $region33: #{faster_rcnn_kd_forward.5} parent=1 // pred_fallthru
      _
    // Predicated region
    $region34: #{faster_rcnn_kd_forward.5} parent=1 // pred_check
      _
    $region35: #{faster_rcnn_kd_forward.5} parent=1 // pred_check_branch
      %40 = sbr.rel (0) target = $region37
    $region36: #{faster_rcnn_kd_forward.5} parent=1 // pred_region
      _
    $region37: #{faster_rcnn_kd_forward.5} parent=1 // pred_fallthru
      _
    // Predicated region
    $region38: #{faster_rcnn_kd_forward.5} parent=1 // pred_check
      _
    $region39: #{faster_rcnn_kd_forward.5} parent=1 // pred_check_branch
      %42 = sbr.rel (0) target = $region41
    $region40: #{faster_rcnn_kd_forward.5} parent=1 // pred_region
      _
    $region41: #{faster_rcnn_kd_forward.5} parent=1 // pred_fallthru
      _
    // Predicated region
    $region42: #{faster_rcnn_kd_forward.5} parent=1 // pred_check
      _
    $region43: #{faster_rcnn_kd_forward.5} parent=1 // pred_check_branch
      %44 = sbr.rel (0) target = $region45
    $region44: #{faster_rcnn_kd_forward.5} parent=1 // pred_region
      _
    $region45: #{faster_rcnn_kd_forward.5} parent=1 // pred_fallthru
      _
    // Predicated region
    $region46: #{faster_rcnn_kd_forward.5} parent=1 // pred_check
      _
    $region47: #{faster_rcnn_kd_forward.5} parent=1 // pred_check_branch
      %46 = sbr.rel (0) target = $region49
    $region48: #{faster_rcnn_kd_forward.5} parent=1 // pred_region
      _
    $region49: #{faster_rcnn_kd_forward.5} parent=1 // pred_fallthru
      _
    // Predicated region
    $region50: #{faster_rcnn_kd_forward.5} parent=1 // pred_check
      _
    $region51: #{faster_rcnn_kd_forward.5} parent=1 // pred_check_branch
      %48 = sbr.rel (0) target = $region53
    $region52: #{faster_rcnn_kd_forward.5} parent=1 // pred_region
      _
    $region53: #{faster_rcnn_kd_forward.5} parent=1 // pred_fallthru
      _
    %v50 = vld [vmem:[%s0] sm:$0xff]
    %v51 = vld [vmem:[%s2] sm:$0xf]
    %v52 = vld [vmem:[%s2 + $0x4] sm:$0xf]
    %v53 = vld [vmem:[%s2 + $0x8] sm:$0xf]
    %v54 = vld [vmem:[%s2 + $0xc] sm:$0xf]
    %v55 = vld [vmem:[%s2 + $0x10] sm:$0xf]
    %v56 = vld [vmem:[%s2 + $0x14] sm:$0xf]
    %v57 = vld [vmem:[%s2 + $0x18] sm:$0xf]
    %v58 = vld [vmem:[%s2 + $0x1c] sm:$0xf]
    %v59 = vld [vmem:[%s2 + $0x20] sm:$0xf]
    %v60 = vld [vmem:[%s2 + $0x24] sm:$0xf]
    %v61 = vld [vmem:[%s2 + $0x28] sm:$0xf]
    %v62 = vld [vmem:[%s2 + $0x2c] sm:$0xf]
    %v63 = vld [vmem:[%s2 + $0x30] sm:$0xf]
    %v64 = vld [vmem:[%s2 + $0x34] sm:$0xf]
    %v65 = vld [vmem:[%s2 + $0x38] sm:$0xf]
    %v66 = vld [vmem:[%s2 + $0x3c] sm:$0xf]
    %v67 = vld [vmem:[%s2 + $0x40] sm:$0xf]
    %v68 = vld [vmem:[%s2 + $0x44] sm:$0xf]
    %v69 = vld [vmem:[%s2 + $0x48] sm:$0xf]
    %v70 = vld [vmem:[%s2 + $0x4c] sm:$0xf]
    %v71 = vld [vmem:[%s2 + $0x50] sm:$0xf]
    %v72 = vld [vmem:[%s2 + $0x54] sm:$0xf]
    %v73 = vld [vmem:[%s2 + $0x58] sm:$0xf]
    %v74 = vld [vmem:[%s2 + $0x5c] sm:$0xf]
    %v75 = vld [vmem:[%s2 + $0x60] sm:$0xf]
    %v76 = vld [vmem:[%s2 + $0x64] sm:$0xf]
    %v77 = vld [vmem:[%s2 + $0x68] sm:$0xf]
    %v78 = vld [vmem:[%s2 + $0x6c] sm:$0xf]
    %v79 = vld [vmem:[%s2 + $0x70] sm:$0xf]
    %v80 = vld [vmem:[%s2 + $0x74] sm:$0xf]
    %v81 = vld [vmem:[%s2 + $0x78] sm:$0xf]
    %v82 = vld [vmem:[%s2 + $0x7c] sm:$0xf]
    %v83 = vld [vmem:[%s3] sm:$0x1]
    %v85 = vlaneseq
    %v86 = vshrl.u32 %v85, 7
    %v87 = vsub.s32 0, %v86
    %v88 = vrot.slane %v83, %v87
    %v91 = vunpack.c.l.b16 %v50
    %v92 = vunpack.c.h.b16 %v50
    %v93 = vpack.c.b16 %v91, %v91
    %v94 = vpack.c.b16 %v92, %v92
    %v129 = vunpack.c.l.b16 %v51
    %v130 = vunpack.c.l.b16 %v52
    %v131 = vunpack.c.l.b16 %v53
    %v132 = vunpack.c.l.b16 %v54
    %v133 = vunpack.c.l.b16 %v55
    %v134 = vunpack.c.l.b16 %v56
    %v135 = vunpack.c.l.b16 %v57
    %v136 = vunpack.c.l.b16 %v58
    %v137 = vunpack.c.l.b16 %v59
    %v138 = vunpack.c.l.b16 %v60
    %v139 = vunpack.c.l.b16 %v61
    %v140 = vunpack.c.l.b16 %v62
    %v141 = vunpack.c.l.b16 %v63
    %v142 = vunpack.c.l.b16 %v64
    %v143 = vunpack.c.l.b16 %v65
    %v144 = vunpack.c.l.b16 %v66
    %v145 = vunpack.c.l.b16 %v67
    %v146 = vunpack.c.l.b16 %v68
    %v147 = vunpack.c.l.b16 %v69
    %v148 = vunpack.c.l.b16 %v70
    %v149 = vunpack.c.l.b16 %v71
    %v150 = vunpack.c.l.b16 %v72
    %v151 = vunpack.c.l.b16 %v73
    %v152 = vunpack.c.l.b16 %v74
    %v153 = vunpack.c.l.b16 %v75
    %v154 = vunpack.c.l.b16 %v76
    %v155 = vunpack.c.l.b16 %v77
    %v156 = vunpack.c.l.b16 %v78
    %v157 = vunpack.c.l.b16 %v79
    %v158 = vunpack.c.l.b16 %v80
    %v159 = vunpack.c.l.b16 %v81
    %v160 = vunpack.c.l.b16 %v82
    %v161 = vpack.c.b16 %v130, %v129
    %v162 = vpack.c.b16 %v132, %v131
    %v163 = vpack.c.b16 %v134, %v133
    %v164 = vpack.c.b16 %v136, %v135
    %v165 = vpack.c.b16 %v138, %v137
    %v166 = vpack.c.b16 %v140, %v139
    %v167 = vpack.c.b16 %v142, %v141
    %v168 = vpack.c.b16 %v144, %v143
    %v169 = vpack.c.b16 %v146, %v145
    %v170 = vpack.c.b16 %v148, %v147
    %v171 = vpack.c.b16 %v150, %v149
    %v172 = vpack.c.b16 %v152, %v151
    %v173 = vpack.c.b16 %v154, %v153
    %v174 = vpack.c.b16 %v156, %v155
    %v175 = vpack.c.b16 %v158, %v157
    %v176 = vpack.c.b16 %v160, %v159
    %193 = vmatprep.subr.bf16.mxu0 0
    %194 = vmatpush1.bf16.msra.mxu0 %v161
    %195 = vmatprep.subr.bf16.mxu0 0
    %196 = vmatpush1.bf16.msra.mxu0 %v162
    %197 = vmatprep.subr.bf16.mxu0 0
    %198 = vmatpush1.bf16.msra.mxu0 %v163
    %199 = vmatprep.subr.bf16.mxu0 0
    %200 = vmatpush1.bf16.msra.mxu0 %v164
    %201 = vmatprep.subr.bf16.mxu0 0
    %202 = vmatpush1.bf16.msra.mxu0 %v165
    %203 = vmatprep.subr.bf16.mxu0 0
    %204 = vmatpush1.bf16.msra.mxu0 %v166
    %205 = vmatprep.subr.bf16.mxu0 0
    %206 = vmatpush1.bf16.msra.mxu0 %v167
    %207 = vmatprep.subr.bf16.mxu0 0
    %208 = vmatpush1.bf16.msra.mxu0 %v168
    %209 = vmatprep.subr.bf16.mxu0 0
    %210 = vmatpush1.bf16.msra.mxu0 %v169
    %211 = vmatprep.subr.bf16.mxu0 0
    %212 = vmatpush1.bf16.msra.mxu0 %v170
    %213 = vmatprep.subr.bf16.mxu0 0
    %214 = vmatpush1.bf16.msra.mxu0 %v171
    %215 = vmatprep.subr.bf16.mxu0 0
    %216 = vmatpush1.bf16.msra.mxu0 %v172
    %217 = vmatprep.subr.bf16.mxu0 0
    %218 = vmatpush1.bf16.msra.mxu0 %v173
    %219 = vmatprep.subr.bf16.mxu0 0
    %220 = vmatpush1.bf16.msra.mxu0 %v174
    %221 = vmatprep.subr.bf16.mxu0 0
    %222 = vmatpush1.bf16.msra.mxu0 %v175
    %223 = vmatprep.subr.bf16.mxu0 0
    %224 = vmatpush1.bf16.msra.mxu0 %v176
    %225 = vmatprep.mubr.bf16.mxu0 %v94
    %226 = vmatmul.mubr.bf16.gmra.mrb[0].mxu0 %v93
    %v227 = vpop.f32.mrb[0].mxu0
    %v228 = vadd.f32 %v88, %v227
    %v229 = vpop.f32.mrb[0].mxu0
    %v230 = vpop.f32.mrb[0].mxu0
    %v231 = vpop.f32.mrb[0].mxu0
    %232 = vdwg.mxu0
    %v233 = vmax.f32 %v228, 0.0
    %v234 = vpack.c.bf16 %v233, %v233
    %v235 = vld [vmem:[%s4] sm:$0xf]
    %v236 = vld [vmem:[%s4 + $0x4] sm:$0xf]
    %v237 = vld [vmem:[%s4 + $0x8] sm:$0xf]
    %v238 = vld [vmem:[%s4 + $0xc] sm:$0xf]
    %v239 = vld [vmem:[%s5] sm:$0x1]
    %v241 = vlaneseq
    %v242 = vshrl.u32 %v241, 7
    %v243 = vsub.s32 0, %v242
    %v244 = vrot.slane %v239, %v243
    %v250 = vunpack.c.l.b16 %v235
    %v251 = vunpack.c.l.b16 %v236
    %v252 = vunpack.c.l.b16 %v237
    %v253 = vunpack.c.l.b16 %v238
    %v254 = vpack.c.b16 %v251, %v250
    %v255 = vpack.c.b16 %v253, %v252
    %vm258 = vcmask 261120
    %v260 = vsel %vm258, %v234, 0
    %262 = vmatprep.subr.bf16.mxu0 0
    %263 = vmatpush1.bf16.msra.mxu0 %v254
    %264 = vmatprep.subr.bf16.mxu0 0
    %265 = vmatpush1.bf16.msra.mxu0 %v255
    %266 = vmatprep.subr.bf16.mxu0 0
    %267 = vmatpush1.bf16.msra.mxu0 0
    %268 = vmatprep.subr.bf16.mxu0 0
    %269 = vmatpush1.bf16.msra.mxu0 0
    %270 = vmatprep.subr.bf16.mxu0 0
    %271 = vmatpush1.bf16.msra.mxu0 0
    %272 = vmatprep.subr.bf16.mxu0 0
    %273 = vmatpush1.bf16.msra.mxu0 0
    %274 = vmatprep.subr.bf16.mxu0 0
    %275 = vmatpush1.bf16.msra.mxu0 0
    %276 = vmatprep.subr.bf16.mxu0 0
    %277 = vmatpush1.bf16.msra.mxu0 0
    %278 = vmatprep.subr.bf16.mxu0 0
    %279 = vmatpush1.bf16.msra.mxu0 0
    %280 = vmatprep.subr.bf16.mxu0 0
    %281 = vmatpush1.bf16.msra.mxu0 0
    %282 = vmatprep.subr.bf16.mxu0 0
    %283 = vmatpush1.bf16.msra.mxu0 0
    %284 = vmatprep.subr.bf16.mxu0 0
    %285 = vmatpush1.bf16.msra.mxu0 0
    %286 = vmatprep.subr.bf16.mxu0 0
    %287 = vmatpush1.bf16.msra.mxu0 0
    %288 = vmatprep.subr.bf16.mxu0 0
    %289 = vmatpush1.bf16.msra.mxu0 0
    %290 = vmatprep.subr.bf16.mxu0 0
    %291 = vmatpush1.bf16.msra.mxu0 0
    %292 = vmatprep.subr.bf16.mxu0 0
    %293 = vmatpush1.bf16.msra.mxu0 0
    %294 = vmatprep.mubr.bf16.mxu0 0
    %295 = vmatmul.mubr.bf16.gmra.mrb[0].mxu0 %v260
    %v296 = vpop.f32.mrb[0].mxu0
    %v297 = vadd.f32 %v244, %v296
    %v298 = vpop.f32.mrb[0].mxu0
    %v299 = vpop.f32.mrb[0].mxu0
    %v300 = vpop.f32.mrb[0].mxu0
    %301 = vdwg.mxu0
    %v302 = vmax.f32 %v297, 0.0
    %v303 = vpack.c.bf16 %v302, %v302
    %v304 = vld [vmem:[%s6] sm:$0xf]
    %v305 = vld [vmem:[%s6 + $0x4] sm:$0xf]
    %v306 = vld [vmem:[%s6 + $0x8] sm:$0xf]
    %v307 = vld [vmem:[%s6 + $0xc] sm:$0xf]
    %v308 = vld [vmem:[%s7] sm:$0x1]
    %v310 = vlaneseq
    %v311 = vshrl.u32 %v310, 7
    %v312 = vsub.s32 0, %v311
    %v313 = vrot.slane %v308, %v312
    %v319 = vunpack.c.l.b16 %v304
    %v320 = vunpack.c.l.b16 %v305
    %v321 = vunpack.c.l.b16 %v306
    %v322 = vunpack.c.l.b16 %v307
    %v323 = vpack.c.b16 %v320, %v319
    %v324 = vpack.c.b16 %v322, %v321
    %v328 = vsel %vm258, %v303, 0
    %330 = vmatprep.subr.bf16.mxu0 0
    %331 = vmatpush1.bf16.msra.mxu0 %v323
    %332 = vmatprep.subr.bf16.mxu0 0
    %333 = vmatpush1.bf16.msra.mxu0 %v324
    %334 = vmatprep.subr.bf16.mxu0 0
    %335 = vmatpush1.bf16.msra.mxu0 0
    %336 = vmatprep.subr.bf16.mxu0 0
    %337 = vmatpush1.bf16.msra.mxu0 0
    %338 = vmatprep.subr.bf16.mxu0 0
    %339 = vmatpush1.bf16.msra.mxu0 0
    %340 = vmatprep.subr.bf16.mxu0 0
    %341 = vmatpush1.bf16.msra.mxu0 0
    %342 = vmatprep.subr.bf16.mxu0 0
    %343 = vmatpush1.bf16.msra.mxu0 0
    %344 = vmatprep.subr.bf16.mxu0 0
    %345 = vmatpush1.bf16.msra.mxu0 0
    %346 = vmatprep.subr.bf16.mxu0 0
    %347 = vmatpush1.bf16.msra.mxu0 0
    %348 = vmatprep.subr.bf16.mxu0 0
    %349 = vmatpush1.bf16.msra.mxu0 0
    %350 = vmatprep.subr.bf16.mxu0 0
    %351 = vmatpush1.bf16.msra.mxu0 0
    %352 = vmatprep.subr.bf16.mxu0 0
    %353 = vmatpush1.bf16.msra.mxu0 0
    %354 = vmatprep.subr.bf16.mxu0 0
    %355 = vmatpush1.bf16.msra.mxu0 0
    %356 = vmatprep.subr.bf16.mxu0 0
    %357 = vmatpush1.bf16.msra.mxu0 0
    %358 = vmatprep.subr.bf16.mxu0 0
    %359 = vmatpush1.bf16.msra.mxu0 0
    %360 = vmatprep.subr.bf16.mxu0 0
    %361 = vmatpush1.bf16.msra.mxu0 0
    %362 = vmatprep.mubr.bf16.mxu0 0
    %363 = vmatmul.mubr.bf16.gmra.mrb[0].mxu0 %v328
    %v364 = vpop.f32.mrb[0].mxu0
    %v365 = vadd.f32 %v313, %v364
    %v366 = vpop.f32.mrb[0].mxu0
    %v367 = vpop.f32.mrb[0].mxu0
    %v368 = vpop.f32.mrb[0].mxu0
    %369 = vdwg.mxu0
    %370 = vst [vmem:[%s13] sm:$0xff] %v365
    %v371 = vld [vmem:[%s1] sm:$0xff]
    %v372 = vld [vmem:[%s8] sm:$0xf]
    %v373 = vld [vmem:[%s8 + $0x4] sm:$0xf]
    %v374 = vld [vmem:[%s8 + $0x8] sm:$0xf]
    %v375 = vld [vmem:[%s8 + $0xc] sm:$0xf]
    %v376 = vld [vmem:[%s8 + $0x10] sm:$0xf]
    %v377 = vld [vmem:[%s8 + $0x14] sm:$0xf]
    %v378 = vld [vmem:[%s8 + $0x18] sm:$0xf]
    %v379 = vld [vmem:[%s8 + $0x1c] sm:$0xf]
    %v380 = vld [vmem:[%s8 + $0x20] sm:$0xf]
    %v381 = vld [vmem:[%s8 + $0x24] sm:$0xf]
    %v382 = vld [vmem:[%s8 + $0x28] sm:$0xf]
    %v383 = vld [vmem:[%s8 + $0x2c] sm:$0xf]
    %v384 = vld [vmem:[%s8 + $0x30] sm:$0xf]
    %v385 = vld [vmem:[%s8 + $0x34] sm:$0xf]
    %v386 = vld [vmem:[%s8 + $0x38] sm:$0xf]
    %v387 = vld [vmem:[%s8 + $0x3c] sm:$0xf]
    %v388 = vld [vmem:[%s8 + $0x40] sm:$0xf]
    %v389 = vld [vmem:[%s8 + $0x44] sm:$0xf]
    %v390 = vld [vmem:[%s8 + $0x48] sm:$0xf]
    %v391 = vld [vmem:[%s8 + $0x4c] sm:$0xf]
    %v392 = vld [vmem:[%s8 + $0x50] sm:$0xf]
    %v393 = vld [vmem:[%s8 + $0x54] sm:$0xf]
    %v394 = vld [vmem:[%s8 + $0x58] sm:$0xf]
    %v395 = vld [vmem:[%s8 + $0x5c] sm:$0xf]
    %v396 = vld [vmem:[%s8 + $0x60] sm:$0xf]
    %v397 = vld [vmem:[%s8 + $0x64] sm:$0xf]
    %v398 = vld [vmem:[%s8 + $0x68] sm:$0xf]
    %v399 = vld [vmem:[%s8 + $0x6c] sm:$0xf]
    %v400 = vld [vmem:[%s8 + $0x70] sm:$0xf]
    %v401 = vld [vmem:[%s8 + $0x74] sm:$0xf]
    %v402 = vld [vmem:[%s8 + $0x78] sm:$0xf]
    %v403 = vld [vmem:[%s8 + $0x7c] sm:$0xf]
    %v404 = vld [vmem:[%s9] sm:$0x1]
    %v406 = vlaneseq
    %v407 = vshrl.u32 %v406, 7
    %v408 = vsub.s32 0, %v407
    %v409 = vrot.slane %v404, %v408
    %v412 = vunpack.c.l.b16 %v371
    %v413 = vunpack.c.h.b16 %v371
    %v414 = vpack.c.b16 %v412, %v412
    %v415 = vpack.c.b16 %v413, %v413
    %v450 = vunpack.c.l.b16 %v372
    %v451 = vunpack.c.l.b16 %v373
    %v452 = vunpack.c.l.b16 %v374
    %v453 = vunpack.c.l.b16 %v375
    %v454 = vunpack.c.l.b16 %v376
    %v455 = vunpack.c.l.b16 %v377
    %v456 = vunpack.c.l.b16 %v378
    %v457 = vunpack.c.l.b16 %v379
    %v458 = vunpack.c.l.b16 %v380
    %v459 = vunpack.c.l.b16 %v381
    %v460 = vunpack.c.l.b16 %v382
    %v461 = vunpack.c.l.b16 %v383
    %v462 = vunpack.c.l.b16 %v384
    %v463 = vunpack.c.l.b16 %v385
    %v464 = vunpack.c.l.b16 %v386
    %v465 = vunpack.c.l.b16 %v387
    %v466 = vunpack.c.l.b16 %v388
    %v467 = vunpack.c.l.b16 %v389
    %v468 = vunpack.c.l.b16 %v390
    %v469 = vunpack.c.l.b16 %v391
    %v470 = vunpack.c.l.b16 %v392
    %v471 = vunpack.c.l.b16 %v393
    %v472 = vunpack.c.l.b16 %v394
    %v473 = vunpack.c.l.b16 %v395
    %v474 = vunpack.c.l.b16 %v396
    %v475 = vunpack.c.l.b16 %v397
    %v476 = vunpack.c.l.b16 %v398
    %v477 = vunpack.c.l.b16 %v399
    %v478 = vunpack.c.l.b16 %v400
    %v479 = vunpack.c.l.b16 %v401
    %v480 = vunpack.c.l.b16 %v402
    %v481 = vunpack.c.l.b16 %v403
    %v482 = vpack.c.b16 %v451, %v450
    %v483 = vpack.c.b16 %v453, %v452
    %v484 = vpack.c.b16 %v455, %v454
    %v485 = vpack.c.b16 %v457, %v456
    %v486 = vpack.c.b16 %v459, %v458
    %v487 = vpack.c.b16 %v461, %v460
    %v488 = vpack.c.b16 %v463, %v462
    %v489 = vpack.c.b16 %v465, %v464
    %v490 = vpack.c.b16 %v467, %v466
    %v491 = vpack.c.b16 %v469, %v468
    %v492 = vpack.c.b16 %v471, %v470
    %v493 = vpack.c.b16 %v473, %v472
    %v494 = vpack.c.b16 %v475, %v474
    %v495 = vpack.c.b16 %v477, %v476
    %v496 = vpack.c.b16 %v479, %v478
    %v497 = vpack.c.b16 %v481, %v480
    %514 = vmatprep.subr.bf16.mxu0 0
    %515 = vmatpush1.bf16.msra.mxu0 %v482
    %516 = vmatprep.subr.bf16.mxu0 0
    %517 = vmatpush1.bf16.msra.mxu0 %v483
    %518 = vmatprep.subr.bf16.mxu0 0
    %519 = vmatpush1.bf16.msra.mxu0 %v484
    %520 = vmatprep.subr.bf16.mxu0 0
    %521 = vmatpush1.bf16.msra.mxu0 %v485
    %522 = vmatprep.subr.bf16.mxu0 0
    %523 = vmatpush1.bf16.msra.mxu0 %v486
    %524 = vmatprep.subr.bf16.mxu0 0
    %525 = vmatpush1.bf16.msra.mxu0 %v487
    %526 = vmatprep.subr.bf16.mxu0 0
    %527 = vmatpush1.bf16.msra.mxu0 %v488
    %528 = vmatprep.subr.bf16.mxu0 0
    %529 = vmatpush1.bf16.msra.mxu0 %v489
    %530 = vmatprep.subr.bf16.mxu0 0
    %531 = vmatpush1.bf16.msra.mxu0 %v490
    %532 = vmatprep.subr.bf16.mxu0 0
    %533 = vmatpush1.bf16.msra.mxu0 %v491
    %534 = vmatprep.subr.bf16.mxu0 0
    %535 = vmatpush1.bf16.msra.mxu0 %v492
    %536 = vmatprep.subr.bf16.mxu0 0
    %537 = vmatpush1.bf16.msra.mxu0 %v493
    %538 = vmatprep.subr.bf16.mxu0 0
    %539 = vmatpush1.bf16.msra.mxu0 %v494
    %540 = vmatprep.subr.bf16.mxu0 0
    %541 = vmatpush1.bf16.msra.mxu0 %v495
    %542 = vmatprep.subr.bf16.mxu0 0
    %543 = vmatpush1.bf16.msra.mxu0 %v496
    %544 = vmatprep.subr.bf16.mxu0 0
    %545 = vmatpush1.bf16.msra.mxu0 %v497
    %546 = vmatprep.mubr.bf16.mxu0 %v415
    %547 = vmatmul.mubr.bf16.gmra.mrb[0].mxu0 %v414
    %v548 = vpop.f32.mrb[0].mxu0
    %v549 = vadd.f32 %v409, %v548
    %v550 = vpop.f32.mrb[0].mxu0
    %v551 = vpop.f32.mrb[0].mxu0
    %v552 = vpop.f32.mrb[0].mxu0
    %553 = vdwg.mxu0
    %v554 = vmax.f32 %v549, 0.0
    %v555 = vpack.c.bf16 %v554, %v554
    %v556 = vld [vmem:[%s10] sm:$0xf]
    %v557 = vld [vmem:[%s10 + $0x4] sm:$0xf]
    %v558 = vld [vmem:[%s10 + $0x8] sm:$0xf]
    %v559 = vld [vmem:[%s10 + $0xc] sm:$0xf]
    %v560 = vld [vmem:[%s11] sm:$0x1]
    %v562 = vlaneseq
    %v563 = vshrl.u32 %v562, 7
    %v564 = vsub.s32 0, %v563
    %v565 = vrot.slane %v560, %v564
    %v571 = vunpack.c.l.b16 %v556
    %v572 = vunpack.c.l.b16 %v557
    %v573 = vunpack.c.l.b16 %v558
    %v574 = vunpack.c.l.b16 %v559
    %v575 = vpack.c.b16 %v572, %v571
    %v576 = vpack.c.b16 %v574, %v573
    %v580 = vsel %vm258, %v555, 0
    %582 = vmatprep.subr.bf16.mxu0 0
    %583 = vmatpush1.bf16.msra.mxu0 %v575
    %584 = vmatprep.subr.bf16.mxu0 0
    %585 = vmatpush1.bf16.msra.mxu0 %v576
    %586 = vmatprep.subr.bf16.mxu0 0
    %587 = vmatpush1.bf16.msra.mxu0 0
    %588 = vmatprep.subr.bf16.mxu0 0
    %589 = vmatpush1.bf16.msra.mxu0 0
    %590 = vmatprep.subr.bf16.mxu0 0
    %591 = vmatpush1.bf16.msra.mxu0 0
    %592 = vmatprep.subr.bf16.mxu0 0
    %593 = vmatpush1.bf16.msra.mxu0 0
    %594 = vmatprep.subr.bf16.mxu0 0
    %595 = vmatpush1.bf16.msra.mxu0 0
    %596 = vmatprep.subr.bf16.mxu0 0
    %597 = vmatpush1.bf16.msra.mxu0 0
    %598 = vmatprep.subr.bf16.mxu0 0
    %599 = vmatpush1.bf16.msra.mxu0 0
    %600 = vmatprep.subr.bf16.mxu0 0
    %601 = vmatpush1.bf16.msra.mxu0 0
    %602 = vmatprep.subr.bf16.mxu0 0
    %603 = vmatpush1.bf16.msra.mxu0 0
    %604 = vmatprep.subr.bf16.mxu0 0
    %605 = vmatpush1.bf16.msra.mxu0 0
    %606 = vmatprep.subr.bf16.mxu0 0
    %607 = vmatpush1.bf16.msra.mxu0 0
    %608 = vmatprep.subr.bf16.mxu0 0
    %609 = vmatpush1.bf16.msra.mxu0 0
    %610 = vmatprep.subr.bf16.mxu0 0
    %611 = vmatpush1.bf16.msra.mxu0 0
    %612 = vmatprep.subr.bf16.mxu0 0
    %613 = vmatpush1.bf16.msra.mxu0 0
    %614 = vmatprep.mubr.bf16.mxu0 0
    %615 = vmatmul.mubr.bf16.gmra.mrb[0].mxu0 %v580
    %v616 = vpop.f32.mrb[0].mxu0
    %v617 = vadd.f32 %v565, %v616
    %v618 = vpop.f32.mrb[0].mxu0
    %v619 = vpop.f32.mrb[0].mxu0
    %v620 = vpop.f32.mrb[0].mxu0
    %621 = vdwg.mxu0
    %v622 = vmax.f32 %v617, 0.0
    %v623 = vsub.f32 %v302, %v622
    %v624 = vmul.f32 %v623, %v623
    %v625 = vsel %vm258, %v624, 0.0
    %626 = vadd.xlane.f32.xlu0 %v625
    %v627 = vpop.xlane.xlu0 %626
    %v628 = vrot.slane %v627, 4
    %v629 = vadd.f32 %v627, %v628
    %v630 = vrot.slane %v629, 2
    %v631 = vadd.f32 %v629, %v630
    %v632 = vrot.slane %v631, 1
    %v633 = vadd.f32 %v631, %v632
    %s634 = vtos %v633
    %v635 = vstv %s634
    %v636 = vld [vmem:[#allocation2] sm:$0x1]
    %v637 = vmul.f32 %v635, %v636
    %v638 = vmul.f32 %v637, 0.00390625
    %vm639 = vcmask 0
    %640 = vst.msk [vmem:[#allocation3] sm:$0x1] %vm639, %v638
    // Predicated region
    $region54: #{faster_rcnn_kd_forward.5} parent=1 // pred_check
      _
    $region55: #{faster_rcnn_kd_forward.5} parent=1 // pred_check_branch
      %642 = sbr.rel (0) target = $region57
    $region56: #{faster_rcnn_kd_forward.5} parent=1 // pred_region
      _
    $region57: #{faster_rcnn_kd_forward.5} parent=1 // pred_fallthru
      _
    // Predicated region
    $region58: #{faster_rcnn_kd_forward.5} parent=1 // pred_check
      _
    $region59: #{faster_rcnn_kd_forward.5} parent=1 // pred_check_branch
      %644 = sbr.rel (0) target = $region61
    $region60: #{faster_rcnn_kd_forward.5} parent=1 // pred_region
      %s646 = ssub.s32 16, 16
      %647 = vsyncadd [#allocation4], %s646
      %s649 = sshll.u32 [#allocation3], 4
      %s650 = int_to_ptr.vmem [resolvable:$true] %s649
      %652 = dma.vmem_to_hbm [thread:$0]  %s650, 16, %s14, [#allocation4]
    $region61: #{faster_rcnn_kd_forward.5} parent=1 // pred_fallthru
      _
    // Predicated region
    $region62: #{faster_rcnn_kd_forward.5} parent=1 // pred_check
      _
    $region63: #{faster_rcnn_kd_forward.5} parent=1 // pred_check_branch
      %654 = sbr.rel (0) target = $region65
    $region64: #{faster_rcnn_kd_forward.5} parent=1 // pred_region
      _
    $region65: #{faster_rcnn_kd_forward.5} parent=1 // pred_fallthru
      _
    // Predicated region
    $region66: #{faster_rcnn_kd_forward.5} parent=1 // pred_check
      _
    $region67: #{faster_rcnn_kd_forward.5} parent=1 // pred_check_branch
      %656 = sbr.rel (0) target = $region69
    $region68: #{faster_rcnn_kd_forward.5} parent=1 // pred_region
      %657 = dma.done [#allocation4], 16
    $region69: #{faster_rcnn_kd_forward.5} parent=1 // pred_fallthru
      _
    %658 = vsyncpa [#allocation4], 1

// kernel: faster_rcnn_kd_forward.4
$region0: #{faster_rcnn_kd_forward.4}
  #allocation0 [shape = 'u32[]', space=smem, size = 0x4, offset = 0x4, fixed_abs, tag = 'smem constant byte address 0x4 - core index']
  #allocation1 [shape = 'u32[144,128]{1,0:T(1,128)}', space=vmem, size = 0x12000, scoped, tag = 'internal scratch']
  %s0 = inlined_call_operand.vmem [shape: bf16[2048,256], index: 0, kind: input, shape index: {}]
  %s1 = inlined_call_operand.vmem [shape: bf16[256,16], index: 1, kind: input, shape index: {}]
  %s2 = inlined_call_operand.vmem [shape: f32[1,16], index: 2, kind: input, shape index: {}]
  %s3 = inlined_call_operand.vmem [shape: bf16[16,3], index: 3, kind: input, shape index: {}]
  %s4 = inlined_call_operand.vmem [shape: f32[1,3], index: 4, kind: input, shape index: {}]
  %s5 = inlined_call_operand.vmem [shape: bf16[16,12], index: 5, kind: input, shape index: {}]
  %s6 = inlined_call_operand.vmem [shape: f32[1,12], index: 6, kind: input, shape index: {}]
  %s7 = inlined_call_operand.hbm [shape: f32[1,1], index: 7, kind: output, shape index: {0}]
  %s8 = inlined_call_operand.hbm [shape: f32[1,1], index: 8, kind: output, shape index: {1}]
  %9 = xla_tuple %s7, %s8
  %s10 = sld [smem:[#allocation0]]
  $region73: #{faster_rcnn_kd_forward.4} parent=0
    _
  %s12 = ssub.s32 1, %s10
  %s13 = scalar_select 0, %s12, %s10
  $region1: #{faster_rcnn_kd_forward.4} parent=0
    #allocation2 [shape = 'u8[512]{0}', space=vmem, size = 0x400, scoped, tag = 'output window, operand 0, single buffered']
    #allocation3 [shape = 's32[2]{0}', space=sflag, size = 0x8, scoped, tag = 'scoped memory for faster_rcnn_kd_forward.4']
    #allocation4 [shape = 'u8[512]{0}', space=vmem, size = 0x400, scoped, tag = 'output window, operand 1, single buffered']
    #allocation5 [shape = 's32[1]{0}', space=sflag, size = 0x4, scoped, tag = 'scoped memory for faster_rcnn_kd_forward.4']
    %14 = vsyncpa [#allocation3], 0
    %15 = vsyncpa [#allocation5], 0
    loop: start=0, step=1, limit=4
    $region2: #{faster_rcnn_kd_forward.4} parent=1 // loop_pre_header
      _
    $region3: #{faster_rcnn_kd_forward.4} parent=1 // loop_header
      %s17 = sphi 0, %s21
      %p18 = scmp.ge.s32.totalorder %s17, 4
      %s27 = sphi 0, %s29
      %s30 = sphi 0, %s27
      %s31 = sphi 0, %s30
      %s47 = sphi 0, %s31
      %s51 = sphi 0, %s51
      %s53 = sphi 0, %s51
      %s54 = sphi 0, %s53
      %s68 = sphi 0, %s54
      %s72 = sphi 0, %s72
      %s74 = sphi 0, %s72
      %s75 = sphi 0, %s74
      %s89 = sphi 0, %s75
      %s93 = sphi 0, %s93
      %s95 = sphi 0, %s93
      %s96 = sphi 0, %s95
      %s110 = sphi 0, %s96
      %s114 = sphi 0, %s114
      %s116 = sphi 0, %s114
      %s117 = sphi 0, %s116
      %s131 = sphi 0, %s117
      %s135 = sphi 0, %s135
      %s137 = sphi 0, %s135
      %s138 = sphi 0, %s137
      %s152 = sphi 0, %s138
      %s156 = sphi 0, %s156
      %s158 = sphi 0, %s156
      %s159 = sphi 0, %s158
      %s173 = sphi 0, %s159
      %s177 = sphi 0, %s177
      %s179 = sphi 0, %s177
      %s180 = sphi 0, %s179
      %s194 = sphi 0, %s180
      %s198 = sphi 0, %s198
      %s200 = sphi 0, %s198
      %s201 = sphi 0, %s200
      %s215 = sphi 0, %s201
    $region4: #{faster_rcnn_kd_forward.4} parent=1 // loop_header_branch
      %20 = sbr.rel (%p18) target = $region8
    $region5: #{faster_rcnn_kd_forward.4} parent=1 // loop_body
      %s22 = ssub.s32 %s17, 1
      %s23 = ssub.s32 %s17, 2
      %s24 = sadd.s32 %s17, 1
      %s25 = ssub.s32 %s17, %s24
      %p26 = scmp.eq.s32.totalorder %s25, 0
      %s28 = sadd.s32 %s27, 1
      %s29 = scalar_select %p26, %s27, %s28
      %p32 = pneg %p26
      %p33 = scmp.eq.s32.totalorder %s17, 1
      %p34 = por %p32, %p33
      %p35 = scmp.ne.s32.totalorder %s27, %s30
      %p36 = scmp.eq.s32.totalorder %s17, 0
      %p37 = por %p35, %p36
      %p38 = scmp.ne.s32.totalorder %s27, %s30
      %p39 = scmp.eq.s32.totalorder %s22, 1
      %p40 = por %p38, %p39
      %p41 = scmp.ne.s32.totalorder %s30, %s31
      %p42 = scmp.eq.s32.totalorder %s22, 0
      %p43 = por %p41, %p42
      %p44 = scmp.ne.s32.totalorder %s30, %s31
      %p45 = scmp.eq.s32.totalorder %s23, 1
      %p46 = por %p44, %p45
      %p48 = scmp.ne.s32.totalorder %s31, %s47
      %p49 = scmp.eq.s32.totalorder %s23, 0
      %p50 = por %p48, %p49
      %s52 = sadd.s32 %s51, 1
      %p55 = scmp.eq.s32.totalorder %s17, 1
      %p56 = scmp.ne.s32.totalorder %s51, %s53
      %p57 = scmp.eq.s32.totalorder %s17, 0
      %p58 = por %p56, %p57
      %p59 = scmp.ne.s32.totalorder %s51, %s53
      %p60 = scmp.eq.s32.totalorder %s22, 1
      %p61 = por %p59, %p60
      %p62 = scmp.ne.s32.totalorder %s53, %s54
      %p63 = scmp.eq.s32.totalorder %s22, 0
      %p64 = por %p62, %p63
      %p65 = scmp.ne.s32.totalorder %s53, %s54
      %p66 = scmp.eq.s32.totalorder %s23, 1
      %p67 = por %p65, %p66
      %p69 = scmp.ne.s32.totalorder %s54, %s68
      %p70 = scmp.eq.s32.totalorder %s23, 0
      %p71 = por %p69, %p70
      %s73 = sadd.s32 %s72, 1
      %p76 = scmp.eq.s32.totalorder %s17, 1
      %p77 = scmp.ne.s32.totalorder %s72, %s74
      %p78 = scmp.eq.s32.totalorder %s17, 0
      %p79 = por %p77, %p78
      %p80 = scmp.ne.s32.totalorder %s72, %s74
      %p81 = scmp.eq.s32.totalorder %s22, 1
      %p82 = por %p80, %p81
      %p83 = scmp.ne.s32.totalorder %s74, %s75
      %p84 = scmp.eq.s32.totalorder %s22, 0
      %p85 = por %p83, %p84
      %p86 = scmp.ne.s32.totalorder %s74, %s75
      %p87 = scmp.eq.s32.totalorder %s23, 1
      %p88 = por %p86, %p87
      %p90 = scmp.ne.s32.totalorder %s75, %s89
      %p91 = scmp.eq.s32.totalorder %s23, 0
      %p92 = por %p90, %p91
      %s94 = sadd.s32 %s93, 1
      %p97 = scmp.eq.s32.totalorder %s17, 1
      %p98 = scmp.ne.s32.totalorder %s93, %s95
      %p99 = scmp.eq.s32.totalorder %s17, 0
      %p100 = por %p98, %p99
      %p101 = scmp.ne.s32.totalorder %s93, %s95
      %p102 = scmp.eq.s32.totalorder %s22, 1
      %p103 = por %p101, %p102
      %p104 = scmp.ne.s32.totalorder %s95, %s96
      %p105 = scmp.eq.s32.totalorder %s22, 0
      %p106 = por %p104, %p105
      %p107 = scmp.ne.s32.totalorder %s95, %s96
      %p108 = scmp.eq.s32.totalorder %s23, 1
      %p109 = por %p107, %p108
      %p111 = scmp.ne.s32.totalorder %s96, %s110
      %p112 = scmp.eq.s32.totalorder %s23, 0
      %p113 = por %p111, %p112
      %s115 = sadd.s32 %s114, 1
      %p118 = scmp.eq.s32.totalorder %s17, 1
      %p119 = scmp.ne.s32.totalorder %s114, %s116
      %p120 = scmp.eq.s32.totalorder %s17, 0
      %p121 = por %p119, %p120
      %p122 = scmp.ne.s32.totalorder %s114, %s116
      %p123 = scmp.eq.s32.totalorder %s22, 1
      %p124 = por %p122, %p123
      %p125 = scmp.ne.s32.totalorder %s116, %s117
      %p126 = scmp.eq.s32.totalorder %s22, 0
      %p127 = por %p125, %p126
      %p128 = scmp.ne.s32.totalorder %s116, %s117
      %p129 = scmp.eq.s32.totalorder %s23, 1
      %p130 = por %p128, %p129
      %p132 = scmp.ne.s32.totalorder %s117, %s131
      %p133 = scmp.eq.s32.totalorder %s23, 0
      %p134 = por %p132, %p133
      %s136 = sadd.s32 %s135, 1
      %p139 = scmp.eq.s32.totalorder %s17, 1
      %p140 = scmp.ne.s32.totalorder %s135, %s137
      %p141 = scmp.eq.s32.totalorder %s17, 0
      %p142 = por %p140, %p141
      %p143 = scmp.ne.s32.totalorder %s135, %s137
      %p144 = scmp.eq.s32.totalorder %s22, 1
      %p145 = por %p143, %p144
      %p146 = scmp.ne.s32.totalorder %s137, %s138
      %p147 = scmp.eq.s32.totalorder %s22, 0
      %p148 = por %p146, %p147
      %p149 = scmp.ne.s32.totalorder %s137, %s138
      %p150 = scmp.eq.s32.totalorder %s23, 1
      %p151 = por %p149, %p150
      %p153 = scmp.ne.s32.totalorder %s138, %s152
      %p154 = scmp.eq.s32.totalorder %s23, 0
      %p155 = por %p153, %p154
      %s157 = sadd.s32 %s156, 1
      %p160 = scmp.eq.s32.totalorder %s17, 1
      %p161 = scmp.ne.s32.totalorder %s156, %s158
      %p162 = scmp.eq.s32.totalorder %s17, 0
      %p163 = por %p161, %p162
      %p164 = scmp.ne.s32.totalorder %s156, %s158
      %p165 = scmp.eq.s32.totalorder %s22, 1
      %p166 = por %p164, %p165
      %p167 = scmp.ne.s32.totalorder %s158, %s159
      %p168 = scmp.eq.s32.totalorder %s22, 0
      %p169 = por %p167, %p168
      %p170 = scmp.ne.s32.totalorder %s158, %s159
      %p171 = scmp.eq.s32.totalorder %s23, 1
      %p172 = por %p170, %p171
      %p174 = scmp.ne.s32.totalorder %s159, %s173
      %p175 = scmp.eq.s32.totalorder %s23, 0
      %p176 = por %p174, %p175
      %s178 = sadd.s32 %s177, 1
      %p181 = scmp.eq.s32.totalorder %s17, 1
      %p182 = scmp.ne.s32.totalorder %s177, %s179
      %p183 = scmp.eq.s32.totalorder %s17, 0
      %p184 = por %p182, %p183
      %p185 = scmp.ne.s32.totalorder %s177, %s179
      %p186 = scmp.eq.s32.totalorder %s22, 1
      %p187 = por %p185, %p186
      %p188 = scmp.ne.s32.totalorder %s179, %s180
      %p189 = scmp.eq.s32.totalorder %s22, 0
      %p190 = por %p188, %p189
      %p191 = scmp.ne.s32.totalorder %s179, %s180
      %p192 = scmp.eq.s32.totalorder %s23, 1
      %p193 = por %p191, %p192
      %p195 = scmp.ne.s32.totalorder %s180, %s194
      %p196 = scmp.eq.s32.totalorder %s23, 0
      %p197 = por %p195, %p196
      %s199 = sadd.s32 %s198, 1
      %p202 = scmp.eq.s32.totalorder %s17, 1
      %p203 = scmp.ne.s32.totalorder %s198, %s200
      %p204 = scmp.eq.s32.totalorder %s17, 0
      %p205 = por %p203, %p204
      %p206 = scmp.ne.s32.totalorder %s198, %s200
      %p207 = scmp.eq.s32.totalorder %s22, 1
      %p208 = por %p206, %p207
      %p209 = scmp.ne.s32.totalorder %s200, %s201
      %p210 = scmp.eq.s32.totalorder %s22, 0
      %p211 = por %p209, %p210
      %p212 = scmp.ne.s32.totalorder %s200, %s201
      %p213 = scmp.eq.s32.totalorder %s23, 1
      %p214 = por %p212, %p213
      %p216 = scmp.ne.s32.totalorder %s201, %s215
      %p217 = scmp.eq.s32.totalorder %s23, 0
      %p218 = por %p216, %p217
      %p219 = scmp.le.s32.totalorder 1, %s17
      %p220 = scmp.lt.s32.totalorder %s17, 3
      %p221 = pnand %p219, %p220
      %p222 = pneg %p221
      // Predicated region
      $region9: #{faster_rcnn_kd_forward.4} parent=5 // pred_check
        _
      $region10: #{faster_rcnn_kd_forward.4} parent=5 // pred_check_branch
        %224 = sbr.rel (%p221) target = $region12
      $region11: #{faster_rcnn_kd_forward.4} parent=5 // pred_region
        %s225 = ssub.s32 %s17, 1
        // Predicated region
        $region13: #{faster_rcnn_kd_forward.4} parent=11 // pred_check
          %p226 = pneg %p64
        $region14: #{faster_rcnn_kd_forward.4} parent=11 // pred_check_branch
          %228 = sbr.rel (%p226) target = $region16
        $region15: #{faster_rcnn_kd_forward.4} parent=11 // pred_region
          _
        $region16: #{faster_rcnn_kd_forward.4} parent=11 // pred_fallthru
          _
        // Predicated region
        $region17: #{faster_rcnn_kd_forward.4} parent=11 // pred_check
          %p229 = pneg %p85
        $region18: #{faster_rcnn_kd_forward.4} parent=11 // pred_check_branch
          %231 = sbr.rel (%p229) target = $region20
        $region19: #{faster_rcnn_kd_forward.4} parent=11 // pred_region
          _
        $region20: #{faster_rcnn_kd_forward.4} parent=11 // pred_fallthru
          _
        // Predicated region
        $region21: #{faster_rcnn_kd_forward.4} parent=11 // pred_check
          %p232 = pneg %p106
        $region22: #{faster_rcnn_kd_forward.4} parent=11 // pred_check_branch
          %234 = sbr.rel (%p232) target = $region24
        $region23: #{faster_rcnn_kd_forward.4} parent=11 // pred_region
          _
        $region24: #{faster_rcnn_kd_forward.4} parent=11 // pred_fallthru
          _
        // Predicated region
        $region25: #{faster_rcnn_kd_forward.4} parent=11 // pred_check
          %p235 = pneg %p127
        $region26: #{faster_rcnn_kd_forward.4} parent=11 // pred_check_branch
          %237 = sbr.rel (%p235) target = $region28
        $region27: #{faster_rcnn_kd_forward.4} parent=11 // pred_region
          _
        $region28: #{faster_rcnn_kd_forward.4} parent=11 // pred_fallthru
          _
        // Predicated region
        $region29: #{faster_rcnn_kd_forward.4} parent=11 // pred_check
          %p238 = pneg %p148
        $region30: #{faster_rcnn_kd_forward.4} parent=11 // pred_check_branch
          %240 = sbr.rel (%p238) target = $region32
        $region31: #{faster_rcnn_kd_forward.4} parent=11 // pred_region
          _
        $region32: #{faster_rcnn_kd_forward.4} parent=11 // pred_fallthru
          _
        // Predicated region
        $region33: #{faster_rcnn_kd_forward.4} parent=11 // pred_check
          %p241 = pneg %p169
        $region34: #{faster_rcnn_kd_forward.4} parent=11 // pred_check_branch
          %243 = sbr.rel (%p241) target = $region36
        $region35: #{faster_rcnn_kd_forward.4} parent=11 // pred_region
          _
        $region36: #{faster_rcnn_kd_forward.4} parent=11 // pred_fallthru
          _
      $region12: #{faster_rcnn_kd_forward.4} parent=5 // pred_fallthru
        _
      %p244 = scmp.lt.s32.totalorder %s17, 2
      // Predicated region
      $region37: #{faster_rcnn_kd_forward.4} parent=5 // pred_check
        %p245 = pneg %p244
      $region38: #{faster_rcnn_kd_forward.4} parent=5 // pred_check_branch
        %247 = sbr.rel (%p245) target = $region40
      $region39: #{faster_rcnn_kd_forward.4} parent=5 // pred_region
        // Predicated region
        $region41: #{faster_rcnn_kd_forward.4} parent=39 // pred_check
          %p248 = pneg %p37
        $region42: #{faster_rcnn_kd_forward.4} parent=39 // pred_check_branch
          %250 = sbr.rel (%p248) target = $region44
        $region43: #{faster_rcnn_kd_forward.4} parent=39 // pred_region
          %s251 = smul.u32 128, %s17
          %p252 = scmp.lt.s32.totalorder %s251, 255
          %s253 = scalar_select %p252, %s251, 255
          %s254 = smul.addr %s253, 2
          %s255 = smul.addr %s254, 4
          %s256 = scalar_lea.vmem %s0, %s255
          %s257 = smul.u32 128, %s17
        $region44: #{faster_rcnn_kd_forward.4} parent=39 // pred_fallthru
          _
      $region40: #{faster_rcnn_kd_forward.4} parent=5 // pred_fallthru
        _
      %p258 = scmp.le.s32.totalorder 1, %s17
      %p259 = scmp.lt.s32.totalorder %s17, 3
      %p260 = pnand %p258, %p259
      %p261 = pneg %p260
      // Predicated region
      $region45: #{faster_rcnn_kd_forward.4} parent=5 // pred_check
        _
      $region46: #{faster_rcnn_kd_forward.4} parent=5 // pred_check_branch
        %263 = sbr.rel (%p260) target = $region48
      $region47: #{faster_rcnn_kd_forward.4} parent=5 // pred_region
        %s264 = ssub.s32 %s17, 1
        %s265 = smul.u32 128, %s22
        %p266 = scmp.lt.s32.totalorder %s265, 255
        %s267 = scalar_select %p266, %s265, 255
        %s268 = smul.addr %s267, 2
        %s269 = smul.addr %s268, 4
        %s270 = scalar_lea.vmem %s0, %s269
        %p271 = pneg %p43
        %p272 = pneg %p40
        %p273 = pneg %p64
        %p274 = pneg %p61
        %p275 = pneg %p85
        %p276 = pneg %p82
        %p277 = pneg %p106
        %p278 = pneg %p103
        %p279 = pneg %p127
        %p280 = pneg %p124
        %p281 = pneg %p148
        %p282 = pneg %p145
        %p283 = pneg %p169
        %p284 = pneg %p166
        %p285 = pneg %p190
        %p286 = pneg %p187
        %p287 = pneg %p211
        %p288 = pneg %p208
        %s289 = smul.u32 128, %s22
        %p290 = scmp.lt.s32.totalorder %s289, 255
        %s291 = scalar_select %p290, %s289, 255
        %s292 = smul.addr %s291, 2
        %s293 = smul.addr %s292, 4
        %s294 = scalar_lea.vmem %s0, %s293
        %s295 = smul.u32 128, %s22
        %p297 = scmp.eq.s32.totalorder %s22, 0
        // Predicated region
        $region49: #{faster_rcnn_kd_forward.4} parent=47 // pred_check
          %p298 = pneg %p297
        $region50: #{faster_rcnn_kd_forward.4} parent=47 // pred_check_branch
          %300 = sbr.rel (%p298) target = $region52
        $region51: #{faster_rcnn_kd_forward.4} parent=47 // pred_region
          %vm301 = vcmask 0
          %302 = vst.msk [vmem:[#allocation2] sm:$0x1] %vm301, 0.0
          %303 = vst.msk [vmem:[#allocation4] sm:$0x1] %vm301, 0.0
        $region52: #{faster_rcnn_kd_forward.4} parent=47 // pred_fallthru
          _
        %v304 = vld [vmem:[%s294] sm:$0xff]
        %v305 = vld [vmem:[%s294 + $0x8] sm:$0xff]
        %v306 = vld [vmem:[%s294 + $0x10] sm:$0xff]
        %v307 = vld [vmem:[%s294 + $0x18] sm:$0xff]
        %v308 = vld [vmem:[%s294 + $0x20] sm:$0xff]
        %v309 = vld [vmem:[%s294 + $0x28] sm:$0xff]
        %v310 = vld [vmem:[%s294 + $0x30] sm:$0xff]
        %v311 = vld [vmem:[%s294 + $0x38] sm:$0xff]
        %v312 = vld [vmem:[%s294 + $0x40] sm:$0xff]
        %v313 = vld [vmem:[%s294 + $0x48] sm:$0xff]
        %v314 = vld [vmem:[%s294 + $0x50] sm:$0xff]
        %v315 = vld [vmem:[%s294 + $0x58] sm:$0xff]
        %v316 = vld [vmem:[%s294 + $0x60] sm:$0xff]
        %v317 = vld [vmem:[%s294 + $0x68] sm:$0xff]
        %v318 = vld [vmem:[%s294 + $0x70] sm:$0xff]
        %v319 = vld [vmem:[%s294 + $0x78] sm:$0xff]
        %v320 = vld [vmem:[%s294 + $0x80] sm:$0xff]
        %v321 = vld [vmem:[%s294 + $0x88] sm:$0xff]
        %v322 = vld [vmem:[%s294 + $0x90] sm:$0xff]
        %v323 = vld [vmem:[%s294 + $0x98] sm:$0xff]
        %v324 = vld [vmem:[%s294 + $0xa0] sm:$0xff]
        %v325 = vld [vmem:[%s294 + $0xa8] sm:$0xff]
        %v326 = vld [vmem:[%s294 + $0xb0] sm:$0xff]
        %v327 = vld [vmem:[%s294 + $0xb8] sm:$0xff]
        %v328 = vld [vmem:[%s294 + $0xc0] sm:$0xff]
        %v329 = vld [vmem:[%s294 + $0xc8] sm:$0xff]
        %v330 = vld [vmem:[%s294 + $0xd0] sm:$0xff]
        %v331 = vld [vmem:[%s294 + $0xd8] sm:$0xff]
        %v332 = vld [vmem:[%s294 + $0xe0] sm:$0xff]
        %v333 = vld [vmem:[%s294 + $0xe8] sm:$0xff]
        %v334 = vld [vmem:[%s294 + $0xf0] sm:$0xff]
        %v335 = vld [vmem:[%s294 + $0xf8] sm:$0xff]
        %v336 = vld [vmem:[%s294 + $0x100] sm:$0xff]
        %v337 = vld [vmem:[%s294 + $0x108] sm:$0xff]
        %v338 = vld [vmem:[%s294 + $0x110] sm:$0xff]
        %v339 = vld [vmem:[%s294 + $0x118] sm:$0xff]
        %v340 = vld [vmem:[%s294 + $0x120] sm:$0xff]
        %v341 = vld [vmem:[%s294 + $0x128] sm:$0xff]
        %v342 = vld [vmem:[%s294 + $0x130] sm:$0xff]
        %v343 = vld [vmem:[%s294 + $0x138] sm:$0xff]
        %v344 = vld [vmem:[%s294 + $0x140] sm:$0xff]
        %v345 = vld [vmem:[%s294 + $0x148] sm:$0xff]
        %v346 = vld [vmem:[%s294 + $0x150] sm:$0xff]
        %v347 = vld [vmem:[%s294 + $0x158] sm:$0xff]
        %v348 = vld [vmem:[%s294 + $0x160] sm:$0xff]
        %v349 = vld [vmem:[%s294 + $0x168] sm:$0xff]
        %v350 = vld [vmem:[%s294 + $0x170] sm:$0xff]
        %v351 = vld [vmem:[%s294 + $0x178] sm:$0xff]
        %v352 = vld [vmem:[%s294 + $0x180] sm:$0xff]
        %v353 = vld [vmem:[%s294 + $0x188] sm:$0xff]
        %v354 = vld [vmem:[%s294 + $0x190] sm:$0xff]
        %v355 = vld [vmem:[%s294 + $0x198] sm:$0xff]
        %v356 = vld [vmem:[%s294 + $0x1a0] sm:$0xff]
        %v357 = vld [vmem:[%s294 + $0x1a8] sm:$0xff]
        %v358 = vld [vmem:[%s294 + $0x1b0] sm:$0xff]
        %v359 = vld [vmem:[%s294 + $0x1b8] sm:$0xff]
        %v360 = vld [vmem:[%s294 + $0x1c0] sm:$0xff]
        %v361 = vld [vmem:[%s294 + $0x1c8] sm:$0xff]
        %v362 = vld [vmem:[%s294 + $0x1d0] sm:$0xff]
        %v363 = vld [vmem:[%s294 + $0x1d8] sm:$0xff]
        %v364 = vld [vmem:[%s294 + $0x1e0] sm:$0xff]
        %v365 = vld [vmem:[%s294 + $0x1e8] sm:$0xff]
        %v366 = vld [vmem:[%s294 + $0x1f0] sm:$0xff]
        %v367 = vld [vmem:[%s294 + $0x1f8] sm:$0xff]
        %v368 = vld [vmem:[%s294 + $0x200] sm:$0xff]
        %v369 = vld [vmem:[%s294 + $0x208] sm:$0xff]
        %v370 = vld [vmem:[%s294 + $0x210] sm:$0xff]
        %v371 = vld [vmem:[%s294 + $0x218] sm:$0xff]
        %v372 = vld [vmem:[%s294 + $0x220] sm:$0xff]
        %v373 = vld [vmem:[%s294 + $0x228] sm:$0xff]
        %v374 = vld [vmem:[%s294 + $0x230] sm:$0xff]
        %v375 = vld [vmem:[%s294 + $0x238] sm:$0xff]
        %v376 = vld [vmem:[%s294 + $0x240] sm:$0xff]
        %v377 = vld [vmem:[%s294 + $0x248] sm:$0xff]
        %v378 = vld [vmem:[%s294 + $0x250] sm:$0xff]
        %v379 = vld [vmem:[%s294 + $0x258] sm:$0xff]
        %v380 = vld [vmem:[%s294 + $0x260] sm:$0xff]
        %v381 = vld [vmem:[%s294 + $0x268] sm:$0xff]
        %v382 = vld [vmem:[%s294 + $0x270] sm:$0xff]
        %v383 = vld [vmem:[%s294 + $0x278] sm:$0xff]
        %v384 = vld [vmem:[%s294 + $0x280] sm:$0xff]
        %v385 = vld [vmem:[%s294 + $0x288] sm:$0xff]
        %v386 = vld [vmem:[%s294 + $0x290] sm:$0xff]
        %v387 = vld [vmem:[%s294 + $0x298] sm:$0xff]
        %v388 = vld [vmem:[%s294 + $0x2a0] sm:$0xff]
        %v389 = vld [vmem:[%s294 + $0x2a8] sm:$0xff]
        %v390 = vld [vmem:[%s294 + $0x2b0] sm:$0xff]
        %v391 = vld [vmem:[%s294 + $0x2b8] sm:$0xff]
        %v392 = vld [vmem:[%s294 + $0x2c0] sm:$0xff]
        %v393 = vld [vmem:[%s294 + $0x2c8] sm:$0xff]
        %v394 = vld [vmem:[%s294 + $0x2d0] sm:$0xff]
        %v395 = vld [vmem:[%s294 + $0x2d8] sm:$0xff]
        %v396 = vld [vmem:[%s294 + $0x2e0] sm:$0xff]
        %v397 = vld [vmem:[%s294 + $0x2e8] sm:$0xff]
        %v398 = vld [vmem:[%s294 + $0x2f0] sm:$0xff]
        %v399 = vld [vmem:[%s294 + $0x2f8] sm:$0xff]
        %v400 = vld [vmem:[%s294 + $0x300] sm:$0xff]
        %v401 = vld [vmem:[%s294 + $0x308] sm:$0xff]
        %v402 = vld [vmem:[%s294 + $0x310] sm:$0xff]
        %v403 = vld [vmem:[%s294 + $0x318] sm:$0xff]
        %v404 = vld [vmem:[%s294 + $0x320] sm:$0xff]
        %v405 = vld [vmem:[%s294 + $0x328] sm:$0xff]
        %v406 = vld [vmem:[%s294 + $0x330] sm:$0xff]
        %v407 = vld [vmem:[%s294 + $0x338] sm:$0xff]
        %v408 = vld [vmem:[%s294 + $0x340] sm:$0xff]
        %v409 = vld [vmem:[%s294 + $0x348] sm:$0xff]
        %v410 = vld [vmem:[%s294 + $0x350] sm:$0xff]
        %v411 = vld [vmem:[%s294 + $0x358] sm:$0xff]
        %v412 = vld [vmem:[%s294 + $0x360] sm:$0xff]
        %v413 = vld [vmem:[%s294 + $0x368] sm:$0xff]
        %v414 = vld [vmem:[%s294 + $0x370] sm:$0xff]
        %v415 = vld [vmem:[%s294 + $0x378] sm:$0xff]
        %v416 = vld [vmem:[%s294 + $0x380] sm:$0xff]
        %v417 = vld [vmem:[%s294 + $0x388] sm:$0xff]
        %v418 = vld [vmem:[%s294 + $0x390] sm:$0xff]
        %v419 = vld [vmem:[%s294 + $0x398] sm:$0xff]
        %v420 = vld [vmem:[%s294 + $0x3a0] sm:$0xff]
        %v421 = vld [vmem:[%s294 + $0x3a8] sm:$0xff]
        %v422 = vld [vmem:[%s294 + $0x3b0] sm:$0xff]
        %v423 = vld [vmem:[%s294 + $0x3b8] sm:$0xff]
        %v424 = vld [vmem:[%s294 + $0x3c0] sm:$0xff]
        %v425 = vld [vmem:[%s294 + $0x3c8] sm:$0xff]
        %v426 = vld [vmem:[%s294 + $0x3d0] sm:$0xff]
        %v427 = vld [vmem:[%s294 + $0x3d8] sm:$0xff]
        %v428 = vld [vmem:[%s294 + $0x3e0] sm:$0xff]
        %v429 = vld [vmem:[%s294 + $0x3e8] sm:$0xff]
        %v430 = vld [vmem:[%s294 + $0x3f0] sm:$0xff]
        %v431 = vld [vmem:[%s294 + $0x3f8] sm:$0xff]
        %v432 = vld [vmem:[%s1] sm:$0xf]
        %v433 = vld [vmem:[%s1 + $0x4] sm:$0xf]
        %v434 = vld [vmem:[%s1 + $0x8] sm:$0xf]
        %v435 = vld [vmem:[%s1 + $0xc] sm:$0xf]
        %v436 = vld [vmem:[%s1 + $0x10] sm:$0xf]
        %v437 = vld [vmem:[%s1 + $0x14] sm:$0xf]
        %v438 = vld [vmem:[%s1 + $0x18] sm:$0xf]
        %v439 = vld [vmem:[%s1 + $0x1c] sm:$0xf]
        %v440 = vld [vmem:[%s1 + $0x20] sm:$0xf]
        %v441 = vld [vmem:[%s1 + $0x24] sm:$0xf]
        %v442 = vld [vmem:[%s1 + $0x28] sm:$0xf]
        %v443 = vld [vmem:[%s1 + $0x2c] sm:$0xf]
        %v444 = vld [vmem:[%s1 + $0x30] sm:$0xf]
        %v445 = vld [vmem:[%s1 + $0x34] sm:$0xf]
        %v446 = vld [vmem:[%s1 + $0x38] sm:$0xf]
        %v447 = vld [vmem:[%s1 + $0x3c] sm:$0xf]
        %v448 = vld [vmem:[%s1 + $0x40] sm:$0xf]
        %v449 = vld [vmem:[%s1 + $0x44] sm:$0xf]
        %v450 = vld [vmem:[%s1 + $0x48] sm:$0xf]
        %v451 = vld [vmem:[%s1 + $0x4c] sm:$0xf]
        %v452 = vld [vmem:[%s1 + $0x50] sm:$0xf]
        %v453 = vld [vmem:[%s1 + $0x54] sm:$0xf]
        %v454 = vld [vmem:[%s1 + $0x58] sm:$0xf]
        %v455 = vld [vmem:[%s1 + $0x5c] sm:$0xf]
        %v456 = vld [vmem:[%s1 + $0x60] sm:$0xf]
        %v457 = vld [vmem:[%s1 + $0x64] sm:$0xf]
        %v458 = vld [vmem:[%s1 + $0x68] sm:$0xf]
        %v459 = vld [vmem:[%s1 + $0x6c] sm:$0xf]
        %v460 = vld [vmem:[%s1 + $0x70] sm:$0xf]
        %v461 = vld [vmem:[%s1 + $0x74] sm:$0xf]
        %v462 = vld [vmem:[%s1 + $0x78] sm:$0xf]
        %v463 = vld [vmem:[%s1 + $0x7c] sm:$0xf]
        %v464 = vld [vmem:[%s2] sm:$0x1]
        %v466 = vlaneseq
        %v467 = vshrl.u32 %v466, 7
        %v468 = vsub.s32 0, %v467
        %v469 = vrot.slane %v464, %v468
        %v599 = vunpack.c.l.b16 %v304
        %v600 = vunpack.c.h.b16 %v304
        %v601 = vunpack.c.l.b16 %v305
        %v602 = vunpack.c.h.b16 %v305
        %v603 = vunpack.c.l.b16 %v306
        %v604 = vunpack.c.h.b16 %v306
        %v605 = vunpack.c.l.b16 %v307
        %v606 = vunpack.c.h.b16 %v307
        %v607 = vunpack.c.l.b16 %v308
        %v608 = vunpack.c.h.b16 %v308
        %v609 = vunpack.c.l.b16 %v309
        %v610 = vunpack.c.h.b16 %v309
        %v611 = vunpack.c.l.b16 %v310
        %v612 = vunpack.c.h.b16 %v310
        %v613 = vunpack.c.l.b16 %v311
        %v614 = vunpack.c.h.b16 %v311
        %v615 = vunpack.c.l.b16 %v312
        %v616 = vunpack.c.h.b16 %v312
        %v617 = vunpack.c.l.b16 %v313
        %v618 = vunpack.c.h.b16 %v313
        %v619 = vunpack.c.l.b16 %v314
        %v620 = vunpack.c.h.b16 %v314
        %v621 = vunpack.c.l.b16 %v315
        %v622 = vunpack.c.h.b16 %v315
        %v623 = vunpack.c.l.b16 %v316
        %v624 = vunpack.c.h.b16 %v316
        %v625 = vunpack.c.l.b16 %v317
        %v626 = vunpack.c.h.b16 %v317
        %v627 = vunpack.c.l.b16 %v318
        %v628 = vunpack.c.h.b16 %v318
        %v629 = vunpack.c.l.b16 %v319
        %v630 = vunpack.c.h.b16 %v319
        %v631 = vunpack.c.l.b16 %v320
        %v632 = vunpack.c.h.b16 %v320
        %v633 = vunpack.c.l.b16 %v321
        %v634 = vunpack.c.h.b16 %v321
        %v635 = vunpack.c.l.b16 %v322
        %v636 = vunpack.c.h.b16 %v322
        %v637 = vunpack.c.l.b16 %v323
        %v638 = vunpack.c.h.b16 %v323
        %v639 = vunpack.c.l.b16 %v324
        %v640 = vunpack.c.h.b16 %v324
        %v641 = vunpack.c.l.b16 %v325
        %v642 = vunpack.c.h.b16 %v325
        %v643 = vunpack.c.l.b16 %v326
        %v644 = vunpack.c.h.b16 %v326
        %v645 = vunpack.c.l.b16 %v327
        %v646 = vunpack.c.h.b16 %v327
        %v647 = vunpack.c.l.b16 %v328
        %v648 = vunpack.c.h.b16 %v328
        %v649 = vunpack.c.l.b16 %v329
        %v650 = vunpack.c.h.b16 %v329
        %v651 = vunpack.c.l.b16 %v330
        %v652 = vunpack.c.h.b16 %v330
        %v653 = vunpack.c.l.b16 %v331
        %v654 = vunpack.c.h.b16 %v331
        %v655 = vunpack.c.l.b16 %v332
        %v656 = vunpack.c.h.b16 %v332
        %v657 = vunpack.c.l.b16 %v333
        %v658 = vunpack.c.h.b16 %v333
        %v659 = vunpack.c.l.b16 %v334
        %v660 = vunpack.c.h.b16 %v334
        %v661 = vunpack.c.l.b16 %v335
        %v662 = vunpack.c.h.b16 %v335
        %v663 = vunpack.c.l.b16 %v336
        %v664 = vunpack.c.h.b16 %v336
        %v665 = vunpack.c.l.b16 %v337
        %v666 = vunpack.c.h.b16 %v337
        %v667 = vunpack.c.l.b16 %v338
        %v668 = vunpack.c.h.b16 %v338
        %v669 = vunpack.c.l.b16 %v339
        %v670 = vunpack.c.h.b16 %v339
        %v671 = vunpack.c.l.b16 %v340
        %v672 = vunpack.c.h.b16 %v340
        %v673 = vunpack.c.l.b16 %v341
        %v674 = vunpack.c.h.b16 %v341
        %v675 = vunpack.c.l.b16 %v342
        %v676 = vunpack.c.h.b16 %v342
        %v677 = vunpack.c.l.b16 %v343
        %v678 = vunpack.c.h.b16 %v343
        %v679 = vunpack.c.l.b16 %v344
        %v680 = vunpack.c.h.b16 %v344
        %v681 = vunpack.c.l.b16 %v345
        %v682 = vunpack.c.h.b16 %v345
        %v683 = vunpack.c.l.b16 %v346
        %v684 = vunpack.c.h.b16 %v346
        %v685 = vunpack.c.l.b16 %v347
        %v686 = vunpack.c.h.b16 %v347
        %v687 = vunpack.c.l.b16 %v348
        %v688 = vunpack.c.h.b16 %v348
        %v689 = vunpack.c.l.b16 %v349
        %v690 = vunpack.c.h.b16 %v349
        %v691 = vunpack.c.l.b16 %v350
        %v692 = vunpack.c.h.b16 %v350
        %v693 = vunpack.c.l.b16 %v351
        %v694 = vunpack.c.h.b16 %v351
        %v695 = vunpack.c.l.b16 %v352
        %v696 = vunpack.c.h.b16 %v352
        %v697 = vunpack.c.l.b16 %v353
        %v698 = vunpack.c.h.b16 %v353
        %v699 = vunpack.c.l.b16 %v354
        %v700 = vunpack.c.h.b16 %v354
        %v701 = vunpack.c.l.b16 %v355
        %v702 = vunpack.c.h.b16 %v355
        %v703 = vunpack.c.l.b16 %v356
        %v704 = vunpack.c.h.b16 %v356
        %v705 = vunpack.c.l.b16 %v357
        %v706 = vunpack.c.h.b16 %v357
        %v707 = vunpack.c.l.b16 %v358
        %v708 = vunpack.c.h.b16 %v358
        %v709 = vunpack.c.l.b16 %v359
        %v710 = vunpack.c.h.b16 %v359
        %v711 = vunpack.c.l.b16 %v360
        %v712 = vunpack.c.h.b16 %v360
        %v713 = vunpack.c.l.b16 %v361
        %v714 = vunpack.c.h.b16 %v361
        %v715 = vunpack.c.l.b16 %v362
        %v716 = vunpack.c.h.b16 %v362
        %v717 = vunpack.c.l.b16 %v363
        %v718 = vunpack.c.h.b16 %v363
        %v719 = vunpack.c.l.b16 %v364
        %v720 = vunpack.c.h.b16 %v364
        %v721 = vunpack.c.l.b16 %v365
        %v722 = vunpack.c.h.b16 %v365
        %v723 = vunpack.c.l.b16 %v366
        %v724 = vunpack.c.h.b16 %v366
        %v725 = vunpack.c.l.b16 %v367
        %v726 = vunpack.c.h.b16 %v367
        %v727 = vunpack.c.l.b16 %v368
        %v728 = vunpack.c.h.b16 %v368
        %v729 = vunpack.c.l.b16 %v369
        %v730 = vunpack.c.h.b16 %v369
        %v731 = vunpack.c.l.b16 %v370
        %v732 = vunpack.c.h.b16 %v370
        %v733 = vunpack.c.l.b16 %v371
        %v734 = vunpack.c.h.b16 %v371
        %v735 = vunpack.c.l.b16 %v372
        %v736 = vunpack.c.h.b16 %v372
        %v737 = vunpack.c.l.b16 %v373
        %v738 = vunpack.c.h.b16 %v373
        %v739 = vunpack.c.l.b16 %v374
        %v740 = vunpack.c.h.b16 %v374
        %v741 = vunpack.c.l.b16 %v375
        %v742 = vunpack.c.h.b16 %v375
        %v743 = vunpack.c.l.b16 %v376
        %v744 = vunpack.c.h.b16 %v376
        %v745 = vunpack.c.l.b16 %v377
        %v746 = vunpack.c.h.b16 %v377
        %v747 = vunpack.c.l.b16 %v378
        %v748 = vunpack.c.h.b16 %v378
        %v749 = vunpack.c.l.b16 %v379
        %v750 = vunpack.c.h.b16 %v379
        %v751 = vunpack.c.l.b16 %v380
        %v752 = vunpack.c.h.b16 %v380
        %v753 = vunpack.c.l.b16 %v381
        %v754 = vunpack.c.h.b16 %v381
        %v755 = vunpack.c.l.b16 %v382
        %v756 = vunpack.c.h.b16 %v382
        %v757 = vunpack.c.l.b16 %v383
        %v758 = vunpack.c.h.b16 %v383
        %v759 = vunpack.c.l.b16 %v384
        %v760 = vunpack.c.h.b16 %v384
        %v761 = vunpack.c.l.b16 %v385
        %v762 = vunpack.c.h.b16 %v385
        %v763 = vunpack.c.l.b16 %v386
        %v764 = vunpack.c.h.b16 %v386
        %v765 = vunpack.c.l.b16 %v387
        %v766 = vunpack.c.h.b16 %v387
        %v767 = vunpack.c.l.b16 %v388
        %v768 = vunpack.c.h.b16 %v388
        %v769 = vunpack.c.l.b16 %v389
        %v770 = vunpack.c.h.b16 %v389
        %v771 = vunpack.c.l.b16 %v390
        %v772 = vunpack.c.h.b16 %v390
        %v773 = vunpack.c.l.b16 %v391
        %v774 = vunpack.c.h.b16 %v391
        %v775 = vunpack.c.l.b16 %v392
        %v776 = vunpack.c.h.b16 %v392
        %v777 = vunpack.c.l.b16 %v393
        %v778 = vunpack.c.h.b16 %v393
        %v779 = vunpack.c.l.b16 %v394
        %v780 = vunpack.c.h.b16 %v394
        %v781 = vunpack.c.l.b16 %v395
        %v782 = vunpack.c.h.b16 %v395
        %v783 = vunpack.c.l.b16 %v396
        %v784 = vunpack.c.h.b16 %v396
        %v785 = vunpack.c.l.b16 %v397
        %v786 = vunpack.c.h.b16 %v397
        %v787 = vunpack.c.l.b16 %v398
        %v788 = vunpack.c.h.b16 %v398
        %v789 = vunpack.c.l.b16 %v399
        %v790 = vunpack.c.h.b16 %v399
        %v791 = vunpack.c.l.b16 %v400
        %v792 = vunpack.c.h.b16 %v400
        %v793 = vunpack.c.l.b16 %v401
        %v794 = vunpack.c.h.b16 %v401
        %v795 = vunpack.c.l.b16 %v402
        %v796 = vunpack.c.h.b16 %v402
        %v797 = vunpack.c.l.b16 %v403
        %v798 = vunpack.c.h.b16 %v403
        %v799 = vunpack.c.l.b16 %v404
        %v800 = vunpack.c.h.b16 %v404
        %v801 = vunpack.c.l.b16 %v405
        %v802 = vunpack.c.h.b16 %v405
        %v803 = vunpack.c.l.b16 %v406
        %v804 = vunpack.c.h.b16 %v406
        %v805 = vunpack.c.l.b16 %v407
        %v806 = vunpack.c.h.b16 %v407
        %v807 = vunpack.c.l.b16 %v408
        %v808 = vunpack.c.h.b16 %v408
        %v809 = vunpack.c.l.b16 %v409
        %v810 = vunpack.c.h.b16 %v409
        %v811 = vunpack.c.l.b16 %v410
        %v812 = vunpack.c.h.b16 %v410
        %v813 = vunpack.c.l.b16 %v411
        %v814 = vunpack.c.h.b16 %v411
        %v815 = vunpack.c.l.b16 %v412
        %v816 = vunpack.c.h.b16 %v412
        %v817 = vunpack.c.l.b16 %v413
        %v818 = vunpack.c.h.b16 %v413
        %v819 = vunpack.c.l.b16 %v414
        %v820 = vunpack.c.h.b16 %v414
        %v821 = vunpack.c.l.b16 %v415
        %v822 = vunpack.c.h.b16 %v415
        %v823 = vunpack.c.l.b16 %v416
        %v824 = vunpack.c.h.b16 %v416
        %v825 = vunpack.c.l.b16 %v417
        %v826 = vunpack.c.h.b16 %v417
        %v827 = vunpack.c.l.b16 %v418
        %v828 = vunpack.c.h.b16 %v418
        %v829 = vunpack.c.l.b16 %v419
        %v830 = vunpack.c.h.b16 %v419
        %v831 = vunpack.c.l.b16 %v420
        %v832 = vunpack.c.h.b16 %v420
        %v833 = vunpack.c.l.b16 %v421
        %v834 = vunpack.c.h.b16 %v421
        %v835 = vunpack.c.l.b16 %v422
        %v836 = vunpack.c.h.b16 %v422
        %v837 = vunpack.c.l.b16 %v423
        %v838 = vunpack.c.h.b16 %v423
        %v839 = vunpack.c.l.b16 %v424
        %v840 = vunpack.c.h.b16 %v424
        %v841 = vunpack.c.l.b16 %v425
        %v842 = vunpack.c.h.b16 %v425
        %v843 = vunpack.c.l.b16 %v426
        %v844 = vunpack.c.h.b16 %v426
        %v845 = vunpack.c.l.b16 %v427
        %v846 = vunpack.c.h.b16 %v427
        %v847 = vunpack.c.l.b16 %v428
        %v848 = vunpack.c.h.b16 %v428
        %v849 = vunpack.c.l.b16 %v429
        %v850 = vunpack.c.h.b16 %v429
        %v851 = vunpack.c.l.b16 %v430
        %v852 = vunpack.c.h.b16 %v430
        %v853 = vunpack.c.l.b16 %v431
        %v854 = vunpack.c.h.b16 %v431
        %v855 = vpack.c.b16 %v601, %v599
        %v856 = vpack.c.b16 %v602, %v600
        %v857 = vpack.c.b16 %v605, %v603
        %v858 = vpack.c.b16 %v606, %v604
        %v859 = vpack.c.b16 %v609, %v607
        %v860 = vpack.c.b16 %v610, %v608
        %v861 = vpack.c.b16 %v613, %v611
        %v862 = vpack.c.b16 %v614, %v612
        %v863 = vpack.c.b16 %v617, %v615
        %v864 = vpack.c.b16 %v618, %v616
        %v865 = vpack.c.b16 %v621, %v619
        %v866 = vpack.c.b16 %v622, %v620
        %v867 = vpack.c.b16 %v625, %v623
        %v868 = vpack.c.b16 %v626, %v624
        %v869 = vpack.c.b16 %v629, %v627
        %v870 = vpack.c.b16 %v630, %v628
        %v871 = vpack.c.b16 %v633, %v631
        %v872 = vpack.c.b16 %v634, %v632
        %v873 = vpack.c.b16 %v637, %v635
        %v874 = vpack.c.b16 %v638, %v636
        %v875 = vpack.c.b16 %v641, %v639
        %v876 = vpack.c.b16 %v642, %v640
        %v877 = vpack.c.b16 %v645, %v643
        %v878 = vpack.c.b16 %v646, %v644
        %v879 = vpack.c.b16 %v649, %v647
        %v880 = vpack.c.b16 %v650, %v648
        %v881 = vpack.c.b16 %v653, %v651
        %v882 = vpack.c.b16 %v654, %v652
        %v883 = vpack.c.b16 %v657, %v655
        %v884 = vpack.c.b16 %v658, %v656
        %v885 = vpack.c.b16 %v661, %v659
        %v886 = vpack.c.b16 %v662, %v660
        %v887 = vpack.c.b16 %v665, %v663
        %v888 = vpack.c.b16 %v666, %v664
        %v889 = vpack.c.b16 %v669, %v667
        %v890 = vpack.c.b16 %v670, %v668
        %v891 = vpack.c.b16 %v673, %v671
        %v892 = vpack.c.b16 %v674, %v672
        %v893 = vpack.c.b16 %v677, %v675
        %v894 = vpack.c.b16 %v678, %v676
        %v895 = vpack.c.b16 %v681, %v679
        %v896 = vpack.c.b16 %v682, %v680
        %v897 = vpack.c.b16 %v685, %v683
        %v898 = vpack.c.b16 %v686, %v684
        %v899 = vpack.c.b16 %v689, %v687
        %v900 = vpack.c.b16 %v690, %v688
        %v901 = vpack.c.b16 %v693, %v691
        %v902 = vpack.c.b16 %v694, %v692
        %v903 = vpack.c.b16 %v697, %v695
        %v904 = vpack.c.b16 %v698, %v696
        %v905 = vpack.c.b16 %v701, %v699
        %v906 = vpack.c.b16 %v702, %v700
        %v907 = vpack.c.b16 %v705, %v703
        %v908 = vpack.c.b16 %v706, %v704
        %v909 = vpack.c.b16 %v709, %v707
        %v910 = vpack.c.b16 %v710, %v708
        %v911 = vpack.c.b16 %v713, %v711
        %v912 = vpack.c.b16 %v714, %v712
        %v913 = vpack.c.b16 %v717, %v715
        %v914 = vpack.c.b16 %v718, %v716
        %v915 = vpack.c.b16 %v721, %v719
        %v916 = vpack.c.b16 %v722, %v720
        %v917 = vpack.c.b16 %v725, %v723
        %v918 = vpack.c.b16 %v726, %v724
        %v919 = vpack.c.b16 %v729, %v727
        %v920 = vpack.c.b16 %v730, %v728
        %v921 = vpack.c.b16 %v733, %v731
        %v922 = vpack.c.b16 %v734, %v732
        %v923 = vpack.c.b16 %v737, %v735
        %v924 = vpack.c.b16 %v738, %v736
        %v925 = vpack.c.b16 %v741, %v739
        %v926 = vpack.c.b16 %v742, %v740
        %v927 = vpack.c.b16 %v745, %v743
        %v928 = vpack.c.b16 %v746, %v744
        %v929 = vpack.c.b16 %v749, %v747
        %v930 = vpack.c.b16 %v750, %v748
        %v931 = vpack.c.b16 %v753, %v751
        %v932 = vpack.c.b16 %v754, %v752
        %v933 = vpack.c.b16 %v757, %v755
        %v934 = vpack.c.b16 %v758, %v756
        %v935 = vpack.c.b16 %v761, %v759
        %v936 = vpack.c.b16 %v762, %v760
        %v937 = vpack.c.b16 %v765, %v763
        %v938 = vpack.c.b16 %v766, %v764
        %v939 = vpack.c.b16 %v769, %v767
        %v940 = vpack.c.b16 %v770, %v768
        %v941 = vpack.c.b16 %v773, %v771
        %v942 = vpack.c.b16 %v774, %v772
        %v943 = vpack.c.b16 %v777, %v775
        %v944 = vpack.c.b16 %v778, %v776
        %v945 = vpack.c.b16 %v781, %v779
        %v946 = vpack.c.b16 %v782, %v780
        %v947 = vpack.c.b16 %v785, %v783
        %v948 = vpack.c.b16 %v786, %v784
        %v949 = vpack.c.b16 %v789, %v787
        %v950 = vpack.c.b16 %v790, %v788
        %v951 = vpack.c.b16 %v793, %v791
        %v952 = vpack.c.b16 %v794, %v792
        %v953 = vpack.c.b16 %v797, %v795
        %v954 = vpack.c.b16 %v798, %v796
        %v955 = vpack.c.b16 %v801, %v799
        %v956 = vpack.c.b16 %v802, %v800
        %v957 = vpack.c.b16 %v805, %v803
        %v958 = vpack.c.b16 %v806, %v804
        %v959 = vpack.c.b16 %v809, %v807
        %v960 = vpack.c.b16 %v810, %v808
        %v961 = vpack.c.b16 %v813, %v811
        %v962 = vpack.c.b16 %v814, %v812
        %v963 = vpack.c.b16 %v817, %v815
        %v964 = vpack.c.b16 %v818, %v816
        %v965 = vpack.c.b16 %v821, %v819
        %v966 = vpack.c.b16 %v822, %v820
        %v967 = vpack.c.b16 %v825, %v823
        %v968 = vpack.c.b16 %v826, %v824
        %v969 = vpack.c.b16 %v829, %v827
        %v970 = vpack.c.b16 %v830, %v828
        %v971 = vpack.c.b16 %v833, %v831
        %v972 = vpack.c.b16 %v834, %v832
        %v973 = vpack.c.b16 %v837, %v835
        %v974 = vpack.c.b16 %v838, %v836
        %v975 = vpack.c.b16 %v841, %v839
        %v976 = vpack.c.b16 %v842, %v840
        %v977 = vpack.c.b16 %v845, %v843
        %v978 = vpack.c.b16 %v846, %v844
        %v979 = vpack.c.b16 %v849, %v847
        %v980 = vpack.c.b16 %v850, %v848
        %v981 = vpack.c.b16 %v853, %v851
        %v982 = vpack.c.b16 %v854, %v852
        %v1143 = vunpack.c.l.b16 %v432
        %v1144 = vunpack.c.l.b16 %v433
        %v1145 = vunpack.c.l.b16 %v434
        %v1146 = vunpack.c.l.b16 %v435
        %v1147 = vunpack.c.l.b16 %v436
        %v1148 = vunpack.c.l.b16 %v437
        %v1149 = vunpack.c.l.b16 %v438
        %v1150 = vunpack.c.l.b16 %v439
        %v1151 = vunpack.c.l.b16 %v440
        %v1152 = vunpack.c.l.b16 %v441
        %v1153 = vunpack.c.l.b16 %v442
        %v1154 = vunpack.c.l.b16 %v443
        %v1155 = vunpack.c.l.b16 %v444
        %v1156 = vunpack.c.l.b16 %v445
        %v1157 = vunpack.c.l.b16 %v446
        %v1158 = vunpack.c.l.b16 %v447
        %v1159 = vunpack.c.l.b16 %v448
        %v1160 = vunpack.c.l.b16 %v449
        %v1161 = vunpack.c.l.b16 %v450
        %v1162 = vunpack.c.l.b16 %v451
        %v1163 = vunpack.c.l.b16 %v452
        %v1164 = vunpack.c.l.b16 %v453
        %v1165 = vunpack.c.l.b16 %v454
        %v1166 = vunpack.c.l.b16 %v455
        %v1167 = vunpack.c.l.b16 %v456
        %v1168 = vunpack.c.l.b16 %v457
        %v1169 = vunpack.c.l.b16 %v458
        %v1170 = vunpack.c.l.b16 %v459
        %v1171 = vunpack.c.l.b16 %v460
        %v1172 = vunpack.c.l.b16 %v461
        %v1173 = vunpack.c.l.b16 %v462
        %v1174 = vunpack.c.l.b16 %v463
        %v1175 = vpack.c.b16 %v1144, %v1143
        %v1176 = vpack.c.b16 %v1146, %v1145
        %v1177 = vpack.c.b16 %v1148, %v1147
        %v1178 = vpack.c.b16 %v1150, %v1149
        %v1179 = vpack.c.b16 %v1152, %v1151
        %v1180 = vpack.c.b16 %v1154, %v1153
        %v1181 = vpack.c.b16 %v1156, %v1155
        %v1182 = vpack.c.b16 %v1158, %v1157
        %v1183 = vpack.c.b16 %v1160, %v1159
        %v1184 = vpack.c.b16 %v1162, %v1161
        %v1185 = vpack.c.b16 %v1164, %v1163
        %v1186 = vpack.c.b16 %v1166, %v1165
        %v1187 = vpack.c.b16 %v1168, %v1167
        %v1188 = vpack.c.b16 %v1170, %v1169
        %v1189 = vpack.c.b16 %v1172, %v1171
        %v1190 = vpack.c.b16 %v1174, %v1173
        %1207 = vmatprep.subr.bf16.mxu0 0
        %1208 = vmatpush1.bf16.msra.mxu0 %v1175
        %1209 = vmatprep.subr.bf16.mxu0 0
        %1210 = vmatpush1.bf16.msra.mxu0 %v1176
        %1211 = vmatprep.subr.bf16.mxu0 0
        %1212 = vmatpush1.bf16.msra.mxu0 %v1177
        %1213 = vmatprep.subr.bf16.mxu0 0
        %1214 = vmatpush1.bf16.msra.mxu0 %v1178
        %1215 = vmatprep.subr.bf16.mxu0 0
        %1216 = vmatpush1.bf16.msra.mxu0 %v1179
        %1217 = vmatprep.subr.bf16.mxu0 0
        %1218 = vmatpush1.bf16.msra.mxu0 %v1180
        %1219 = vmatprep.subr.bf16.mxu0 0
        %1220 = vmatpush1.bf16.msra.mxu0 %v1181
        %1221 = vmatprep.subr.bf16.mxu0 0
        %1222 = vmatpush1.bf16.msra.mxu0 %v1182
        %1223 = vmatprep.subr.bf16.mxu0 0
        %1224 = vmatpush1.bf16.msra.mxu0 %v1183
        %1225 = vmatprep.subr.bf16.mxu0 0
        %1226 = vmatpush1.bf16.msra.mxu0 %v1184
        %1227 = vmatprep.subr.bf16.mxu0 0
        %1228 = vmatpush1.bf16.msra.mxu0 %v1185
        %1229 = vmatprep.subr.bf16.mxu0 0
        %1230 = vmatpush1.bf16.msra.mxu0 %v1186
        %1231 = vmatprep.subr.bf16.mxu0 0
        %1232 = vmatpush1.bf16.msra.mxu0 %v1187
        %1233 = vmatprep.subr.bf16.mxu0 0
        %1234 = vmatpush1.bf16.msra.mxu0 %v1188
        %1235 = vmatprep.subr.bf16.mxu0 0
        %1236 = vmatpush1.bf16.msra.mxu0 %v1189
        %1237 = vmatprep.subr.bf16.mxu0 0
        %1238 = vmatpush1.bf16.msra.mxu0 %v1190
        %1239 = vmatprep.mubr.bf16.mxu0 %v856
        %1240 = vmatmul.mubr.bf16.gmra.mrb[0].mxu0 %v855
        %v1241 = vpop.f32.mrb[0].mxu0
        %v1242 = vadd.f32 %v469, %v1241
        %v1243 = vpop.f32.mrb[0].mxu0
        %v1244 = vpop.f32.mrb[0].mxu0
        %v1245 = vadd.f32 %v469, %v1244
        %v1246 = vpop.f32.mrb[0].mxu0
        %1247 = vmatprep.mubr.bf16.mxu0 %v858
        %1248 = vmatmul.mubr.bf16.gmra.mrb[0].mxu0 %v857
        %v1249 = vpop.f32.mrb[0].mxu0
        %v1250 = vadd.f32 %v469, %v1249
        %v1251 = vpop.f32.mrb[0].mxu0
        %v1252 = vpop.f32.mrb[0].mxu0
        %v1253 = vadd.f32 %v469, %v1252
        %v1254 = vpop.f32.mrb[0].mxu0
        %1255 = vmatprep.mubr.bf16.mxu0 %v860
        %1256 = vmatmul.mubr.bf16.gmra.mrb[0].mxu0 %v859
        %v1257 = vpop.f32.mrb[0].mxu0
        %v1258 = vadd.f32 %v469, %v1257
        %v1259 = vpop.f32.mrb[0].mxu0
        %v1260 = vpop.f32.mrb[0].mxu0
        %v1261 = vadd.f32 %v469, %v1260
        %v1262 = vpop.f32.mrb[0].mxu0
        %1263 = vmatprep.mubr.bf16.mxu0 %v862
        %1264 = vmatmul.mubr.bf16.gmra.mrb[0].mxu0 %v861
        %v1265 = vpop.f32.mrb[0].mxu0
        %v1266 = vadd.f32 %v469, %v1265
        %v1267 = vpop.f32.mrb[0].mxu0
        %v1268 = vpop.f32.mrb[0].mxu0
        %v1269 = vadd.f32 %v469, %v1268
        %v1270 = vpop.f32.mrb[0].mxu0
        %1271 = vmatprep.mubr.bf16.mxu0 %v864
        %1272 = vmatmul.mubr.bf16.gmra.mrb[0].mxu0 %v863
        %v1273 = vpop.f32.mrb[0].mxu0
        %v1274 = vadd.f32 %v469, %v1273
        %v1275 = vpop.f32.mrb[0].mxu0
        %v1276 = vpop.f32.mrb[0].mxu0
        %v1277 = vadd.f32 %v469, %v1276
        %v1278 = vpop.f32.mrb[0].mxu0
        %1279 = vmatprep.mubr.bf16.mxu0 %v866
        %1280 = vmatmul.mubr.bf16.gmra.mrb[0].mxu0 %v865
        %v1281 = vpop.f32.mrb[0].mxu0
        %v1282 = vadd.f32 %v469, %v1281
        %v1283 = vpop.f32.mrb[0].mxu0
        %v1284 = vpop.f32.mrb[0].mxu0
        %v1285 = vadd.f32 %v469, %v1284
        %v1286 = vpop.f32.mrb[0].mxu0
        %1287 = vmatprep.mubr.bf16.mxu0 %v868
        %1288 = vmatmul.mubr.bf16.gmra.mrb[0].mxu0 %v867
        %v1289 = vpop.f32.mrb[0].mxu0
        %v1290 = vadd.f32 %v469, %v1289
        %v1291 = vpop.f32.mrb[0].mxu0
        %v1292 = vpop.f32.mrb[0].mxu0
        %v1293 = vadd.f32 %v469, %v1292
        %v1294 = vpop.f32.mrb[0].mxu0
        %1295 = vmatprep.mubr.bf16.mxu0 %v870
        %1296 = vmatmul.mubr.bf16.gmra.mrb[0].mxu0 %v869
        %v1297 = vpop.f32.mrb[0].mxu0
        %v1298 = vadd.f32 %v469, %v1297
        %v1299 = vpop.f32.mrb[0].mxu0
        %v1300 = vpop.f32.mrb[0].mxu0
        %v1301 = vadd.f32 %v469, %v1300
        %v1302 = vpop.f32.mrb[0].mxu0
        %1303 = vmatprep.mubr.bf16.mxu0 %v872
        %1304 = vmatmul.mubr.bf16.gmra.mrb[0].mxu0 %v871
        %v1305 = vpop.f32.mrb[0].mxu0
        %v1306 = vadd.f32 %v469, %v1305
        %v1307 = vpop.f32.mrb[0].mxu0
        %v1308 = vpop.f32.mrb[0].mxu0
        %v1309 = vadd.f32 %v469, %v1308
        %v1310 = vpop.f32.mrb[0].mxu0
        %1311 = vmatprep.mubr.bf16.mxu0 %v874
        %1312 = vmatmul.mubr.bf16.gmra.mrb[0].mxu0 %v873
        %v1313 = vpop.f32.mrb[0].mxu0
        %v1314 = vadd.f32 %v469, %v1313
        %v1315 = vpop.f32.mrb[0].mxu0
        %v1316 = vpop.f32.mrb[0].mxu0
        %v1317 = vadd.f32 %v469, %v1316
        %v1318 = vpop.f32.mrb[0].mxu0
        %1319 = vmatprep.mubr.bf16.mxu0 %v876
        %1320 = vmatmul.mubr.bf16.gmra.mrb[0].mxu0 %v875
        %v1321 = vpop.f32.mrb[0].mxu0
        %v1322 = vadd.f32 %v469, %v1321
        %v1323 = vpop.f32.mrb[0].mxu0
        %v1324 = vpop.f32.mrb[0].mxu0
        %v1325 = vadd.f32 %v469, %v1324
        %v1326 = vpop.f32.mrb[0].mxu0
        %1327 = vmatprep.mubr.bf16.mxu0 %v878
        %1328 = vmatmul.mubr.bf16.gmra.mrb[0].mxu0 %v877
        %v1329 = vpop.f32.mrb[0].mxu0
        %v1330 = vadd.f32 %v469, %v1329
        %v1331 = vpop.f32.mrb[0].mxu0
        %v1332 = vpop.f32.mrb[0].mxu0
        %v1333 = vadd.f32 %v469, %v1332
        %v1334 = vpop.f32.mrb[0].mxu0
        %1335 = vmatprep.mubr.bf16.mxu0 %v880
        %1336 = vmatmul.mubr.bf16.gmra.mrb[0].mxu0 %v879
        %v1337 = vpop.f32.mrb[0].mxu0
        %v1338 = vadd.f32 %v469, %v1337
        %v1339 = vpop.f32.mrb[0].mxu0
        %v1340 = vpop.f32.mrb[0].mxu0
        %v1341 = vadd.f32 %v469, %v1340
        %v1342 = vpop.f32.mrb[0].mxu0
        %1343 = vmatprep.mubr.bf16.mxu0 %v882
        %1344 = vmatmul.mubr.bf16.gmra.mrb[0].mxu0 %v881
        %v1345 = vpop.f32.mrb[0].mxu0
        %v1346 = vadd.f32 %v469, %v1345
        %v1347 = vpop.f32.mrb[0].mxu0
        %v1348 = vpop.f32.mrb[0].mxu0
        %v1349 = vadd.f32 %v469, %v1348
        %v1350 = vpop.f32.mrb[0].mxu0
        %1351 = vmatprep.mubr.bf16.mxu0 %v884
        %1352 = vmatmul.mubr.bf16.gmra.mrb[0].mxu0 %v883
        %v1353 = vpop.f32.mrb[0].mxu0
        %v1354 = vadd.f32 %v469, %v1353
        %v1355 = vpop.f32.mrb[0].mxu0
        %v1356 = vpop.f32.mrb[0].mxu0
        %v1357 = vadd.f32 %v469, %v1356
        %v1358 = vpop.f32.mrb[0].mxu0
        %1359 = vmatprep.mubr.bf16.mxu0 %v886
        %1360 = vmatmul.mubr.bf16.gmra.mrb[0].mxu0 %v885
        %v1361 = vpop.f32.mrb[0].mxu0
        %v1362 = vadd.f32 %v469, %v1361
        %v1363 = vpop.f32.mrb[0].mxu0
        %v1364 = vpop.f32.mrb[0].mxu0
        %v1365 = vadd.f32 %v469, %v1364
        %v1366 = vpop.f32.mrb[0].mxu0
        %1367 = vmatprep.mubr.bf16.mxu0 %v888
        %1368 = vmatmul.mubr.bf16.gmra.mrb[0].mxu0 %v887
        %v1369 = vpop.f32.mrb[0].mxu0
        %v1370 = vadd.f32 %v469, %v1369
        %v1371 = vpop.f32.mrb[0].mxu0
        %v1372 = vpop.f32.mrb[0].mxu0
        %v1373 = vadd.f32 %v469, %v1372
        %v1374 = vpop.f32.mrb[0].mxu0
        %1375 = vmatprep.mubr.bf16.mxu0 %v890
        %1376 = vmatmul.mubr.bf16.gmra.mrb[0].mxu0 %v889
        %v1377 = vpop.f32.mrb[0].mxu0
        %v1378 = vadd.f32 %v469, %v1377
        %v1379 = vpop.f32.mrb[0].mxu0
        %v1380 = vpop.f32.mrb[0].mxu0
        %v1381 = vadd.f32 %v469, %v1380
        %v1382 = vpop.f32.mrb[0].mxu0
        %1383 = vmatprep.mubr.bf16.mxu0 %v892
        %1384 = vmatmul.mubr.bf16.gmra.mrb[0].mxu0 %v891
        %v1385 = vpop.f32.mrb[0].mxu0
        %v1386 = vadd.f32 %v469, %v1385
        %v1387 = vpop.f32.mrb[0].mxu0
        %v1388 = vpop.f32.mrb[0].mxu0
        %v1389 = vadd.f32 %v469, %v1388
        %v1390 = vpop.f32.mrb[0].mxu0
        %1391 = vmatprep.mubr.bf16.mxu0 %v894
        %1392 = vmatmul.mubr.bf16.gmra.mrb[0].mxu0 %v893
        %v1393 = vpop.f32.mrb[0].mxu0
        %v1394 = vadd.f32 %v469, %v1393
        %v1395 = vpop.f32.mrb[0].mxu0
        %v1396 = vpop.f32.mrb[0].mxu0
        %v1397 = vadd.f32 %v469, %v1396
        %v1398 = vpop.f32.mrb[0].mxu0
        %1399 = vmatprep.mubr.bf16.mxu0 %v896
        %1400 = vmatmul.mubr.bf16.gmra.mrb[0].mxu0 %v895
        %v1401 = vpop.f32.mrb[0].mxu0
        %v1402 = vadd.f32 %v469, %v1401
        %v1403 = vpop.f32.mrb[0].mxu0
        %v1404 = vpop.f32.mrb[0].mxu0
        %v1405 = vadd.f32 %v469, %v1404
        %v1406 = vpop.f32.mrb[0].mxu0
        %1407 = vmatprep.mubr.bf16.mxu0 %v898
        %1408 = vmatmul.mubr.bf16.gmra.mrb[0].mxu0 %v897
        %v1409 = vpop.f32.mrb[0].mxu0
        %v1410 = vadd.f32 %v469, %v1409
        %v1411 = vpop.f32.mrb[0].mxu0
        %v1412 = vpop.f32.mrb[0].mxu0
        %v1413 = vadd.f32 %v469, %v1412
        %v1414 = vpop.f32.mrb[0].mxu0
        %1415 = vmatprep.mubr.bf16.mxu0 %v900
        %1416 = vmatmul.mubr.bf16.gmra.mrb[0].mxu0 %v899
        %v1417 = vpop.f32.mrb[0].mxu0
        %v1418 = vadd.f32 %v469, %v1417
        %v1419 = vpop.f32.mrb[0].mxu0
        %v1420 = vpop.f32.mrb[0].mxu0
        %v1421 = vadd.f32 %v469, %v1420
        %v1422 = vpop.f32.mrb[0].mxu0
        %1423 = vmatprep.mubr.bf16.mxu0 %v902
        %1424 = vmatmul.mubr.bf16.gmra.mrb[0].mxu0 %v901
        %v1425 = vpop.f32.mrb[0].mxu0
        %v1426 = vadd.f32 %v469, %v1425
        %v1427 = vpop.f32.mrb[0].mxu0
        %v1428 = vpop.f32.mrb[0].mxu0
        %v1429 = vadd.f32 %v469, %v1428
        %v1430 = vpop.f32.mrb[0].mxu0
        %1431 = vmatprep.mubr.bf16.mxu0 %v904
        %1432 = vmatmul.mubr.bf16.gmra.mrb[0].mxu0 %v903
        %v1433 = vpop.f32.mrb[0].mxu0
        %v1434 = vadd.f32 %v469, %v1433
        %v1435 = vpop.f32.mrb[0].mxu0
        %v1436 = vpop.f32.mrb[0].mxu0
        %v1437 = vadd.f32 %v469, %v1436
        %v1438 = vpop.f32.mrb[0].mxu0
        %1439 = vmatprep.mubr.bf16.mxu0 %v906
        %1440 = vmatmul.mubr.bf16.gmra.mrb[0].mxu0 %v905
        %v1441 = vpop.f32.mrb[0].mxu0
        %v1442 = vadd.f32 %v469, %v1441
        %v1443 = vpop.f32.mrb[0].mxu0
        %v1444 = vpop.f32.mrb[0].mxu0
        %v1445 = vadd.f32 %v469, %v1444
        %v1446 = vpop.f32.mrb[0].mxu0
        %1447 = vmatprep.mubr.bf16.mxu0 %v908
        %1448 = vmatmul.mubr.bf16.gmra.mrb[0].mxu0 %v907
        %v1449 = vpop.f32.mrb[0].mxu0
        %v1450 = vadd.f32 %v469, %v1449
        %v1451 = vpop.f32.mrb[0].mxu0
        %v1452 = vpop.f32.mrb[0].mxu0
        %v1453 = vadd.f32 %v469, %v1452
        %v1454 = vpop.f32.mrb[0].mxu0
        %1455 = vmatprep.mubr.bf16.mxu0 %v910
        %1456 = vmatmul.mubr.bf16.gmra.mrb[0].mxu0 %v909
        %v1457 = vpop.f32.mrb[0].mxu0
        %v1458 = vadd.f32 %v469, %v1457
        %v1459 = vpop.f32.mrb[0].mxu0
        %v1460 = vpop.f32.mrb[0].mxu0
        %v1461 = vadd.f32 %v469, %v1460
        %v1462 = vpop.f32.mrb[0].mxu0
        %1463 = vmatprep.mubr.bf16.mxu0 %v912
        %1464 = vmatmul.mubr.bf16.gmra.mrb[0].mxu0 %v911
        %v1465 = vpop.f32.mrb[0].mxu0
        %v1466 = vadd.f32 %v469, %v1465
        %v1467 = vpop.f32.mrb[0].mxu0
        %v1468 = vpop.f32.mrb[0].mxu0
        %v1469 = vadd.f32 %v469, %v1468
        %v1470 = vpop.f32.mrb[0].mxu0
        %1471 = vmatprep.mubr.bf16.mxu0 %v914
        %1472 = vmatmul.mubr.bf16.gmra.mrb[0].mxu0 %v913
        %v1473 = vpop.f32.mrb[0].mxu0
        %v1474 = vadd.f32 %v469, %v1473
        %v1475 = vpop.f32.mrb[0].mxu0
        %v1476 = vpop.f32.mrb[0].mxu0
        %v1477 = vadd.f32 %v469, %v1476
        %v1478 = vpop.f32.mrb[0].mxu0
        %1479 = vmatprep.mubr.bf16.mxu0 %v916
        %1480 = vmatmul.mubr.bf16.gmra.mrb[0].mxu0 %v915
        %v1481 = vpop.f32.mrb[0].mxu0
        %v1482 = vadd.f32 %v469, %v1481
        %v1483 = vpop.f32.mrb[0].mxu0
        %v1484 = vpop.f32.mrb[0].mxu0
        %v1485 = vadd.f32 %v469, %v1484
        %v1486 = vpop.f32.mrb[0].mxu0
        %1487 = vmatprep.mubr.bf16.mxu0 %v918
        %1488 = vmatmul.mubr.bf16.gmra.mrb[0].mxu0 %v917
        %v1489 = vpop.f32.mrb[0].mxu0
        %v1490 = vadd.f32 %v469, %v1489
        %v1491 = vpop.f32.mrb[0].mxu0
        %v1492 = vpop.f32.mrb[0].mxu0
        %v1493 = vadd.f32 %v469, %v1492
        %v1494 = vpop.f32.mrb[0].mxu0
        %1495 = vmatprep.mubr.bf16.mxu0 %v920
        %1496 = vmatmul.mubr.bf16.gmra.mrb[0].mxu0 %v919
        %v1497 = vpop.f32.mrb[0].mxu0
        %v1498 = vadd.f32 %v469, %v1497
        %v1499 = vpop.f32.mrb[0].mxu0
        %v1500 = vpop.f32.mrb[0].mxu0
        %v1501 = vadd.f32 %v469, %v1500
        %v1502 = vpop.f32.mrb[0].mxu0
        %1503 = vmatprep.mubr.bf16.mxu0 %v922
        %1504 = vmatmul.mubr.bf16.gmra.mrb[0].mxu0 %v921
        %v1505 = vpop.f32.mrb[0].mxu0
        %v1506 = vadd.f32 %v469, %v1505
        %v1507 = vpop.f32.mrb[0].mxu0
        %v1508 = vpop.f32.mrb[0].mxu0
        %v1509 = vadd.f32 %v469, %v1508
        %v1510 = vpop.f32.mrb[0].mxu0
        %1511 = vmatprep.mubr.bf16.mxu0 %v924
        %1512 = vmatmul.mubr.bf16.gmra.mrb[0].mxu0 %v923
        %v1513 = vpop.f32.mrb[0].mxu0
        %v1514 = vadd.f32 %v469, %v1513
        %v1515 = vpop.f32.mrb[0].mxu0
        %v1516 = vpop.f32.mrb[0].mxu0
        %v1517 = vadd.f32 %v469, %v1516
        %v1518 = vpop.f32.mrb[0].mxu0
        %1519 = vmatprep.mubr.bf16.mxu0 %v926
        %1520 = vmatmul.mubr.bf16.gmra.mrb[0].mxu0 %v925
        %v1521 = vpop.f32.mrb[0].mxu0
        %v1522 = vadd.f32 %v469, %v1521
        %v1523 = vpop.f32.mrb[0].mxu0
        %v1524 = vpop.f32.mrb[0].mxu0
        %v1525 = vadd.f32 %v469, %v1524
        %v1526 = vpop.f32.mrb[0].mxu0
        %1527 = vmatprep.mubr.bf16.mxu0 %v928
        %1528 = vmatmul.mubr.bf16.gmra.mrb[0].mxu0 %v927
        %v1529 = vpop.f32.mrb[0].mxu0
        %v1530 = vadd.f32 %v469, %v1529
        %v1531 = vpop.f32.mrb[0].mxu0
        %v1532 = vpop.f32.mrb[0].mxu0
        %v1533 = vadd.f32 %v469, %v1532
        %v1534 = vpop.f32.mrb[0].mxu0
        %1535 = vmatprep.mubr.bf16.mxu0 %v930
        %1536 = vmatmul.mubr.bf16.gmra.mrb[0].mxu0 %v929
        %v1537 = vpop.f32.mrb[0].mxu0
        %v1538 = vadd.f32 %v469, %v1537
        %v1539 = vpop.f32.mrb[0].mxu0
        %v1540 = vpop.f32.mrb[0].mxu0
        %v1541 = vadd.f32 %v469, %v1540
        %v1542 = vpop.f32.mrb[0].mxu0
        %1543 = vmatprep.mubr.bf16.mxu0 %v932
        %1544 = vmatmul.mubr.bf16.gmra.mrb[0].mxu0 %v931
        %v1545 = vpop.f32.mrb[0].mxu0
        %v1546 = vadd.f32 %v469, %v1545
        %v1547 = vpop.f32.mrb[0].mxu0
        %v1548 = vpop.f32.mrb[0].mxu0
        %v1549 = vadd.f32 %v469, %v1548
        %v1550 = vpop.f32.mrb[0].mxu0
        %1551 = vmatprep.mubr.bf16.mxu0 %v934
        %1552 = vmatmul.mubr.bf16.gmra.mrb[0].mxu0 %v933
        %v1553 = vpop.f32.mrb[0].mxu0
        %v1554 = vadd.f32 %v469, %v1553
        %v1555 = vpop.f32.mrb[0].mxu0
        %v1556 = vpop.f32.mrb[0].mxu0
        %v1557 = vadd.f32 %v469, %v1556
        %v1558 = vpop.f32.mrb[0].mxu0
        %1559 = vmatprep.mubr.bf16.mxu0 %v936
        %1560 = vmatmul.mubr.bf16.gmra.mrb[0].mxu0 %v935
        %v1561 = vpop.f32.mrb[0].mxu0
        %v1562 = vadd.f32 %v469, %v1561
        %v1563 = vpop.f32.mrb[0].mxu0
        %v1564 = vpop.f32.mrb[0].mxu0
        %v1565 = vadd.f32 %v469, %v1564
        %v1566 = vpop.f32.mrb[0].mxu0
        %1567 = vmatprep.mubr.bf16.mxu0 %v938
        %1568 = vmatmul.mubr.bf16.gmra.mrb[0].mxu0 %v937
        %v1569 = vpop.f32.mrb[0].mxu0
        %v1570 = vadd.f32 %v469, %v1569
        %v1571 = vpop.f32.mrb[0].mxu0
        %v1572 = vpop.f32.mrb[0].mxu0
        %v1573 = vadd.f32 %v469, %v1572
        %v1574 = vpop.f32.mrb[0].mxu0
        %1575 = vmatprep.mubr.bf16.mxu0 %v940
        %1576 = vmatmul.mubr.bf16.gmra.mrb[0].mxu0 %v939
        %v1577 = vpop.f32.mrb[0].mxu0
        %v1578 = vadd.f32 %v469, %v1577
        %v1579 = vpop.f32.mrb[0].mxu0
        %v1580 = vpop.f32.mrb[0].mxu0
        %v1581 = vadd.f32 %v469, %v1580
        %v1582 = vpop.f32.mrb[0].mxu0
        %1583 = vmatprep.mubr.bf16.mxu0 %v942
        %1584 = vmatmul.mubr.bf16.gmra.mrb[0].mxu0 %v941
        %v1585 = vpop.f32.mrb[0].mxu0
        %v1586 = vadd.f32 %v469, %v1585
        %v1587 = vpop.f32.mrb[0].mxu0
        %v1588 = vpop.f32.mrb[0].mxu0
        %v1589 = vadd.f32 %v469, %v1588
        %v1590 = vpop.f32.mrb[0].mxu0
        %1591 = vmatprep.mubr.bf16.mxu0 %v944
        %1592 = vmatmul.mubr.bf16.gmra.mrb[0].mxu0 %v943
        %v1593 = vpop.f32.mrb[0].mxu0
        %v1594 = vadd.f32 %v469, %v1593
        %v1595 = vpop.f32.mrb[0].mxu0
        %v1596 = vpop.f32.mrb[0].mxu0
        %v1597 = vadd.f32 %v469, %v1596
        %v1598 = vpop.f32.mrb[0].mxu0
        %1599 = vmatprep.mubr.bf16.mxu0 %v946
        %1600 = vmatmul.mubr.bf16.gmra.mrb[0].mxu0 %v945
        %v1601 = vpop.f32.mrb[0].mxu0
        %v1602 = vadd.f32 %v469, %v1601
        %v1603 = vpop.f32.mrb[0].mxu0
        %v1604 = vpop.f32.mrb[0].mxu0
        %v1605 = vadd.f32 %v469, %v1604
        %v1606 = vpop.f32.mrb[0].mxu0
        %1607 = vmatprep.mubr.bf16.mxu0 %v948
        %1608 = vmatmul.mubr.bf16.gmra.mrb[0].mxu0 %v947
        %v1609 = vpop.f32.mrb[0].mxu0
        %v1610 = vadd.f32 %v469, %v1609
        %v1611 = vpop.f32.mrb[0].mxu0
        %v1612 = vpop.f32.mrb[0].mxu0
        %v1613 = vadd.f32 %v469, %v1612
        %v1614 = vpop.f32.mrb[0].mxu0
        %1615 = vmatprep.mubr.bf16.mxu0 %v950
        %1616 = vmatmul.mubr.bf16.gmra.mrb[0].mxu0 %v949
        %v1617 = vpop.f32.mrb[0].mxu0
        %v1618 = vadd.f32 %v469, %v1617
        %v1619 = vpop.f32.mrb[0].mxu0
        %v1620 = vpop.f32.mrb[0].mxu0
        %v1621 = vadd.f32 %v469, %v1620
        %v1622 = vpop.f32.mrb[0].mxu0
        %1623 = vmatprep.mubr.bf16.mxu0 %v952
        %1624 = vmatmul.mubr.bf16.gmra.mrb[0].mxu0 %v951
        %v1625 = vpop.f32.mrb[0].mxu0
        %v1626 = vadd.f32 %v469, %v1625
        %v1627 = vpop.f32.mrb[0].mxu0
        %v1628 = vpop.f32.mrb[0].mxu0
        %v1629 = vadd.f32 %v469, %v1628
        %v1630 = vpop.f32.mrb[0].mxu0
        %1631 = vmatprep.mubr.bf16.mxu0 %v954
        %1632 = vmatmul.mubr.bf16.gmra.mrb[0].mxu0 %v953
        %v1633 = vpop.f32.mrb[0].mxu0
        %v1634 = vadd.f32 %v469, %v1633
        %v1635 = vpop.f32.mrb[0].mxu0
        %v1636 = vpop.f32.mrb[0].mxu0
        %v1637 = vadd.f32 %v469, %v1636
        %v1638 = vpop.f32.mrb[0].mxu0
        %1639 = vmatprep.mubr.bf16.mxu0 %v956
        %1640 = vmatmul.mubr.bf16.gmra.mrb[0].mxu0 %v955
        %v1641 = vpop.f32.mrb[0].mxu0
        %v1642 = vadd.f32 %v469, %v1641
        %v1643 = vpop.f32.mrb[0].mxu0
        %v1644 = vpop.f32.mrb[0].mxu0
        %v1645 = vadd.f32 %v469, %v1644
        %v1646 = vpop.f32.mrb[0].mxu0
        %1647 = vmatprep.mubr.bf16.mxu0 %v958
        %1648 = vmatmul.mubr.bf16.gmra.mrb[0].mxu0 %v957
        %v1649 = vpop.f32.mrb[0].mxu0
        %v1650 = vadd.f32 %v469, %v1649
        %v1651 = vpop.f32.mrb[0].mxu0
        %v1652 = vpop.f32.mrb[0].mxu0
        %v1653 = vadd.f32 %v469, %v1652
        %v1654 = vpop.f32.mrb[0].mxu0
        %1655 = vmatprep.mubr.bf16.mxu0 %v960
        %1656 = vmatmul.mubr.bf16.gmra.mrb[0].mxu0 %v959
        %v1657 = vpop.f32.mrb[0].mxu0
        %v1658 = vadd.f32 %v469, %v1657
        %v1659 = vpop.f32.mrb[0].mxu0
        %v1660 = vpop.f32.mrb[0].mxu0
        %v1661 = vadd.f32 %v469, %v1660
        %v1662 = vpop.f32.mrb[0].mxu0
        %1663 = vmatprep.mubr.bf16.mxu0 %v962
        %1664 = vmatmul.mubr.bf16.gmra.mrb[0].mxu0 %v961
        %v1665 = vpop.f32.mrb[0].mxu0
        %v1666 = vadd.f32 %v469, %v1665
        %v1667 = vpop.f32.mrb[0].mxu0
        %v1668 = vpop.f32.mrb[0].mxu0
        %v1669 = vadd.f32 %v469, %v1668
        %v1670 = vpop.f32.mrb[0].mxu0
        %1671 = vmatprep.mubr.bf16.mxu0 %v964
        %1672 = vmatmul.mubr.bf16.gmra.mrb[0].mxu0 %v963
        %v1673 = vpop.f32.mrb[0].mxu0
        %v1674 = vadd.f32 %v469, %v1673
        %v1675 = vpop.f32.mrb[0].mxu0
        %v1676 = vpop.f32.mrb[0].mxu0
        %v1677 = vadd.f32 %v469, %v1676
        %v1678 = vpop.f32.mrb[0].mxu0
        %1679 = vmatprep.mubr.bf16.mxu0 %v966
        %1680 = vmatmul.mubr.bf16.gmra.mrb[0].mxu0 %v965
        %v1681 = vpop.f32.mrb[0].mxu0
        %v1682 = vadd.f32 %v469, %v1681
        %v1683 = vpop.f32.mrb[0].mxu0
        %v1684 = vpop.f32.mrb[0].mxu0
        %v1685 = vadd.f32 %v469, %v1684
        %v1686 = vpop.f32.mrb[0].mxu0
        %1687 = vmatprep.mubr.bf16.mxu0 %v968
        %1688 = vmatmul.mubr.bf16.gmra.mrb[0].mxu0 %v967
        %v1689 = vpop.f32.mrb[0].mxu0
        %v1690 = vadd.f32 %v469, %v1689
        %v1691 = vpop.f32.mrb[0].mxu0
        %v1692 = vpop.f32.mrb[0].mxu0
        %v1693 = vadd.f32 %v469, %v1692
        %v1694 = vpop.f32.mrb[0].mxu0
        %1695 = vmatprep.mubr.bf16.mxu0 %v970
        %1696 = vmatmul.mubr.bf16.gmra.mrb[0].mxu0 %v969
        %v1697 = vpop.f32.mrb[0].mxu0
        %v1698 = vadd.f32 %v469, %v1697
        %v1699 = vpop.f32.mrb[0].mxu0
        %v1700 = vpop.f32.mrb[0].mxu0
        %v1701 = vadd.f32 %v469, %v1700
        %v1702 = vpop.f32.mrb[0].mxu0
        %1703 = vmatprep.mubr.bf16.mxu0 %v972
        %1704 = vmatmul.mubr.bf16.gmra.mrb[0].mxu0 %v971
        %v1705 = vpop.f32.mrb[0].mxu0
        %v1706 = vadd.f32 %v469, %v1705
        %v1707 = vpop.f32.mrb[0].mxu0
        %v1708 = vpop.f32.mrb[0].mxu0
        %v1709 = vadd.f32 %v469, %v1708
        %v1710 = vpop.f32.mrb[0].mxu0
        %1711 = vmatprep.mubr.bf16.mxu0 %v974
        %1712 = vmatmul.mubr.bf16.gmra.mrb[0].mxu0 %v973
        %v1713 = vpop.f32.mrb[0].mxu0
        %v1714 = vadd.f32 %v469, %v1713
        %v1715 = vpop.f32.mrb[0].mxu0
        %v1716 = vpop.f32.mrb[0].mxu0
        %v1717 = vadd.f32 %v469, %v1716
        %v1718 = vpop.f32.mrb[0].mxu0
        %1719 = vmatprep.mubr.bf16.mxu0 %v976
        %1720 = vmatmul.mubr.bf16.gmra.mrb[0].mxu0 %v975
        %v1721 = vpop.f32.mrb[0].mxu0
        %v1722 = vadd.f32 %v469, %v1721
        %v1723 = vpop.f32.mrb[0].mxu0
        %v1724 = vpop.f32.mrb[0].mxu0
        %v1725 = vadd.f32 %v469, %v1724
        %v1726 = vpop.f32.mrb[0].mxu0
        %1727 = vmatprep.mubr.bf16.mxu0 %v978
        %1728 = vmatmul.mubr.bf16.gmra.mrb[0].mxu0 %v977
        %v1729 = vpop.f32.mrb[0].mxu0
        %v1730 = vadd.f32 %v469, %v1729
        %v1731 = vpop.f32.mrb[0].mxu0
        %v1732 = vpop.f32.mrb[0].mxu0
        %v1733 = vadd.f32 %v469, %v1732
        %v1734 = vpop.f32.mrb[0].mxu0
        %1735 = vmatprep.mubr.bf16.mxu0 %v980
        %1736 = vmatmul.mubr.bf16.gmra.mrb[0].mxu0 %v979
        %v1737 = vpop.f32.mrb[0].mxu0
        %v1738 = vadd.f32 %v469, %v1737
        %v1739 = vpop.f32.mrb[0].mxu0
        %v1740 = vpop.f32.mrb[0].mxu0
        %v1741 = vadd.f32 %v469, %v1740
        %v1742 = vpop.f32.mrb[0].mxu0
        %1743 = vmatprep.mubr.bf16.mxu0 %v982
        %1744 = vmatmul.mubr.bf16.gmra.mrb[0].mxu0 %v981
        %v1745 = vpop.f32.mrb[0].mxu0
        %v1746 = vadd.f32 %v469, %v1745
        %v1747 = vpop.f32.mrb[0].mxu0
        %v1748 = vpop.f32.mrb[0].mxu0
        %v1749 = vadd.f32 %v469, %v1748
        %v1750 = vpop.f32.mrb[0].mxu0
        %1751 = vdwg.mxu0
        %v1752 = vmax.f32 %v1242, 0.0
        %v1753 = vmax.f32 %v1245, 0.0
        %v1754 = vmax.f32 %v1250, 0.0
        %v1755 = vmax.f32 %v1253, 0.0
        %v1756 = vmax.f32 %v1258, 0.0
        %v1757 = vmax.f32 %v1261, 0.0
        %v1758 = vmax.f32 %v1266, 0.0
        %v1759 = vmax.f32 %v1269, 0.0
        %v1760 = vmax.f32 %v1274, 0.0
        %v1761 = vmax.f32 %v1277, 0.0
        %v1762 = vmax.f32 %v1282, 0.0
        %v1763 = vmax.f32 %v1285, 0.0
        %v1764 = vmax.f32 %v1290, 0.0
        %v1765 = vmax.f32 %v1293, 0.0
        %v1766 = vmax.f32 %v1298, 0.0
        %v1767 = vmax.f32 %v1301, 0.0
        %v1768 = vmax.f32 %v1306, 0.0
        %v1769 = vmax.f32 %v1309, 0.0
        %v1770 = vmax.f32 %v1314, 0.0
        %v1771 = vmax.f32 %v1317, 0.0
        %v1772 = vmax.f32 %v1322, 0.0
        %v1773 = vmax.f32 %v1325, 0.0
        %v1774 = vmax.f32 %v1330, 0.0
        %v1775 = vmax.f32 %v1333, 0.0
        %v1776 = vmax.f32 %v1338, 0.0
        %v1777 = vmax.f32 %v1341, 0.0
        %v1778 = vmax.f32 %v1346, 0.0
        %v1779 = vmax.f32 %v1349, 0.0
        %v1780 = vmax.f32 %v1354, 0.0
        %v1781 = vmax.f32 %v1357, 0.0
        %v1782 = vmax.f32 %v1362, 0.0
        %v1783 = vmax.f32 %v1365, 0.0
        %v1784 = vmax.f32 %v1370, 0.0
        %v1785 = vmax.f32 %v1373, 0.0
        %v1786 = vmax.f32 %v1378, 0.0
        %v1787 = vmax.f32 %v1381, 0.0
        %v1788 = vmax.f32 %v1386, 0.0
        %v1789 = vmax.f32 %v1389, 0.0
        %v1790 = vmax.f32 %v1394, 0.0
        %v1791 = vmax.f32 %v1397, 0.0
        %v1792 = vmax.f32 %v1402, 0.0
        %v1793 = vmax.f32 %v1405, 0.0
        %v1794 = vmax.f32 %v1410, 0.0
        %v1795 = vmax.f32 %v1413, 0.0
        %v1796 = vmax.f32 %v1418, 0.0
        %v1797 = vmax.f32 %v1421, 0.0
        %v1798 = vmax.f32 %v1426, 0.0
        %v1799 = vmax.f32 %v1429, 0.0
        %v1800 = vmax.f32 %v1434, 0.0
        %v1801 = vmax.f32 %v1437, 0.0
        %v1802 = vmax.f32 %v1442, 0.0
        %v1803 = vmax.f32 %v1445, 0.0
        %v1804 = vmax.f32 %v1450, 0.0
        %v1805 = vmax.f32 %v1453, 0.0
        %v1806 = vmax.f32 %v1458, 0.0
        %v1807 = vmax.f32 %v1461, 0.0
        %v1808 = vmax.f32 %v1466, 0.0
        %v1809 = vmax.f32 %v1469, 0.0
        %v1810 = vmax.f32 %v1474, 0.0
        %v1811 = vmax.f32 %v1477, 0.0
        %v1812 = vmax.f32 %v1482, 0.0
        %v1813 = vmax.f32 %v1485, 0.0
        %v1814 = vmax.f32 %v1490, 0.0
        %v1815 = vmax.f32 %v1493, 0.0
        %v1816 = vmax.f32 %v1498, 0.0
        %v1817 = vmax.f32 %v1501, 0.0
        %v1818 = vmax.f32 %v1506, 0.0
        %v1819 = vmax.f32 %v1509, 0.0
        %v1820 = vmax.f32 %v1514, 0.0
        %v1821 = vmax.f32 %v1517, 0.0
        %v1822 = vmax.f32 %v1522, 0.0
        %v1823 = vmax.f32 %v1525, 0.0
        %v1824 = vmax.f32 %v1530, 0.0
        %v1825 = vmax.f32 %v1533, 0.0
        %v1826 = vmax.f32 %v1538, 0.0
        %v1827 = vmax.f32 %v1541, 0.0
        %v1828 = vmax.f32 %v1546, 0.0
        %v1829 = vmax.f32 %v1549, 0.0
        %v1830 = vmax.f32 %v1554, 0.0
        %v1831 = vmax.f32 %v1557, 0.0
        %v1832 = vmax.f32 %v1562, 0.0
        %v1833 = vmax.f32 %v1565, 0.0
        %v1834 = vmax.f32 %v1570, 0.0
        %v1835 = vmax.f32 %v1573, 0.0
        %v1836 = vmax.f32 %v1578, 0.0
        %v1837 = vmax.f32 %v1581, 0.0
        %v1838 = vmax.f32 %v1586, 0.0
        %v1839 = vmax.f32 %v1589, 0.0
        %v1840 = vmax.f32 %v1594, 0.0
        %v1841 = vmax.f32 %v1597, 0.0
        %v1842 = vmax.f32 %v1602, 0.0
        %v1843 = vmax.f32 %v1605, 0.0
        %v1844 = vmax.f32 %v1610, 0.0
        %v1845 = vmax.f32 %v1613, 0.0
        %v1846 = vmax.f32 %v1618, 0.0
        %v1847 = vmax.f32 %v1621, 0.0
        %v1848 = vmax.f32 %v1626, 0.0
        %v1849 = vmax.f32 %v1629, 0.0
        %v1850 = vmax.f32 %v1634, 0.0
        %v1851 = vmax.f32 %v1637, 0.0
        %v1852 = vmax.f32 %v1642, 0.0
        %v1853 = vmax.f32 %v1645, 0.0
        %v1854 = vmax.f32 %v1650, 0.0
        %v1855 = vmax.f32 %v1653, 0.0
        %v1856 = vmax.f32 %v1658, 0.0
        %v1857 = vmax.f32 %v1661, 0.0
        %v1858 = vmax.f32 %v1666, 0.0
        %v1859 = vmax.f32 %v1669, 0.0
        %v1860 = vmax.f32 %v1674, 0.0
        %v1861 = vmax.f32 %v1677, 0.0
        %v1862 = vmax.f32 %v1682, 0.0
        %v1863 = vmax.f32 %v1685, 0.0
        %v1864 = vmax.f32 %v1690, 0.0
        %v1865 = vmax.f32 %v1693, 0.0
        %v1866 = vmax.f32 %v1698, 0.0
        %v1867 = vmax.f32 %v1701, 0.0
        %v1868 = vmax.f32 %v1706, 0.0
        %v1869 = vmax.f32 %v1709, 0.0
        %v1870 = vmax.f32 %v1714, 0.0
        %v1871 = vmax.f32 %v1717, 0.0
        %v1872 = vmax.f32 %v1722, 0.0
        %v1873 = vmax.f32 %v1725, 0.0
        %v1874 = vmax.f32 %v1730, 0.0
        %v1875 = vmax.f32 %v1733, 0.0
        %v1876 = vmax.f32 %v1738, 0.0
        %v1877 = vmax.f32 %v1741, 0.0
        %v1878 = vmax.f32 %v1746, 0.0
        %v1879 = vmax.f32 %v1749, 0.0
        %v1880 = vpack.c.bf16 %v1753, %v1752
        %v1881 = vpack.c.bf16 %v1755, %v1754
        %v1882 = vpack.c.bf16 %v1757, %v1756
        %v1883 = vpack.c.bf16 %v1759, %v1758
        %v1884 = vpack.c.bf16 %v1761, %v1760
        %v1885 = vpack.c.bf16 %v1763, %v1762
        %v1886 = vpack.c.bf16 %v1765, %v1764
        %v1887 = vpack.c.bf16 %v1767, %v1766
        %v1888 = vpack.c.bf16 %v1769, %v1768
        %v1889 = vpack.c.bf16 %v1771, %v1770
        %v1890 = vpack.c.bf16 %v1773, %v1772
        %v1891 = vpack.c.bf16 %v1775, %v1774
        %v1892 = vpack.c.bf16 %v1777, %v1776
        %v1893 = vpack.c.bf16 %v1779, %v1778
        %v1894 = vpack.c.bf16 %v1781, %v1780
        %v1895 = vpack.c.bf16 %v1783, %v1782
        %v1896 = vpack.c.bf16 %v1785, %v1784
        %v1897 = vpack.c.bf16 %v1787, %v1786
        %v1898 = vpack.c.bf16 %v1789, %v1788
        %v1899 = vpack.c.bf16 %v1791, %v1790
        %v1900 = vpack.c.bf16 %v1793, %v1792
        %v1901 = vpack.c.bf16 %v1795, %v1794
        %v1902 = vpack.c.bf16 %v1797, %v1796
        %v1903 = vpack.c.bf16 %v1799, %v1798
        %v1904 = vpack.c.bf16 %v1801, %v1800
        %v1905 = vpack.c.bf16 %v1803, %v1802
        %v1906 = vpack.c.bf16 %v1805, %v1804
        %v1907 = vpack.c.bf16 %v1807, %v1806
        %v1908 = vpack.c.bf16 %v1809, %v1808
        %v1909 = vpack.c.bf16 %v1811, %v1810
        %v1910 = vpack.c.bf16 %v1813, %v1812
        %v1911 = vpack.c.bf16 %v1815, %v1814
        %v1912 = vpack.c.bf16 %v1817, %v1816
        %v1913 = vpack.c.bf16 %v1819, %v1818
        %v1914 = vpack.c.bf16 %v1821, %v1820
        %v1915 = vpack.c.bf16 %v1823, %v1822
        %v1916 = vpack.c.bf16 %v1825, %v1824
        %v1917 = vpack.c.bf16 %v1827, %v1826
        %v1918 = vpack.c.bf16 %v1829, %v1828
        %v1919 = vpack.c.bf16 %v1831, %v1830
        %v1920 = vpack.c.bf16 %v1833, %v1832
        %v1921 = vpack.c.bf16 %v1835, %v1834
        %v1922 = vpack.c.bf16 %v1837, %v1836
        %v1923 = vpack.c.bf16 %v1839, %v1838
        %v1924 = vpack.c.bf16 %v1841, %v1840
        %v1925 = vpack.c.bf16 %v1843, %v1842
        %v1926 = vpack.c.bf16 %v1845, %v1844
        %v1927 = vpack.c.bf16 %v1847, %v1846
        %v1928 = vpack.c.bf16 %v1849, %v1848
        %v1929 = vpack.c.bf16 %v1851, %v1850
        %v1930 = vpack.c.bf16 %v1853, %v1852
        %v1931 = vpack.c.bf16 %v1855, %v1854
        %v1932 = vpack.c.bf16 %v1857, %v1856
        %v1933 = vpack.c.bf16 %v1859, %v1858
        %v1934 = vpack.c.bf16 %v1861, %v1860
        %v1935 = vpack.c.bf16 %v1863, %v1862
        %v1936 = vpack.c.bf16 %v1865, %v1864
        %v1937 = vpack.c.bf16 %v1867, %v1866
        %v1938 = vpack.c.bf16 %v1869, %v1868
        %v1939 = vpack.c.bf16 %v1871, %v1870
        %v1940 = vpack.c.bf16 %v1873, %v1872
        %v1941 = vpack.c.bf16 %v1875, %v1874
        %v1942 = vpack.c.bf16 %v1877, %v1876
        %v1943 = vpack.c.bf16 %v1879, %v1878
        %v1944 = vld [vmem:[%s3] sm:$0xf]
        %v1945 = vld [vmem:[%s3 + $0x4] sm:$0xf]
        %v1946 = vld [vmem:[%s4] sm:$0x1]
        %v1948 = vlaneseq
        %v1949 = vshrl.u32 %v1948, 7
        %v1950 = vsub.s32 0, %v1949
        %v1951 = vrot.slane %v1946, %v1950
        %v1955 = vunpack.c.l.b16 %v1944
        %v1956 = vunpack.c.l.b16 %v1945
        %v1957 = vpack.c.b16 %v1956, %v1955
        %vm1959 = vcmask 130048
        %v1961 = vsel %vm1959, %v1880, 0
        %v1964 = vsel %vm1959, %v1881, 0
        %v1967 = vsel %vm1959, %v1882, 0
        %v1970 = vsel %vm1959, %v1883, 0
        %v1973 = vsel %vm1959, %v1884, 0
        %v1976 = vsel %vm1959, %v1885, 0
        %v1979 = vsel %vm1959, %v1886, 0
        %v1982 = vsel %vm1959, %v1887, 0
        %v1985 = vsel %vm1959, %v1888, 0
        %v1988 = vsel %vm1959, %v1889, 0
        %v1991 = vsel %vm1959, %v1890, 0
        %v1994 = vsel %vm1959, %v1891, 0
        %v1997 = vsel %vm1959, %v1892, 0
        %v2000 = vsel %vm1959, %v1893, 0
        %v2003 = vsel %vm1959, %v1894, 0
        %v2006 = vsel %vm1959, %v1895, 0
        %v2009 = vsel %vm1959, %v1896, 0
        %v2012 = vsel %vm1959, %v1897, 0
        %v2015 = vsel %vm1959, %v1898, 0
        %v2018 = vsel %vm1959, %v1899, 0
        %v2021 = vsel %vm1959, %v1900, 0
        %v2024 = vsel %vm1959, %v1901, 0
        %v2027 = vsel %vm1959, %v1902, 0
        %v2030 = vsel %vm1959, %v1903, 0
        %v2033 = vsel %vm1959, %v1904, 0
        %v2036 = vsel %vm1959, %v1905, 0
        %v2039 = vsel %vm1959, %v1906, 0
        %v2042 = vsel %vm1959, %v1907, 0
        %v2045 = vsel %vm1959, %v1908, 0
        %v2048 = vsel %vm1959, %v1909, 0
        %v2051 = vsel %vm1959, %v1910, 0
        %v2054 = vsel %vm1959, %v1911, 0
        %v2057 = vsel %vm1959, %v1912, 0
        %v2060 = vsel %vm1959, %v1913, 0
        %v2063 = vsel %vm1959, %v1914, 0
        %v2066 = vsel %vm1959, %v1915, 0
        %v2069 = vsel %vm1959, %v1916, 0
        %v2072 = vsel %vm1959, %v1917, 0
        %v2075 = vsel %vm1959, %v1918, 0
        %v2078 = vsel %vm1959, %v1919, 0
        %v2081 = vsel %vm1959, %v1920, 0
        %v2084 = vsel %vm1959, %v1921, 0
        %v2087 = vsel %vm1959, %v1922, 0
        %v2090 = vsel %vm1959, %v1923, 0
        %v2093 = vsel %vm1959, %v1924, 0
        %v2096 = vsel %vm1959, %v1925, 0
        %v2099 = vsel %vm1959, %v1926, 0
        %v2102 = vsel %vm1959, %v1927, 0
        %v2105 = vsel %vm1959, %v1928, 0
        %v2108 = vsel %vm1959, %v1929, 0
        %v2111 = vsel %vm1959, %v1930, 0
        %v2114 = vsel %vm1959, %v1931, 0
        %v2117 = vsel %vm1959, %v1932, 0
        %v2120 = vsel %vm1959, %v1933, 0
        %v2123 = vsel %vm1959, %v1934, 0
        %v2126 = vsel %vm1959, %v1935, 0
        %v2129 = vsel %vm1959, %v1936, 0
        %v2132 = vsel %vm1959, %v1937, 0
        %v2135 = vsel %vm1959, %v1938, 0
        %v2138 = vsel %vm1959, %v1939, 0
        %v2141 = vsel %vm1959, %v1940, 0
        %v2144 = vsel %vm1959, %v1941, 0
        %v2147 = vsel %vm1959, %v1942, 0
        %v2150 = vsel %vm1959, %v1943, 0
        %2152 = vmatprep.subr.bf16.mxu0 0
        %2153 = vmatpush1.bf16.msra.mxu0 %v1957
        %2154 = vmatprep.subr.bf16.mxu0 0
        %2155 = vmatpush1.bf16.msra.mxu0 0
        %2156 = vmatprep.subr.bf16.mxu0 0
        %2157 = vmatpush1.bf16.msra.mxu0 0
        %2158 = vmatprep.subr.bf16.mxu0 0
        %2159 = vmatpush1.bf16.msra.mxu0 0
        %2160 = vmatprep.subr.bf16.mxu0 0
        %2161 = vmatpush1.bf16.msra.mxu0 0
        %2162 = vmatprep.subr.bf16.mxu0 0
        %2163 = vmatpush1.bf16.msra.mxu0 0
        %2164 = vmatprep.subr.bf16.mxu0 0
        %2165 = vmatpush1.bf16.msra.mxu0 0
        %2166 = vmatprep.subr.bf16.mxu0 0
        %2167 = vmatpush1.bf16.msra.mxu0 0
        %2168 = vmatprep.subr.bf16.mxu0 0
        %2169 = vmatpush1.bf16.msra.mxu0 0
        %2170 = vmatprep.subr.bf16.mxu0 0
        %2171 = vmatpush1.bf16.msra.mxu0 0
        %2172 = vmatprep.subr.bf16.mxu0 0
        %2173 = vmatpush1.bf16.msra.mxu0 0
        %2174 = vmatprep.subr.bf16.mxu0 0
        %2175 = vmatpush1.bf16.msra.mxu0 0
        %2176 = vmatprep.subr.bf16.mxu0 0
        %2177 = vmatpush1.bf16.msra.mxu0 0
        %2178 = vmatprep.subr.bf16.mxu0 0
        %2179 = vmatpush1.bf16.msra.mxu0 0
        %2180 = vmatprep.subr.bf16.mxu0 0
        %2181 = vmatpush1.bf16.msra.mxu0 0
        %2182 = vmatprep.subr.bf16.mxu0 0
        %2183 = vmatpush1.bf16.msra.mxu0 0
        %2184 = vmatprep.mubr.bf16.mxu0 0
        %2185 = vmatmul.mubr.bf16.gmra.mrb[0].mxu0 %v1961
        %v2186 = vpop.f32.mrb[0].mxu0
        %v2187 = vadd.f32 %v1951, %v2186
        %v2188 = vpop.f32.mrb[0].mxu0
        %v2189 = vpop.f32.mrb[0].mxu0
        %v2190 = vadd.f32 %v1951, %v2189
        %v2191 = vpop.f32.mrb[0].mxu0
        %2192 = vmatprep.mubr.bf16.mxu0 0
        %2193 = vmatmul.mubr.bf16.gmra.mrb[0].mxu0 %v1964
        %v2194 = vpop.f32.mrb[0].mxu0
        %v2195 = vadd.f32 %v1951, %v2194
        %v2196 = vpop.f32.mrb[0].mxu0
        %v2197 = vpop.f32.mrb[0].mxu0
        %v2198 = vadd.f32 %v1951, %v2197
        %v2199 = vpop.f32.mrb[0].mxu0
        %2200 = vmatprep.mubr.bf16.mxu0 0
        %2201 = vmatmul.mubr.bf16.gmra.mrb[0].mxu0 %v1967
        %v2202 = vpop.f32.mrb[0].mxu0
        %v2203 = vadd.f32 %v1951, %v2202
        %v2204 = vpop.f32.mrb[0].mxu0
        %v2205 = vpop.f32.mrb[0].mxu0
        %v2206 = vadd.f32 %v1951, %v2205
        %v2207 = vpop.f32.mrb[0].mxu0
        %2208 = vmatprep.mubr.bf16.mxu0 0
        %2209 = vmatmul.mubr.bf16.gmra.mrb[0].mxu0 %v1970
        %v2210 = vpop.f32.mrb[0].mxu0
        %v2211 = vadd.f32 %v1951, %v2210
        %v2212 = vpop.f32.mrb[0].mxu0
        %v2213 = vpop.f32.mrb[0].mxu0
        %v2214 = vadd.f32 %v1951, %v2213
        %v2215 = vpop.f32.mrb[0].mxu0
        %2216 = vmatprep.mubr.bf16.mxu0 0
        %2217 = vmatmul.mubr.bf16.gmra.mrb[0].mxu0 %v1973
        %v2218 = vpop.f32.mrb[0].mxu0
        %v2219 = vadd.f32 %v1951, %v2218
        %v2220 = vpop.f32.mrb[0].mxu0
        %v2221 = vpop.f32.mrb[0].mxu0
        %v2222 = vadd.f32 %v1951, %v2221
        %v2223 = vpop.f32.mrb[0].mxu0
        %2224 = vmatprep.mubr.bf16.mxu0 0
        %2225 = vmatmul.mubr.bf16.gmra.mrb[0].mxu0 %v1976
        %v2226 = vpop.f32.mrb[0].mxu0
        %v2227 = vadd.f32 %v1951, %v2226
        %v2228 = vpop.f32.mrb[0].mxu0
        %v2229 = vpop.f32.mrb[0].mxu0
        %v2230 = vadd.f32 %v1951, %v2229
        %v2231 = vpop.f32.mrb[0].mxu0
        %2232 = vmatprep.mubr.bf16.mxu0 0
        %2233 = vmatmul.mubr.bf16.gmra.mrb[0].mxu0 %v1979
        %v2234 = vpop.f32.mrb[0].mxu0
        %v2235 = vadd.f32 %v1951, %v2234
        %v2236 = vpop.f32.mrb[0].mxu0
        %v2237 = vpop.f32.mrb[0].mxu0
        %v2238 = vadd.f32 %v1951, %v2237
        %v2239 = vpop.f32.mrb[0].mxu0
        %2240 = vmatprep.mubr.bf16.mxu0 0
        %2241 = vmatmul.mubr.bf16.gmra.mrb[0].mxu0 %v1982
        %v2242 = vpop.f32.mrb[0].mxu0
        %v2243 = vadd.f32 %v1951, %v2242
        %v2244 = vpop.f32.mrb[0].mxu0
        %v2245 = vpop.f32.mrb[0].mxu0
        %v2246 = vadd.f32 %v1951, %v2245
        %v2247 = vpop.f32.mrb[0].mxu0
        %2248 = vmatprep.mubr.bf16.mxu0 0
        %2249 = vmatmul.mubr.bf16.gmra.mrb[0].mxu0 %v1985
        %v2250 = vpop.f32.mrb[0].mxu0
        %v2251 = vadd.f32 %v1951, %v2250
        %v2252 = vpop.f32.mrb[0].mxu0
        %v2253 = vpop.f32.mrb[0].mxu0
        %v2254 = vadd.f32 %v1951, %v2253
        %v2255 = vpop.f32.mrb[0].mxu0
        %2256 = vmatprep.mubr.bf16.mxu0 0
        %2257 = vmatmul.mubr.bf16.gmra.mrb[0].mxu0 %v1988
        %v2258 = vpop.f32.mrb[0].mxu0
        %v2259 = vadd.f32 %v1951, %v2258
        %v2260 = vpop.f32.mrb[0].mxu0
        %v2261 = vpop.f32.mrb[0].mxu0
        %v2262 = vadd.f32 %v1951, %v2261
        %v2263 = vpop.f32.mrb[0].mxu0
        %2264 = vmatprep.mubr.bf16.mxu0 0
        %2265 = vmatmul.mubr.bf16.gmra.mrb[0].mxu0 %v1991
        %v2266 = vpop.f32.mrb[0].mxu0
        %v2267 = vadd.f32 %v1951, %v2266
        %v2268 = vpop.f32.mrb[0].mxu0
        %v2269 = vpop.f32.mrb[0].mxu0
        %v2270 = vadd.f32 %v1951, %v2269
        %v2271 = vpop.f32.mrb[0].mxu0
        %2272 = vmatprep.mubr.bf16.mxu0 0
        %2273 = vmatmul.mubr.bf16.gmra.mrb[0].mxu0 %v1994
        %v2274 = vpop.f32.mrb[0].mxu0
        %v2275 = vadd.f32 %v1951, %v2274
        %v2276 = vpop.f32.mrb[0].mxu0
        %v2277 = vpop.f32.mrb[0].mxu0
        %v2278 = vadd.f32 %v1951, %v2277
        %v2279 = vpop.f32.mrb[0].mxu0
        %2280 = vmatprep.mubr.bf16.mxu0 0
        %2281 = vmatmul.mubr.bf16.gmra.mrb[0].mxu0 %v1997
        %v2282 = vpop.f32.mrb[0].mxu0
        %v2283 = vadd.f32 %v1951, %v2282
        %v2284 = vpop.f32.mrb[0].mxu0
        %v2285 = vpop.f32.mrb[0].mxu0
        %v2286 = vadd.f32 %v1951, %v2285
        %v2287 = vpop.f32.mrb[0].mxu0
        %2288 = vmatprep.mubr.bf16.mxu0 0
        %2289 = vmatmul.mubr.bf16.gmra.mrb[0].mxu0 %v2000
        %v2290 = vpop.f32.mrb[0].mxu0
        %v2291 = vadd.f32 %v1951, %v2290
        %v2292 = vpop.f32.mrb[0].mxu0
        %v2293 = vpop.f32.mrb[0].mxu0
        %v2294 = vadd.f32 %v1951, %v2293
        %v2295 = vpop.f32.mrb[0].mxu0
        %2296 = vmatprep.mubr.bf16.mxu0 0
        %2297 = vmatmul.mubr.bf16.gmra.mrb[0].mxu0 %v2003
        %v2298 = vpop.f32.mrb[0].mxu0
        %v2299 = vadd.f32 %v1951, %v2298
        %v2300 = vpop.f32.mrb[0].mxu0
        %v2301 = vpop.f32.mrb[0].mxu0
        %v2302 = vadd.f32 %v1951, %v2301
        %v2303 = vpop.f32.mrb[0].mxu0
        %2304 = vmatprep.mubr.bf16.mxu0 0
        %2305 = vmatmul.mubr.bf16.gmra.mrb[0].mxu0 %v2006
        %v2306 = vpop.f32.mrb[0].mxu0
        %v2307 = vadd.f32 %v1951, %v2306
        %v2308 = vpop.f32.mrb[0].mxu0
        %v2309 = vpop.f32.mrb[0].mxu0
        %v2310 = vadd.f32 %v1951, %v2309
        %v2311 = vpop.f32.mrb[0].mxu0
        %2312 = vmatprep.mubr.bf16.mxu0 0
        %2313 = vmatmul.mubr.bf16.gmra.mrb[0].mxu0 %v2009
        %v2314 = vpop.f32.mrb[0].mxu0
        %v2315 = vadd.f32 %v1951, %v2314
        %v2316 = vpop.f32.mrb[0].mxu0
        %v2317 = vpop.f32.mrb[0].mxu0
        %v2318 = vadd.f32 %v1951, %v2317
        %v2319 = vpop.f32.mrb[0].mxu0
        %2320 = vmatprep.mubr.bf16.mxu0 0
        %2321 = vmatmul.mubr.bf16.gmra.mrb[0].mxu0 %v2012
        %v2322 = vpop.f32.mrb[0].mxu0
        %v2323 = vadd.f32 %v1951, %v2322
        %v2324 = vpop.f32.mrb[0].mxu0
        %v2325 = vpop.f32.mrb[0].mxu0
        %v2326 = vadd.f32 %v1951, %v2325
        %v2327 = vpop.f32.mrb[0].mxu0
        %2328 = vmatprep.mubr.bf16.mxu0 0
        %2329 = vmatmul.mubr.bf16.gmra.mrb[0].mxu0 %v2015
        %v2330 = vpop.f32.mrb[0].mxu0
        %v2331 = vadd.f32 %v1951, %v2330
        %v2332 = vpop.f32.mrb[0].mxu0
        %v2333 = vpop.f32.mrb[0].mxu0
        %v2334 = vadd.f32 %v1951, %v2333
        %v2335 = vpop.f32.mrb[0].mxu0
        %2336 = vmatprep.mubr.bf16.mxu0 0
        %2337 = vmatmul.mubr.bf16.gmra.mrb[0].mxu0 %v2018
        %v2338 = vpop.f32.mrb[0].mxu0
        %v2339 = vadd.f32 %v1951, %v2338
        %v2340 = vpop.f32.mrb[0].mxu0
        %v2341 = vpop.f32.mrb[0].mxu0
        %v2342 = vadd.f32 %v1951, %v2341
        %v2343 = vpop.f32.mrb[0].mxu0
        %2344 = vmatprep.mubr.bf16.mxu0 0
        %2345 = vmatmul.mubr.bf16.gmra.mrb[0].mxu0 %v2021
        %v2346 = vpop.f32.mrb[0].mxu0
        %v2347 = vadd.f32 %v1951, %v2346
        %v2348 = vpop.f32.mrb[0].mxu0
        %v2349 = vpop.f32.mrb[0].mxu0
        %v2350 = vadd.f32 %v1951, %v2349
        %v2351 = vpop.f32.mrb[0].mxu0
        %2352 = vmatprep.mubr.bf16.mxu0 0
        %2353 = vmatmul.mubr.bf16.gmra.mrb[0].mxu0 %v2024
        %v2354 = vpop.f32.mrb[0].mxu0
        %v2355 = vadd.f32 %v1951, %v2354
        %v2356 = vpop.f32.mrb[0].mxu0
        %v2357 = vpop.f32.mrb[0].mxu0
        %v2358 = vadd.f32 %v1951, %v2357
        %v2359 = vpop.f32.mrb[0].mxu0
        %2360 = vmatprep.mubr.bf16.mxu0 0
        %2361 = vmatmul.mubr.bf16.gmra.mrb[0].mxu0 %v2027
        %v2362 = vpop.f32.mrb[0].mxu0
        %v2363 = vadd.f32 %v1951, %v2362
        %v2364 = vpop.f32.mrb[0].mxu0
        %v2365 = vpop.f32.mrb[0].mxu0
        %v2366 = vadd.f32 %v1951, %v2365
        %v2367 = vpop.f32.mrb[0].mxu0
        %2368 = vmatprep.mubr.bf16.mxu0 0
        %2369 = vmatmul.mubr.bf16.gmra.mrb[0].mxu0 %v2030
        %v2370 = vpop.f32.mrb[0].mxu0
        %v2371 = vadd.f32 %v1951, %v2370
        %v2372 = vpop.f32.mrb[0].mxu0
        %v2373 = vpop.f32.mrb[0].mxu0
        %v2374 = vadd.f32 %v1951, %v2373
        %v2375 = vpop.f32.mrb[0].mxu0
        %2376 = vmatprep.mubr.bf16.mxu0 0
        %2377 = vmatmul.mubr.bf16.gmra.mrb[0].mxu0 %v2033
        %v2378 = vpop.f32.mrb[0].mxu0
        %v2379 = vadd.f32 %v1951, %v2378
        %v2380 = vpop.f32.mrb[0].mxu0
        %v2381 = vpop.f32.mrb[0].mxu0
        %v2382 = vadd.f32 %v1951, %v2381
        %v2383 = vpop.f32.mrb[0].mxu0
        %2384 = vmatprep.mubr.bf16.mxu0 0
        %2385 = vmatmul.mubr.bf16.gmra.mrb[0].mxu0 %v2036
        %v2386 = vpop.f32.mrb[0].mxu0
        %v2387 = vadd.f32 %v1951, %v2386
        %v2388 = vpop.f32.mrb[0].mxu0
        %v2389 = vpop.f32.mrb[0].mxu0
        %v2390 = vadd.f32 %v1951, %v2389
        %v2391 = vpop.f32.mrb[0].mxu0
        %2392 = vmatprep.mubr.bf16.mxu0 0
        %2393 = vmatmul.mubr.bf16.gmra.mrb[0].mxu0 %v2039
        %v2394 = vpop.f32.mrb[0].mxu0
        %v2395 = vadd.f32 %v1951, %v2394
        %v2396 = vpop.f32.mrb[0].mxu0
        %v2397 = vpop.f32.mrb[0].mxu0
        %v2398 = vadd.f32 %v1951, %v2397
        %v2399 = vpop.f32.mrb[0].mxu0
        %2400 = vmatprep.mubr.bf16.mxu0 0
        %2401 = vmatmul.mubr.bf16.gmra.mrb[0].mxu0 %v2042
        %v2402 = vpop.f32.mrb[0].mxu0
        %v2403 = vadd.f32 %v1951, %v2402
        %v2404 = vpop.f32.mrb[0].mxu0
        %v2405 = vpop.f32.mrb[0].mxu0
        %v2406 = vadd.f32 %v1951, %v2405
        %v2407 = vpop.f32.mrb[0].mxu0
        %2408 = vmatprep.mubr.bf16.mxu0 0
        %2409 = vmatmul.mubr.bf16.gmra.mrb[0].mxu0 %v2045
        %v2410 = vpop.f32.mrb[0].mxu0
        %v2411 = vadd.f32 %v1951, %v2410
        %v2412 = vpop.f32.mrb[0].mxu0
        %v2413 = vpop.f32.mrb[0].mxu0
        %v2414 = vadd.f32 %v1951, %v2413
        %v2415 = vpop.f32.mrb[0].mxu0
        %2416 = vmatprep.mubr.bf16.mxu0 0
        %2417 = vmatmul.mubr.bf16.gmra.mrb[0].mxu0 %v2048
        %v2418 = vpop.f32.mrb[0].mxu0
        %v2419 = vadd.f32 %v1951, %v2418
        %v2420 = vpop.f32.mrb[0].mxu0
        %v2421 = vpop.f32.mrb[0].mxu0
        %v2422 = vadd.f32 %v1951, %v2421
        %v2423 = vpop.f32.mrb[0].mxu0
        %2424 = vmatprep.mubr.bf16.mxu0 0
        %2425 = vmatmul.mubr.bf16.gmra.mrb[0].mxu0 %v2051
        %v2426 = vpop.f32.mrb[0].mxu0
        %v2427 = vadd.f32 %v1951, %v2426
        %v2428 = vpop.f32.mrb[0].mxu0
        %v2429 = vpop.f32.mrb[0].mxu0
        %v2430 = vadd.f32 %v1951, %v2429
        %v2431 = vpop.f32.mrb[0].mxu0
        %2432 = vmatprep.mubr.bf16.mxu0 0
        %2433 = vmatmul.mubr.bf16.gmra.mrb[0].mxu0 %v2054
        %v2434 = vpop.f32.mrb[0].mxu0
        %v2435 = vadd.f32 %v1951, %v2434
        %v2436 = vpop.f32.mrb[0].mxu0
        %v2437 = vpop.f32.mrb[0].mxu0
        %v2438 = vadd.f32 %v1951, %v2437
        %v2439 = vpop.f32.mrb[0].mxu0
        %2440 = vmatprep.mubr.bf16.mxu0 0
        %2441 = vmatmul.mubr.bf16.gmra.mrb[0].mxu0 %v2057
        %v2442 = vpop.f32.mrb[0].mxu0
        %v2443 = vadd.f32 %v1951, %v2442
        %v2444 = vpop.f32.mrb[0].mxu0
        %v2445 = vpop.f32.mrb[0].mxu0
        %v2446 = vadd.f32 %v1951, %v2445
        %v2447 = vpop.f32.mrb[0].mxu0
        %2448 = vmatprep.mubr.bf16.mxu0 0
        %2449 = vmatmul.mubr.bf16.gmra.mrb[0].mxu0 %v2060
        %v2450 = vpop.f32.mrb[0].mxu0
        %v2451 = vadd.f32 %v1951, %v2450
        %v2452 = vpop.f32.mrb[0].mxu0
        %v2453 = vpop.f32.mrb[0].mxu0
        %v2454 = vadd.f32 %v1951, %v2453
        %v2455 = vpop.f32.mrb[0].mxu0
        %2456 = vmatprep.mubr.bf16.mxu0 0
        %2457 = vmatmul.mubr.bf16.gmra.mrb[0].mxu0 %v2063
        %v2458 = vpop.f32.mrb[0].mxu0
        %v2459 = vadd.f32 %v1951, %v2458
        %v2460 = vpop.f32.mrb[0].mxu0
        %v2461 = vpop.f32.mrb[0].mxu0
        %v2462 = vadd.f32 %v1951, %v2461
        %v2463 = vpop.f32.mrb[0].mxu0
        %2464 = vmatprep.mubr.bf16.mxu0 0
        %2465 = vmatmul.mubr.bf16.gmra.mrb[0].mxu0 %v2066
        %v2466 = vpop.f32.mrb[0].mxu0
        %v2467 = vadd.f32 %v1951, %v2466
        %v2468 = vpop.f32.mrb[0].mxu0
        %v2469 = vpop.f32.mrb[0].mxu0
        %v2470 = vadd.f32 %v1951, %v2469
        %v2471 = vpop.f32.mrb[0].mxu0
        %2472 = vmatprep.mubr.bf16.mxu0 0
        %2473 = vmatmul.mubr.bf16.gmra.mrb[0].mxu0 %v2069
        %v2474 = vpop.f32.mrb[0].mxu0
        %v2475 = vadd.f32 %v1951, %v2474
        %v2476 = vpop.f32.mrb[0].mxu0
        %v2477 = vpop.f32.mrb[0].mxu0
        %v2478 = vadd.f32 %v1951, %v2477
        %v2479 = vpop.f32.mrb[0].mxu0
        %2480 = vmatprep.mubr.bf16.mxu0 0
        %2481 = vmatmul.mubr.bf16.gmra.mrb[0].mxu0 %v2072
        %v2482 = vpop.f32.mrb[0].mxu0
        %v2483 = vadd.f32 %v1951, %v2482
        %v2484 = vpop.f32.mrb[0].mxu0
        %v2485 = vpop.f32.mrb[0].mxu0
        %v2486 = vadd.f32 %v1951, %v2485
        %v2487 = vpop.f32.mrb[0].mxu0
        %2488 = vmatprep.mubr.bf16.mxu0 0
        %2489 = vmatmul.mubr.bf16.gmra.mrb[0].mxu0 %v2075
        %v2490 = vpop.f32.mrb[0].mxu0
        %v2491 = vadd.f32 %v1951, %v2490
        %v2492 = vpop.f32.mrb[0].mxu0
        %v2493 = vpop.f32.mrb[0].mxu0
        %v2494 = vadd.f32 %v1951, %v2493
        %v2495 = vpop.f32.mrb[0].mxu0
        %2496 = vmatprep.mubr.bf16.mxu0 0
        %2497 = vmatmul.mubr.bf16.gmra.mrb[0].mxu0 %v2078
        %v2498 = vpop.f32.mrb[0].mxu0
        %v2499 = vadd.f32 %v1951, %v2498
        %v2500 = vpop.f32.mrb[0].mxu0
        %v2501 = vpop.f32.mrb[0].mxu0
        %v2502 = vadd.f32 %v1951, %v2501
        %v2503 = vpop.f32.mrb[0].mxu0
        %2504 = vmatprep.mubr.bf16.mxu0 0
        %2505 = vmatmul.mubr.bf16.gmra.mrb[0].mxu0 %v2081
        %v2506 = vpop.f32.mrb[0].mxu0
        %v2507 = vadd.f32 %v1951, %v2506
        %v2508 = vpop.f32.mrb[0].mxu0
        %v2509 = vpop.f32.mrb[0].mxu0
        %v2510 = vadd.f32 %v1951, %v2509
        %v2511 = vpop.f32.mrb[0].mxu0
        %2512 = vmatprep.mubr.bf16.mxu0 0
        %2513 = vmatmul.mubr.bf16.gmra.mrb[0].mxu0 %v2084
        %v2514 = vpop.f32.mrb[0].mxu0
        %v2515 = vadd.f32 %v1951, %v2514
        %v2516 = vpop.f32.mrb[0].mxu0
        %v2517 = vpop.f32.mrb[0].mxu0
        %v2518 = vadd.f32 %v1951, %v2517
        %v2519 = vpop.f32.mrb[0].mxu0
        %2520 = vmatprep.mubr.bf16.mxu0 0
        %2521 = vmatmul.mubr.bf16.gmra.mrb[0].mxu0 %v2087
        %v2522 = vpop.f32.mrb[0].mxu0
        %v2523 = vadd.f32 %v1951, %v2522
        %v2524 = vpop.f32.mrb[0].mxu0
        %v2525 = vpop.f32.mrb[0].mxu0
        %v2526 = vadd.f32 %v1951, %v2525
        %v2527 = vpop.f32.mrb[0].mxu0
        %2528 = vmatprep.mubr.bf16.mxu0 0
        %2529 = vmatmul.mubr.bf16.gmra.mrb[0].mxu0 %v2090
        %v2530 = vpop.f32.mrb[0].mxu0
        %v2531 = vadd.f32 %v1951, %v2530
        %v2532 = vpop.f32.mrb[0].mxu0
        %v2533 = vpop.f32.mrb[0].mxu0
        %v2534 = vadd.f32 %v1951, %v2533
        %v2535 = vpop.f32.mrb[0].mxu0
        %2536 = vmatprep.mubr.bf16.mxu0 0
        %2537 = vmatmul.mubr.bf16.gmra.mrb[0].mxu0 %v2093
        %v2538 = vpop.f32.mrb[0].mxu0
        %v2539 = vadd.f32 %v1951, %v2538
        %v2540 = vpop.f32.mrb[0].mxu0
        %v2541 = vpop.f32.mrb[0].mxu0
        %v2542 = vadd.f32 %v1951, %v2541
        %v2543 = vpop.f32.mrb[0].mxu0
        %2544 = vmatprep.mubr.bf16.mxu0 0
        %2545 = vmatmul.mubr.bf16.gmra.mrb[0].mxu0 %v2096
        %v2546 = vpop.f32.mrb[0].mxu0
        %v2547 = vadd.f32 %v1951, %v2546
        %v2548 = vpop.f32.mrb[0].mxu0
        %v2549 = vpop.f32.mrb[0].mxu0
        %v2550 = vadd.f32 %v1951, %v2549
        %v2551 = vpop.f32.mrb[0].mxu0
        %2552 = vmatprep.mubr.bf16.mxu0 0
        %2553 = vmatmul.mubr.bf16.gmra.mrb[0].mxu0 %v2099
        %v2554 = vpop.f32.mrb[0].mxu0
        %v2555 = vadd.f32 %v1951, %v2554
        %v2556 = vpop.f32.mrb[0].mxu0
        %v2557 = vpop.f32.mrb[0].mxu0
        %v2558 = vadd.f32 %v1951, %v2557
        %v2559 = vpop.f32.mrb[0].mxu0
        %2560 = vmatprep.mubr.bf16.mxu0 0
        %2561 = vmatmul.mubr.bf16.gmra.mrb[0].mxu0 %v2102
        %v2562 = vpop.f32.mrb[0].mxu0
        %v2563 = vadd.f32 %v1951, %v2562
        %v2564 = vpop.f32.mrb[0].mxu0
        %v2565 = vpop.f32.mrb[0].mxu0
        %v2566 = vadd.f32 %v1951, %v2565
        %v2567 = vpop.f32.mrb[0].mxu0
        %2568 = vmatprep.mubr.bf16.mxu0 0
        %2569 = vmatmul.mubr.bf16.gmra.mrb[0].mxu0 %v2105
        %v2570 = vpop.f32.mrb[0].mxu0
        %v2571 = vadd.f32 %v1951, %v2570
        %v2572 = vpop.f32.mrb[0].mxu0
        %v2573 = vpop.f32.mrb[0].mxu0
        %v2574 = vadd.f32 %v1951, %v2573
        %v2575 = vpop.f32.mrb[0].mxu0
        %2576 = vmatprep.mubr.bf16.mxu0 0
        %2577 = vmatmul.mubr.bf16.gmra.mrb[0].mxu0 %v2108
        %v2578 = vpop.f32.mrb[0].mxu0
        %v2579 = vadd.f32 %v1951, %v2578
        %v2580 = vpop.f32.mrb[0].mxu0
        %v2581 = vpop.f32.mrb[0].mxu0
        %v2582 = vadd.f32 %v1951, %v2581
        %v2583 = vpop.f32.mrb[0].mxu0
        %2584 = vmatprep.mubr.bf16.mxu0 0
        %2585 = vmatmul.mubr.bf16.gmra.mrb[0].mxu0 %v2111
        %v2586 = vpop.f32.mrb[0].mxu0
        %v2587 = vadd.f32 %v1951, %v2586
        %v2588 = vpop.f32.mrb[0].mxu0
        %v2589 = vpop.f32.mrb[0].mxu0
        %v2590 = vadd.f32 %v1951, %v2589
        %v2591 = vpop.f32.mrb[0].mxu0
        %2592 = vmatprep.mubr.bf16.mxu0 0
        %2593 = vmatmul.mubr.bf16.gmra.mrb[0].mxu0 %v2114
        %v2594 = vpop.f32.mrb[0].mxu0
        %v2595 = vadd.f32 %v1951, %v2594
        %v2596 = vpop.f32.mrb[0].mxu0
        %v2597 = vpop.f32.mrb[0].mxu0
        %v2598 = vadd.f32 %v1951, %v2597
        %v2599 = vpop.f32.mrb[0].mxu0
        %2600 = vmatprep.mubr.bf16.mxu0 0
        %2601 = vmatmul.mubr.bf16.gmra.mrb[0].mxu0 %v2117
        %v2602 = vpop.f32.mrb[0].mxu0
        %v2603 = vadd.f32 %v1951, %v2602
        %v2604 = vpop.f32.mrb[0].mxu0
        %v2605 = vpop.f32.mrb[0].mxu0
        %v2606 = vadd.f32 %v1951, %v2605
        %v2607 = vpop.f32.mrb[0].mxu0
        %2608 = vmatprep.mubr.bf16.mxu0 0
        %2609 = vmatmul.mubr.bf16.gmra.mrb[0].mxu0 %v2120
        %v2610 = vpop.f32.mrb[0].mxu0
        %v2611 = vadd.f32 %v1951, %v2610
        %v2612 = vpop.f32.mrb[0].mxu0
        %v2613 = vpop.f32.mrb[0].mxu0
        %v2614 = vadd.f32 %v1951, %v2613
        %v2615 = vpop.f32.mrb[0].mxu0
        %2616 = vmatprep.mubr.bf16.mxu0 0
        %2617 = vmatmul.mubr.bf16.gmra.mrb[0].mxu0 %v2123
        %v2618 = vpop.f32.mrb[0].mxu0
        %v2619 = vadd.f32 %v1951, %v2618
        %v2620 = vpop.f32.mrb[0].mxu0
        %v2621 = vpop.f32.mrb[0].mxu0
        %v2622 = vadd.f32 %v1951, %v2621
        %v2623 = vpop.f32.mrb[0].mxu0
        %2624 = vmatprep.mubr.bf16.mxu0 0
        %2625 = vmatmul.mubr.bf16.gmra.mrb[0].mxu0 %v2126
        %v2626 = vpop.f32.mrb[0].mxu0
        %v2627 = vadd.f32 %v1951, %v2626
        %v2628 = vpop.f32.mrb[0].mxu0
        %v2629 = vpop.f32.mrb[0].mxu0
        %v2630 = vadd.f32 %v1951, %v2629
        %v2631 = vpop.f32.mrb[0].mxu0
        %2632 = vmatprep.mubr.bf16.mxu0 0
        %2633 = vmatmul.mubr.bf16.gmra.mrb[0].mxu0 %v2129
        %v2634 = vpop.f32.mrb[0].mxu0
        %v2635 = vadd.f32 %v1951, %v2634
        %v2636 = vpop.f32.mrb[0].mxu0
        %v2637 = vpop.f32.mrb[0].mxu0
        %v2638 = vadd.f32 %v1951, %v2637
        %v2639 = vpop.f32.mrb[0].mxu0
        %2640 = vmatprep.mubr.bf16.mxu0 0
        %2641 = vmatmul.mubr.bf16.gmra.mrb[0].mxu0 %v2132
        %v2642 = vpop.f32.mrb[0].mxu0
        %v2643 = vadd.f32 %v1951, %v2642
        %v2644 = vpop.f32.mrb[0].mxu0
        %v2645 = vpop.f32.mrb[0].mxu0
        %v2646 = vadd.f32 %v1951, %v2645
        %v2647 = vpop.f32.mrb[0].mxu0
        %2648 = vmatprep.mubr.bf16.mxu0 0
        %2649 = vmatmul.mubr.bf16.gmra.mrb[0].mxu0 %v2135
        %v2650 = vpop.f32.mrb[0].mxu0
        %v2651 = vadd.f32 %v1951, %v2650
        %v2652 = vpop.f32.mrb[0].mxu0
        %v2653 = vpop.f32.mrb[0].mxu0
        %v2654 = vadd.f32 %v1951, %v2653
        %v2655 = vpop.f32.mrb[0].mxu0
        %2656 = vmatprep.mubr.bf16.mxu0 0
        %2657 = vmatmul.mubr.bf16.gmra.mrb[0].mxu0 %v2138
        %v2658 = vpop.f32.mrb[0].mxu0
        %v2659 = vadd.f32 %v1951, %v2658
        %v2660 = vpop.f32.mrb[0].mxu0
        %v2661 = vpop.f32.mrb[0].mxu0
        %v2662 = vadd.f32 %v1951, %v2661
        %v2663 = vpop.f32.mrb[0].mxu0
        %2664 = vmatprep.mubr.bf16.mxu0 0
        %2665 = vmatmul.mubr.bf16.gmra.mrb[0].mxu0 %v2141
        %v2666 = vpop.f32.mrb[0].mxu0
        %v2667 = vadd.f32 %v1951, %v2666
        %v2668 = vpop.f32.mrb[0].mxu0
        %v2669 = vpop.f32.mrb[0].mxu0
        %v2670 = vadd.f32 %v1951, %v2669
        %v2671 = vpop.f32.mrb[0].mxu0
        %2672 = vmatprep.mubr.bf16.mxu0 0
        %2673 = vmatmul.mubr.bf16.gmra.mrb[0].mxu0 %v2144
        %v2674 = vpop.f32.mrb[0].mxu0
        %v2675 = vadd.f32 %v1951, %v2674
        %v2676 = vpop.f32.mrb[0].mxu0
        %v2677 = vpop.f32.mrb[0].mxu0
        %v2678 = vadd.f32 %v1951, %v2677
        %v2679 = vpop.f32.mrb[0].mxu0
        %2680 = vmatprep.mubr.bf16.mxu0 0
        %2681 = vmatmul.mubr.bf16.gmra.mrb[0].mxu0 %v2147
        %v2682 = vpop.f32.mrb[0].mxu0
        %v2683 = vadd.f32 %v1951, %v2682
        %v2684 = vpop.f32.mrb[0].mxu0
        %v2685 = vpop.f32.mrb[0].mxu0
        %v2686 = vadd.f32 %v1951, %v2685
        %v2687 = vpop.f32.mrb[0].mxu0
        %2688 = vmatprep.mubr.bf16.mxu0 0
        %2689 = vmatmul.mubr.bf16.gmra.mrb[0].mxu0 %v2150
        %v2690 = vpop.f32.mrb[0].mxu0
        %v2691 = vadd.f32 %v1951, %v2690
        %v2692 = vpop.f32.mrb[0].mxu0
        %v2693 = vpop.f32.mrb[0].mxu0
        %v2694 = vadd.f32 %v1951, %v2693
        %v2695 = vpop.f32.mrb[0].mxu0
        %2696 = vdwg.mxu0
        %v2697 = vld [vmem:[%s5] sm:$0xf]
        %v2698 = vld [vmem:[%s5 + $0x4] sm:$0xf]
        %v2699 = vld [vmem:[%s6] sm:$0x1]
        %v2701 = vlaneseq
        %v2702 = vshrl.u32 %v2701, 7
        %v2703 = vsub.s32 0, %v2702
        %v2704 = vrot.slane %v2699, %v2703
        %v2708 = vunpack.c.l.b16 %v2697
        %v2709 = vunpack.c.l.b16 %v2698
        %v2710 = vpack.c.b16 %v2709, %v2708
        %2712 = vmatprep.subr.bf16.mxu0 0
        %2713 = vmatpush1.bf16.msra.mxu0 %v2710
        %2714 = vmatprep.subr.bf16.mxu0 0
        %2715 = vmatpush1.bf16.msra.mxu0 0
        %2716 = vmatprep.subr.bf16.mxu0 0
        %2717 = vmatpush1.bf16.msra.mxu0 0
        %2718 = vmatprep.subr.bf16.mxu0 0
        %2719 = vmatpush1.bf16.msra.mxu0 0
        %2720 = vmatprep.subr.bf16.mxu0 0
        %2721 = vmatpush1.bf16.msra.mxu0 0
        %2722 = vmatprep.subr.bf16.mxu0 0
        %2723 = vmatpush1.bf16.msra.mxu0 0
        %2724 = vmatprep.subr.bf16.mxu0 0
        %2725 = vmatpush1.bf16.msra.mxu0 0
        %2726 = vmatprep.subr.bf16.mxu0 0
        %2727 = vmatpush1.bf16.msra.mxu0 0
        %2728 = vmatprep.subr.bf16.mxu0 0
        %2729 = vmatpush1.bf16.msra.mxu0 0
        %2730 = vmatprep.subr.bf16.mxu0 0
        %2731 = vmatpush1.bf16.msra.mxu0 0
        %2732 = vmatprep.subr.bf16.mxu0 0
        %2733 = vmatpush1.bf16.msra.mxu0 0
        %2734 = vmatprep.subr.bf16.mxu0 0
        %2735 = vmatpush1.bf16.msra.mxu0 0
        %2736 = vmatprep.subr.bf16.mxu0 0
        %2737 = vmatpush1.bf16.msra.mxu0 0
        %2738 = vmatprep.subr.bf16.mxu0 0
        %2739 = vmatpush1.bf16.msra.mxu0 0
        %2740 = vmatprep.subr.bf16.mxu0 0
        %2741 = vmatpush1.bf16.msra.mxu0 0
        %2742 = vmatprep.subr.bf16.mxu0 0
        %2743 = vmatpush1.bf16.msra.mxu0 0
        %2744 = vmatprep.mubr.bf16.mxu0 0
        %2745 = vmatmul.mubr.bf16.gmra.mrb[0].mxu0 %v1961
        %v2746 = vpop.f32.mrb[0].mxu0
        %v2747 = vadd.f32 %v2704, %v2746
        %v2748 = vpop.f32.mrb[0].mxu0
        %v2749 = vpop.f32.mrb[0].mxu0
        %v2750 = vadd.f32 %v2704, %v2749
        %v2751 = vpop.f32.mrb[0].mxu0
        %2752 = vmatprep.mubr.bf16.mxu0 0
        %2753 = vmatmul.mubr.bf16.gmra.mrb[0].mxu0 %v1964
        %v2754 = vpop.f32.mrb[0].mxu0
        %v2755 = vadd.f32 %v2704, %v2754
        %v2756 = vpop.f32.mrb[0].mxu0
        %v2757 = vpop.f32.mrb[0].mxu0
        %v2758 = vadd.f32 %v2704, %v2757
        %v2759 = vpop.f32.mrb[0].mxu0
        %2760 = vmatprep.mubr.bf16.mxu0 0
        %2761 = vmatmul.mubr.bf16.gmra.mrb[0].mxu0 %v1967
        %v2762 = vpop.f32.mrb[0].mxu0
        %v2763 = vadd.f32 %v2704, %v2762
        %v2764 = vpop.f32.mrb[0].mxu0
        %v2765 = vpop.f32.mrb[0].mxu0
        %v2766 = vadd.f32 %v2704, %v2765
        %v2767 = vpop.f32.mrb[0].mxu0
        %2768 = vmatprep.mubr.bf16.mxu0 0
        %2769 = vmatmul.mubr.bf16.gmra.mrb[0].mxu0 %v1970
        %v2770 = vpop.f32.mrb[0].mxu0
        %v2771 = vadd.f32 %v2704, %v2770
        %v2772 = vpop.f32.mrb[0].mxu0
        %v2773 = vpop.f32.mrb[0].mxu0
        %v2774 = vadd.f32 %v2704, %v2773
        %v2775 = vpop.f32.mrb[0].mxu0
        %2776 = vmatprep.mubr.bf16.mxu0 0
        %2777 = vmatmul.mubr.bf16.gmra.mrb[0].mxu0 %v1973
        %v2778 = vpop.f32.mrb[0].mxu0
        %v2779 = vadd.f32 %v2704, %v2778
        %v2780 = vpop.f32.mrb[0].mxu0
        %v2781 = vpop.f32.mrb[0].mxu0
        %v2782 = vadd.f32 %v2704, %v2781
        %v2783 = vpop.f32.mrb[0].mxu0
        %2784 = vmatprep.mubr.bf16.mxu0 0
        %2785 = vmatmul.mubr.bf16.gmra.mrb[0].mxu0 %v1976
        %v2786 = vpop.f32.mrb[0].mxu0
        %v2787 = vadd.f32 %v2704, %v2786
        %v2788 = vpop.f32.mrb[0].mxu0
        %v2789 = vpop.f32.mrb[0].mxu0
        %v2790 = vadd.f32 %v2704, %v2789
        %v2791 = vpop.f32.mrb[0].mxu0
        %2792 = vmatprep.mubr.bf16.mxu0 0
        %2793 = vmatmul.mubr.bf16.gmra.mrb[0].mxu0 %v1979
        %v2794 = vpop.f32.mrb[0].mxu0
        %v2795 = vadd.f32 %v2704, %v2794
        %v2796 = vpop.f32.mrb[0].mxu0
        %v2797 = vpop.f32.mrb[0].mxu0
        %v2798 = vadd.f32 %v2704, %v2797
        %v2799 = vpop.f32.mrb[0].mxu0
        %2800 = vmatprep.mubr.bf16.mxu0 0
        %2801 = vmatmul.mubr.bf16.gmra.mrb[0].mxu0 %v1982
        %v2802 = vpop.f32.mrb[0].mxu0
        %v2803 = vadd.f32 %v2704, %v2802
        %v2804 = vpop.f32.mrb[0].mxu0
        %v2805 = vpop.f32.mrb[0].mxu0
        %v2806 = vadd.f32 %v2704, %v2805
        %v2807 = vpop.f32.mrb[0].mxu0
        %2808 = vmatprep.mubr.bf16.mxu0 0
        %2809 = vmatmul.mubr.bf16.gmra.mrb[0].mxu0 %v1985
        %v2810 = vpop.f32.mrb[0].mxu0
        %v2811 = vadd.f32 %v2704, %v2810
        %v2812 = vpop.f32.mrb[0].mxu0
        %v2813 = vpop.f32.mrb[0].mxu0
        %v2814 = vadd.f32 %v2704, %v2813
        %v2815 = vpop.f32.mrb[0].mxu0
        %2816 = vmatprep.mubr.bf16.mxu0 0
        %2817 = vmatmul.mubr.bf16.gmra.mrb[0].mxu0 %v1988
        %v2818 = vpop.f32.mrb[0].mxu0
        %v2819 = vadd.f32 %v2704, %v2818
        %v2820 = vpop.f32.mrb[0].mxu0
        %v2821 = vpop.f32.mrb[0].mxu0
        %v2822 = vadd.f32 %v2704, %v2821
        %v2823 = vpop.f32.mrb[0].mxu0
        %2824 = vmatprep.mubr.bf16.mxu0 0
        %2825 = vmatmul.mubr.bf16.gmra.mrb[0].mxu0 %v1991
        %v2826 = vpop.f32.mrb[0].mxu0
        %v2827 = vadd.f32 %v2704, %v2826
        %v2828 = vpop.f32.mrb[0].mxu0
        %v2829 = vpop.f32.mrb[0].mxu0
        %v2830 = vadd.f32 %v2704, %v2829
        %v2831 = vpop.f32.mrb[0].mxu0
        %2832 = vmatprep.mubr.bf16.mxu0 0
        %2833 = vmatmul.mubr.bf16.gmra.mrb[0].mxu0 %v1994
        %v2834 = vpop.f32.mrb[0].mxu0
        %v2835 = vadd.f32 %v2704, %v2834
        %v2836 = vpop.f32.mrb[0].mxu0
        %v2837 = vpop.f32.mrb[0].mxu0
        %v2838 = vadd.f32 %v2704, %v2837
        %v2839 = vpop.f32.mrb[0].mxu0
        %2840 = vmatprep.mubr.bf16.mxu0 0
        %2841 = vmatmul.mubr.bf16.gmra.mrb[0].mxu0 %v1997
        %v2842 = vpop.f32.mrb[0].mxu0
        %v2843 = vadd.f32 %v2704, %v2842
        %v2844 = vpop.f32.mrb[0].mxu0
        %v2845 = vpop.f32.mrb[0].mxu0
        %v2846 = vadd.f32 %v2704, %v2845
        %v2847 = vpop.f32.mrb[0].mxu0
        %2848 = vmatprep.mubr.bf16.mxu0 0
        %2849 = vmatmul.mubr.bf16.gmra.mrb[0].mxu0 %v2000
        %v2850 = vpop.f32.mrb[0].mxu0
        %v2851 = vadd.f32 %v2704, %v2850
        %v2852 = vpop.f32.mrb[0].mxu0
        %v2853 = vpop.f32.mrb[0].mxu0
        %v2854 = vadd.f32 %v2704, %v2853
        %v2855 = vpop.f32.mrb[0].mxu0
        %2856 = vmatprep.mubr.bf16.mxu0 0
        %2857 = vmatmul.mubr.bf16.gmra.mrb[0].mxu0 %v2003
        %v2858 = vpop.f32.mrb[0].mxu0
        %v2859 = vadd.f32 %v2704, %v2858
        %v2860 = vpop.f32.mrb[0].mxu0
        %v2861 = vpop.f32.mrb[0].mxu0
        %v2862 = vadd.f32 %v2704, %v2861
        %v2863 = vpop.f32.mrb[0].mxu0
        %2864 = vmatprep.mubr.bf16.mxu0 0
        %2865 = vmatmul.mubr.bf16.gmra.mrb[0].mxu0 %v2006
        %v2866 = vpop.f32.mrb[0].mxu0
        %v2867 = vadd.f32 %v2704, %v2866
        %v2868 = vpop.f32.mrb[0].mxu0
        %v2869 = vpop.f32.mrb[0].mxu0
        %v2870 = vadd.f32 %v2704, %v2869
        %v2871 = vpop.f32.mrb[0].mxu0
        %2872 = vmatprep.mubr.bf16.mxu0 0
        %2873 = vmatmul.mubr.bf16.gmra.mrb[0].mxu0 %v2009
        %v2874 = vpop.f32.mrb[0].mxu0
        %v2875 = vadd.f32 %v2704, %v2874
        %v2876 = vpop.f32.mrb[0].mxu0
        %v2877 = vpop.f32.mrb[0].mxu0
        %v2878 = vadd.f32 %v2704, %v2877
        %v2879 = vpop.f32.mrb[0].mxu0
        %2880 = vmatprep.mubr.bf16.mxu0 0
        %2881 = vmatmul.mubr.bf16.gmra.mrb[0].mxu0 %v2012
        %v2882 = vpop.f32.mrb[0].mxu0
        %v2883 = vadd.f32 %v2704, %v2882
        %v2884 = vpop.f32.mrb[0].mxu0
        %v2885 = vpop.f32.mrb[0].mxu0
        %v2886 = vadd.f32 %v2704, %v2885
        %v2887 = vpop.f32.mrb[0].mxu0
        %2888 = vmatprep.mubr.bf16.mxu0 0
        %2889 = vmatmul.mubr.bf16.gmra.mrb[0].mxu0 %v2015
        %v2890 = vpop.f32.mrb[0].mxu0
        %v2891 = vadd.f32 %v2704, %v2890
        %v2892 = vpop.f32.mrb[0].mxu0
        %v2893 = vpop.f32.mrb[0].mxu0
        %v2894 = vadd.f32 %v2704, %v2893
        %v2895 = vpop.f32.mrb[0].mxu0
        %2896 = vmatprep.mubr.bf16.mxu0 0
        %2897 = vmatmul.mubr.bf16.gmra.mrb[0].mxu0 %v2018
        %v2898 = vpop.f32.mrb[0].mxu0
        %v2899 = vadd.f32 %v2704, %v2898
        %v2900 = vpop.f32.mrb[0].mxu0
        %v2901 = vpop.f32.mrb[0].mxu0
        %v2902 = vadd.f32 %v2704, %v2901
        %v2903 = vpop.f32.mrb[0].mxu0
        %2904 = vmatprep.mubr.bf16.mxu0 0
        %2905 = vmatmul.mubr.bf16.gmra.mrb[0].mxu0 %v2021
        %v2906 = vpop.f32.mrb[0].mxu0
        %v2907 = vadd.f32 %v2704, %v2906
        %v2908 = vpop.f32.mrb[0].mxu0
        %v2909 = vpop.f32.mrb[0].mxu0
        %v2910 = vadd.f32 %v2704, %v2909
        %v2911 = vpop.f32.mrb[0].mxu0
        %2912 = vmatprep.mubr.bf16.mxu0 0
        %2913 = vmatmul.mubr.bf16.gmra.mrb[0].mxu0 %v2024
        %v2914 = vpop.f32.mrb[0].mxu0
        %v2915 = vadd.f32 %v2704, %v2914
        %v2916 = vpop.f32.mrb[0].mxu0
        %v2917 = vpop.f32.mrb[0].mxu0
        %v2918 = vadd.f32 %v2704, %v2917
        %v2919 = vpop.f32.mrb[0].mxu0
        %2920 = vmatprep.mubr.bf16.mxu0 0
        %2921 = vmatmul.mubr.bf16.gmra.mrb[0].mxu0 %v2027
        %v2922 = vpop.f32.mrb[0].mxu0
        %v2923 = vadd.f32 %v2704, %v2922
        %v2924 = vpop.f32.mrb[0].mxu0
        %v2925 = vpop.f32.mrb[0].mxu0
        %v2926 = vadd.f32 %v2704, %v2925
        %v2927 = vpop.f32.mrb[0].mxu0
        %2928 = vmatprep.mubr.bf16.mxu0 0
        %2929 = vmatmul.mubr.bf16.gmra.mrb[0].mxu0 %v2030
        %v2930 = vpop.f32.mrb[0].mxu0
        %v2931 = vadd.f32 %v2704, %v2930
        %v2932 = vpop.f32.mrb[0].mxu0
        %v2933 = vpop.f32.mrb[0].mxu0
        %v2934 = vadd.f32 %v2704, %v2933
        %v2935 = vpop.f32.mrb[0].mxu0
        %2936 = vmatprep.mubr.bf16.mxu0 0
        %2937 = vmatmul.mubr.bf16.gmra.mrb[0].mxu0 %v2033
        %v2938 = vpop.f32.mrb[0].mxu0
        %v2939 = vadd.f32 %v2704, %v2938
        %v2940 = vpop.f32.mrb[0].mxu0
        %v2941 = vpop.f32.mrb[0].mxu0
        %v2942 = vadd.f32 %v2704, %v2941
        %v2943 = vpop.f32.mrb[0].mxu0
        %2944 = vmatprep.mubr.bf16.mxu0 0
        %2945 = vmatmul.mubr.bf16.gmra.mrb[0].mxu0 %v2036
        %v2946 = vpop.f32.mrb[0].mxu0
        %v2947 = vadd.f32 %v2704, %v2946
        %v2948 = vpop.f32.mrb[0].mxu0
        %v2949 = vpop.f32.mrb[0].mxu0
        %v2950 = vadd.f32 %v2704, %v2949
        %v2951 = vpop.f32.mrb[0].mxu0
        %2952 = vmatprep.mubr.bf16.mxu0 0
        %2953 = vmatmul.mubr.bf16.gmra.mrb[0].mxu0 %v2039
        %v2954 = vpop.f32.mrb[0].mxu0
        %v2955 = vadd.f32 %v2704, %v2954
        %v2956 = vpop.f32.mrb[0].mxu0
        %v2957 = vpop.f32.mrb[0].mxu0
        %v2958 = vadd.f32 %v2704, %v2957
        %v2959 = vpop.f32.mrb[0].mxu0
        %2960 = vmatprep.mubr.bf16.mxu0 0
        %2961 = vmatmul.mubr.bf16.gmra.mrb[0].mxu0 %v2042
        %v2962 = vpop.f32.mrb[0].mxu0
        %v2963 = vadd.f32 %v2704, %v2962
        %v2964 = vpop.f32.mrb[0].mxu0
        %v2965 = vpop.f32.mrb[0].mxu0
        %v2966 = vadd.f32 %v2704, %v2965
        %v2967 = vpop.f32.mrb[0].mxu0
        %2968 = vmatprep.mubr.bf16.mxu0 0
        %2969 = vmatmul.mubr.bf16.gmra.mrb[0].mxu0 %v2045
        %v2970 = vpop.f32.mrb[0].mxu0
        %v2971 = vadd.f32 %v2704, %v2970
        %v2972 = vpop.f32.mrb[0].mxu0
        %v2973 = vpop.f32.mrb[0].mxu0
        %v2974 = vadd.f32 %v2704, %v2973
        %v2975 = vpop.f32.mrb[0].mxu0
        %2976 = vmatprep.mubr.bf16.mxu0 0
        %2977 = vmatmul.mubr.bf16.gmra.mrb[0].mxu0 %v2048
        %v2978 = vpop.f32.mrb[0].mxu0
        %v2979 = vadd.f32 %v2704, %v2978
        %v2980 = vpop.f32.mrb[0].mxu0
        %v2981 = vpop.f32.mrb[0].mxu0
        %v2982 = vadd.f32 %v2704, %v2981
        %v2983 = vpop.f32.mrb[0].mxu0
        %2984 = vmatprep.mubr.bf16.mxu0 0
        %2985 = vmatmul.mubr.bf16.gmra.mrb[0].mxu0 %v2051
        %v2986 = vpop.f32.mrb[0].mxu0
        %v2987 = vadd.f32 %v2704, %v2986
        %v2988 = vpop.f32.mrb[0].mxu0
        %v2989 = vpop.f32.mrb[0].mxu0
        %v2990 = vadd.f32 %v2704, %v2989
        %v2991 = vpop.f32.mrb[0].mxu0
        %2992 = vmatprep.mubr.bf16.mxu0 0
        %2993 = vmatmul.mubr.bf16.gmra.mrb[0].mxu0 %v2054
        %v2994 = vpop.f32.mrb[0].mxu0
        %v2995 = vadd.f32 %v2704, %v2994
        %v2996 = vpop.f32.mrb[0].mxu0
        %v2997 = vpop.f32.mrb[0].mxu0
        %v2998 = vadd.f32 %v2704, %v2997
        %v2999 = vpop.f32.mrb[0].mxu0
        %3000 = vmatprep.mubr.bf16.mxu0 0
        %3001 = vmatmul.mubr.bf16.gmra.mrb[0].mxu0 %v2057
        %v3002 = vpop.f32.mrb[0].mxu0
        %v3003 = vadd.f32 %v2704, %v3002
        %v3004 = vpop.f32.mrb[0].mxu0
        %v3005 = vpop.f32.mrb[0].mxu0
        %v3006 = vadd.f32 %v2704, %v3005
        %v3007 = vpop.f32.mrb[0].mxu0
        %3008 = vmatprep.mubr.bf16.mxu0 0
        %3009 = vmatmul.mubr.bf16.gmra.mrb[0].mxu0 %v2060
        %v3010 = vpop.f32.mrb[0].mxu0
        %v3011 = vadd.f32 %v2704, %v3010
        %v3012 = vpop.f32.mrb[0].mxu0
        %v3013 = vpop.f32.mrb[0].mxu0
        %v3014 = vadd.f32 %v2704, %v3013
        %v3015 = vpop.f32.mrb[0].mxu0
        %3016 = vmatprep.mubr.bf16.mxu0 0
        %3017 = vmatmul.mubr.bf16.gmra.mrb[0].mxu0 %v2063
        %v3018 = vpop.f32.mrb[0].mxu0
        %v3019 = vadd.f32 %v2704, %v3018
        %v3020 = vpop.f32.mrb[0].mxu0
        %v3021 = vpop.f32.mrb[0].mxu0
        %v3022 = vadd.f32 %v2704, %v3021
        %v3023 = vpop.f32.mrb[0].mxu0
        %3024 = vmatprep.mubr.bf16.mxu0 0
        %3025 = vmatmul.mubr.bf16.gmra.mrb[0].mxu0 %v2066
        %v3026 = vpop.f32.mrb[0].mxu0
        %v3027 = vadd.f32 %v2704, %v3026
        %v3028 = vpop.f32.mrb[0].mxu0
        %v3029 = vpop.f32.mrb[0].mxu0
        %v3030 = vadd.f32 %v2704, %v3029
        %v3031 = vpop.f32.mrb[0].mxu0
        %3032 = vmatprep.mubr.bf16.mxu0 0
        %3033 = vmatmul.mubr.bf16.gmra.mrb[0].mxu0 %v2069
        %v3034 = vpop.f32.mrb[0].mxu0
        %v3035 = vadd.f32 %v2704, %v3034
        %v3036 = vpop.f32.mrb[0].mxu0
        %v3037 = vpop.f32.mrb[0].mxu0
        %v3038 = vadd.f32 %v2704, %v3037
        %v3039 = vpop.f32.mrb[0].mxu0
        %3040 = vmatprep.mubr.bf16.mxu0 0
        %3041 = vmatmul.mubr.bf16.gmra.mrb[0].mxu0 %v2072
        %v3042 = vpop.f32.mrb[0].mxu0
        %v3043 = vadd.f32 %v2704, %v3042
        %v3044 = vpop.f32.mrb[0].mxu0
        %v3045 = vpop.f32.mrb[0].mxu0
        %v3046 = vadd.f32 %v2704, %v3045
        %v3047 = vpop.f32.mrb[0].mxu0
        %3048 = vmatprep.mubr.bf16.mxu0 0
        %3049 = vmatmul.mubr.bf16.gmra.mrb[0].mxu0 %v2075
        %v3050 = vpop.f32.mrb[0].mxu0
        %v3051 = vadd.f32 %v2704, %v3050
        %v3052 = vpop.f32.mrb[0].mxu0
        %v3053 = vpop.f32.mrb[0].mxu0
        %v3054 = vadd.f32 %v2704, %v3053
        %v3055 = vpop.f32.mrb[0].mxu0
        %3056 = vmatprep.mubr.bf16.mxu0 0
        %3057 = vmatmul.mubr.bf16.gmra.mrb[0].mxu0 %v2078
        %v3058 = vpop.f32.mrb[0].mxu0
        %v3059 = vadd.f32 %v2704, %v3058
        %v3060 = vpop.f32.mrb[0].mxu0
        %v3061 = vpop.f32.mrb[0].mxu0
        %v3062 = vadd.f32 %v2704, %v3061
        %v3063 = vpop.f32.mrb[0].mxu0
        %3064 = vmatprep.mubr.bf16.mxu0 0
        %3065 = vmatmul.mubr.bf16.gmra.mrb[0].mxu0 %v2081
        %v3066 = vpop.f32.mrb[0].mxu0
        %v3067 = vadd.f32 %v2704, %v3066
        %v3068 = vpop.f32.mrb[0].mxu0
        %v3069 = vpop.f32.mrb[0].mxu0
        %v3070 = vadd.f32 %v2704, %v3069
        %v3071 = vpop.f32.mrb[0].mxu0
        %3072 = vmatprep.mubr.bf16.mxu0 0
        %3073 = vmatmul.mubr.bf16.gmra.mrb[0].mxu0 %v2084
        %v3074 = vpop.f32.mrb[0].mxu0
        %v3075 = vadd.f32 %v2704, %v3074
        %v3076 = vpop.f32.mrb[0].mxu0
        %v3077 = vpop.f32.mrb[0].mxu0
        %v3078 = vadd.f32 %v2704, %v3077
        %v3079 = vpop.f32.mrb[0].mxu0
        %3080 = vmatprep.mubr.bf16.mxu0 0
        %3081 = vmatmul.mubr.bf16.gmra.mrb[0].mxu0 %v2087
        %v3082 = vpop.f32.mrb[0].mxu0
        %v3083 = vadd.f32 %v2704, %v3082
        %v3084 = vpop.f32.mrb[0].mxu0
        %v3085 = vpop.f32.mrb[0].mxu0
        %v3086 = vadd.f32 %v2704, %v3085
        %v3087 = vpop.f32.mrb[0].mxu0
        %3088 = vmatprep.mubr.bf16.mxu0 0
        %3089 = vmatmul.mubr.bf16.gmra.mrb[0].mxu0 %v2090
        %v3090 = vpop.f32.mrb[0].mxu0
        %v3091 = vadd.f32 %v2704, %v3090
        %v3092 = vpop.f32.mrb[0].mxu0
        %v3093 = vpop.f32.mrb[0].mxu0
        %v3094 = vadd.f32 %v2704, %v3093
        %v3095 = vpop.f32.mrb[0].mxu0
        %3096 = vmatprep.mubr.bf16.mxu0 0
        %3097 = vmatmul.mubr.bf16.gmra.mrb[0].mxu0 %v2093
        %v3098 = vpop.f32.mrb[0].mxu0
        %v3099 = vadd.f32 %v2704, %v3098
        %v3100 = vpop.f32.mrb[0].mxu0
        %v3101 = vpop.f32.mrb[0].mxu0
        %v3102 = vadd.f32 %v2704, %v3101
        %v3103 = vpop.f32.mrb[0].mxu0
        %3104 = vmatprep.mubr.bf16.mxu0 0
        %3105 = vmatmul.mubr.bf16.gmra.mrb[0].mxu0 %v2096
        %v3106 = vpop.f32.mrb[0].mxu0
        %v3107 = vadd.f32 %v2704, %v3106
        %v3108 = vpop.f32.mrb[0].mxu0
        %v3109 = vpop.f32.mrb[0].mxu0
        %v3110 = vadd.f32 %v2704, %v3109
        %v3111 = vpop.f32.mrb[0].mxu0
        %3112 = vmatprep.mubr.bf16.mxu0 0
        %3113 = vmatmul.mubr.bf16.gmra.mrb[0].mxu0 %v2099
        %v3114 = vpop.f32.mrb[0].mxu0
        %v3115 = vadd.f32 %v2704, %v3114
        %v3116 = vpop.f32.mrb[0].mxu0
        %v3117 = vpop.f32.mrb[0].mxu0
        %v3118 = vadd.f32 %v2704, %v3117
        %v3119 = vpop.f32.mrb[0].mxu0
        %3120 = vmatprep.mubr.bf16.mxu0 0
        %3121 = vmatmul.mubr.bf16.gmra.mrb[0].mxu0 %v2102
        %v3122 = vpop.f32.mrb[0].mxu0
        %v3123 = vadd.f32 %v2704, %v3122
        %v3124 = vpop.f32.mrb[0].mxu0
        %v3125 = vpop.f32.mrb[0].mxu0
        %v3126 = vadd.f32 %v2704, %v3125
        %v3127 = vpop.f32.mrb[0].mxu0
        %3128 = vmatprep.mubr.bf16.mxu0 0
        %3129 = vmatmul.mubr.bf16.gmra.mrb[0].mxu0 %v2105
        %v3130 = vpop.f32.mrb[0].mxu0
        %v3131 = vadd.f32 %v2704, %v3130
        %v3132 = vpop.f32.mrb[0].mxu0
        %v3133 = vpop.f32.mrb[0].mxu0
        %v3134 = vadd.f32 %v2704, %v3133
        %v3135 = vpop.f32.mrb[0].mxu0
        %3136 = vmatprep.mubr.bf16.mxu0 0
        %3137 = vmatmul.mubr.bf16.gmra.mrb[0].mxu0 %v2108
        %v3138 = vpop.f32.mrb[0].mxu0
        %v3139 = vadd.f32 %v2704, %v3138
        %v3140 = vpop.f32.mrb[0].mxu0
        %v3141 = vpop.f32.mrb[0].mxu0
        %v3142 = vadd.f32 %v2704, %v3141
        %v3143 = vpop.f32.mrb[0].mxu0
        %3144 = vmatprep.mubr.bf16.mxu0 0
        %3145 = vmatmul.mubr.bf16.gmra.mrb[0].mxu0 %v2111
        %v3146 = vpop.f32.mrb[0].mxu0
        %v3147 = vadd.f32 %v2704, %v3146
        %v3148 = vpop.f32.mrb[0].mxu0
        %v3149 = vpop.f32.mrb[0].mxu0
        %v3150 = vadd.f32 %v2704, %v3149
        %v3151 = vpop.f32.mrb[0].mxu0
        %3152 = vmatprep.mubr.bf16.mxu0 0
        %3153 = vmatmul.mubr.bf16.gmra.mrb[0].mxu0 %v2114
        %v3154 = vpop.f32.mrb[0].mxu0
        %v3155 = vadd.f32 %v2704, %v3154
        %v3156 = vpop.f32.mrb[0].mxu0
        %v3157 = vpop.f32.mrb[0].mxu0
        %v3158 = vadd.f32 %v2704, %v3157
        %v3159 = vpop.f32.mrb[0].mxu0
        %3160 = vmatprep.mubr.bf16.mxu0 0
        %3161 = vmatmul.mubr.bf16.gmra.mrb[0].mxu0 %v2117
        %v3162 = vpop.f32.mrb[0].mxu0
        %v3163 = vadd.f32 %v2704, %v3162
        %v3164 = vpop.f32.mrb[0].mxu0
        %v3165 = vpop.f32.mrb[0].mxu0
        %v3166 = vadd.f32 %v2704, %v3165
        %v3167 = vpop.f32.mrb[0].mxu0
        %3168 = vmatprep.mubr.bf16.mxu0 0
        %3169 = vmatmul.mubr.bf16.gmra.mrb[0].mxu0 %v2120
        %v3170 = vpop.f32.mrb[0].mxu0
        %v3171 = vadd.f32 %v2704, %v3170
        %v3172 = vpop.f32.mrb[0].mxu0
        %v3173 = vpop.f32.mrb[0].mxu0
        %v3174 = vadd.f32 %v2704, %v3173
        %v3175 = vpop.f32.mrb[0].mxu0
        %3176 = vmatprep.mubr.bf16.mxu0 0
        %3177 = vmatmul.mubr.bf16.gmra.mrb[0].mxu0 %v2123
        %v3178 = vpop.f32.mrb[0].mxu0
        %v3179 = vadd.f32 %v2704, %v3178
        %v3180 = vpop.f32.mrb[0].mxu0
        %v3181 = vpop.f32.mrb[0].mxu0
        %v3182 = vadd.f32 %v2704, %v3181
        %v3183 = vpop.f32.mrb[0].mxu0
        %3184 = vmatprep.mubr.bf16.mxu0 0
        %3185 = vmatmul.mubr.bf16.gmra.mrb[0].mxu0 %v2126
        %v3186 = vpop.f32.mrb[0].mxu0
        %v3187 = vadd.f32 %v2704, %v3186
        %v3188 = vpop.f32.mrb[0].mxu0
        %v3189 = vpop.f32.mrb[0].mxu0
        %v3190 = vadd.f32 %v2704, %v3189
        %v3191 = vpop.f32.mrb[0].mxu0
        %3192 = vmatprep.mubr.bf16.mxu0 0
        %3193 = vmatmul.mubr.bf16.gmra.mrb[0].mxu0 %v2129
        %v3194 = vpop.f32.mrb[0].mxu0
        %v3195 = vadd.f32 %v2704, %v3194
        %v3196 = vpop.f32.mrb[0].mxu0
        %v3197 = vpop.f32.mrb[0].mxu0
        %v3198 = vadd.f32 %v2704, %v3197
        %v3199 = vpop.f32.mrb[0].mxu0
        %3200 = vmatprep.mubr.bf16.mxu0 0
        %3201 = vmatmul.mubr.bf16.gmra.mrb[0].mxu0 %v2132
        %v3202 = vpop.f32.mrb[0].mxu0
        %v3203 = vadd.f32 %v2704, %v3202
        %v3204 = vpop.f32.mrb[0].mxu0
        %v3205 = vpop.f32.mrb[0].mxu0
        %v3206 = vadd.f32 %v2704, %v3205
        %v3207 = vpop.f32.mrb[0].mxu0
        %3208 = vmatprep.mubr.bf16.mxu0 0
        %3209 = vmatmul.mubr.bf16.gmra.mrb[0].mxu0 %v2135
        %v3210 = vpop.f32.mrb[0].mxu0
        %v3211 = vadd.f32 %v2704, %v3210
        %v3212 = vpop.f32.mrb[0].mxu0
        %v3213 = vpop.f32.mrb[0].mxu0
        %v3214 = vadd.f32 %v2704, %v3213
        %v3215 = vpop.f32.mrb[0].mxu0
        %3216 = vmatprep.mubr.bf16.mxu0 0
        %3217 = vmatmul.mubr.bf16.gmra.mrb[0].mxu0 %v2138
        %v3218 = vpop.f32.mrb[0].mxu0
        %v3219 = vadd.f32 %v2704, %v3218
        %v3220 = vpop.f32.mrb[0].mxu0
        %v3221 = vpop.f32.mrb[0].mxu0
        %v3222 = vadd.f32 %v2704, %v3221
        %v3223 = vpop.f32.mrb[0].mxu0
        %3224 = vmatprep.mubr.bf16.mxu0 0
        %3225 = vmatmul.mubr.bf16.gmra.mrb[0].mxu0 %v2141
        %v3226 = vpop.f32.mrb[0].mxu0
        %v3227 = vadd.f32 %v2704, %v3226
        %v3228 = vpop.f32.mrb[0].mxu0
        %v3229 = vpop.f32.mrb[0].mxu0
        %v3230 = vadd.f32 %v2704, %v3229
        %v3231 = vpop.f32.mrb[0].mxu0
        %3232 = vmatprep.mubr.bf16.mxu0 0
        %3233 = vmatmul.mubr.bf16.gmra.mrb[0].mxu0 %v2144
        %v3234 = vpop.f32.mrb[0].mxu0
        %v3235 = vadd.f32 %v2704, %v3234
        %v3236 = vpop.f32.mrb[0].mxu0
        %v3237 = vpop.f32.mrb[0].mxu0
        %v3238 = vadd.f32 %v2704, %v3237
        %v3239 = vpop.f32.mrb[0].mxu0
        %3240 = vmatprep.mubr.bf16.mxu0 0
        %3241 = vmatmul.mubr.bf16.gmra.mrb[0].mxu0 %v2147
        %v3242 = vpop.f32.mrb[0].mxu0
        %v3243 = vadd.f32 %v2704, %v3242
        %v3244 = vpop.f32.mrb[0].mxu0
        %v3245 = vpop.f32.mrb[0].mxu0
        %v3246 = vadd.f32 %v2704, %v3245
        %v3247 = vpop.f32.mrb[0].mxu0
        %3248 = vmatprep.mubr.bf16.mxu0 0
        %3249 = vmatmul.mubr.bf16.gmra.mrb[0].mxu0 %v2150
        %v3250 = vpop.f32.mrb[0].mxu0
        %v3251 = vadd.f32 %v2704, %v3250
        %v3252 = vpop.f32.mrb[0].mxu0
        %v3253 = vpop.f32.mrb[0].mxu0
        %v3254 = vadd.f32 %v2704, %v3253
        %v3255 = vpop.f32.mrb[0].mxu0
        %3256 = vdwg.mxu0
        %v3257 = vmax.f32 %v2187, 0.0
        %v3258 = vmax.f32 %v2190, 0.0
        %v3259 = vmax.f32 %v2195, 0.0
        %v3260 = vmax.f32 %v2198, 0.0
        %v3261 = vmax.f32 %v2203, 0.0
        %v3262 = vmax.f32 %v2206, 0.0
        %v3263 = vmax.f32 %v2211, 0.0
        %v3264 = vmax.f32 %v2214, 0.0
        %v3265 = vmax.f32 %v2219, 0.0
        %v3266 = vmax.f32 %v2222, 0.0
        %v3267 = vmax.f32 %v2227, 0.0
        %v3268 = vmax.f32 %v2230, 0.0
        %v3269 = vmax.f32 %v2235, 0.0
        %v3270 = vmax.f32 %v2238, 0.0
        %v3271 = vmax.f32 %v2243, 0.0
        %v3272 = vmax.f32 %v2246, 0.0
        %v3273 = vmax.f32 %v2251, 0.0
        %v3274 = vmax.f32 %v2254, 0.0
        %v3275 = vmax.f32 %v2259, 0.0
        %v3276 = vmax.f32 %v2262, 0.0
        %v3277 = vmax.f32 %v2267, 0.0
        %v3278 = vmax.f32 %v2270, 0.0
        %v3279 = vmax.f32 %v2275, 0.0
        %v3280 = vmax.f32 %v2278, 0.0
        %v3281 = vmax.f32 %v2283, 0.0
        %v3282 = vmax.f32 %v2286, 0.0
        %v3283 = vmax.f32 %v2291, 0.0
        %v3284 = vmax.f32 %v2294, 0.0
        %v3285 = vmax.f32 %v2299, 0.0
        %v3286 = vmax.f32 %v2302, 0.0
        %v3287 = vmax.f32 %v2307, 0.0
        %v3288 = vmax.f32 %v2310, 0.0
        %v3289 = vmax.f32 %v2315, 0.0
        %v3290 = vmax.f32 %v2318, 0.0
        %v3291 = vmax.f32 %v2323, 0.0
        %v3292 = vmax.f32 %v2326, 0.0
        %v3293 = vmax.f32 %v2331, 0.0
        %v3294 = vmax.f32 %v2334, 0.0
        %v3295 = vmax.f32 %v2339, 0.0
        %v3296 = vmax.f32 %v2342, 0.0
        %v3297 = vmax.f32 %v2347, 0.0
        %v3298 = vmax.f32 %v2350, 0.0
        %v3299 = vmax.f32 %v2355, 0.0
        %v3300 = vmax.f32 %v2358, 0.0
        %v3301 = vmax.f32 %v2363, 0.0
        %v3302 = vmax.f32 %v2366, 0.0
        %v3303 = vmax.f32 %v2371, 0.0
        %v3304 = vmax.f32 %v2374, 0.0
        %v3305 = vmax.f32 %v2379, 0.0
        %v3306 = vmax.f32 %v2382, 0.0
        %v3307 = vmax.f32 %v2387, 0.0
        %v3308 = vmax.f32 %v2390, 0.0
        %v3309 = vmax.f32 %v2395, 0.0
        %v3310 = vmax.f32 %v2398, 0.0
        %v3311 = vmax.f32 %v2403, 0.0
        %v3312 = vmax.f32 %v2406, 0.0
        %v3313 = vmax.f32 %v2411, 0.0
        %v3314 = vmax.f32 %v2414, 0.0
        %v3315 = vmax.f32 %v2419, 0.0
        %v3316 = vmax.f32 %v2422, 0.0
        %v3317 = vmax.f32 %v2427, 0.0
        %v3318 = vmax.f32 %v2430, 0.0
        %v3319 = vmax.f32 %v2435, 0.0
        %v3320 = vmax.f32 %v2438, 0.0
        %v3321 = vmax.f32 %v2443, 0.0
        %v3322 = vmax.f32 %v2446, 0.0
        %v3323 = vmax.f32 %v2451, 0.0
        %v3324 = vmax.f32 %v2454, 0.0
        %v3325 = vmax.f32 %v2459, 0.0
        %v3326 = vmax.f32 %v2462, 0.0
        %v3327 = vmax.f32 %v2467, 0.0
        %v3328 = vmax.f32 %v2470, 0.0
        %v3329 = vmax.f32 %v2475, 0.0
        %v3330 = vmax.f32 %v2478, 0.0
        %v3331 = vmax.f32 %v2483, 0.0
        %v3332 = vmax.f32 %v2486, 0.0
        %v3333 = vmax.f32 %v2491, 0.0
        %v3334 = vmax.f32 %v2494, 0.0
        %v3335 = vmax.f32 %v2499, 0.0
        %v3336 = vmax.f32 %v2502, 0.0
        %v3337 = vmax.f32 %v2507, 0.0
        %v3338 = vmax.f32 %v2510, 0.0
        %v3339 = vmax.f32 %v2515, 0.0
        %v3340 = vmax.f32 %v2518, 0.0
        %v3341 = vmax.f32 %v2523, 0.0
        %v3342 = vmax.f32 %v2526, 0.0
        %v3343 = vmax.f32 %v2531, 0.0
        %v3344 = vmax.f32 %v2534, 0.0
        %v3345 = vmax.f32 %v2539, 0.0
        %v3346 = vmax.f32 %v2542, 0.0
        %v3347 = vmax.f32 %v2547, 0.0
        %v3348 = vmax.f32 %v2550, 0.0
        %v3349 = vmax.f32 %v2555, 0.0
        %v3350 = vmax.f32 %v2558, 0.0
        %v3351 = vmax.f32 %v2563, 0.0
        %v3352 = vmax.f32 %v2566, 0.0
        %v3353 = vmax.f32 %v2571, 0.0
        %v3354 = vmax.f32 %v2574, 0.0
        %v3355 = vmax.f32 %v2579, 0.0
        %v3356 = vmax.f32 %v2582, 0.0
        %v3357 = vmax.f32 %v2587, 0.0
        %v3358 = vmax.f32 %v2590, 0.0
        %v3359 = vmax.f32 %v2595, 0.0
        %v3360 = vmax.f32 %v2598, 0.0
        %v3361 = vmax.f32 %v2603, 0.0
        %v3362 = vmax.f32 %v2606, 0.0
        %v3363 = vmax.f32 %v2611, 0.0
        %v3364 = vmax.f32 %v2614, 0.0
        %v3365 = vmax.f32 %v2619, 0.0
        %v3366 = vmax.f32 %v2622, 0.0
        %v3367 = vmax.f32 %v2627, 0.0
        %v3368 = vmax.f32 %v2630, 0.0
        %v3369 = vmax.f32 %v2635, 0.0
        %v3370 = vmax.f32 %v2638, 0.0
        %v3371 = vmax.f32 %v2643, 0.0
        %v3372 = vmax.f32 %v2646, 0.0
        %v3373 = vmax.f32 %v2651, 0.0
        %v3374 = vmax.f32 %v2654, 0.0
        %v3375 = vmax.f32 %v2659, 0.0
        %v3376 = vmax.f32 %v2662, 0.0
        %v3377 = vmax.f32 %v2667, 0.0
        %v3378 = vmax.f32 %v2670, 0.0
        %v3379 = vmax.f32 %v2675, 0.0
        %v3380 = vmax.f32 %v2678, 0.0
        %v3381 = vmax.f32 %v2683, 0.0
        %v3382 = vmax.f32 %v2686, 0.0
        %v3383 = vmax.f32 %v2691, 0.0
        %v3384 = vmax.f32 %v2694, 0.0
        %v3385 = vand.u32 2147483647, %v2187
        %v3386 = vand.u32 2147483647, %v2190
        %v3387 = vand.u32 2147483647, %v2195
        %v3388 = vand.u32 2147483647, %v2198
        %v3389 = vand.u32 2147483647, %v2203
        %v3390 = vand.u32 2147483647, %v2206
        %v3391 = vand.u32 2147483647, %v2211
        %v3392 = vand.u32 2147483647, %v2214
        %v3393 = vand.u32 2147483647, %v2219
        %v3394 = vand.u32 2147483647, %v2222
        %v3395 = vand.u32 2147483647, %v2227
        %v3396 = vand.u32 2147483647, %v2230
        %v3397 = vand.u32 2147483647, %v2235
        %v3398 = vand.u32 2147483647, %v2238
        %v3399 = vand.u32 2147483647, %v2243
        %v3400 = vand.u32 2147483647, %v2246
        %v3401 = vand.u32 2147483647, %v2251
        %v3402 = vand.u32 2147483647, %v2254
        %v3403 = vand.u32 2147483647, %v2259
        %v3404 = vand.u32 2147483647, %v2262
        %v3405 = vand.u32 2147483647, %v2267
        %v3406 = vand.u32 2147483647, %v2270
        %v3407 = vand.u32 2147483647, %v2275
        %v3408 = vand.u32 2147483647, %v2278
        %v3409 = vand.u32 2147483647, %v2283
        %v3410 = vand.u32 2147483647, %v2286
        %v3411 = vand.u32 2147483647, %v2291
        %v3412 = vand.u32 2147483647, %v2294
        %v3413 = vand.u32 2147483647, %v2299
        %v3414 = vand.u32 2147483647, %v2302
        %v3415 = vand.u32 2147483647, %v2307
        %v3416 = vand.u32 2147483647, %v2310
        %v3417 = vand.u32 2147483647, %v2315
        %v3418 = vand.u32 2147483647, %v2318
        %v3419 = vand.u32 2147483647, %v2323
        %v3420 = vand.u32 2147483647, %v2326
        %v3421 = vand.u32 2147483647, %v2331
        %v3422 = vand.u32 2147483647, %v2334
        %v3423 = vand.u32 2147483647, %v2339
        %v3424 = vand.u32 2147483647, %v2342
        %v3425 = vand.u32 2147483647, %v2347
        %v3426 = vand.u32 2147483647, %v2350
        %v3427 = vand.u32 2147483647, %v2355
        %v3428 = vand.u32 2147483647, %v2358
        %v3429 = vand.u32 2147483647, %v2363
        %v3430 = vand.u32 2147483647, %v2366
        %v3431 = vand.u32 2147483647, %v2371
        %v3432 = vand.u32 2147483647, %v2374
        %v3433 = vand.u32 2147483647, %v2379
        %v3434 = vand.u32 2147483647, %v2382
        %v3435 = vand.u32 2147483647, %v2387
        %v3436 = vand.u32 2147483647, %v2390
        %v3437 = vand.u32 2147483647, %v2395
        %v3438 = vand.u32 2147483647, %v2398
        %v3439 = vand.u32 2147483647, %v2403
        %v3440 = vand.u32 2147483647, %v2406
        %v3441 = vand.u32 2147483647, %v2411
        %v3442 = vand.u32 2147483647, %v2414
        %v3443 = vand.u32 2147483647, %v2419
        %v3444 = vand.u32 2147483647, %v2422
        %v3445 = vand.u32 2147483647, %v2427
        %v3446 = vand.u32 2147483647, %v2430
        %v3447 = vand.u32 2147483647, %v2435
        %v3448 = vand.u32 2147483647, %v2438
        %v3449 = vand.u32 2147483647, %v2443
        %v3450 = vand.u32 2147483647, %v2446
        %v3451 = vand.u32 2147483647, %v2451
        %v3452 = vand.u32 2147483647, %v2454
        %v3453 = vand.u32 2147483647, %v2459
        %v3454 = vand.u32 2147483647, %v2462
        %v3455 = vand.u32 2147483647, %v2467
        %v3456 = vand.u32 2147483647, %v2470
        %v3457 = vand.u32 2147483647, %v2475
        %v3458 = vand.u32 2147483647, %v2478
        %v3459 = vand.u32 2147483647, %v2483
        %v3460 = vand.u32 2147483647, %v2486
        %v3461 = vand.u32 2147483647, %v2491
        %v3462 = vand.u32 2147483647, %v2494
        %v3463 = vand.u32 2147483647, %v2499
        %v3464 = vand.u32 2147483647, %v2502
        %v3465 = vand.u32 2147483647, %v2507
        %v3466 = vand.u32 2147483647, %v2510
        %v3467 = vand.u32 2147483647, %v2515
        %v3468 = vand.u32 2147483647, %v2518
        %v3469 = vand.u32 2147483647, %v2523
        %v3470 = vand.u32 2147483647, %v2526
        %v3471 = vand.u32 2147483647, %v2531
        %v3472 = vand.u32 2147483647, %v2534
        %v3473 = vand.u32 2147483647, %v2539
        %v3474 = vand.u32 2147483647, %v2542
        %v3475 = vand.u32 2147483647, %v2547
        %v3476 = vand.u32 2147483647, %v2550
        %v3477 = vand.u32 2147483647, %v2555
        %v3478 = vand.u32 2147483647, %v2558
        %v3479 = vand.u32 2147483647, %v2563
        %v3480 = vand.u32 2147483647, %v2566
        %v3481 = vand.u32 2147483647, %v2571
        %v3482 = vand.u32 2147483647, %v2574
        %v3483 = vand.u32 2147483647, %v2579
        %v3484 = vand.u32 2147483647, %v2582
        %v3485 = vand.u32 2147483647, %v2587
        %v3486 = vand.u32 2147483647, %v2590
        %v3487 = vand.u32 2147483647, %v2595
        %v3488 = vand.u32 2147483647, %v2598
        %v3489 = vand.u32 2147483647, %v2603
        %v3490 = vand.u32 2147483647, %v2606
        %v3491 = vand.u32 2147483647, %v2611
        %v3492 = vand.u32 2147483647, %v2614
        %v3493 = vand.u32 2147483647, %v2619
        %v3494 = vand.u32 2147483647, %v2622
        %v3495 = vand.u32 2147483647, %v2627
        %v3496 = vand.u32 2147483647, %v2630
        %v3497 = vand.u32 2147483647, %v2635
        %v3498 = vand.u32 2147483647, %v2638
        %v3499 = vand.u32 2147483647, %v2643
        %v3500 = vand.u32 2147483647, %v2646
        %v3501 = vand.u32 2147483647, %v2651
        %v3502 = vand.u32 2147483647, %v2654
        %v3503 = vand.u32 2147483647, %v2659
        %v3504 = vand.u32 2147483647, %v2662
        %v3505 = vand.u32 2147483647, %v2667
        %v3506 = vand.u32 2147483647, %v2670
        %v3507 = vand.u32 2147483647, %v2675
        %v3508 = vand.u32 2147483647, %v2678
        %v3509 = vand.u32 2147483647, %v2683
        %v3510 = vand.u32 2147483647, %v2686
        %v3511 = vand.u32 2147483647, %v2691
        %v3512 = vand.u32 2147483647, %v2694
        %v3513 = vsub.f32 0.0, %v3385
        %v3514 = vsub.f32 0.0, %v3386
        %v3515 = vsub.f32 0.0, %v3387
        %v3516 = vsub.f32 0.0, %v3388
        %v3517 = vsub.f32 0.0, %v3389
        %v3518 = vsub.f32 0.0, %v3390
        %v3519 = vsub.f32 0.0, %v3391
        %v3520 = vsub.f32 0.0, %v3392
        %v3521 = vsub.f32 0.0, %v3393
        %v3522 = vsub.f32 0.0, %v3394
        %v3523 = vsub.f32 0.0, %v3395
        %v3524 = vsub.f32 0.0, %v3396
        %v3525 = vsub.f32 0.0, %v3397
        %v3526 = vsub.f32 0.0, %v3398
        %v3527 = vsub.f32 0.0, %v3399
        %v3528 = vsub.f32 0.0, %v3400
        %v3529 = vsub.f32 0.0, %v3401
        %v3530 = vsub.f32 0.0, %v3402
        %v3531 = vsub.f32 0.0, %v3403
        %v3532 = vsub.f32 0.0, %v3404
        %v3533 = vsub.f32 0.0, %v3405
        %v3534 = vsub.f32 0.0, %v3406
        %v3535 = vsub.f32 0.0, %v3407
        %v3536 = vsub.f32 0.0, %v3408
        %v3537 = vsub.f32 0.0, %v3409
        %v3538 = vsub.f32 0.0, %v3410
        %v3539 = vsub.f32 0.0, %v3411
        %v3540 = vsub.f32 0.0, %v3412
        %v3541 = vsub.f32 0.0, %v3413
        %v3542 = vsub.f32 0.0, %v3414
        %v3543 = vsub.f32 0.0, %v3415
        %v3544 = vsub.f32 0.0, %v3416
        %v3545 = vsub.f32 0.0, %v3417
        %v3546 = vsub.f32 0.0, %v3418
        %v3547 = vsub.f32 0.0, %v3419
        %v3548 = vsub.f32 0.0, %v3420
        %v3549 = vsub.f32 0.0, %v3421
        %v3550 = vsub.f32 0.0, %v3422
        %v3551 = vsub.f32 0.0, %v3423
        %v3552 = vsub.f32 0.0, %v3424
        %v3553 = vsub.f32 0.0, %v3425
        %v3554 = vsub.f32 0.0, %v3426
        %v3555 = vsub.f32 0.0, %v3427
        %v3556 = vsub.f32 0.0, %v3428
        %v3557 = vsub.f32 0.0, %v3429
        %v3558 = vsub.f32 0.0, %v3430
        %v3559 = vsub.f32 0.0, %v3431
        %v3560 = vsub.f32 0.0, %v3432
        %v3561 = vsub.f32 0.0, %v3433
        %v3562 = vsub.f32 0.0, %v3434
        %v3563 = vsub.f32 0.0, %v3435
        %v3564 = vsub.f32 0.0, %v3436
        %v3565 = vsub.f32 0.0, %v3437
        %v3566 = vsub.f32 0.0, %v3438
        %v3567 = vsub.f32 0.0, %v3439
        %v3568 = vsub.f32 0.0, %v3440
        %v3569 = vsub.f32 0.0, %v3441
        %v3570 = vsub.f32 0.0, %v3442
        %v3571 = vsub.f32 0.0, %v3443
        %v3572 = vsub.f32 0.0, %v3444
        %v3573 = vsub.f32 0.0, %v3445
        %v3574 = vsub.f32 0.0, %v3446
        %v3575 = vsub.f32 0.0, %v3447
        %v3576 = vsub.f32 0.0, %v3448
        %v3577 = vsub.f32 0.0, %v3449
        %v3578 = vsub.f32 0.0, %v3450
        %v3579 = vsub.f32 0.0, %v3451
        %v3580 = vsub.f32 0.0, %v3452
        %v3581 = vsub.f32 0.0, %v3453
        %v3582 = vsub.f32 0.0, %v3454
        %v3583 = vsub.f32 0.0, %v3455
        %v3584 = vsub.f32 0.0, %v3456
        %v3585 = vsub.f32 0.0, %v3457
        %v3586 = vsub.f32 0.0, %v3458
        %v3587 = vsub.f32 0.0, %v3459
        %v3588 = vsub.f32 0.0, %v3460
        %v3589 = vsub.f32 0.0, %v3461
        %v3590 = vsub.f32 0.0, %v3462
        %v3591 = vsub.f32 0.0, %v3463
        %v3592 = vsub.f32 0.0, %v3464
        %v3593 = vsub.f32 0.0, %v3465
        %v3594 = vsub.f32 0.0, %v3466
        %v3595 = vsub.f32 0.0, %v3467
        %v3596 = vsub.f32 0.0, %v3468
        %v3597 = vsub.f32 0.0, %v3469
        %v3598 = vsub.f32 0.0, %v3470
        %v3599 = vsub.f32 0.0, %v3471
        %v3600 = vsub.f32 0.0, %v3472
        %v3601 = vsub.f32 0.0, %v3473
        %v3602 = vsub.f32 0.0, %v3474
        %v3603 = vsub.f32 0.0, %v3475
        %v3604 = vsub.f32 0.0, %v3476
        %v3605 = vsub.f32 0.0, %v3477
        %v3606 = vsub.f32 0.0, %v3478
        %v3607 = vsub.f32 0.0, %v3479
        %v3608 = vsub.f32 0.0, %v3480
        %v3609 = vsub.f32 0.0, %v3481
        %v3610 = vsub.f32 0.0, %v3482
        %v3611 = vsub.f32 0.0, %v3483
        %v3612 = vsub.f32 0.0, %v3484
        %v3613 = vsub.f32 0.0, %v3485
        %v3614 = vsub.f32 0.0, %v3486
        %v3615 = vsub.f32 0.0, %v3487
        %v3616 = vsub.f32 0.0, %v3488
        %v3617 = vsub.f32 0.0, %v3489
        %v3618 = vsub.f32 0.0, %v3490
        %v3619 = vsub.f32 0.0, %v3491
        %v3620 = vsub.f32 0.0, %v3492
        %v3621 = vsub.f32 0.0, %v3493
        %v3622 = vsub.f32 0.0, %v3494
        %v3623 = vsub.f32 0.0, %v3495
        %v3624 = vsub.f32 0.0, %v3496
        %v3625 = vsub.f32 0.0, %v3497
        %v3626 = vsub.f32 0.0, %v3498
        %v3627 = vsub.f32 0.0, %v3499
        %v3628 = vsub.f32 0.0, %v3500
        %v3629 = vsub.f32 0.0, %v3501
        %v3630 = vsub.f32 0.0, %v3502
        %v3631 = vsub.f32 0.0, %v3503
        %v3632 = vsub.f32 0.0, %v3504
        %v3633 = vsub.f32 0.0, %v3505
        %v3634 = vsub.f32 0.0, %v3506
        %v3635 = vsub.f32 0.0, %v3507
        %v3636 = vsub.f32 0.0, %v3508
        %v3637 = vsub.f32 0.0, %v3509
        %v3638 = vsub.f32 0.0, %v3510
        %v3639 = vsub.f32 0.0, %v3511
        %v3640 = vsub.f32 0.0, %v3512
        %v3641 = vmul.f32 %v3513, 1.442695
        %v3642 = vpow.pop %v3641
        %v3643 = vmul.f32 %v3514, 1.442695
        %v3644 = vpow.pop %v3643
        %v3645 = vmul.f32 %v3515, 1.442695
        %v3646 = vpow.pop %v3645
        %v3647 = vmul.f32 %v3516, 1.442695
        %v3648 = vpow.pop %v3647
        %v3649 = vmul.f32 %v3517, 1.442695
        %v3650 = vpow.pop %v3649
        %v3651 = vmul.f32 %v3518, 1.442695
        %v3652 = vpow.pop %v3651
        %v3653 = vmul.f32 %v3519, 1.442695
        %v3654 = vpow.pop %v3653
        %v3655 = vmul.f32 %v3520, 1.442695
        %v3656 = vpow.pop %v3655
        %v3657 = vmul.f32 %v3521, 1.442695
        %v3658 = vpow.pop %v3657
        %v3659 = vmul.f32 %v3522, 1.442695
        %v3660 = vpow.pop %v3659
        %v3661 = vmul.f32 %v3523, 1.442695
        %v3662 = vpow.pop %v3661
        %v3663 = vmul.f32 %v3524, 1.442695
        %v3664 = vpow.pop %v3663
        %v3665 = vmul.f32 %v3525, 1.442695
        %v3666 = vpow.pop %v3665
        %v3667 = vmul.f32 %v3526, 1.442695
        %v3668 = vpow.pop %v3667
        %v3669 = vmul.f32 %v3527, 1.442695
        %v3670 = vpow.pop %v3669
        %v3671 = vmul.f32 %v3528, 1.442695
        %v3672 = vpow.pop %v3671
        %v3673 = vmul.f32 %v3529, 1.442695
        %v3674 = vpow.pop %v3673
        %v3675 = vmul.f32 %v3530, 1.442695
        %v3676 = vpow.pop %v3675
        %v3677 = vmul.f32 %v3531, 1.442695
        %v3678 = vpow.pop %v3677
        %v3679 = vmul.f32 %v3532, 1.442695
        %v3680 = vpow.pop %v3679
        %v3681 = vmul.f32 %v3533, 1.442695
        %v3682 = vpow.pop %v3681
        %v3683 = vmul.f32 %v3534, 1.442695
        %v3684 = vpow.pop %v3683
        %v3685 = vmul.f32 %v3535, 1.442695
        %v3686 = vpow.pop %v3685
        %v3687 = vmul.f32 %v3536, 1.442695
        %v3688 = vpow.pop %v3687
        %v3689 = vmul.f32 %v3537, 1.442695
        %v3690 = vpow.pop %v3689
        %v3691 = vmul.f32 %v3538, 1.442695
        %v3692 = vpow.pop %v3691
        %v3693 = vmul.f32 %v3539, 1.442695
        %v3694 = vpow.pop %v3693
        %v3695 = vmul.f32 %v3540, 1.442695
        %v3696 = vpow.pop %v3695
        %v3697 = vmul.f32 %v3541, 1.442695
        %v3698 = vpow.pop %v3697
        %v3699 = vmul.f32 %v3542, 1.442695
        %v3700 = vpow.pop %v3699
        %v3701 = vmul.f32 %v3543, 1.442695
        %v3702 = vpow.pop %v3701
        %v3703 = vmul.f32 %v3544, 1.442695
        %v3704 = vpow.pop %v3703
        %v3705 = vmul.f32 %v3545, 1.442695
        %v3706 = vpow.pop %v3705
        %v3707 = vmul.f32 %v3546, 1.442695
        %v3708 = vpow.pop %v3707
        %v3709 = vmul.f32 %v3547, 1.442695
        %v3710 = vpow.pop %v3709
        %v3711 = vmul.f32 %v3548, 1.442695
        %v3712 = vpow.pop %v3711
        %v3713 = vmul.f32 %v3549, 1.442695
        %v3714 = vpow.pop %v3713
        %v3715 = vmul.f32 %v3550, 1.442695
        %v3716 = vpow.pop %v3715
        %v3717 = vmul.f32 %v3551, 1.442695
        %v3718 = vpow.pop %v3717
        %v3719 = vmul.f32 %v3552, 1.442695
        %v3720 = vpow.pop %v3719
        %v3721 = vmul.f32 %v3553, 1.442695
        %v3722 = vpow.pop %v3721
        %v3723 = vmul.f32 %v3554, 1.442695
        %v3724 = vpow.pop %v3723
        %v3725 = vmul.f32 %v3555, 1.442695
        %v3726 = vpow.pop %v3725
        %v3727 = vmul.f32 %v3556, 1.442695
        %v3728 = vpow.pop %v3727
        %v3729 = vmul.f32 %v3557, 1.442695
        %v3730 = vpow.pop %v3729
        %v3731 = vmul.f32 %v3558, 1.442695
        %v3732 = vpow.pop %v3731
        %v3733 = vmul.f32 %v3559, 1.442695
        %v3734 = vpow.pop %v3733
        %v3735 = vmul.f32 %v3560, 1.442695
        %v3736 = vpow.pop %v3735
        %v3737 = vmul.f32 %v3561, 1.442695
        %v3738 = vpow.pop %v3737
        %v3739 = vmul.f32 %v3562, 1.442695
        %v3740 = vpow.pop %v3739
        %v3741 = vmul.f32 %v3563, 1.442695
        %v3742 = vpow.pop %v3741
        %v3743 = vmul.f32 %v3564, 1.442695
        %v3744 = vpow.pop %v3743
        %v3745 = vmul.f32 %v3565, 1.442695
        %v3746 = vpow.pop %v3745
        %v3747 = vmul.f32 %v3566, 1.442695
        %v3748 = vpow.pop %v3747
        %v3749 = vmul.f32 %v3567, 1.442695
        %v3750 = vpow.pop %v3749
        %v3751 = vmul.f32 %v3568, 1.442695
        %v3752 = vpow.pop %v3751
        %v3753 = vmul.f32 %v3569, 1.442695
        %v3754 = vpow.pop %v3753
        %v3755 = vmul.f32 %v3570, 1.442695
        %v3756 = vpow.pop %v3755
        %v3757 = vmul.f32 %v3571, 1.442695
        %v3758 = vpow.pop %v3757
        %v3759 = vmul.f32 %v3572, 1.442695
        %v3760 = vpow.pop %v3759
        %v3761 = vmul.f32 %v3573, 1.442695
        %v3762 = vpow.pop %v3761
        %v3763 = vmul.f32 %v3574, 1.442695
        %v3764 = vpow.pop %v3763
        %v3765 = vmul.f32 %v3575, 1.442695
        %v3766 = vpow.pop %v3765
        %v3767 = vmul.f32 %v3576, 1.442695
        %v3768 = vpow.pop %v3767
        %v3769 = vmul.f32 %v3577, 1.442695
        %v3770 = vpow.pop %v3769
        %v3771 = vmul.f32 %v3578, 1.442695
        %v3772 = vpow.pop %v3771
        %v3773 = vmul.f32 %v3579, 1.442695
        %v3774 = vpow.pop %v3773
        %v3775 = vmul.f32 %v3580, 1.442695
        %v3776 = vpow.pop %v3775
        %v3777 = vmul.f32 %v3581, 1.442695
        %v3778 = vpow.pop %v3777
        %v3779 = vmul.f32 %v3582, 1.442695
        %v3780 = vpow.pop %v3779
        %v3781 = vmul.f32 %v3583, 1.442695
        %v3782 = vpow.pop %v3781
        %v3783 = vmul.f32 %v3584, 1.442695
        %v3784 = vpow.pop %v3783
        %v3785 = vmul.f32 %v3585, 1.442695
        %v3786 = vpow.pop %v3785
        %v3787 = vmul.f32 %v3586, 1.442695
        %v3788 = vpow.pop %v3787
        %v3789 = vmul.f32 %v3587, 1.442695
        %v3790 = vpow.pop %v3789
        %v3791 = vmul.f32 %v3588, 1.442695
        %v3792 = vpow.pop %v3791
        %v3793 = vmul.f32 %v3589, 1.442695
        %v3794 = vpow.pop %v3793
        %v3795 = vmul.f32 %v3590, 1.442695
        %v3796 = vpow.pop %v3795
        %v3797 = vmul.f32 %v3591, 1.442695
        %v3798 = vpow.pop %v3797
        %v3799 = vmul.f32 %v3592, 1.442695
        %v3800 = vpow.pop %v3799
        %v3801 = vmul.f32 %v3593, 1.442695
        %v3802 = vpow.pop %v3801
        %v3803 = vmul.f32 %v3594, 1.442695
        %v3804 = vpow.pop %v3803
        %v3805 = vmul.f32 %v3595, 1.442695
        %v3806 = vpow.pop %v3805
        %v3807 = vmul.f32 %v3596, 1.442695
        %v3808 = vpow.pop %v3807
        %v3809 = vmul.f32 %v3597, 1.442695
        %v3810 = vpow.pop %v3809
        %v3811 = vmul.f32 %v3598, 1.442695
        %v3812 = vpow.pop %v3811
        %v3813 = vmul.f32 %v3599, 1.442695
        %v3814 = vpow.pop %v3813
        %v3815 = vmul.f32 %v3600, 1.442695
        %v3816 = vpow.pop %v3815
        %v3817 = vmul.f32 %v3601, 1.442695
        %v3818 = vpow.pop %v3817
        %v3819 = vmul.f32 %v3602, 1.442695
        %v3820 = vpow.pop %v3819
        %v3821 = vmul.f32 %v3603, 1.442695
        %v3822 = vpow.pop %v3821
        %v3823 = vmul.f32 %v3604, 1.442695
        %v3824 = vpow.pop %v3823
        %v3825 = vmul.f32 %v3605, 1.442695
        %v3826 = vpow.pop %v3825
        %v3827 = vmul.f32 %v3606, 1.442695
        %v3828 = vpow.pop %v3827
        %v3829 = vmul.f32 %v3607, 1.442695
        %v3830 = vpow.pop %v3829
        %v3831 = vmul.f32 %v3608, 1.442695
        %v3832 = vpow.pop %v3831
        %v3833 = vmul.f32 %v3609, 1.442695
        %v3834 = vpow.pop %v3833
        %v3835 = vmul.f32 %v3610, 1.442695
        %v3836 = vpow.pop %v3835
        %v3837 = vmul.f32 %v3611, 1.442695
        %v3838 = vpow.pop %v3837
        %v3839 = vmul.f32 %v3612, 1.442695
        %v3840 = vpow.pop %v3839
        %v3841 = vmul.f32 %v3613, 1.442695
        %v3842 = vpow.pop %v3841
        %v3843 = vmul.f32 %v3614, 1.442695
        %v3844 = vpow.pop %v3843
        %v3845 = vmul.f32 %v3615, 1.442695
        %v3846 = vpow.pop %v3845
        %v3847 = vmul.f32 %v3616, 1.442695
        %v3848 = vpow.pop %v3847
        %v3849 = vmul.f32 %v3617, 1.442695
        %v3850 = vpow.pop %v3849
        %v3851 = vmul.f32 %v3618, 1.442695
        %v3852 = vpow.pop %v3851
        %v3853 = vmul.f32 %v3619, 1.442695
        %v3854 = vpow.pop %v3853
        %v3855 = vmul.f32 %v3620, 1.442695
        %v3856 = vpow.pop %v3855
        %v3857 = vmul.f32 %v3621, 1.442695
        %v3858 = vpow.pop %v3857
        %v3859 = vmul.f32 %v3622, 1.442695
        %v3860 = vpow.pop %v3859
        %v3861 = vmul.f32 %v3623, 1.442695
        %v3862 = vpow.pop %v3861
        %v3863 = vmul.f32 %v3624, 1.442695
        %v3864 = vpow.pop %v3863
        %v3865 = vmul.f32 %v3625, 1.442695
        %v3866 = vpow.pop %v3865
        %v3867 = vmul.f32 %v3626, 1.442695
        %v3868 = vpow.pop %v3867
        %v3869 = vmul.f32 %v3627, 1.442695
        %v3870 = vpow.pop %v3869
        %v3871 = vmul.f32 %v3628, 1.442695
        %v3872 = vpow.pop %v3871
        %v3873 = vmul.f32 %v3629, 1.442695
        %v3874 = vpow.pop %v3873
        %v3875 = vmul.f32 %v3630, 1.442695
        %v3876 = vpow.pop %v3875
        %v3877 = vmul.f32 %v3631, 1.442695
        %v3878 = vpow.pop %v3877
        %v3879 = vmul.f32 %v3632, 1.442695
        %v3880 = vpow.pop %v3879
        %v3881 = vmul.f32 %v3633, 1.442695
        %v3882 = vpow.pop %v3881
        %v3883 = vmul.f32 %v3634, 1.442695
        %v3884 = vpow.pop %v3883
        %v3885 = vmul.f32 %v3635, 1.442695
        %v3886 = vpow.pop %v3885
        %v3887 = vmul.f32 %v3636, 1.442695
        %v3888 = vpow.pop %v3887
        %v3889 = vmul.f32 %v3637, 1.442695
        %v3890 = vpow.pop %v3889
        %v3891 = vmul.f32 %v3638, 1.442695
        %v3892 = vpow.pop %v3891
        %v3893 = vmul.f32 %v3639, 1.442695
        %v3894 = vpow.pop %v3893
        %v3895 = vmul.f32 %v3640, 1.442695
        %v3896 = vpow.pop %v3895
        %v3897 = vadd.f32 %v3642, 1.0
        %v3898 = vadd.f32 %v3644, 1.0
        %v3899 = vadd.f32 %v3646, 1.0
        %v3900 = vadd.f32 %v3648, 1.0
        %v3901 = vadd.f32 %v3650, 1.0
        %v3902 = vadd.f32 %v3652, 1.0
        %v3903 = vadd.f32 %v3654, 1.0
        %v3904 = vadd.f32 %v3656, 1.0
        %v3905 = vadd.f32 %v3658, 1.0
        %v3906 = vadd.f32 %v3660, 1.0
        %v3907 = vadd.f32 %v3662, 1.0
        %v3908 = vadd.f32 %v3664, 1.0
        %v3909 = vadd.f32 %v3666, 1.0
        %v3910 = vadd.f32 %v3668, 1.0
        %v3911 = vadd.f32 %v3670, 1.0
        %v3912 = vadd.f32 %v3672, 1.0
        %v3913 = vadd.f32 %v3674, 1.0
        %v3914 = vadd.f32 %v3676, 1.0
        %v3915 = vadd.f32 %v3678, 1.0
        %v3916 = vadd.f32 %v3680, 1.0
        %v3917 = vadd.f32 %v3682, 1.0
        %v3918 = vadd.f32 %v3684, 1.0
        %v3919 = vadd.f32 %v3686, 1.0
        %v3920 = vadd.f32 %v3688, 1.0
        %v3921 = vadd.f32 %v3690, 1.0
        %v3922 = vadd.f32 %v3692, 1.0
        %v3923 = vadd.f32 %v3694, 1.0
        %v3924 = vadd.f32 %v3696, 1.0
        %v3925 = vadd.f32 %v3698, 1.0
        %v3926 = vadd.f32 %v3700, 1.0
        %v3927 = vadd.f32 %v3702, 1.0
        %v3928 = vadd.f32 %v3704, 1.0
        %v3929 = vadd.f32 %v3706, 1.0
        %v3930 = vadd.f32 %v3708, 1.0
        %v3931 = vadd.f32 %v3710, 1.0
        %v3932 = vadd.f32 %v3712, 1.0
        %v3933 = vadd.f32 %v3714, 1.0
        %v3934 = vadd.f32 %v3716, 1.0
        %v3935 = vadd.f32 %v3718, 1.0
        %v3936 = vadd.f32 %v3720, 1.0
        %v3937 = vadd.f32 %v3722, 1.0
        %v3938 = vadd.f32 %v3724, 1.0
        %v3939 = vadd.f32 %v3726, 1.0
        %v3940 = vadd.f32 %v3728, 1.0
        %v3941 = vadd.f32 %v3730, 1.0
        %v3942 = vadd.f32 %v3732, 1.0
        %v3943 = vadd.f32 %v3734, 1.0
        %v3944 = vadd.f32 %v3736, 1.0
        %v3945 = vadd.f32 %v3738, 1.0
        %v3946 = vadd.f32 %v3740, 1.0
        %v3947 = vadd.f32 %v3742, 1.0
        %v3948 = vadd.f32 %v3744, 1.0
        %v3949 = vadd.f32 %v3746, 1.0
        %v3950 = vadd.f32 %v3748, 1.0
        %v3951 = vadd.f32 %v3750, 1.0
        %v3952 = vadd.f32 %v3752, 1.0
        %v3953 = vadd.f32 %v3754, 1.0
        %v3954 = vadd.f32 %v3756, 1.0
        %v3955 = vadd.f32 %v3758, 1.0
        %v3956 = vadd.f32 %v3760, 1.0
        %v3957 = vadd.f32 %v3762, 1.0
        %v3958 = vadd.f32 %v3764, 1.0
        %v3959 = vadd.f32 %v3766, 1.0
        %v3960 = vadd.f32 %v3768, 1.0
        %v3961 = vadd.f32 %v3770, 1.0
        %v3962 = vadd.f32 %v3772, 1.0
        %v3963 = vadd.f32 %v3774, 1.0
        %v3964 = vadd.f32 %v3776, 1.0
        %v3965 = vadd.f32 %v3778, 1.0
        %v3966 = vadd.f32 %v3780, 1.0
        %v3967 = vadd.f32 %v3782, 1.0
        %v3968 = vadd.f32 %v3784, 1.0
        %v3969 = vadd.f32 %v3786, 1.0
        %v3970 = vadd.f32 %v3788, 1.0
        %v3971 = vadd.f32 %v3790, 1.0
        %v3972 = vadd.f32 %v3792, 1.0
        %v3973 = vadd.f32 %v3794, 1.0
        %v3974 = vadd.f32 %v3796, 1.0
        %v3975 = vadd.f32 %v3798, 1.0
        %v3976 = vadd.f32 %v3800, 1.0
        %v3977 = vadd.f32 %v3802, 1.0
        %v3978 = vadd.f32 %v3804, 1.0
        %v3979 = vadd.f32 %v3806, 1.0
        %v3980 = vadd.f32 %v3808, 1.0
        %v3981 = vadd.f32 %v3810, 1.0
        %v3982 = vadd.f32 %v3812, 1.0
        %v3983 = vadd.f32 %v3814, 1.0
        %v3984 = vadd.f32 %v3816, 1.0
        %v3985 = vadd.f32 %v3818, 1.0
        %v3986 = vadd.f32 %v3820, 1.0
        %v3987 = vadd.f32 %v3822, 1.0
        %v3988 = vadd.f32 %v3824, 1.0
        %v3989 = vadd.f32 %v3826, 1.0
        %v3990 = vadd.f32 %v3828, 1.0
        %v3991 = vadd.f32 %v3830, 1.0
        %v3992 = vadd.f32 %v3832, 1.0
        %v3993 = vadd.f32 %v3834, 1.0
        %v3994 = vadd.f32 %v3836, 1.0
        %v3995 = vadd.f32 %v3838, 1.0
        %v3996 = vadd.f32 %v3840, 1.0
        %v3997 = vadd.f32 %v3842, 1.0
        %v3998 = vadd.f32 %v3844, 1.0
        %v3999 = vadd.f32 %v3846, 1.0
        %v4000 = vadd.f32 %v3848, 1.0
        %v4001 = vadd.f32 %v3850, 1.0
        %v4002 = vadd.f32 %v3852, 1.0
        %v4003 = vadd.f32 %v3854, 1.0
        %v4004 = vadd.f32 %v3856, 1.0
        %v4005 = vadd.f32 %v3858, 1.0
        %v4006 = vadd.f32 %v3860, 1.0
        %v4007 = vadd.f32 %v3862, 1.0
        %v4008 = vadd.f32 %v3864, 1.0
        %v4009 = vadd.f32 %v3866, 1.0
        %v4010 = vadd.f32 %v3868, 1.0
        %v4011 = vadd.f32 %v3870, 1.0
        %v4012 = vadd.f32 %v3872, 1.0
        %v4013 = vadd.f32 %v3874, 1.0
        %v4014 = vadd.f32 %v3876, 1.0
        %v4015 = vadd.f32 %v3878, 1.0
        %v4016 = vadd.f32 %v3880, 1.0
        %v4017 = vadd.f32 %v3882, 1.0
        %v4018 = vadd.f32 %v3884, 1.0
        %v4019 = vadd.f32 %v3886, 1.0
        %v4020 = vadd.f32 %v3888, 1.0
        %v4021 = vadd.f32 %v3890, 1.0
        %v4022 = vadd.f32 %v3892, 1.0
        %v4023 = vadd.f32 %v3894, 1.0
        %v4024 = vadd.f32 %v3896, 1.0
        %v4025 = vlog2.pop %v3897
        %v4026 = vmul.f32 %v4025, 0.6931472
        %v4027 = vlog2.pop %v3898
        %v4028 = vmul.f32 %v4027, 0.6931472
        %v4029 = vlog2.pop %v3899
        %v4030 = vmul.f32 %v4029, 0.6931472
        %v4031 = vlog2.pop %v3900
        %v4032 = vmul.f32 %v4031, 0.6931472
        %v4033 = vlog2.pop %v3901
        %v4034 = vmul.f32 %v4033, 0.6931472
        %v4035 = vlog2.pop %v3902
        %v4036 = vmul.f32 %v4035, 0.6931472
        %v4037 = vlog2.pop %v3903
        %v4038 = vmul.f32 %v4037, 0.6931472
        %v4039 = vlog2.pop %v3904
        %v4040 = vmul.f32 %v4039, 0.6931472
        %v4041 = vlog2.pop %v3905
        %v4042 = vmul.f32 %v4041, 0.6931472
        %v4043 = vlog2.pop %v3906
        %v4044 = vmul.f32 %v4043, 0.6931472
        %v4045 = vlog2.pop %v3907
        %v4046 = vmul.f32 %v4045, 0.6931472
        %v4047 = vlog2.pop %v3908
        %v4048 = vmul.f32 %v4047, 0.6931472
        %v4049 = vlog2.pop %v3909
        %v4050 = vmul.f32 %v4049, 0.6931472
        %v4051 = vlog2.pop %v3910
        %v4052 = vmul.f32 %v4051, 0.6931472
        %v4053 = vlog2.pop %v3911
        %v4054 = vmul.f32 %v4053, 0.6931472
        %v4055 = vlog2.pop %v3912
        %v4056 = vmul.f32 %v4055, 0.6931472
        %v4057 = vlog2.pop %v3913
        %v4058 = vmul.f32 %v4057, 0.6931472
        %v4059 = vlog2.pop %v3914
        %v4060 = vmul.f32 %v4059, 0.6931472
        %v4061 = vlog2.pop %v3915
        %v4062 = vmul.f32 %v4061, 0.6931472
        %v4063 = vlog2.pop %v3916
        %v4064 = vmul.f32 %v4063, 0.6931472
        %v4065 = vlog2.pop %v3917
        %v4066 = vmul.f32 %v4065, 0.6931472
        %v4067 = vlog2.pop %v3918
        %v4068 = vmul.f32 %v4067, 0.6931472
        %v4069 = vlog2.pop %v3919
        %v4070 = vmul.f32 %v4069, 0.6931472
        %v4071 = vlog2.pop %v3920
        %v4072 = vmul.f32 %v4071, 0.6931472
        %v4073 = vlog2.pop %v3921
        %v4074 = vmul.f32 %v4073, 0.6931472
        %v4075 = vlog2.pop %v3922
        %v4076 = vmul.f32 %v4075, 0.6931472
        %v4077 = vlog2.pop %v3923
        %v4078 = vmul.f32 %v4077, 0.6931472
        %v4079 = vlog2.pop %v3924
        %v4080 = vmul.f32 %v4079, 0.6931472
        %v4081 = vlog2.pop %v3925
        %v4082 = vmul.f32 %v4081, 0.6931472
        %v4083 = vlog2.pop %v3926
        %v4084 = vmul.f32 %v4083, 0.6931472
        %v4085 = vlog2.pop %v3927
        %v4086 = vmul.f32 %v4085, 0.6931472
        %v4087 = vlog2.pop %v3928
        %v4088 = vmul.f32 %v4087, 0.6931472
        %v4089 = vlog2.pop %v3929
        %v4090 = vmul.f32 %v4089, 0.6931472
        %v4091 = vlog2.pop %v3930
        %v4092 = vmul.f32 %v4091, 0.6931472
        %v4093 = vlog2.pop %v3931
        %v4094 = vmul.f32 %v4093, 0.6931472
        %v4095 = vlog2.pop %v3932
        %v4096 = vmul.f32 %v4095, 0.6931472
        %v4097 = vlog2.pop %v3933
        %v4098 = vmul.f32 %v4097, 0.6931472
        %v4099 = vlog2.pop %v3934
        %v4100 = vmul.f32 %v4099, 0.6931472
        %v4101 = vlog2.pop %v3935
        %v4102 = vmul.f32 %v4101, 0.6931472
        %v4103 = vlog2.pop %v3936
        %v4104 = vmul.f32 %v4103, 0.6931472
        %v4105 = vlog2.pop %v3937
        %v4106 = vmul.f32 %v4105, 0.6931472
        %v4107 = vlog2.pop %v3938
        %v4108 = vmul.f32 %v4107, 0.6931472
        %v4109 = vlog2.pop %v3939
        %v4110 = vmul.f32 %v4109, 0.6931472
        %v4111 = vlog2.pop %v3940
        %v4112 = vmul.f32 %v4111, 0.6931472
        %v4113 = vlog2.pop %v3941
        %v4114 = vmul.f32 %v4113, 0.6931472
        %v4115 = vlog2.pop %v3942
        %v4116 = vmul.f32 %v4115, 0.6931472
        %v4117 = vlog2.pop %v3943
        %v4118 = vmul.f32 %v4117, 0.6931472
        %v4119 = vlog2.pop %v3944
        %v4120 = vmul.f32 %v4119, 0.6931472
        %v4121 = vlog2.pop %v3945
        %v4122 = vmul.f32 %v4121, 0.6931472
        %v4123 = vlog2.pop %v3946
        %v4124 = vmul.f32 %v4123, 0.6931472
        %v4125 = vlog2.pop %v3947
        %v4126 = vmul.f32 %v4125, 0.6931472
        %v4127 = vlog2.pop %v3948
        %v4128 = vmul.f32 %v4127, 0.6931472
        %v4129 = vlog2.pop %v3949
        %v4130 = vmul.f32 %v4129, 0.6931472
        %v4131 = vlog2.pop %v3950
        %v4132 = vmul.f32 %v4131, 0.6931472
        %v4133 = vlog2.pop %v3951
        %v4134 = vmul.f32 %v4133, 0.6931472
        %v4135 = vlog2.pop %v3952
        %v4136 = vmul.f32 %v4135, 0.6931472
        %v4137 = vlog2.pop %v3953
        %v4138 = vmul.f32 %v4137, 0.6931472
        %v4139 = vlog2.pop %v3954
        %v4140 = vmul.f32 %v4139, 0.6931472
        %v4141 = vlog2.pop %v3955
        %v4142 = vmul.f32 %v4141, 0.6931472
        %v4143 = vlog2.pop %v3956
        %v4144 = vmul.f32 %v4143, 0.6931472
        %v4145 = vlog2.pop %v3957
        %v4146 = vmul.f32 %v4145, 0.6931472
        %v4147 = vlog2.pop %v3958
        %v4148 = vmul.f32 %v4147, 0.6931472
        %v4149 = vlog2.pop %v3959
        %v4150 = vmul.f32 %v4149, 0.6931472
        %v4151 = vlog2.pop %v3960
        %v4152 = vmul.f32 %v4151, 0.6931472
        %v4153 = vlog2.pop %v3961
        %v4154 = vmul.f32 %v4153, 0.6931472
        %v4155 = vlog2.pop %v3962
        %v4156 = vmul.f32 %v4155, 0.6931472
        %v4157 = vlog2.pop %v3963
        %v4158 = vmul.f32 %v4157, 0.6931472
        %v4159 = vlog2.pop %v3964
        %v4160 = vmul.f32 %v4159, 0.6931472
        %v4161 = vlog2.pop %v3965
        %v4162 = vmul.f32 %v4161, 0.6931472
        %v4163 = vlog2.pop %v3966
        %v4164 = vmul.f32 %v4163, 0.6931472
        %v4165 = vlog2.pop %v3967
        %v4166 = vmul.f32 %v4165, 0.6931472
        %v4167 = vlog2.pop %v3968
        %v4168 = vmul.f32 %v4167, 0.6931472
        %v4169 = vlog2.pop %v3969
        %v4170 = vmul.f32 %v4169, 0.6931472
        %v4171 = vlog2.pop %v3970
        %v4172 = vmul.f32 %v4171, 0.6931472
        %v4173 = vlog2.pop %v3971
        %v4174 = vmul.f32 %v4173, 0.6931472
        %v4175 = vlog2.pop %v3972
        %v4176 = vmul.f32 %v4175, 0.6931472
        %v4177 = vlog2.pop %v3973
        %v4178 = vmul.f32 %v4177, 0.6931472
        %v4179 = vlog2.pop %v3974
        %v4180 = vmul.f32 %v4179, 0.6931472
        %v4181 = vlog2.pop %v3975
        %v4182 = vmul.f32 %v4181, 0.6931472
        %v4183 = vlog2.pop %v3976
        %v4184 = vmul.f32 %v4183, 0.6931472
        %v4185 = vlog2.pop %v3977
        %v4186 = vmul.f32 %v4185, 0.6931472
        %v4187 = vlog2.pop %v3978
        %v4188 = vmul.f32 %v4187, 0.6931472
        %v4189 = vlog2.pop %v3979
        %v4190 = vmul.f32 %v4189, 0.6931472
        %v4191 = vlog2.pop %v3980
        %v4192 = vmul.f32 %v4191, 0.6931472
        %v4193 = vlog2.pop %v3981
        %v4194 = vmul.f32 %v4193, 0.6931472
        %v4195 = vlog2.pop %v3982
        %v4196 = vmul.f32 %v4195, 0.6931472
        %v4197 = vlog2.pop %v3983
        %v4198 = vmul.f32 %v4197, 0.6931472
        %v4199 = vlog2.pop %v3984
        %v4200 = vmul.f32 %v4199, 0.6931472
        %v4201 = vlog2.pop %v3985
        %v4202 = vmul.f32 %v4201, 0.6931472
        %v4203 = vlog2.pop %v3986
        %v4204 = vmul.f32 %v4203, 0.6931472
        %v4205 = vlog2.pop %v3987
        %v4206 = vmul.f32 %v4205, 0.6931472
        %v4207 = vlog2.pop %v3988
        %v4208 = vmul.f32 %v4207, 0.6931472
        %v4209 = vlog2.pop %v3989
        %v4210 = vmul.f32 %v4209, 0.6931472
        %v4211 = vlog2.pop %v3990
        %v4212 = vmul.f32 %v4211, 0.6931472
        %v4213 = vlog2.pop %v3991
        %v4214 = vmul.f32 %v4213, 0.6931472
        %v4215 = vlog2.pop %v3992
        %v4216 = vmul.f32 %v4215, 0.6931472
        %v4217 = vlog2.pop %v3993
        %v4218 = vmul.f32 %v4217, 0.6931472
        %v4219 = vlog2.pop %v3994
        %v4220 = vmul.f32 %v4219, 0.6931472
        %v4221 = vlog2.pop %v3995
        %v4222 = vmul.f32 %v4221, 0.6931472
        %v4223 = vlog2.pop %v3996
        %v4224 = vmul.f32 %v4223, 0.6931472
        %v4225 = vlog2.pop %v3997
        %v4226 = vmul.f32 %v4225, 0.6931472
        %v4227 = vlog2.pop %v3998
        %v4228 = vmul.f32 %v4227, 0.6931472
        %v4229 = vlog2.pop %v3999
        %v4230 = vmul.f32 %v4229, 0.6931472
        %v4231 = vlog2.pop %v4000
        %v4232 = vmul.f32 %v4231, 0.6931472
        %v4233 = vlog2.pop %v4001
        %v4234 = vmul.f32 %v4233, 0.6931472
        %v4235 = vlog2.pop %v4002
        %v4236 = vmul.f32 %v4235, 0.6931472
        %v4237 = vlog2.pop %v4003
        %v4238 = vmul.f32 %v4237, 0.6931472
        %v4239 = vlog2.pop %v4004
        %v4240 = vmul.f32 %v4239, 0.6931472
        %v4241 = vlog2.pop %v4005
        %v4242 = vmul.f32 %v4241, 0.6931472
        %v4243 = vlog2.pop %v4006
        %v4244 = vmul.f32 %v4243, 0.6931472
        %v4245 = vlog2.pop %v4007
        %v4246 = vmul.f32 %v4245, 0.6931472
        %v4247 = vlog2.pop %v4008
        %v4248 = vmul.f32 %v4247, 0.6931472
        %v4249 = vlog2.pop %v4009
        %v4250 = vmul.f32 %v4249, 0.6931472
        %v4251 = vlog2.pop %v4010
        %v4252 = vmul.f32 %v4251, 0.6931472
        %v4253 = vlog2.pop %v4011
        %v4254 = vmul.f32 %v4253, 0.6931472
        %v4255 = vlog2.pop %v4012
        %v4256 = vmul.f32 %v4255, 0.6931472
        %v4257 = vlog2.pop %v4013
        %v4258 = vmul.f32 %v4257, 0.6931472
        %v4259 = vlog2.pop %v4014
        %v4260 = vmul.f32 %v4259, 0.6931472
        %v4261 = vlog2.pop %v4015
        %v4262 = vmul.f32 %v4261, 0.6931472
        %v4263 = vlog2.pop %v4016
        %v4264 = vmul.f32 %v4263, 0.6931472
        %v4265 = vlog2.pop %v4017
        %v4266 = vmul.f32 %v4265, 0.6931472
        %v4267 = vlog2.pop %v4018
        %v4268 = vmul.f32 %v4267, 0.6931472
        %v4269 = vlog2.pop %v4019
        %v4270 = vmul.f32 %v4269, 0.6931472
        %v4271 = vlog2.pop %v4020
        %v4272 = vmul.f32 %v4271, 0.6931472
        %v4273 = vlog2.pop %v4021
        %v4274 = vmul.f32 %v4273, 0.6931472
        %v4275 = vlog2.pop %v4022
        %v4276 = vmul.f32 %v4275, 0.6931472
        %v4277 = vlog2.pop %v4023
        %v4278 = vmul.f32 %v4277, 0.6931472
        %v4279 = vlog2.pop %v4024
        %v4280 = vmul.f32 %v4279, 0.6931472
        %v4281 = vadd.f32 %v3257, %v4026
        %v4282 = vadd.f32 %v3258, %v4028
        %v4283 = vadd.f32 %v3259, %v4030
        %v4284 = vadd.f32 %v3260, %v4032
        %v4285 = vadd.f32 %v3261, %v4034
        %v4286 = vadd.f32 %v3262, %v4036
        %v4287 = vadd.f32 %v3263, %v4038
        %v4288 = vadd.f32 %v3264, %v4040
        %v4289 = vadd.f32 %v3265, %v4042
        %v4290 = vadd.f32 %v3266, %v4044
        %v4291 = vadd.f32 %v3267, %v4046
        %v4292 = vadd.f32 %v3268, %v4048
        %v4293 = vadd.f32 %v3269, %v4050
        %v4294 = vadd.f32 %v3270, %v4052
        %v4295 = vadd.f32 %v3271, %v4054
        %v4296 = vadd.f32 %v3272, %v4056
        %v4297 = vadd.f32 %v3273, %v4058
        %v4298 = vadd.f32 %v3274, %v4060
        %v4299 = vadd.f32 %v3275, %v4062
        %v4300 = vadd.f32 %v3276, %v4064
        %v4301 = vadd.f32 %v3277, %v4066
        %v4302 = vadd.f32 %v3278, %v4068
        %v4303 = vadd.f32 %v3279, %v4070
        %v4304 = vadd.f32 %v3280, %v4072
        %v4305 = vadd.f32 %v3281, %v4074
        %v4306 = vadd.f32 %v3282, %v4076
        %v4307 = vadd.f32 %v3283, %v4078
        %v4308 = vadd.f32 %v3284, %v4080
        %v4309 = vadd.f32 %v3285, %v4082
        %v4310 = vadd.f32 %v3286, %v4084
        %v4311 = vadd.f32 %v3287, %v4086
        %v4312 = vadd.f32 %v3288, %v4088
        %v4313 = vadd.f32 %v3289, %v4090
        %v4314 = vadd.f32 %v3290, %v4092
        %v4315 = vadd.f32 %v3291, %v4094
        %v4316 = vadd.f32 %v3292, %v4096
        %v4317 = vadd.f32 %v3293, %v4098
        %v4318 = vadd.f32 %v3294, %v4100
        %v4319 = vadd.f32 %v3295, %v4102
        %v4320 = vadd.f32 %v3296, %v4104
        %v4321 = vadd.f32 %v3297, %v4106
        %v4322 = vadd.f32 %v3298, %v4108
        %v4323 = vadd.f32 %v3299, %v4110
        %v4324 = vadd.f32 %v3300, %v4112
        %v4325 = vadd.f32 %v3301, %v4114
        %v4326 = vadd.f32 %v3302, %v4116
        %v4327 = vadd.f32 %v3303, %v4118
        %v4328 = vadd.f32 %v3304, %v4120
        %v4329 = vadd.f32 %v3305, %v4122
        %v4330 = vadd.f32 %v3306, %v4124
        %v4331 = vadd.f32 %v3307, %v4126
        %v4332 = vadd.f32 %v3308, %v4128
        %v4333 = vadd.f32 %v3309, %v4130
        %v4334 = vadd.f32 %v3310, %v4132
        %v4335 = vadd.f32 %v3311, %v4134
        %v4336 = vadd.f32 %v3312, %v4136
        %v4337 = vadd.f32 %v3313, %v4138
        %v4338 = vadd.f32 %v3314, %v4140
        %v4339 = vadd.f32 %v3315, %v4142
        %v4340 = vadd.f32 %v3316, %v4144
        %v4341 = vadd.f32 %v3317, %v4146
        %v4342 = vadd.f32 %v3318, %v4148
        %v4343 = vadd.f32 %v3319, %v4150
        %v4344 = vadd.f32 %v3320, %v4152
        %v4345 = vadd.f32 %v3321, %v4154
        %v4346 = vadd.f32 %v3322, %v4156
        %v4347 = vadd.f32 %v3323, %v4158
        %v4348 = vadd.f32 %v3324, %v4160
        %v4349 = vadd.f32 %v3325, %v4162
        %v4350 = vadd.f32 %v3326, %v4164
        %v4351 = vadd.f32 %v3327, %v4166
        %v4352 = vadd.f32 %v3328, %v4168
        %v4353 = vadd.f32 %v3329, %v4170
        %v4354 = vadd.f32 %v3330, %v4172
        %v4355 = vadd.f32 %v3331, %v4174
        %v4356 = vadd.f32 %v3332, %v4176
        %v4357 = vadd.f32 %v3333, %v4178
        %v4358 = vadd.f32 %v3334, %v4180
        %v4359 = vadd.f32 %v3335, %v4182
        %v4360 = vadd.f32 %v3336, %v4184
        %v4361 = vadd.f32 %v3337, %v4186
        %v4362 = vadd.f32 %v3338, %v4188
        %v4363 = vadd.f32 %v3339, %v4190
        %v4364 = vadd.f32 %v3340, %v4192
        %v4365 = vadd.f32 %v3341, %v4194
        %v4366 = vadd.f32 %v3342, %v4196
        %v4367 = vadd.f32 %v3343, %v4198
        %v4368 = vadd.f32 %v3344, %v4200
        %v4369 = vadd.f32 %v3345, %v4202
        %v4370 = vadd.f32 %v3346, %v4204
        %v4371 = vadd.f32 %v3347, %v4206
        %v4372 = vadd.f32 %v3348, %v4208
        %v4373 = vadd.f32 %v3349, %v4210
        %v4374 = vadd.f32 %v3350, %v4212
        %v4375 = vadd.f32 %v3351, %v4214
        %v4376 = vadd.f32 %v3352, %v4216
        %v4377 = vadd.f32 %v3353, %v4218
        %v4378 = vadd.f32 %v3354, %v4220
        %v4379 = vadd.f32 %v3355, %v4222
        %v4380 = vadd.f32 %v3356, %v4224
        %v4381 = vadd.f32 %v3357, %v4226
        %v4382 = vadd.f32 %v3358, %v4228
        %v4383 = vadd.f32 %v3359, %v4230
        %v4384 = vadd.f32 %v3360, %v4232
        %v4385 = vadd.f32 %v3361, %v4234
        %v4386 = vadd.f32 %v3362, %v4236
        %v4387 = vadd.f32 %v3363, %v4238
        %v4388 = vadd.f32 %v3364, %v4240
        %v4389 = vadd.f32 %v3365, %v4242
        %v4390 = vadd.f32 %v3366, %v4244
        %v4391 = vadd.f32 %v3367, %v4246
        %v4392 = vadd.f32 %v3368, %v4248
        %v4393 = vadd.f32 %v3369, %v4250
        %v4394 = vadd.f32 %v3370, %v4252
        %v4395 = vadd.f32 %v3371, %v4254
        %v4396 = vadd.f32 %v3372, %v4256
        %v4397 = vadd.f32 %v3373, %v4258
        %v4398 = vadd.f32 %v3374, %v4260
        %v4399 = vadd.f32 %v3375, %v4262
        %v4400 = vadd.f32 %v3376, %v4264
        %v4401 = vadd.f32 %v3377, %v4266
        %v4402 = vadd.f32 %v3378, %v4268
        %v4403 = vadd.f32 %v3379, %v4270
        %v4404 = vadd.f32 %v3380, %v4272
        %v4405 = vadd.f32 %v3381, %v4274
        %v4406 = vadd.f32 %v3382, %v4276
        %v4407 = vadd.f32 %v3383, %v4278
        %v4408 = vadd.f32 %v3384, %v4280
        %v4409 = vand.u32 2147483647, %v2747
        %v4410 = vand.u32 2147483647, %v2750
        %v4411 = vand.u32 2147483647, %v2755
        %v4412 = vand.u32 2147483647, %v2758
        %v4413 = vand.u32 2147483647, %v2763
        %v4414 = vand.u32 2147483647, %v2766
        %v4415 = vand.u32 2147483647, %v2771
        %v4416 = vand.u32 2147483647, %v2774
        %v4417 = vand.u32 2147483647, %v2779
        %v4418 = vand.u32 2147483647, %v2782
        %v4419 = vand.u32 2147483647, %v2787
        %v4420 = vand.u32 2147483647, %v2790
        %v4421 = vand.u32 2147483647, %v2795
        %v4422 = vand.u32 2147483647, %v2798
        %v4423 = vand.u32 2147483647, %v2803
        %v4424 = vand.u32 2147483647, %v2806
        %v4425 = vand.u32 2147483647, %v2811
        %v4426 = vand.u32 2147483647, %v2814
        %v4427 = vand.u32 2147483647, %v2819
        %v4428 = vand.u32 2147483647, %v2822
        %v4429 = vand.u32 2147483647, %v2827
        %v4430 = vand.u32 2147483647, %v2830
        %v4431 = vand.u32 2147483647, %v2835
        %v4432 = vand.u32 2147483647, %v2838
        %v4433 = vand.u32 2147483647, %v2843
        %v4434 = vand.u32 2147483647, %v2846
        %v4435 = vand.u32 2147483647, %v2851
        %v4436 = vand.u32 2147483647, %v2854
        %v4437 = vand.u32 2147483647, %v2859
        %v4438 = vand.u32 2147483647, %v2862
        %v4439 = vand.u32 2147483647, %v2867
        %v4440 = vand.u32 2147483647, %v2870
        %v4441 = vand.u32 2147483647, %v2875
        %v4442 = vand.u32 2147483647, %v2878
        %v4443 = vand.u32 2147483647, %v2883
        %v4444 = vand.u32 2147483647, %v2886
        %v4445 = vand.u32 2147483647, %v2891
        %v4446 = vand.u32 2147483647, %v2894
        %v4447 = vand.u32 2147483647, %v2899
        %v4448 = vand.u32 2147483647, %v2902
        %v4449 = vand.u32 2147483647, %v2907
        %v4450 = vand.u32 2147483647, %v2910
        %v4451 = vand.u32 2147483647, %v2915
        %v4452 = vand.u32 2147483647, %v2918
        %v4453 = vand.u32 2147483647, %v2923
        %v4454 = vand.u32 2147483647, %v2926
        %v4455 = vand.u32 2147483647, %v2931
        %v4456 = vand.u32 2147483647, %v2934
        %v4457 = vand.u32 2147483647, %v2939
        %v4458 = vand.u32 2147483647, %v2942
        %v4459 = vand.u32 2147483647, %v2947
        %v4460 = vand.u32 2147483647, %v2950
        %v4461 = vand.u32 2147483647, %v2955
        %v4462 = vand.u32 2147483647, %v2958
        %v4463 = vand.u32 2147483647, %v2963
        %v4464 = vand.u32 2147483647, %v2966
        %v4465 = vand.u32 2147483647, %v2971
        %v4466 = vand.u32 2147483647, %v2974
        %v4467 = vand.u32 2147483647, %v2979
        %v4468 = vand.u32 2147483647, %v2982
        %v4469 = vand.u32 2147483647, %v2987
        %v4470 = vand.u32 2147483647, %v2990
        %v4471 = vand.u32 2147483647, %v2995
        %v4472 = vand.u32 2147483647, %v2998
        %v4473 = vand.u32 2147483647, %v3003
        %v4474 = vand.u32 2147483647, %v3006
        %v4475 = vand.u32 2147483647, %v3011
        %v4476 = vand.u32 2147483647, %v3014
        %v4477 = vand.u32 2147483647, %v3019
        %v4478 = vand.u32 2147483647, %v3022
        %v4479 = vand.u32 2147483647, %v3027
        %v4480 = vand.u32 2147483647, %v3030
        %v4481 = vand.u32 2147483647, %v3035
        %v4482 = vand.u32 2147483647, %v3038
        %v4483 = vand.u32 2147483647, %v3043
        %v4484 = vand.u32 2147483647, %v3046
        %v4485 = vand.u32 2147483647, %v3051
        %v4486 = vand.u32 2147483647, %v3054
        %v4487 = vand.u32 2147483647, %v3059
        %v4488 = vand.u32 2147483647, %v3062
        %v4489 = vand.u32 2147483647, %v3067
        %v4490 = vand.u32 2147483647, %v3070
        %v4491 = vand.u32 2147483647, %v3075
        %v4492 = vand.u32 2147483647, %v3078
        %v4493 = vand.u32 2147483647, %v3083
        %v4494 = vand.u32 2147483647, %v3086
        %v4495 = vand.u32 2147483647, %v3091
        %v4496 = vand.u32 2147483647, %v3094
        %v4497 = vand.u32 2147483647, %v3099
        %v4498 = vand.u32 2147483647, %v3102
        %v4499 = vand.u32 2147483647, %v3107
        %v4500 = vand.u32 2147483647, %v3110
        %v4501 = vand.u32 2147483647, %v3115
        %v4502 = vand.u32 2147483647, %v3118
        %v4503 = vand.u32 2147483647, %v3123
        %v4504 = vand.u32 2147483647, %v3126
        %v4505 = vand.u32 2147483647, %v3131
        %v4506 = vand.u32 2147483647, %v3134
        %v4507 = vand.u32 2147483647, %v3139
        %v4508 = vand.u32 2147483647, %v3142
        %v4509 = vand.u32 2147483647, %v3147
        %v4510 = vand.u32 2147483647, %v3150
        %v4511 = vand.u32 2147483647, %v3155
        %v4512 = vand.u32 2147483647, %v3158
        %v4513 = vand.u32 2147483647, %v3163
        %v4514 = vand.u32 2147483647, %v3166
        %v4515 = vand.u32 2147483647, %v3171
        %v4516 = vand.u32 2147483647, %v3174
        %v4517 = vand.u32 2147483647, %v3179
        %v4518 = vand.u32 2147483647, %v3182
        %v4519 = vand.u32 2147483647, %v3187
        %v4520 = vand.u32 2147483647, %v3190
        %v4521 = vand.u32 2147483647, %v3195
        %v4522 = vand.u32 2147483647, %v3198
        %v4523 = vand.u32 2147483647, %v3203
        %v4524 = vand.u32 2147483647, %v3206
        %v4525 = vand.u32 2147483647, %v3211
        %v4526 = vand.u32 2147483647, %v3214
        %v4527 = vand.u32 2147483647, %v3219
        %v4528 = vand.u32 2147483647, %v3222
        %v4529 = vand.u32 2147483647, %v3227
        %v4530 = vand.u32 2147483647, %v3230
        %v4531 = vand.u32 2147483647, %v3235
        %v4532 = vand.u32 2147483647, %v3238
        %v4533 = vand.u32 2147483647, %v3243
        %v4534 = vand.u32 2147483647, %v3246
        %v4535 = vand.u32 2147483647, %v3251
        %v4536 = vand.u32 2147483647, %v3254
        %vm4537 = vcmp.lt.f32.partialorder %v4409, 1.0
        %vm4538 = vcmp.lt.f32.partialorder %v4410, 1.0
        %vm4539 = vcmp.lt.f32.partialorder %v4411, 1.0
        %vm4540 = vcmp.lt.f32.partialorder %v4412, 1.0
        %vm4541 = vcmp.lt.f32.partialorder %v4413, 1.0
        %vm4542 = vcmp.lt.f32.partialorder %v4414, 1.0
        %vm4543 = vcmp.lt.f32.partialorder %v4415, 1.0
        %vm4544 = vcmp.lt.f32.partialorder %v4416, 1.0
        %vm4545 = vcmp.lt.f32.partialorder %v4417, 1.0
        %vm4546 = vcmp.lt.f32.partialorder %v4418, 1.0
        %vm4547 = vcmp.lt.f32.partialorder %v4419, 1.0
        %vm4548 = vcmp.lt.f32.partialorder %v4420, 1.0
        %vm4549 = vcmp.lt.f32.partialorder %v4421, 1.0
        %vm4550 = vcmp.lt.f32.partialorder %v4422, 1.0
        %vm4551 = vcmp.lt.f32.partialorder %v4423, 1.0
        %vm4552 = vcmp.lt.f32.partialorder %v4424, 1.0
        %vm4553 = vcmp.lt.f32.partialorder %v4425, 1.0
        %vm4554 = vcmp.lt.f32.partialorder %v4426, 1.0
        %vm4555 = vcmp.lt.f32.partialorder %v4427, 1.0
        %vm4556 = vcmp.lt.f32.partialorder %v4428, 1.0
        %vm4557 = vcmp.lt.f32.partialorder %v4429, 1.0
        %vm4558 = vcmp.lt.f32.partialorder %v4430, 1.0
        %vm4559 = vcmp.lt.f32.partialorder %v4431, 1.0
        %vm4560 = vcmp.lt.f32.partialorder %v4432, 1.0
        %vm4561 = vcmp.lt.f32.partialorder %v4433, 1.0
        %vm4562 = vcmp.lt.f32.partialorder %v4434, 1.0
        %vm4563 = vcmp.lt.f32.partialorder %v4435, 1.0
        %vm4564 = vcmp.lt.f32.partialorder %v4436, 1.0
        %vm4565 = vcmp.lt.f32.partialorder %v4437, 1.0
        %vm4566 = vcmp.lt.f32.partialorder %v4438, 1.0
        %vm4567 = vcmp.lt.f32.partialorder %v4439, 1.0
        %vm4568 = vcmp.lt.f32.partialorder %v4440, 1.0
        %vm4569 = vcmp.lt.f32.partialorder %v4441, 1.0
        %vm4570 = vcmp.lt.f32.partialorder %v4442, 1.0
        %vm4571 = vcmp.lt.f32.partialorder %v4443, 1.0
        %vm4572 = vcmp.lt.f32.partialorder %v4444, 1.0
        %vm4573 = vcmp.lt.f32.partialorder %v4445, 1.0
        %vm4574 = vcmp.lt.f32.partialorder %v4446, 1.0
        %vm4575 = vcmp.lt.f32.partialorder %v4447, 1.0
        %vm4576 = vcmp.lt.f32.partialorder %v4448, 1.0
        %vm4577 = vcmp.lt.f32.partialorder %v4449, 1.0
        %vm4578 = vcmp.lt.f32.partialorder %v4450, 1.0
        %vm4579 = vcmp.lt.f32.partialorder %v4451, 1.0
        %vm4580 = vcmp.lt.f32.partialorder %v4452, 1.0
        %vm4581 = vcmp.lt.f32.partialorder %v4453, 1.0
        %vm4582 = vcmp.lt.f32.partialorder %v4454, 1.0
        %vm4583 = vcmp.lt.f32.partialorder %v4455, 1.0
        %vm4584 = vcmp.lt.f32.partialorder %v4456, 1.0
        %vm4585 = vcmp.lt.f32.partialorder %v4457, 1.0
        %vm4586 = vcmp.lt.f32.partialorder %v4458, 1.0
        %vm4587 = vcmp.lt.f32.partialorder %v4459, 1.0
        %vm4588 = vcmp.lt.f32.partialorder %v4460, 1.0
        %vm4589 = vcmp.lt.f32.partialorder %v4461, 1.0
        %vm4590 = vcmp.lt.f32.partialorder %v4462, 1.0
        %vm4591 = vcmp.lt.f32.partialorder %v4463, 1.0
        %vm4592 = vcmp.lt.f32.partialorder %v4464, 1.0
        %vm4593 = vcmp.lt.f32.partialorder %v4465, 1.0
        %vm4594 = vcmp.lt.f32.partialorder %v4466, 1.0
        %vm4595 = vcmp.lt.f32.partialorder %v4467, 1.0
        %vm4596 = vcmp.lt.f32.partialorder %v4468, 1.0
        %vm4597 = vcmp.lt.f32.partialorder %v4469, 1.0
        %vm4598 = vcmp.lt.f32.partialorder %v4470, 1.0
        %vm4599 = vcmp.lt.f32.partialorder %v4471, 1.0
        %vm4600 = vcmp.lt.f32.partialorder %v4472, 1.0
        %vm4601 = vcmp.lt.f32.partialorder %v4473, 1.0
        %vm4602 = vcmp.lt.f32.partialorder %v4474, 1.0
        %vm4603 = vcmp.lt.f32.partialorder %v4475, 1.0
        %vm4604 = vcmp.lt.f32.partialorder %v4476, 1.0
        %vm4605 = vcmp.lt.f32.partialorder %v4477, 1.0
        %vm4606 = vcmp.lt.f32.partialorder %v4478, 1.0
        %vm4607 = vcmp.lt.f32.partialorder %v4479, 1.0
        %vm4608 = vcmp.lt.f32.partialorder %v4480, 1.0
        %vm4609 = vcmp.lt.f32.partialorder %v4481, 1.0
        %vm4610 = vcmp.lt.f32.partialorder %v4482, 1.0
        %vm4611 = vcmp.lt.f32.partialorder %v4483, 1.0
        %vm4612 = vcmp.lt.f32.partialorder %v4484, 1.0
        %vm4613 = vcmp.lt.f32.partialorder %v4485, 1.0
        %vm4614 = vcmp.lt.f32.partialorder %v4486, 1.0
        %vm4615 = vcmp.lt.f32.partialorder %v4487, 1.0
        %vm4616 = vcmp.lt.f32.partialorder %v4488, 1.0
        %vm4617 = vcmp.lt.f32.partialorder %v4489, 1.0
        %vm4618 = vcmp.lt.f32.partialorder %v4490, 1.0
        %vm4619 = vcmp.lt.f32.partialorder %v4491, 1.0
        %vm4620 = vcmp.lt.f32.partialorder %v4492, 1.0
        %vm4621 = vcmp.lt.f32.partialorder %v4493, 1.0
        %vm4622 = vcmp.lt.f32.partialorder %v4494, 1.0
        %vm4623 = vcmp.lt.f32.partialorder %v4495, 1.0
        %vm4624 = vcmp.lt.f32.partialorder %v4496, 1.0
        %vm4625 = vcmp.lt.f32.partialorder %v4497, 1.0
        %vm4626 = vcmp.lt.f32.partialorder %v4498, 1.0
        %vm4627 = vcmp.lt.f32.partialorder %v4499, 1.0
        %vm4628 = vcmp.lt.f32.partialorder %v4500, 1.0
        %vm4629 = vcmp.lt.f32.partialorder %v4501, 1.0
        %vm4630 = vcmp.lt.f32.partialorder %v4502, 1.0
        %vm4631 = vcmp.lt.f32.partialorder %v4503, 1.0
        %vm4632 = vcmp.lt.f32.partialorder %v4504, 1.0
        %vm4633 = vcmp.lt.f32.partialorder %v4505, 1.0
        %vm4634 = vcmp.lt.f32.partialorder %v4506, 1.0
        %vm4635 = vcmp.lt.f32.partialorder %v4507, 1.0
        %vm4636 = vcmp.lt.f32.partialorder %v4508, 1.0
        %vm4637 = vcmp.lt.f32.partialorder %v4509, 1.0
        %vm4638 = vcmp.lt.f32.partialorder %v4510, 1.0
        %vm4639 = vcmp.lt.f32.partialorder %v4511, 1.0
        %vm4640 = vcmp.lt.f32.partialorder %v4512, 1.0
        %vm4641 = vcmp.lt.f32.partialorder %v4513, 1.0
        %vm4642 = vcmp.lt.f32.partialorder %v4514, 1.0
        %vm4643 = vcmp.lt.f32.partialorder %v4515, 1.0
        %vm4644 = vcmp.lt.f32.partialorder %v4516, 1.0
        %vm4645 = vcmp.lt.f32.partialorder %v4517, 1.0
        %vm4646 = vcmp.lt.f32.partialorder %v4518, 1.0
        %vm4647 = vcmp.lt.f32.partialorder %v4519, 1.0
        %vm4648 = vcmp.lt.f32.partialorder %v4520, 1.0
        %vm4649 = vcmp.lt.f32.partialorder %v4521, 1.0
        %vm4650 = vcmp.lt.f32.partialorder %v4522, 1.0
        %vm4651 = vcmp.lt.f32.partialorder %v4523, 1.0
        %vm4652 = vcmp.lt.f32.partialorder %v4524, 1.0
        %vm4653 = vcmp.lt.f32.partialorder %v4525, 1.0
        %vm4654 = vcmp.lt.f32.partialorder %v4526, 1.0
        %vm4655 = vcmp.lt.f32.partialorder %v4527, 1.0
        %vm4656 = vcmp.lt.f32.partialorder %v4528, 1.0
        %vm4657 = vcmp.lt.f32.partialorder %v4529, 1.0
        %vm4658 = vcmp.lt.f32.partialorder %v4530, 1.0
        %vm4659 = vcmp.lt.f32.partialorder %v4531, 1.0
        %vm4660 = vcmp.lt.f32.partialorder %v4532, 1.0
        %vm4661 = vcmp.lt.f32.partialorder %v4533, 1.0
        %vm4662 = vcmp.lt.f32.partialorder %v4534, 1.0
        %vm4663 = vcmp.lt.f32.partialorder %v4535, 1.0
        %vm4664 = vcmp.lt.f32.partialorder %v4536, 1.0
        %v4665 = vmul.f32 %v2747, 0.5
        %v4666 = vmul.f32 %v2750, 0.5
        %v4667 = vmul.f32 %v2755, 0.5
        %v4668 = vmul.f32 %v2758, 0.5
        %v4669 = vmul.f32 %v2763, 0.5
        %v4670 = vmul.f32 %v2766, 0.5
        %v4671 = vmul.f32 %v2771, 0.5
        %v4672 = vmul.f32 %v2774, 0.5
        %v4673 = vmul.f32 %v2779, 0.5
        %v4674 = vmul.f32 %v2782, 0.5
        %v4675 = vmul.f32 %v2787, 0.5
        %v4676 = vmul.f32 %v2790, 0.5
        %v4677 = vmul.f32 %v2795, 0.5
        %v4678 = vmul.f32 %v2798, 0.5
        %v4679 = vmul.f32 %v2803, 0.5
        %v4680 = vmul.f32 %v2806, 0.5
        %v4681 = vmul.f32 %v2811, 0.5
        %v4682 = vmul.f32 %v2814, 0.5
        %v4683 = vmul.f32 %v2819, 0.5
        %v4684 = vmul.f32 %v2822, 0.5
        %v4685 = vmul.f32 %v2827, 0.5
        %v4686 = vmul.f32 %v2830, 0.5
        %v4687 = vmul.f32 %v2835, 0.5
        %v4688 = vmul.f32 %v2838, 0.5
        %v4689 = vmul.f32 %v2843, 0.5
        %v4690 = vmul.f32 %v2846, 0.5
        %v4691 = vmul.f32 %v2851, 0.5
        %v4692 = vmul.f32 %v2854, 0.5
        %v4693 = vmul.f32 %v2859, 0.5
        %v4694 = vmul.f32 %v2862, 0.5
        %v4695 = vmul.f32 %v2867, 0.5
        %v4696 = vmul.f32 %v2870, 0.5
        %v4697 = vmul.f32 %v2875, 0.5
        %v4698 = vmul.f32 %v2878, 0.5
        %v4699 = vmul.f32 %v2883, 0.5
        %v4700 = vmul.f32 %v2886, 0.5
        %v4701 = vmul.f32 %v2891, 0.5
        %v4702 = vmul.f32 %v2894, 0.5
        %v4703 = vmul.f32 %v2899, 0.5
        %v4704 = vmul.f32 %v2902, 0.5
        %v4705 = vmul.f32 %v2907, 0.5
        %v4706 = vmul.f32 %v2910, 0.5
        %v4707 = vmul.f32 %v2915, 0.5
        %v4708 = vmul.f32 %v2918, 0.5
        %v4709 = vmul.f32 %v2923, 0.5
        %v4710 = vmul.f32 %v2926, 0.5
        %v4711 = vmul.f32 %v2931, 0.5
        %v4712 = vmul.f32 %v2934, 0.5
        %v4713 = vmul.f32 %v2939, 0.5
        %v4714 = vmul.f32 %v2942, 0.5
        %v4715 = vmul.f32 %v2947, 0.5
        %v4716 = vmul.f32 %v2950, 0.5
        %v4717 = vmul.f32 %v2955, 0.5
        %v4718 = vmul.f32 %v2958, 0.5
        %v4719 = vmul.f32 %v2963, 0.5
        %v4720 = vmul.f32 %v2966, 0.5
        %v4721 = vmul.f32 %v2971, 0.5
        %v4722 = vmul.f32 %v2974, 0.5
        %v4723 = vmul.f32 %v2979, 0.5
        %v4724 = vmul.f32 %v2982, 0.5
        %v4725 = vmul.f32 %v2987, 0.5
        %v4726 = vmul.f32 %v2990, 0.5
        %v4727 = vmul.f32 %v2995, 0.5
        %v4728 = vmul.f32 %v2998, 0.5
        %v4729 = vmul.f32 %v3003, 0.5
        %v4730 = vmul.f32 %v3006, 0.5
        %v4731 = vmul.f32 %v3011, 0.5
        %v4732 = vmul.f32 %v3014, 0.5
        %v4733 = vmul.f32 %v3019, 0.5
        %v4734 = vmul.f32 %v3022, 0.5
        %v4735 = vmul.f32 %v3027, 0.5
        %v4736 = vmul.f32 %v3030, 0.5
        %v4737 = vmul.f32 %v3035, 0.5
        %v4738 = vmul.f32 %v3038, 0.5
        %v4739 = vmul.f32 %v3043, 0.5
        %v4740 = vmul.f32 %v3046, 0.5
        %v4741 = vmul.f32 %v3051, 0.5
        %v4742 = vmul.f32 %v3054, 0.5
        %v4743 = vmul.f32 %v3059, 0.5
        %v4744 = vmul.f32 %v3062, 0.5
        %v4745 = vmul.f32 %v3067, 0.5
        %v4746 = vmul.f32 %v3070, 0.5
        %v4747 = vmul.f32 %v3075, 0.5
        %v4748 = vmul.f32 %v3078, 0.5
        %v4749 = vmul.f32 %v3083, 0.5
        %v4750 = vmul.f32 %v3086, 0.5
        %v4751 = vmul.f32 %v3091, 0.5
        %v4752 = vmul.f32 %v3094, 0.5
        %v4753 = vmul.f32 %v3099, 0.5
        %v4754 = vmul.f32 %v3102, 0.5
        %v4755 = vmul.f32 %v3107, 0.5
        %v4756 = vmul.f32 %v3110, 0.5
        %v4757 = vmul.f32 %v3115, 0.5
        %v4758 = vmul.f32 %v3118, 0.5
        %v4759 = vmul.f32 %v3123, 0.5
        %v4760 = vmul.f32 %v3126, 0.5
        %v4761 = vmul.f32 %v3131, 0.5
        %v4762 = vmul.f32 %v3134, 0.5
        %v4763 = vmul.f32 %v3139, 0.5
        %v4764 = vmul.f32 %v3142, 0.5
        %v4765 = vmul.f32 %v3147, 0.5
        %v4766 = vmul.f32 %v3150, 0.5
        %v4767 = vmul.f32 %v3155, 0.5
        %v4768 = vmul.f32 %v3158, 0.5
        %v4769 = vmul.f32 %v3163, 0.5
        %v4770 = vmul.f32 %v3166, 0.5
        %v4771 = vmul.f32 %v3171, 0.5
        %v4772 = vmul.f32 %v3174, 0.5
        %v4773 = vmul.f32 %v3179, 0.5
        %v4774 = vmul.f32 %v3182, 0.5
        %v4775 = vmul.f32 %v3187, 0.5
        %v4776 = vmul.f32 %v3190, 0.5
        %v4777 = vmul.f32 %v3195, 0.5
        %v4778 = vmul.f32 %v3198, 0.5
        %v4779 = vmul.f32 %v3203, 0.5
        %v4780 = vmul.f32 %v3206, 0.5
        %v4781 = vmul.f32 %v3211, 0.5
        %v4782 = vmul.f32 %v3214, 0.5
        %v4783 = vmul.f32 %v3219, 0.5
        %v4784 = vmul.f32 %v3222, 0.5
        %v4785 = vmul.f32 %v3227, 0.5
        %v4786 = vmul.f32 %v3230, 0.5
        %v4787 = vmul.f32 %v3235, 0.5
        %v4788 = vmul.f32 %v3238, 0.5
        %v4789 = vmul.f32 %v3243, 0.5
        %v4790 = vmul.f32 %v3246, 0.5
        %v4791 = vmul.f32 %v3251, 0.5
        %v4792 = vmul.f32 %v3254, 0.5
        %v4793 = vmul.f32 %v4665, %v2747
        %v4794 = vmul.f32 %v4666, %v2750
        %v4795 = vmul.f32 %v4667, %v2755
        %v4796 = vmul.f32 %v4668, %v2758
        %v4797 = vmul.f32 %v4669, %v2763
        %v4798 = vmul.f32 %v4670, %v2766
        %v4799 = vmul.f32 %v4671, %v2771
        %v4800 = vmul.f32 %v4672, %v2774
        %v4801 = vmul.f32 %v4673, %v2779
        %v4802 = vmul.f32 %v4674, %v2782
        %v4803 = vmul.f32 %v4675, %v2787
        %v4804 = vmul.f32 %v4676, %v2790
        %v4805 = vmul.f32 %v4677, %v2795
        %v4806 = vmul.f32 %v4678, %v2798
        %v4807 = vmul.f32 %v4679, %v2803
        %v4808 = vmul.f32 %v4680, %v2806
        %v4809 = vmul.f32 %v4681, %v2811
        %v4810 = vmul.f32 %v4682, %v2814
        %v4811 = vmul.f32 %v4683, %v2819
        %v4812 = vmul.f32 %v4684, %v2822
        %v4813 = vmul.f32 %v4685, %v2827
        %v4814 = vmul.f32 %v4686, %v2830
        %v4815 = vmul.f32 %v4687, %v2835
        %v4816 = vmul.f32 %v4688, %v2838
        %v4817 = vmul.f32 %v4689, %v2843
        %v4818 = vmul.f32 %v4690, %v2846
        %v4819 = vmul.f32 %v4691, %v2851
        %v4820 = vmul.f32 %v4692, %v2854
        %v4821 = vmul.f32 %v4693, %v2859
        %v4822 = vmul.f32 %v4694, %v2862
        %v4823 = vmul.f32 %v4695, %v2867
        %v4824 = vmul.f32 %v4696, %v2870
        %v4825 = vmul.f32 %v4697, %v2875
        %v4826 = vmul.f32 %v4698, %v2878
        %v4827 = vmul.f32 %v4699, %v2883
        %v4828 = vmul.f32 %v4700, %v2886
        %v4829 = vmul.f32 %v4701, %v2891
        %v4830 = vmul.f32 %v4702, %v2894
        %v4831 = vmul.f32 %v4703, %v2899
        %v4832 = vmul.f32 %v4704, %v2902
        %v4833 = vmul.f32 %v4705, %v2907
        %v4834 = vmul.f32 %v4706, %v2910
        %v4835 = vmul.f32 %v4707, %v2915
        %v4836 = vmul.f32 %v4708, %v2918
        %v4837 = vmul.f32 %v4709, %v2923
        %v4838 = vmul.f32 %v4710, %v2926
        %v4839 = vmul.f32 %v4711, %v2931
        %v4840 = vmul.f32 %v4712, %v2934
        %v4841 = vmul.f32 %v4713, %v2939
        %v4842 = vmul.f32 %v4714, %v2942
        %v4843 = vmul.f32 %v4715, %v2947
        %v4844 = vmul.f32 %v4716, %v2950
        %v4845 = vmul.f32 %v4717, %v2955
        %v4846 = vmul.f32 %v4718, %v2958
        %v4847 = vmul.f32 %v4719, %v2963
        %v4848 = vmul.f32 %v4720, %v2966
        %v4849 = vmul.f32 %v4721, %v2971
        %v4850 = vmul.f32 %v4722, %v2974
        %v4851 = vmul.f32 %v4723, %v2979
        %v4852 = vmul.f32 %v4724, %v2982
        %v4853 = vmul.f32 %v4725, %v2987
        %v4854 = vmul.f32 %v4726, %v2990
        %v4855 = vmul.f32 %v4727, %v2995
        %v4856 = vmul.f32 %v4728, %v2998
        %v4857 = vmul.f32 %v4729, %v3003
        %v4858 = vmul.f32 %v4730, %v3006
        %v4859 = vmul.f32 %v4731, %v3011
        %v4860 = vmul.f32 %v4732, %v3014
        %v4861 = vmul.f32 %v4733, %v3019
        %v4862 = vmul.f32 %v4734, %v3022
        %v4863 = vmul.f32 %v4735, %v3027
        %v4864 = vmul.f32 %v4736, %v3030
        %v4865 = vmul.f32 %v4737, %v3035
        %v4866 = vmul.f32 %v4738, %v3038
        %v4867 = vmul.f32 %v4739, %v3043
        %v4868 = vmul.f32 %v4740, %v3046
        %v4869 = vmul.f32 %v4741, %v3051
        %v4870 = vmul.f32 %v4742, %v3054
        %v4871 = vmul.f32 %v4743, %v3059
        %v4872 = vmul.f32 %v4744, %v3062
        %v4873 = vmul.f32 %v4745, %v3067
        %v4874 = vmul.f32 %v4746, %v3070
        %v4875 = vmul.f32 %v4747, %v3075
        %v4876 = vmul.f32 %v4748, %v3078
        %v4877 = vmul.f32 %v4749, %v3083
        %v4878 = vmul.f32 %v4750, %v3086
        %v4879 = vmul.f32 %v4751, %v3091
        %v4880 = vmul.f32 %v4752, %v3094
        %v4881 = vmul.f32 %v4753, %v3099
        %v4882 = vmul.f32 %v4754, %v3102
        %v4883 = vmul.f32 %v4755, %v3107
        %v4884 = vmul.f32 %v4756, %v3110
        %v4885 = vmul.f32 %v4757, %v3115
        %v4886 = vmul.f32 %v4758, %v3118
        %v4887 = vmul.f32 %v4759, %v3123
        %v4888 = vmul.f32 %v4760, %v3126
        %v4889 = vmul.f32 %v4761, %v3131
        %v4890 = vmul.f32 %v4762, %v3134
        %v4891 = vmul.f32 %v4763, %v3139
        %v4892 = vmul.f32 %v4764, %v3142
        %v4893 = vmul.f32 %v4765, %v3147
        %v4894 = vmul.f32 %v4766, %v3150
        %v4895 = vmul.f32 %v4767, %v3155
        %v4896 = vmul.f32 %v4768, %v3158
        %v4897 = vmul.f32 %v4769, %v3163
        %v4898 = vmul.f32 %v4770, %v3166
        %v4899 = vmul.f32 %v4771, %v3171
        %v4900 = vmul.f32 %v4772, %v3174
        %v4901 = vmul.f32 %v4773, %v3179
        %v4902 = vmul.f32 %v4774, %v3182
        %v4903 = vmul.f32 %v4775, %v3187
        %v4904 = vmul.f32 %v4776, %v3190
        %v4905 = vmul.f32 %v4777, %v3195
        %v4906 = vmul.f32 %v4778, %v3198
        %v4907 = vmul.f32 %v4779, %v3203
        %v4908 = vmul.f32 %v4780, %v3206
        %v4909 = vmul.f32 %v4781, %v3211
        %v4910 = vmul.f32 %v4782, %v3214
        %v4911 = vmul.f32 %v4783, %v3219
        %v4912 = vmul.f32 %v4784, %v3222
        %v4913 = vmul.f32 %v4785, %v3227
        %v4914 = vmul.f32 %v4786, %v3230
        %v4915 = vmul.f32 %v4787, %v3235
        %v4916 = vmul.f32 %v4788, %v3238
        %v4917 = vmul.f32 %v4789, %v3243
        %v4918 = vmul.f32 %v4790, %v3246
        %v4919 = vmul.f32 %v4791, %v3251
        %v4920 = vmul.f32 %v4792, %v3254
        %v4921 = vsub.f32 %v4409, 0.5
        %v4922 = vsub.f32 %v4410, 0.5
        %v4923 = vsub.f32 %v4411, 0.5
        %v4924 = vsub.f32 %v4412, 0.5
        %v4925 = vsub.f32 %v4413, 0.5
        %v4926 = vsub.f32 %v4414, 0.5
        %v4927 = vsub.f32 %v4415, 0.5
        %v4928 = vsub.f32 %v4416, 0.5
        %v4929 = vsub.f32 %v4417, 0.5
        %v4930 = vsub.f32 %v4418, 0.5
        %v4931 = vsub.f32 %v4419, 0.5
        %v4932 = vsub.f32 %v4420, 0.5
        %v4933 = vsub.f32 %v4421, 0.5
        %v4934 = vsub.f32 %v4422, 0.5
        %v4935 = vsub.f32 %v4423, 0.5
        %v4936 = vsub.f32 %v4424, 0.5
        %v4937 = vsub.f32 %v4425, 0.5
        %v4938 = vsub.f32 %v4426, 0.5
        %v4939 = vsub.f32 %v4427, 0.5
        %v4940 = vsub.f32 %v4428, 0.5
        %v4941 = vsub.f32 %v4429, 0.5
        %v4942 = vsub.f32 %v4430, 0.5
        %v4943 = vsub.f32 %v4431, 0.5
        %v4944 = vsub.f32 %v4432, 0.5
        %v4945 = vsub.f32 %v4433, 0.5
        %v4946 = vsub.f32 %v4434, 0.5
        %v4947 = vsub.f32 %v4435, 0.5
        %v4948 = vsub.f32 %v4436, 0.5
        %v4949 = vsub.f32 %v4437, 0.5
        %v4950 = vsub.f32 %v4438, 0.5
        %v4951 = vsub.f32 %v4439, 0.5
        %v4952 = vsub.f32 %v4440, 0.5
        %v4953 = vsub.f32 %v4441, 0.5
        %v4954 = vsub.f32 %v4442, 0.5
        %v4955 = vsub.f32 %v4443, 0.5
        %v4956 = vsub.f32 %v4444, 0.5
        %v4957 = vsub.f32 %v4445, 0.5
        %v4958 = vsub.f32 %v4446, 0.5
        %v4959 = vsub.f32 %v4447, 0.5
        %v4960 = vsub.f32 %v4448, 0.5
        %v4961 = vsub.f32 %v4449, 0.5
        %v4962 = vsub.f32 %v4450, 0.5
        %v4963 = vsub.f32 %v4451, 0.5
        %v4964 = vsub.f32 %v4452, 0.5
        %v4965 = vsub.f32 %v4453, 0.5
        %v4966 = vsub.f32 %v4454, 0.5
        %v4967 = vsub.f32 %v4455, 0.5
        %v4968 = vsub.f32 %v4456, 0.5
        %v4969 = vsub.f32 %v4457, 0.5
        %v4970 = vsub.f32 %v4458, 0.5
        %v4971 = vsub.f32 %v4459, 0.5
        %v4972 = vsub.f32 %v4460, 0.5
        %v4973 = vsub.f32 %v4461, 0.5
        %v4974 = vsub.f32 %v4462, 0.5
        %v4975 = vsub.f32 %v4463, 0.5
        %v4976 = vsub.f32 %v4464, 0.5
        %v4977 = vsub.f32 %v4465, 0.5
        %v4978 = vsub.f32 %v4466, 0.5
        %v4979 = vsub.f32 %v4467, 0.5
        %v4980 = vsub.f32 %v4468, 0.5
        %v4981 = vsub.f32 %v4469, 0.5
        %v4982 = vsub.f32 %v4470, 0.5
        %v4983 = vsub.f32 %v4471, 0.5
        %v4984 = vsub.f32 %v4472, 0.5
        %v4985 = vsub.f32 %v4473, 0.5
        %v4986 = vsub.f32 %v4474, 0.5
        %v4987 = vsub.f32 %v4475, 0.5
        %v4988 = vsub.f32 %v4476, 0.5
        %v4989 = vsub.f32 %v4477, 0.5
        %v4990 = vsub.f32 %v4478, 0.5
        %v4991 = vsub.f32 %v4479, 0.5
        %v4992 = vsub.f32 %v4480, 0.5
        %v4993 = vsub.f32 %v4481, 0.5
        %v4994 = vsub.f32 %v4482, 0.5
        %v4995 = vsub.f32 %v4483, 0.5
        %v4996 = vsub.f32 %v4484, 0.5
        %v4997 = vsub.f32 %v4485, 0.5
        %v4998 = vsub.f32 %v4486, 0.5
        %v4999 = vsub.f32 %v4487, 0.5
        %v5000 = vsub.f32 %v4488, 0.5
        %v5001 = vsub.f32 %v4489, 0.5
        %v5002 = vsub.f32 %v4490, 0.5
        %v5003 = vsub.f32 %v4491, 0.5
        %v5004 = vsub.f32 %v4492, 0.5
        %v5005 = vsub.f32 %v4493, 0.5
        %v5006 = vsub.f32 %v4494, 0.5
        %v5007 = vsub.f32 %v4495, 0.5
        %v5008 = vsub.f32 %v4496, 0.5
        %v5009 = vsub.f32 %v4497, 0.5
        %v5010 = vsub.f32 %v4498, 0.5
        %v5011 = vsub.f32 %v4499, 0.5
        %v5012 = vsub.f32 %v4500, 0.5
        %v5013 = vsub.f32 %v4501, 0.5
        %v5014 = vsub.f32 %v4502, 0.5
        %v5015 = vsub.f32 %v4503, 0.5
        %v5016 = vsub.f32 %v4504, 0.5
        %v5017 = vsub.f32 %v4505, 0.5
        %v5018 = vsub.f32 %v4506, 0.5
        %v5019 = vsub.f32 %v4507, 0.5
        %v5020 = vsub.f32 %v4508, 0.5
        %v5021 = vsub.f32 %v4509, 0.5
        %v5022 = vsub.f32 %v4510, 0.5
        %v5023 = vsub.f32 %v4511, 0.5
        %v5024 = vsub.f32 %v4512, 0.5
        %v5025 = vsub.f32 %v4513, 0.5
        %v5026 = vsub.f32 %v4514, 0.5
        %v5027 = vsub.f32 %v4515, 0.5
        %v5028 = vsub.f32 %v4516, 0.5
        %v5029 = vsub.f32 %v4517, 0.5
        %v5030 = vsub.f32 %v4518, 0.5
        %v5031 = vsub.f32 %v4519, 0.5
        %v5032 = vsub.f32 %v4520, 0.5
        %v5033 = vsub.f32 %v4521, 0.5
        %v5034 = vsub.f32 %v4522, 0.5
        %v5035 = vsub.f32 %v4523, 0.5
        %v5036 = vsub.f32 %v4524, 0.5
        %v5037 = vsub.f32 %v4525, 0.5
        %v5038 = vsub.f32 %v4526, 0.5
        %v5039 = vsub.f32 %v4527, 0.5
        %v5040 = vsub.f32 %v4528, 0.5
        %v5041 = vsub.f32 %v4529, 0.5
        %v5042 = vsub.f32 %v4530, 0.5
        %v5043 = vsub.f32 %v4531, 0.5
        %v5044 = vsub.f32 %v4532, 0.5
        %v5045 = vsub.f32 %v4533, 0.5
        %v5046 = vsub.f32 %v4534, 0.5
        %v5047 = vsub.f32 %v4535, 0.5
        %v5048 = vsub.f32 %v4536, 0.5
        %v5049 = vsel %vm4537, %v4793, %v4921
        %v5050 = vsel %vm4538, %v4794, %v4922
        %v5051 = vsel %vm4539, %v4795, %v4923
        %v5052 = vsel %vm4540, %v4796, %v4924
        %v5053 = vsel %vm4541, %v4797, %v4925
        %v5054 = vsel %vm4542, %v4798, %v4926
        %v5055 = vsel %vm4543, %v4799, %v4927
        %v5056 = vsel %vm4544, %v4800, %v4928
        %v5057 = vsel %vm4545, %v4801, %v4929
        %v5058 = vsel %vm4546, %v4802, %v4930
        %v5059 = vsel %vm4547, %v4803, %v4931
        %v5060 = vsel %vm4548, %v4804, %v4932
        %v5061 = vsel %vm4549, %v4805, %v4933
        %v5062 = vsel %vm4550, %v4806, %v4934
        %v5063 = vsel %vm4551, %v4807, %v4935
        %v5064 = vsel %vm4552, %v4808, %v4936
        %v5065 = vsel %vm4553, %v4809, %v4937
        %v5066 = vsel %vm4554, %v4810, %v4938
        %v5067 = vsel %vm4555, %v4811, %v4939
        %v5068 = vsel %vm4556, %v4812, %v4940
        %v5069 = vsel %vm4557, %v4813, %v4941
        %v5070 = vsel %vm4558, %v4814, %v4942
        %v5071 = vsel %vm4559, %v4815, %v4943
        %v5072 = vsel %vm4560, %v4816, %v4944
        %v5073 = vsel %vm4561, %v4817, %v4945
        %v5074 = vsel %vm4562, %v4818, %v4946
        %v5075 = vsel %vm4563, %v4819, %v4947
        %v5076 = vsel %vm4564, %v4820, %v4948
        %v5077 = vsel %vm4565, %v4821, %v4949
        %v5078 = vsel %vm4566, %v4822, %v4950
        %v5079 = vsel %vm4567, %v4823, %v4951
        %v5080 = vsel %vm4568, %v4824, %v4952
        %v5081 = vsel %vm4569, %v4825, %v4953
        %v5082 = vsel %vm4570, %v4826, %v4954
        %v5083 = vsel %vm4571, %v4827, %v4955
        %v5084 = vsel %vm4572, %v4828, %v4956
        %v5085 = vsel %vm4573, %v4829, %v4957
        %v5086 = vsel %vm4574, %v4830, %v4958
        %v5087 = vsel %vm4575, %v4831, %v4959
        %v5088 = vsel %vm4576, %v4832, %v4960
        %v5089 = vsel %vm4577, %v4833, %v4961
        %v5090 = vsel %vm4578, %v4834, %v4962
        %v5091 = vsel %vm4579, %v4835, %v4963
        %v5092 = vsel %vm4580, %v4836, %v4964
        %v5093 = vsel %vm4581, %v4837, %v4965
        %v5094 = vsel %vm4582, %v4838, %v4966
        %v5095 = vsel %vm4583, %v4839, %v4967
        %v5096 = vsel %vm4584, %v4840, %v4968
        %v5097 = vsel %vm4585, %v4841, %v4969
        %v5098 = vsel %vm4586, %v4842, %v4970
        %v5099 = vsel %vm4587, %v4843, %v4971
        %v5100 = vsel %vm4588, %v4844, %v4972
        %v5101 = vsel %vm4589, %v4845, %v4973
        %v5102 = vsel %vm4590, %v4846, %v4974
        %v5103 = vsel %vm4591, %v4847, %v4975
        %v5104 = vsel %vm4592, %v4848, %v4976
        %v5105 = vsel %vm4593, %v4849, %v4977
        %v5106 = vsel %vm4594, %v4850, %v4978
        %v5107 = vsel %vm4595, %v4851, %v4979
        %v5108 = vsel %vm4596, %v4852, %v4980
        %v5109 = vsel %vm4597, %v4853, %v4981
        %v5110 = vsel %vm4598, %v4854, %v4982
        %v5111 = vsel %vm4599, %v4855, %v4983
        %v5112 = vsel %vm4600, %v4856, %v4984
        %v5113 = vsel %vm4601, %v4857, %v4985
        %v5114 = vsel %vm4602, %v4858, %v4986
        %v5115 = vsel %vm4603, %v4859, %v4987
        %v5116 = vsel %vm4604, %v4860, %v4988
        %v5117 = vsel %vm4605, %v4861, %v4989
        %v5118 = vsel %vm4606, %v4862, %v4990
        %v5119 = vsel %vm4607, %v4863, %v4991
        %v5120 = vsel %vm4608, %v4864, %v4992
        %v5121 = vsel %vm4609, %v4865, %v4993
        %v5122 = vsel %vm4610, %v4866, %v4994
        %v5123 = vsel %vm4611, %v4867, %v4995
        %v5124 = vsel %vm4612, %v4868, %v4996
        %v5125 = vsel %vm4613, %v4869, %v4997
        %v5126 = vsel %vm4614, %v4870, %v4998
        %v5127 = vsel %vm4615, %v4871, %v4999
        %v5128 = vsel %vm4616, %v4872, %v5000
        %v5129 = vsel %vm4617, %v4873, %v5001
        %v5130 = vsel %vm4618, %v4874, %v5002
        %v5131 = vsel %vm4619, %v4875, %v5003
        %v5132 = vsel %vm4620, %v4876, %v5004
        %v5133 = vsel %vm4621, %v4877, %v5005
        %v5134 = vsel %vm4622, %v4878, %v5006
        %v5135 = vsel %vm4623, %v4879, %v5007
        %v5136 = vsel %vm4624, %v4880, %v5008
        %v5137 = vsel %vm4625, %v4881, %v5009
        %v5138 = vsel %vm4626, %v4882, %v5010
        %v5139 = vsel %vm4627, %v4883, %v5011
        %v5140 = vsel %vm4628, %v4884, %v5012
        %v5141 = vsel %vm4629, %v4885, %v5013
        %v5142 = vsel %vm4630, %v4886, %v5014
        %v5143 = vsel %vm4631, %v4887, %v5015
        %v5144 = vsel %vm4632, %v4888, %v5016
        %v5145 = vsel %vm4633, %v4889, %v5017
        %v5146 = vsel %vm4634, %v4890, %v5018
        %v5147 = vsel %vm4635, %v4891, %v5019
        %v5148 = vsel %vm4636, %v4892, %v5020
        %v5149 = vsel %vm4637, %v4893, %v5021
        %v5150 = vsel %vm4638, %v4894, %v5022
        %v5151 = vsel %vm4639, %v4895, %v5023
        %v5152 = vsel %vm4640, %v4896, %v5024
        %v5153 = vsel %vm4641, %v4897, %v5025
        %v5154 = vsel %vm4642, %v4898, %v5026
        %v5155 = vsel %vm4643, %v4899, %v5027
        %v5156 = vsel %vm4644, %v4900, %v5028
        %v5157 = vsel %vm4645, %v4901, %v5029
        %v5158 = vsel %vm4646, %v4902, %v5030
        %v5159 = vsel %vm4647, %v4903, %v5031
        %v5160 = vsel %vm4648, %v4904, %v5032
        %v5161 = vsel %vm4649, %v4905, %v5033
        %v5162 = vsel %vm4650, %v4906, %v5034
        %v5163 = vsel %vm4651, %v4907, %v5035
        %v5164 = vsel %vm4652, %v4908, %v5036
        %v5165 = vsel %vm4653, %v4909, %v5037
        %v5166 = vsel %vm4654, %v4910, %v5038
        %v5167 = vsel %vm4655, %v4911, %v5039
        %v5168 = vsel %vm4656, %v4912, %v5040
        %v5169 = vsel %vm4657, %v4913, %v5041
        %v5170 = vsel %vm4658, %v4914, %v5042
        %v5171 = vsel %vm4659, %v4915, %v5043
        %v5172 = vsel %vm4660, %v4916, %v5044
        %v5173 = vsel %vm4661, %v4917, %v5045
        %v5174 = vsel %vm4662, %v4918, %v5046
        %v5175 = vsel %vm4663, %v4919, %v5047
        %v5176 = vsel %vm4664, %v4920, %v5048
        %v5177 = vld [vmem:[#allocation2] sm:$0x1]
        %vm5178 = vcmask 23552
        %v5179 = vsel %vm5178, %v4281, 0.0
        %v5180 = vsel %vm5178, %v4282, 0.0
        %v5181 = vadd.f32 %v5179, %v5180
        %v5182 = vsel %vm5178, %v4283, 0.0
        %v5183 = vadd.f32 %v5181, %v5182
        %v5184 = vsel %vm5178, %v4284, 0.0
        %v5185 = vadd.f32 %v5183, %v5184
        %v5186 = vsel %vm5178, %v4285, 0.0
        %v5187 = vadd.f32 %v5185, %v5186
        %v5188 = vsel %vm5178, %v4286, 0.0
        %v5189 = vadd.f32 %v5187, %v5188
        %v5190 = vsel %vm5178, %v4287, 0.0
        %v5191 = vadd.f32 %v5189, %v5190
        %v5192 = vsel %vm5178, %v4288, 0.0
        %v5193 = vadd.f32 %v5191, %v5192
        %v5194 = vsel %vm5178, %v4289, 0.0
        %v5195 = vadd.f32 %v5193, %v5194
        %v5196 = vsel %vm5178, %v4290, 0.0
        %v5197 = vadd.f32 %v5195, %v5196
        %v5198 = vsel %vm5178, %v4291, 0.0
        %v5199 = vadd.f32 %v5197, %v5198
        %v5200 = vsel %vm5178, %v4292, 0.0
        %v5201 = vadd.f32 %v5199, %v5200
        %v5202 = vsel %vm5178, %v4293, 0.0
        %v5203 = vadd.f32 %v5201, %v5202
        %v5204 = vsel %vm5178, %v4294, 0.0
        %v5205 = vadd.f32 %v5203, %v5204
        %v5206 = vsel %vm5178, %v4295, 0.0
        %v5207 = vadd.f32 %v5205, %v5206
        %v5208 = vsel %vm5178, %v4296, 0.0
        %v5209 = vadd.f32 %v5207, %v5208
        %v5210 = vsel %vm5178, %v4297, 0.0
        %v5211 = vadd.f32 %v5209, %v5210
        %v5212 = vsel %vm5178, %v4298, 0.0
        %v5213 = vadd.f32 %v5211, %v5212
        %v5214 = vsel %vm5178, %v4299, 0.0
        %v5215 = vadd.f32 %v5213, %v5214
        %v5216 = vsel %vm5178, %v4300, 0.0
        %v5217 = vadd.f32 %v5215, %v5216
        %v5218 = vsel %vm5178, %v4301, 0.0
        %v5219 = vadd.f32 %v5217, %v5218
        %v5220 = vsel %vm5178, %v4302, 0.0
        %v5221 = vadd.f32 %v5219, %v5220
        %v5222 = vsel %vm5178, %v4303, 0.0
        %v5223 = vadd.f32 %v5221, %v5222
        %v5224 = vsel %vm5178, %v4304, 0.0
        %v5225 = vadd.f32 %v5223, %v5224
        %v5226 = vsel %vm5178, %v4305, 0.0
        %v5227 = vadd.f32 %v5225, %v5226
        %v5228 = vsel %vm5178, %v4306, 0.0
        %v5229 = vadd.f32 %v5227, %v5228
        %v5230 = vsel %vm5178, %v4307, 0.0
        %v5231 = vadd.f32 %v5229, %v5230
        %v5232 = vsel %vm5178, %v4308, 0.0
        %v5233 = vadd.f32 %v5231, %v5232
        %v5234 = vsel %vm5178, %v4309, 0.0
        %v5235 = vadd.f32 %v5233, %v5234
        %v5236 = vsel %vm5178, %v4310, 0.0
        %v5237 = vadd.f32 %v5235, %v5236
        %v5238 = vsel %vm5178, %v4311, 0.0
        %v5239 = vadd.f32 %v5237, %v5238
        %v5240 = vsel %vm5178, %v4312, 0.0
        %v5241 = vadd.f32 %v5239, %v5240
        %v5242 = vsel %vm5178, %v4313, 0.0
        %v5243 = vadd.f32 %v5241, %v5242
        %v5244 = vsel %vm5178, %v4314, 0.0
        %v5245 = vadd.f32 %v5243, %v5244
        %v5246 = vsel %vm5178, %v4315, 0.0
        %v5247 = vadd.f32 %v5245, %v5246
        %v5248 = vsel %vm5178, %v4316, 0.0
        %v5249 = vadd.f32 %v5247, %v5248
        %v5250 = vsel %vm5178, %v4317, 0.0
        %v5251 = vadd.f32 %v5249, %v5250
        %v5252 = vsel %vm5178, %v4318, 0.0
        %v5253 = vadd.f32 %v5251, %v5252
        %v5254 = vsel %vm5178, %v4319, 0.0
        %v5255 = vadd.f32 %v5253, %v5254
        %v5256 = vsel %vm5178, %v4320, 0.0
        %v5257 = vadd.f32 %v5255, %v5256
        %v5258 = vsel %vm5178, %v4321, 0.0
        %v5259 = vadd.f32 %v5257, %v5258
        %v5260 = vsel %vm5178, %v4322, 0.0
        %v5261 = vadd.f32 %v5259, %v5260
        %v5262 = vsel %vm5178, %v4323, 0.0
        %v5263 = vadd.f32 %v5261, %v5262
        %v5264 = vsel %vm5178, %v4324, 0.0
        %v5265 = vadd.f32 %v5263, %v5264
        %v5266 = vsel %vm5178, %v4325, 0.0
        %v5267 = vadd.f32 %v5265, %v5266
        %v5268 = vsel %vm5178, %v4326, 0.0
        %v5269 = vadd.f32 %v5267, %v5268
        %v5270 = vsel %vm5178, %v4327, 0.0
        %v5271 = vadd.f32 %v5269, %v5270
        %v5272 = vsel %vm5178, %v4328, 0.0
        %v5273 = vadd.f32 %v5271, %v5272
        %v5274 = vsel %vm5178, %v4329, 0.0
        %v5275 = vadd.f32 %v5273, %v5274
        %v5276 = vsel %vm5178, %v4330, 0.0
        %v5277 = vadd.f32 %v5275, %v5276
        %v5278 = vsel %vm5178, %v4331, 0.0
        %v5279 = vadd.f32 %v5277, %v5278
        %v5280 = vsel %vm5178, %v4332, 0.0
        %v5281 = vadd.f32 %v5279, %v5280
        %v5282 = vsel %vm5178, %v4333, 0.0
        %v5283 = vadd.f32 %v5281, %v5282
        %v5284 = vsel %vm5178, %v4334, 0.0
        %v5285 = vadd.f32 %v5283, %v5284
        %v5286 = vsel %vm5178, %v4335, 0.0
        %v5287 = vadd.f32 %v5285, %v5286
        %v5288 = vsel %vm5178, %v4336, 0.0
        %v5289 = vadd.f32 %v5287, %v5288
        %v5290 = vsel %vm5178, %v4337, 0.0
        %v5291 = vadd.f32 %v5289, %v5290
        %v5292 = vsel %vm5178, %v4338, 0.0
        %v5293 = vadd.f32 %v5291, %v5292
        %v5294 = vsel %vm5178, %v4339, 0.0
        %v5295 = vadd.f32 %v5293, %v5294
        %v5296 = vsel %vm5178, %v4340, 0.0
        %v5297 = vadd.f32 %v5295, %v5296
        %v5298 = vsel %vm5178, %v4341, 0.0
        %v5299 = vadd.f32 %v5297, %v5298
        %v5300 = vsel %vm5178, %v4342, 0.0
        %v5301 = vadd.f32 %v5299, %v5300
        %v5302 = vsel %vm5178, %v4343, 0.0
        %v5303 = vadd.f32 %v5301, %v5302
        %v5304 = vsel %vm5178, %v4344, 0.0
        %v5305 = vadd.f32 %v5303, %v5304
        %v5306 = vsel %vm5178, %v4345, 0.0
        %v5307 = vadd.f32 %v5305, %v5306
        %v5308 = vsel %vm5178, %v4346, 0.0
        %v5309 = vadd.f32 %v5307, %v5308
        %v5310 = vsel %vm5178, %v4347, 0.0
        %v5311 = vadd.f32 %v5309, %v5310
        %v5312 = vsel %vm5178, %v4348, 0.0
        %v5313 = vadd.f32 %v5311, %v5312
        %v5314 = vsel %vm5178, %v4349, 0.0
        %v5315 = vadd.f32 %v5313, %v5314
        %v5316 = vsel %vm5178, %v4350, 0.0
        %v5317 = vadd.f32 %v5315, %v5316
        %v5318 = vsel %vm5178, %v4351, 0.0
        %v5319 = vadd.f32 %v5317, %v5318
        %v5320 = vsel %vm5178, %v4352, 0.0
        %v5321 = vadd.f32 %v5319, %v5320
        %v5322 = vsel %vm5178, %v4353, 0.0
        %v5323 = vadd.f32 %v5321, %v5322
        %v5324 = vsel %vm5178, %v4354, 0.0
        %v5325 = vadd.f32 %v5323, %v5324
        %v5326 = vsel %vm5178, %v4355, 0.0
        %v5327 = vadd.f32 %v5325, %v5326
        %v5328 = vsel %vm5178, %v4356, 0.0
        %v5329 = vadd.f32 %v5327, %v5328
        %v5330 = vsel %vm5178, %v4357, 0.0
        %v5331 = vadd.f32 %v5329, %v5330
        %v5332 = vsel %vm5178, %v4358, 0.0
        %v5333 = vadd.f32 %v5331, %v5332
        %v5334 = vsel %vm5178, %v4359, 0.0
        %v5335 = vadd.f32 %v5333, %v5334
        %v5336 = vsel %vm5178, %v4360, 0.0
        %v5337 = vadd.f32 %v5335, %v5336
        %v5338 = vsel %vm5178, %v4361, 0.0
        %v5339 = vadd.f32 %v5337, %v5338
        %v5340 = vsel %vm5178, %v4362, 0.0
        %v5341 = vadd.f32 %v5339, %v5340
        %v5342 = vsel %vm5178, %v4363, 0.0
        %v5343 = vadd.f32 %v5341, %v5342
        %v5344 = vsel %vm5178, %v4364, 0.0
        %v5345 = vadd.f32 %v5343, %v5344
        %v5346 = vsel %vm5178, %v4365, 0.0
        %v5347 = vadd.f32 %v5345, %v5346
        %v5348 = vsel %vm5178, %v4366, 0.0
        %v5349 = vadd.f32 %v5347, %v5348
        %v5350 = vsel %vm5178, %v4367, 0.0
        %v5351 = vadd.f32 %v5349, %v5350
        %v5352 = vsel %vm5178, %v4368, 0.0
        %v5353 = vadd.f32 %v5351, %v5352
        %v5354 = vsel %vm5178, %v4369, 0.0
        %v5355 = vadd.f32 %v5353, %v5354
        %v5356 = vsel %vm5178, %v4370, 0.0
        %v5357 = vadd.f32 %v5355, %v5356
        %v5358 = vsel %vm5178, %v4371, 0.0
        %v5359 = vadd.f32 %v5357, %v5358
        %v5360 = vsel %vm5178, %v4372, 0.0
        %v5361 = vadd.f32 %v5359, %v5360
        %v5362 = vsel %vm5178, %v4373, 0.0
        %v5363 = vadd.f32 %v5361, %v5362
        %v5364 = vsel %vm5178, %v4374, 0.0
        %v5365 = vadd.f32 %v5363, %v5364
        %v5366 = vsel %vm5178, %v4375, 0.0
        %v5367 = vadd.f32 %v5365, %v5366
        %v5368 = vsel %vm5178, %v4376, 0.0
        %v5369 = vadd.f32 %v5367, %v5368
        %v5370 = vsel %vm5178, %v4377, 0.0
        %v5371 = vadd.f32 %v5369, %v5370
        %v5372 = vsel %vm5178, %v4378, 0.0
        %v5373 = vadd.f32 %v5371, %v5372
        %v5374 = vsel %vm5178, %v4379, 0.0
        %v5375 = vadd.f32 %v5373, %v5374
        %v5376 = vsel %vm5178, %v4380, 0.0
        %v5377 = vadd.f32 %v5375, %v5376
        %v5378 = vsel %vm5178, %v4381, 0.0
        %v5379 = vadd.f32 %v5377, %v5378
        %v5380 = vsel %vm5178, %v4382, 0.0
        %v5381 = vadd.f32 %v5379, %v5380
        %v5382 = vsel %vm5178, %v4383, 0.0
        %v5383 = vadd.f32 %v5381, %v5382
        %v5384 = vsel %vm5178, %v4384, 0.0
        %v5385 = vadd.f32 %v5383, %v5384
        %v5386 = vsel %vm5178, %v4385, 0.0
        %v5387 = vadd.f32 %v5385, %v5386
        %v5388 = vsel %vm5178, %v4386, 0.0
        %v5389 = vadd.f32 %v5387, %v5388
        %v5390 = vsel %vm5178, %v4387, 0.0
        %v5391 = vadd.f32 %v5389, %v5390
        %v5392 = vsel %vm5178, %v4388, 0.0
        %v5393 = vadd.f32 %v5391, %v5392
        %v5394 = vsel %vm5178, %v4389, 0.0
        %v5395 = vadd.f32 %v5393, %v5394
        %v5396 = vsel %vm5178, %v4390, 0.0
        %v5397 = vadd.f32 %v5395, %v5396
        %v5398 = vsel %vm5178, %v4391, 0.0
        %v5399 = vadd.f32 %v5397, %v5398
        %v5400 = vsel %vm5178, %v4392, 0.0
        %v5401 = vadd.f32 %v5399, %v5400
        %v5402 = vsel %vm5178, %v4393, 0.0
        %v5403 = vadd.f32 %v5401, %v5402
        %v5404 = vsel %vm5178, %v4394, 0.0
        %v5405 = vadd.f32 %v5403, %v5404
        %v5406 = vsel %vm5178, %v4395, 0.0
        %v5407 = vadd.f32 %v5405, %v5406
        %v5408 = vsel %vm5178, %v4396, 0.0
        %v5409 = vadd.f32 %v5407, %v5408
        %v5410 = vsel %vm5178, %v4397, 0.0
        %v5411 = vadd.f32 %v5409, %v5410
        %v5412 = vsel %vm5178, %v4398, 0.0
        %v5413 = vadd.f32 %v5411, %v5412
        %v5414 = vsel %vm5178, %v4399, 0.0
        %v5415 = vadd.f32 %v5413, %v5414
        %v5416 = vsel %vm5178, %v4400, 0.0
        %v5417 = vadd.f32 %v5415, %v5416
        %v5418 = vsel %vm5178, %v4401, 0.0
        %v5419 = vadd.f32 %v5417, %v5418
        %v5420 = vsel %vm5178, %v4402, 0.0
        %v5421 = vadd.f32 %v5419, %v5420
        %v5422 = vsel %vm5178, %v4403, 0.0
        %v5423 = vadd.f32 %v5421, %v5422
        %v5424 = vsel %vm5178, %v4404, 0.0
        %v5425 = vadd.f32 %v5423, %v5424
        %v5426 = vsel %vm5178, %v4405, 0.0
        %v5427 = vadd.f32 %v5425, %v5426
        %v5428 = vsel %vm5178, %v4406, 0.0
        %v5429 = vadd.f32 %v5427, %v5428
        %v5430 = vsel %vm5178, %v4407, 0.0
        %v5431 = vadd.f32 %v5429, %v5430
        %v5432 = vsel %vm5178, %v4408, 0.0
        %v5433 = vadd.f32 %v5431, %v5432
        %5434 = vadd.xlane.f32.xlu0 %v5433
        %v5435 = vpop.xlane.xlu0 %5434
        %v5436 = vrot.slane %v5435, 4
        %v5437 = vadd.f32 %v5435, %v5436
        %v5438 = vrot.slane %v5437, 2
        %v5439 = vadd.f32 %v5437, %v5438
        %v5440 = vrot.slane %v5439, 1
        %v5441 = vadd.f32 %v5439, %v5440
        %s5442 = vtos %v5441
        %v5443 = vstv %s5442
        %v5444 = vadd.f32 %v5177, %v5443
        %vm5445 = vcmask 0
        %5446 = vst.msk [vmem:[#allocation2] sm:$0x1] %vm5445, %v5444
        %v5447 = vld [vmem:[#allocation4] sm:$0x1]
        %vm5448 = vcmask 97280
        %v5449 = vsel %vm5448, %v5049, 0.0
        %v5450 = vsel %vm5448, %v5050, 0.0
        %v5451 = vadd.f32 %v5449, %v5450
        %v5452 = vsel %vm5448, %v5051, 0.0
        %v5453 = vadd.f32 %v5451, %v5452
        %v5454 = vsel %vm5448, %v5052, 0.0
        %v5455 = vadd.f32 %v5453, %v5454
        %v5456 = vsel %vm5448, %v5053, 0.0
        %v5457 = vadd.f32 %v5455, %v5456
        %v5458 = vsel %vm5448, %v5054, 0.0
        %v5459 = vadd.f32 %v5457, %v5458
        %v5460 = vsel %vm5448, %v5055, 0.0
        %v5461 = vadd.f32 %v5459, %v5460
        %v5462 = vsel %vm5448, %v5056, 0.0
        %v5463 = vadd.f32 %v5461, %v5462
        %v5464 = vsel %vm5448, %v5057, 0.0
        %v5465 = vadd.f32 %v5463, %v5464
        %v5466 = vsel %vm5448, %v5058, 0.0
        %v5467 = vadd.f32 %v5465, %v5466
        %v5468 = vsel %vm5448, %v5059, 0.0
        %v5469 = vadd.f32 %v5467, %v5468
        %v5470 = vsel %vm5448, %v5060, 0.0
        %v5471 = vadd.f32 %v5469, %v5470
        %v5472 = vsel %vm5448, %v5061, 0.0
        %v5473 = vadd.f32 %v5471, %v5472
        %v5474 = vsel %vm5448, %v5062, 0.0
        %v5475 = vadd.f32 %v5473, %v5474
        %v5476 = vsel %vm5448, %v5063, 0.0
        %v5477 = vadd.f32 %v5475, %v5476
        %v5478 = vsel %vm5448, %v5064, 0.0
        %v5479 = vadd.f32 %v5477, %v5478
        %v5480 = vsel %vm5448, %v5065, 0.0
        %v5481 = vadd.f32 %v5479, %v5480
        %v5482 = vsel %vm5448, %v5066, 0.0
        %v5483 = vadd.f32 %v5481, %v5482
        %v5484 = vsel %vm5448, %v5067, 0.0
        %v5485 = vadd.f32 %v5483, %v5484
        %v5486 = vsel %vm5448, %v5068, 0.0
        %v5487 = vadd.f32 %v5485, %v5486
        %v5488 = vsel %vm5448, %v5069, 0.0
        %v5489 = vadd.f32 %v5487, %v5488
        %v5490 = vsel %vm5448, %v5070, 0.0
        %v5491 = vadd.f32 %v5489, %v5490
        %v5492 = vsel %vm5448, %v5071, 0.0
        %v5493 = vadd.f32 %v5491, %v5492
        %v5494 = vsel %vm5448, %v5072, 0.0
        %v5495 = vadd.f32 %v5493, %v5494
        %v5496 = vsel %vm5448, %v5073, 0.0
        %v5497 = vadd.f32 %v5495, %v5496
        %v5498 = vsel %vm5448, %v5074, 0.0
        %v5499 = vadd.f32 %v5497, %v5498
        %v5500 = vsel %vm5448, %v5075, 0.0
        %v5501 = vadd.f32 %v5499, %v5500
        %v5502 = vsel %vm5448, %v5076, 0.0
        %v5503 = vadd.f32 %v5501, %v5502
        %v5504 = vsel %vm5448, %v5077, 0.0
        %v5505 = vadd.f32 %v5503, %v5504
        %v5506 = vsel %vm5448, %v5078, 0.0
        %v5507 = vadd.f32 %v5505, %v5506
        %v5508 = vsel %vm5448, %v5079, 0.0
        %v5509 = vadd.f32 %v5507, %v5508
        %v5510 = vsel %vm5448, %v5080, 0.0
        %v5511 = vadd.f32 %v5509, %v5510
        %v5512 = vsel %vm5448, %v5081, 0.0
        %v5513 = vadd.f32 %v5511, %v5512
        %v5514 = vsel %vm5448, %v5082, 0.0
        %v5515 = vadd.f32 %v5513, %v5514
        %v5516 = vsel %vm5448, %v5083, 0.0
        %v5517 = vadd.f32 %v5515, %v5516
        %v5518 = vsel %vm5448, %v5084, 0.0
        %v5519 = vadd.f32 %v5517, %v5518
        %v5520 = vsel %vm5448, %v5085, 0.0
        %v5521 = vadd.f32 %v5519, %v5520
        %v5522 = vsel %vm5448, %v5086, 0.0
        %v5523 = vadd.f32 %v5521, %v5522
        %v5524 = vsel %vm5448, %v5087, 0.0
        %v5525 = vadd.f32 %v5523, %v5524
        %v5526 = vsel %vm5448, %v5088, 0.0
        %v5527 = vadd.f32 %v5525, %v5526
        %v5528 = vsel %vm5448, %v5089, 0.0
        %v5529 = vadd.f32 %v5527, %v5528
        %v5530 = vsel %vm5448, %v5090, 0.0
        %v5531 = vadd.f32 %v5529, %v5530
        %v5532 = vsel %vm5448, %v5091, 0.0
        %v5533 = vadd.f32 %v5531, %v5532
        %v5534 = vsel %vm5448, %v5092, 0.0
        %v5535 = vadd.f32 %v5533, %v5534
        %v5536 = vsel %vm5448, %v5093, 0.0
        %v5537 = vadd.f32 %v5535, %v5536
        %v5538 = vsel %vm5448, %v5094, 0.0
        %v5539 = vadd.f32 %v5537, %v5538
        %v5540 = vsel %vm5448, %v5095, 0.0
        %v5541 = vadd.f32 %v5539, %v5540
        %v5542 = vsel %vm5448, %v5096, 0.0
        %v5543 = vadd.f32 %v5541, %v5542
        %v5544 = vsel %vm5448, %v5097, 0.0
        %v5545 = vadd.f32 %v5543, %v5544
        %v5546 = vsel %vm5448, %v5098, 0.0
        %v5547 = vadd.f32 %v5545, %v5546
        %v5548 = vsel %vm5448, %v5099, 0.0
        %v5549 = vadd.f32 %v5547, %v5548
        %v5550 = vsel %vm5448, %v5100, 0.0
        %v5551 = vadd.f32 %v5549, %v5550
        %v5552 = vsel %vm5448, %v5101, 0.0
        %v5553 = vadd.f32 %v5551, %v5552
        %v5554 = vsel %vm5448, %v5102, 0.0
        %v5555 = vadd.f32 %v5553, %v5554
        %v5556 = vsel %vm5448, %v5103, 0.0
        %v5557 = vadd.f32 %v5555, %v5556
        %v5558 = vsel %vm5448, %v5104, 0.0
        %v5559 = vadd.f32 %v5557, %v5558
        %v5560 = vsel %vm5448, %v5105, 0.0
        %v5561 = vadd.f32 %v5559, %v5560
        %v5562 = vsel %vm5448, %v5106, 0.0
        %v5563 = vadd.f32 %v5561, %v5562
        %v5564 = vsel %vm5448, %v5107, 0.0
        %v5565 = vadd.f32 %v5563, %v5564
        %v5566 = vsel %vm5448, %v5108, 0.0
        %v5567 = vadd.f32 %v5565, %v5566
        %v5568 = vsel %vm5448, %v5109, 0.0
        %v5569 = vadd.f32 %v5567, %v5568
        %v5570 = vsel %vm5448, %v5110, 0.0
        %v5571 = vadd.f32 %v5569, %v5570
        %v5572 = vsel %vm5448, %v5111, 0.0
        %v5573 = vadd.f32 %v5571, %v5572
        %v5574 = vsel %vm5448, %v5112, 0.0
        %v5575 = vadd.f32 %v5573, %v5574
        %v5576 = vsel %vm5448, %v5113, 0.0
        %v5577 = vadd.f32 %v5575, %v5576
        %v5578 = vsel %vm5448, %v5114, 0.0
        %v5579 = vadd.f32 %v5577, %v5578
        %v5580 = vsel %vm5448, %v5115, 0.0
        %v5581 = vadd.f32 %v5579, %v5580
        %v5582 = vsel %vm5448, %v5116, 0.0
        %v5583 = vadd.f32 %v5581, %v5582
        %v5584 = vsel %vm5448, %v5117, 0.0
        %v5585 = vadd.f32 %v5583, %v5584
        %v5586 = vsel %vm5448, %v5118, 0.0
        %v5587 = vadd.f32 %v5585, %v5586
        %v5588 = vsel %vm5448, %v5119, 0.0
        %v5589 = vadd.f32 %v5587, %v5588
        %v5590 = vsel %vm5448, %v5120, 0.0
        %v5591 = vadd.f32 %v5589, %v5590
        %v5592 = vsel %vm5448, %v5121, 0.0
        %v5593 = vadd.f32 %v5591, %v5592
        %v5594 = vsel %vm5448, %v5122, 0.0
        %v5595 = vadd.f32 %v5593, %v5594
        %v5596 = vsel %vm5448, %v5123, 0.0
        %v5597 = vadd.f32 %v5595, %v5596
        %v5598 = vsel %vm5448, %v5124, 0.0
        %v5599 = vadd.f32 %v5597, %v5598
        %v5600 = vsel %vm5448, %v5125, 0.0
        %v5601 = vadd.f32 %v5599, %v5600
        %v5602 = vsel %vm5448, %v5126, 0.0
        %v5603 = vadd.f32 %v5601, %v5602
        %v5604 = vsel %vm5448, %v5127, 0.0
        %v5605 = vadd.f32 %v5603, %v5604
        %v5606 = vsel %vm5448, %v5128, 0.0
        %v5607 = vadd.f32 %v5605, %v5606
        %v5608 = vsel %vm5448, %v5129, 0.0
        %v5609 = vadd.f32 %v5607, %v5608
        %v5610 = vsel %vm5448, %v5130, 0.0
        %v5611 = vadd.f32 %v5609, %v5610
        %v5612 = vsel %vm5448, %v5131, 0.0
        %v5613 = vadd.f32 %v5611, %v5612
        %v5614 = vsel %vm5448, %v5132, 0.0
        %v5615 = vadd.f32 %v5613, %v5614
        %v5616 = vsel %vm5448, %v5133, 0.0
        %v5617 = vadd.f32 %v5615, %v5616
        %v5618 = vsel %vm5448, %v5134, 0.0
        %v5619 = vadd.f32 %v5617, %v5618
        %v5620 = vsel %vm5448, %v5135, 0.0
        %v5621 = vadd.f32 %v5619, %v5620
        %v5622 = vsel %vm5448, %v5136, 0.0
        %v5623 = vadd.f32 %v5621, %v5622
        %v5624 = vsel %vm5448, %v5137, 0.0
        %v5625 = vadd.f32 %v5623, %v5624
        %v5626 = vsel %vm5448, %v5138, 0.0
        %v5627 = vadd.f32 %v5625, %v5626
        %v5628 = vsel %vm5448, %v5139, 0.0
        %v5629 = vadd.f32 %v5627, %v5628
        %v5630 = vsel %vm5448, %v5140, 0.0
        %v5631 = vadd.f32 %v5629, %v5630
        %v5632 = vsel %vm5448, %v5141, 0.0
        %v5633 = vadd.f32 %v5631, %v5632
        %v5634 = vsel %vm5448, %v5142, 0.0
        %v5635 = vadd.f32 %v5633, %v5634
        %v5636 = vsel %vm5448, %v5143, 0.0
        %v5637 = vadd.f32 %v5635, %v5636
        %v5638 = vsel %vm5448, %v5144, 0.0
        %v5639 = vadd.f32 %v5637, %v5638
        %v5640 = vsel %vm5448, %v5145, 0.0
        %v5641 = vadd.f32 %v5639, %v5640
        %v5642 = vsel %vm5448, %v5146, 0.0
        %v5643 = vadd.f32 %v5641, %v5642
        %v5644 = vsel %vm5448, %v5147, 0.0
        %v5645 = vadd.f32 %v5643, %v5644
        %v5646 = vsel %vm5448, %v5148, 0.0
        %v5647 = vadd.f32 %v5645, %v5646
        %v5648 = vsel %vm5448, %v5149, 0.0
        %v5649 = vadd.f32 %v5647, %v5648
        %v5650 = vsel %vm5448, %v5150, 0.0
        %v5651 = vadd.f32 %v5649, %v5650
        %v5652 = vsel %vm5448, %v5151, 0.0
        %v5653 = vadd.f32 %v5651, %v5652
        %v5654 = vsel %vm5448, %v5152, 0.0
        %v5655 = vadd.f32 %v5653, %v5654
        %v5656 = vsel %vm5448, %v5153, 0.0
        %v5657 = vadd.f32 %v5655, %v5656
        %v5658 = vsel %vm5448, %v5154, 0.0
        %v5659 = vadd.f32 %v5657, %v5658
        %v5660 = vsel %vm5448, %v5155, 0.0
        %v5661 = vadd.f32 %v5659, %v5660
        %v5662 = vsel %vm5448, %v5156, 0.0
        %v5663 = vadd.f32 %v5661, %v5662
        %v5664 = vsel %vm5448, %v5157, 0.0
        %v5665 = vadd.f32 %v5663, %v5664
        %v5666 = vsel %vm5448, %v5158, 0.0
        %v5667 = vadd.f32 %v5665, %v5666
        %v5668 = vsel %vm5448, %v5159, 0.0
        %v5669 = vadd.f32 %v5667, %v5668
        %v5670 = vsel %vm5448, %v5160, 0.0
        %v5671 = vadd.f32 %v5669, %v5670
        %v5672 = vsel %vm5448, %v5161, 0.0
        %v5673 = vadd.f32 %v5671, %v5672
        %v5674 = vsel %vm5448, %v5162, 0.0
        %v5675 = vadd.f32 %v5673, %v5674
        %v5676 = vsel %vm5448, %v5163, 0.0
        %v5677 = vadd.f32 %v5675, %v5676
        %v5678 = vsel %vm5448, %v5164, 0.0
        %v5679 = vadd.f32 %v5677, %v5678
        %v5680 = vsel %vm5448, %v5165, 0.0
        %v5681 = vadd.f32 %v5679, %v5680
        %v5682 = vsel %vm5448, %v5166, 0.0
        %v5683 = vadd.f32 %v5681, %v5682
        %v5684 = vsel %vm5448, %v5167, 0.0
        %v5685 = vadd.f32 %v5683, %v5684
        %v5686 = vsel %vm5448, %v5168, 0.0
        %v5687 = vadd.f32 %v5685, %v5686
        %v5688 = vsel %vm5448, %v5169, 0.0
        %v5689 = vadd.f32 %v5687, %v5688
        %v5690 = vsel %vm5448, %v5170, 0.0
        %v5691 = vadd.f32 %v5689, %v5690
        %v5692 = vsel %vm5448, %v5171, 0.0
        %v5693 = vadd.f32 %v5691, %v5692
        %v5694 = vsel %vm5448, %v5172, 0.0
        %v5695 = vadd.f32 %v5693, %v5694
        %v5696 = vsel %vm5448, %v5173, 0.0
        %v5697 = vadd.f32 %v5695, %v5696
        %v5698 = vsel %vm5448, %v5174, 0.0
        %v5699 = vadd.f32 %v5697, %v5698
        %v5700 = vsel %vm5448, %v5175, 0.0
        %v5701 = vadd.f32 %v5699, %v5700
        %v5702 = vsel %vm5448, %v5176, 0.0
        %v5703 = vadd.f32 %v5701, %v5702
        %5704 = vadd.xlane.f32.xlu0 %v5703
        %v5705 = vpop.xlane.xlu0 %5704
        %v5706 = vrot.slane %v5705, 4
        %v5707 = vadd.f32 %v5705, %v5706
        %v5708 = vrot.slane %v5707, 2
        %v5709 = vadd.f32 %v5707, %v5708
        %v5710 = vrot.slane %v5709, 1
        %v5711 = vadd.f32 %v5709, %v5710
        %s5712 = vtos %v5711
        %v5713 = vstv %s5712
        %v5714 = vadd.f32 %v5447, %v5713
        %5715 = vst.msk [vmem:[#allocation4] sm:$0x1] %vm5445, %v5714
        // Predicated region
        $region53: #{faster_rcnn_kd_forward.4} parent=47 // pred_check
          %p5716 = pneg %p187
        $region54: #{faster_rcnn_kd_forward.4} parent=47 // pred_check_branch
          %5718 = sbr.rel (%p5716) target = $region56
        $region55: #{faster_rcnn_kd_forward.4} parent=47 // pred_region
          %s5720 = ssub.s32 16, 16
          %5721 = vsyncadd [#allocation3], %s5720
          %s5723 = sshll.u32 [#allocation2], 4
          %s5724 = int_to_ptr.vmem [resolvable:$true] %s5723
          %5726 = dma.vmem_to_hbm [thread:$0]  %s5724, 16, %s7, [#allocation3]
        $region56: #{faster_rcnn_kd_forward.4} parent=47 // pred_fallthru
          _
        // Predicated region
        $region57: #{faster_rcnn_kd_forward.4} parent=47 // pred_check
          %p5727 = pneg %p208
        $region58: #{faster_rcnn_kd_forward.4} parent=47 // pred_check_branch
          %5729 = sbr.rel (%p5727) target = $region60
        $region59: #{faster_rcnn_kd_forward.4} parent=47 // pred_region
          %s5731 = ssub.s32 16, 16
          %5732 = vsyncadd [#allocation5], %s5731
          %s5734 = sshll.u32 [#allocation4], 4
          %s5735 = int_to_ptr.vmem [resolvable:$true] %s5734
          %5737 = dma.vmem_to_hbm [thread:$0]  %s5735, 16, %s8, [#allocation5]
        $region60: #{faster_rcnn_kd_forward.4} parent=47 // pred_fallthru
          _
        // Predicated region
        $region61: #{faster_rcnn_kd_forward.4} parent=47 // pred_check
          %p5738 = pneg %p187
        $region62: #{faster_rcnn_kd_forward.4} parent=47 // pred_check_branch
          %5740 = sbr.rel (%p5738) target = $region64
        $region63: #{faster_rcnn_kd_forward.4} parent=47 // pred_region
          %5741 = dma.done [#allocation3], 16
        $region64: #{faster_rcnn_kd_forward.4} parent=47 // pred_fallthru
          _
        // Predicated region
        $region65: #{faster_rcnn_kd_forward.4} parent=47 // pred_check
          %p5742 = pneg %p208
        $region66: #{faster_rcnn_kd_forward.4} parent=47 // pred_check_branch
          %5744 = sbr.rel (%p5742) target = $region68
        $region67: #{faster_rcnn_kd_forward.4} parent=47 // pred_region
          %5745 = dma.done [#allocation5], 16
        $region68: #{faster_rcnn_kd_forward.4} parent=47 // pred_fallthru
          _
      $region48: #{faster_rcnn_kd_forward.4} parent=5 // pred_fallthru
        _
      %p5746 = scmp.le.s32.totalorder 2, %s17
      // Predicated region
      $region69: #{faster_rcnn_kd_forward.4} parent=5 // pred_check
        %p5747 = pneg %p5746
      $region70: #{faster_rcnn_kd_forward.4} parent=5 // pred_check_branch
        %5749 = sbr.rel (%p5747) target = $region72
      $region71: #{faster_rcnn_kd_forward.4} parent=5 // pred_region
        %s5750 = ssub.s32 %s17, 2
      $region72: #{faster_rcnn_kd_forward.4} parent=5 // pred_fallthru
        _
    $region6: #{faster_rcnn_kd_forward.4} parent=1 // loop_footer
      %s21 = sadd.s32 1, %s17
    $region7: #{faster_rcnn_kd_forward.4} parent=1 // loop_footer_branch
      %16 = sbr.rel target = $region3
    $region8: #{faster_rcnn_kd_forward.4} parent=1 // loop_exit
      _
    %5751 = vsyncpa [#allocation3], 1
    %s5752 = scalar_lea.sflag [#allocation3], 1
    %5753 = vsyncpa %s5752, 1
    %5754 = vsyncpa [#allocation5], 1

</llo_original>
